<compile_context>
chip_gen: v6e
topology: v6e:2x2x1
jax: 0.10.0
libtpu: 0.0.40
codegen_flags: <defaults>
</compile_context>

<pallas_src>
import functools

import jax
import jax.numpy as jnp
from jax.experimental import pallas as pl
from jax.experimental.pallas import tpu as pltpu

_LEAKY_SLOPE = 0.01   # F.leaky_relu_ default negative_slope
_BN_EPS = 1e-5        # nn.BatchNorm2d default eps
_VMEM = pl.BlockSpec(memory_space=pltpu.MemorySpace.VMEM)


# ------------------------------ fused kernel --------------------------------

def _res_down_kernel(*refs, n, hh, wh, cin, cout, has_proj):
    # refs layout:
    #   [0:4]   four 2x2-pool taps, each (n, hh, wh, cin)  (NHWC)
    #   [4:10]  block1: w1 (3,3,cin,cout), g1 (1,cout), be1, w2 (3,3,cout,cout), g2, be2
    #   [.. 2]  block1 skip projection (only if has_proj): w3 (cin,cout), b3 (1,cout)
    #   [.. 6]  block2: w1, g1, be1, w2, g2, be2 (all cout->cout)
    #   then:   out_ref (m, cout), pad_a (n,hh+2,wh+2,cin), pad_b (n,hh+2,wh+2,cout)
    t00, t01, t10, t11 = refs[:4]
    w1a, g1a, b1a, w1b, g1b, b1b = refs[4:10]
    idx = 10
    if has_proj:
        w1s, b1s = refs[10:12]
        idx = 12
    w2a, g2a, b2a, w2b, g2b, b2b = refs[idx:idx + 6]
    out_ref, pad_a, pad_b = refs[idx + 6:idx + 9]

    m = n * hh * wh

    # Zero the padded scratch buffers once; interiors are fully overwritten below,
    # so the halo stays zero across reuses (this is the "same" padding).
    pad_a[...] = jnp.zeros_like(pad_a)
    pad_b[...] = jnp.zeros_like(pad_b)

    # ---- fused 2x2 max-pool: elementwise max of the four window taps (VPU) ----
    x0 = jnp.maximum(jnp.maximum(t00[...], t01[...]),
                     jnp.maximum(t10[...], t11[...]))          # (n, hh, wh, cin)

    def leaky(v):
        return jnp.maximum(v, _LEAKY_SLOPE * v)

    def conv3x3_bn_lrelu(pad_ref, w_ref, g_ref, b_ref, c_in):
        # pad_ref: (n, hh+2, wh+2, c_in), interior filled, halo = 0.
        # 3x3 stride-1 conv (bias=False) as 9 channel matmuls accumulated in fp32,
        # fused with training-mode BatchNorm (single-pass batch stats) + leaky_relu.
        xp = pad_ref[...]
        acc = jnp.zeros((m, cout), jnp.float32)
        for dy in range(3):
            for dx in range(3):
                patch = xp[:, dy:dy + hh, dx:dx + wh, :].reshape(m, c_in)
                acc = acc + jnp.dot(patch, w_ref[dy, dx],
                                    preferred_element_type=jnp.float32)
        mean = jnp.mean(acc, axis=0, keepdims=True)                    # (1, cout)
        var = jnp.mean(acc * acc, axis=0, keepdims=True) - mean * mean
        var = jnp.maximum(var, 0.0)                                    # numerical guard
        y = (acc - mean) * jax.lax.rsqrt(var + _BN_EPS)
        y = y * g_ref[...] + b_ref[...]
        return leaky(y)                                                # (m, cout)

    # --------------------------- residual block 1 ---------------------------
    pad_a[:, 1:hh + 1, 1:wh + 1, :] = x0
    h = conv3x3_bn_lrelu(pad_a, w1a, g1a, b1a, cin)
    pad_b[:, 1:hh + 1, 1:wh + 1, :] = h.reshape(n, hh, wh, cout)
    h = conv3x3_bn_lrelu(pad_b, w1b, g1b, b1b, cout)
    x0f = x0.reshape(m, cin)
    if has_proj:
        skip = jnp.dot(x0f, w1s[...],
                       preferred_element_type=jnp.float32) + b1s[...]
    else:
        skip = x0f                                              # cin == cout
    y1 = leaky(skip + h)                                        # (m, cout)

    # ---------------------- residual block 2 (identity skip) ----------------
    pad_b[:, 1:hh + 1, 1:wh + 1, :] = y1.reshape(n, hh, wh, cout)
    h = conv3x3_bn_lrelu(pad_b, w2a, g2a, b2a, cout)
    pad_b[:, 1:hh + 1, 1:wh + 1, :] = h.reshape(n, hh, wh, cout)
    h = conv3x3_bn_lrelu(pad_b, w2b, g2b, b2b, cout)
    y2 = leaky(y1 + h)                                          # (m, cout)

    out_ref[...] = y2.astype(out_ref.dtype)                     # flat store, no reshape


# ------------------------------ host wrappers --------------------------------

def _res_down_fused(taps, params):
    """taps: 4 NHWC arrays (N, Hh, Wh, Cin) — the 2x2-pool window taps."""
    N, Hh, Wh, Cin = taps[0].shape
    b1, b2 = params['block1'], params['block2']
    has_proj = not params['same_shape1']
    Cout = b1['w1'].shape[-1]
    M = N * Hh * Wh

    inputs = list(taps) + [b1['w1'], b1['g1'], b1['be1'],
                           b1['w2'], b1['g2'], b1['be2']]
    if has_proj:
        inputs += [b1['w3'], b1['b3']]
    inputs += [b2['w1'], b2['g1'], b2['be1'],
               b2['w2'], b2['g2'], b2['be2']]

    kernel = functools.partial(_res_down_kernel, n=N, hh=Hh, wh=Wh,
                               cin=Cin, cout=Cout, has_proj=has_proj)

    out = pl.pallas_call(
        kernel,
        out_shape=jax.ShapeDtypeStruct((M, Cout), jnp.float32),
        in_specs=[_VMEM] * len(inputs),
        out_specs=_VMEM,
        scratch_shapes=[
            pltpu.VMEM((N, Hh + 2, Wh + 2, Cin), jnp.float32),   # padded block-1 input
            pltpu.VMEM((N, Hh + 2, Wh + 2, Cout), jnp.float32),  # padded intermediates (reused)
        ],
        compiler_params=pltpu.CompilerParams(vmem_limit_bytes=32 * 1024 * 1024),
    )(*inputs)
    return out.reshape(N, Hh, Wh, Cout)


def res_down_nhwc(x_nhwc, params):
    """NHWC -> NHWC entry point (use this inside an NHWC model to avoid boundary
    transposes entirely)."""
    taps = [x_nhwc[:, r::2, s::2, :] for r in (0, 1) for s in (0, 1)]
    return _res_down_fused(taps, params)


def res_down(x_nchw, params):
    """PyTorch-style NCHW -> NCHW entry point."""
    N, Cin, H, W = x_nchw.shape
    # Extract the four pooling taps and convert to NHWC in one pass over the input
    # (this replaces — and costs no more than — a single NCHW->NHWC transpose).
    taps = [jnp.transpose(x_nchw[:, :, r::2, s::2], (0, 2, 3, 1))
            for r in (0, 1) for s in (0, 1)]
    y = _res_down_fused(taps, params)                       # (N, Hh, Wh, Cout)
    return jnp.transpose(y, (0, 3, 1, 2))                   # NHWC -> NCHW


# ------------------------------- parameters ----------------------------------

def init_block(key, cin, cout, same_shape):
    ks = jax.random.split(key, 8)
    p = {
        # conv weights stored HWIO (3, 3, Cin, Cout)
        'w1':  0.1 * jax.random.normal(ks[0], (3, 3, cin, cout), jnp.float32),
        'g1':  1.0 + 0.1 * jax.random.normal(ks[1], (1, cout), jnp.float32),
        'be1': 0.1 * jax.random.normal(ks[2], (1, cout), jnp.float32),
        'w2':  0.1 * jax.random.normal(ks[3], (3, 3, cout, cout), jnp.float32),
        'g2':  1.0 + 0.1 * jax.random.normal(ks[4], (1, cout), jnp.float32),
        'be2': 0.1 * jax.random.normal(ks[5], (1, cout), jnp.float32),
    }
    if not same_shape:
        p['w3'] = 0.1 * jax.random.normal(ks[6], (cin, cout), jnp.float32)
        p['b3'] = 0.1 * jax.random.normal(ks[7], (1, cout), jnp.float32)
    return p


def init_res_down(key, in_channels, out_channels):
    k1, k2 = jax.random.split(key, 2)
    same1 = (in_channels == out_channels)
    return {
        'same_shape1': same1,
        'block1': init_block(k1, in_channels, out_channels, same1),
        'block2': init_block(k2, out_channels, out_channels, True),
    }


# ---------------------------------- main --------------------------------------

if __name__ == "__main__":
    in_channels, out_channels = 4, 8
    N, H, W = 2, 16, 16

    key = jax.random.PRNGKey(0)
    kx, kp = jax.random.split(key)
    x = jax.random.normal(kx, (N, in_channels, H, W), jnp.float32)   # NCHW
    params = init_res_down(kp, in_channels, out_channels)

    y = jax.block_until_ready(res_down(x, params))

    expected_shape = (N, out_channels, H // 2, W // 2)
    assert y.shape == expected_shape, (y.shape, expected_shape)
    assert bool(jnp.all(jnp.isfinite(y)))
    print("KERNEL_OK")
</pallas_src>

<mosaic_0001>
module attributes {stable_mosaic.version = 11 : i64} {
  func.func @_res_down_kernel(%arg0: memref<2x8x8x4xf32, #tpu.memory_space<vmem>>, %arg1: memref<2x8x8x4xf32, #tpu.memory_space<vmem>>, %arg2: memref<2x8x8x4xf32, #tpu.memory_space<vmem>>, %arg3: memref<2x8x8x4xf32, #tpu.memory_space<vmem>>, %arg4: memref<3x3x4x8xf32, #tpu.memory_space<vmem>>, %arg5: memref<1x8xf32, #tpu.memory_space<vmem>>, %arg6: memref<1x8xf32, #tpu.memory_space<vmem>>, %arg7: memref<3x3x8x8xf32, #tpu.memory_space<vmem>>, %arg8: memref<1x8xf32, #tpu.memory_space<vmem>>, %arg9: memref<1x8xf32, #tpu.memory_space<vmem>>, %arg10: memref<4x8xf32, #tpu.memory_space<vmem>>, %arg11: memref<1x8xf32, #tpu.memory_space<vmem>>, %arg12: memref<3x3x8x8xf32, #tpu.memory_space<vmem>>, %arg13: memref<1x8xf32, #tpu.memory_space<vmem>>, %arg14: memref<1x8xf32, #tpu.memory_space<vmem>>, %arg15: memref<3x3x8x8xf32, #tpu.memory_space<vmem>>, %arg16: memref<1x8xf32, #tpu.memory_space<vmem>>, %arg17: memref<1x8xf32, #tpu.memory_space<vmem>>, %arg18: memref<128x8xf32, #tpu.memory_space<vmem>>, %arg19: memref<2x10x10x4xf32, #tpu.memory_space<vmem>>, %arg20: memref<2x10x10x8xf32, #tpu.memory_space<vmem>>) attributes {dimension_semantics = [], scalar_prefetch = 0 : i64, scratch_operands = 2 : i64, tpu.core_type = #tpu.core_type<tc>} {
    %cst = arith.constant 0.000000e+00 : f32
    %0 = vector.broadcast %cst : f32 to vector<2x10x10x4xf32>
    %c0 = arith.constant 0 : index
    %c0_0 = arith.constant 0 : index
    %c0_1 = arith.constant 0 : index
    %c0_2 = arith.constant 0 : index
    %1 = vector.load %arg19[%c0, %c0_0, %c0_1, %c0_2] : memref<2x10x10x4xf32, #tpu.memory_space<vmem>>, vector<2x10x10x4xf32>
    tpu.vector_store %arg19[%c0, %c0_0, %c0_1, %c0_2], %0 {strides = array<i32>} : memref<2x10x10x4xf32, #tpu.memory_space<vmem>>, vector<2x10x10x4xf32>,
    %cst_3 = arith.constant 0.000000e+00 : f32
    %2 = vector.broadcast %cst_3 : f32 to vector<2x10x10x8xf32>
    %c0_4 = arith.constant 0 : index
    %c0_5 = arith.constant 0 : index
    %c0_6 = arith.constant 0 : index
    %c0_7 = arith.constant 0 : index
    %3 = vector.load %arg20[%c0_4, %c0_5, %c0_6, %c0_7] : memref<2x10x10x8xf32, #tpu.memory_space<vmem>>, vector<2x10x10x8xf32>
    tpu.vector_store %arg20[%c0_4, %c0_5, %c0_6, %c0_7], %2 {strides = array<i32>} : memref<2x10x10x8xf32, #tpu.memory_space<vmem>>, vector<2x10x10x8xf32>,
    %c0_8 = arith.constant 0 : index
    %c0_9 = arith.constant 0 : index
    %c0_10 = arith.constant 0 : index
    %c0_11 = arith.constant 0 : index
    %4 = vector.load %arg0[%c0_8, %c0_9, %c0_10, %c0_11] : memref<2x8x8x4xf32, #tpu.memory_space<vmem>>, vector<2x8x8x4xf32>
    %c0_12 = arith.constant 0 : index
    %c0_13 = arith.constant 0 : index
    %c0_14 = arith.constant 0 : index
    %c0_15 = arith.constant 0 : index
    %5 = vector.load %arg1[%c0_12, %c0_13, %c0_14, %c0_15] : memref<2x8x8x4xf32, #tpu.memory_space<vmem>>, vector<2x8x8x4xf32>
    %6 = arith.maximumf %4, %5 : vector<2x8x8x4xf32>
    %c0_16 = arith.constant 0 : index
    %c0_17 = arith.constant 0 : index
    %c0_18 = arith.constant 0 : index
    %c0_19 = arith.constant 0 : index
    %7 = vector.load %arg2[%c0_16, %c0_17, %c0_18, %c0_19] : memref<2x8x8x4xf32, #tpu.memory_space<vmem>>, vector<2x8x8x4xf32>
    %c0_20 = arith.constant 0 : index
    %c0_21 = arith.constant 0 : index
    %c0_22 = arith.constant 0 : index
    %c0_23 = arith.constant 0 : index
    %8 = vector.load %arg3[%c0_20, %c0_21, %c0_22, %c0_23] : memref<2x8x8x4xf32, #tpu.memory_space<vmem>>, vector<2x8x8x4xf32>
    %9 = arith.maximumf %7, %8 : vector<2x8x8x4xf32>
    %10 = arith.maximumf %6, %9 : vector<2x8x8x4xf32>
    %c0_24 = arith.constant 0 : index
    %c1 = arith.constant 1 : index
    %c1_25 = arith.constant 1 : index
    %c0_26 = arith.constant 0 : index
    %11 = vector.load %arg19[%c0_24, %c1, %c1_25, %c0_26] : memref<2x10x10x4xf32, #tpu.memory_space<vmem>>, vector<2x8x8x4xf32>
    tpu.vector_store %arg19[%c0_24, %c1, %c1_25, %c0_26], %10 {strides = array<i32>} : memref<2x10x10x4xf32, #tpu.memory_space<vmem>>, vector<2x8x8x4xf32>,
    %c0_27 = arith.constant 0 : index
    %c0_28 = arith.constant 0 : index
    %c0_29 = arith.constant 0 : index
    %c0_30 = arith.constant 0 : index
    %12 = vector.load %arg19[%c0_27, %c0_28, %c0_29, %c0_30] : memref<2x10x10x4xf32, #tpu.memory_space<vmem>>, vector<2x10x10x4xf32>
    %cst_31 = arith.constant 0.000000e+00 : f32
    %13 = vector.broadcast %cst_31 : f32 to vector<128x8xf32>
    %14 = vector.extract_strided_slice %12 {offsets = [0, 0, 0, 0], sizes = [2, 8, 8, 4], strides = [1, 1, 1, 1]} : vector<2x10x10x4xf32> to vector<2x8x8x4xf32>
    %15 = vector.shape_cast %14 : vector<2x8x8x4xf32> to vector<128x4xf32>
    %c0_32 = arith.constant 0 : index
    %c0_33 = arith.constant 0 : index
    %c0_34 = arith.constant 0 : index
    %c0_35 = arith.constant 0 : index
    %16 = vector.load %arg4[%c0_32, %c0_33, %c0_34, %c0_35] : memref<3x3x4x8xf32, #tpu.memory_space<vmem>>, vector<1x1x4x8xf32>
    %17 = vector.shape_cast %16 : vector<1x1x4x8xf32> to vector<4x8xf32>
    %cst_36 = arith.constant dense<0.000000e+00> : vector<128x8xf32>
    %18 = tpu.matmul %15, %17, %cst_36 {dimension_numbers = #tpu.dot_dimension_numbers<[1], [0], [0], [1], [0, 0, 1, 1], [], []>} : vector<128x4xf32>, vector<4x8xf32>, vector<128x8xf32> -> vector<128x8xf32>
    %19 = arith.addf %13, %18 : vector<128x8xf32>
    %20 = vector.extract_strided_slice %12 {offsets = [0, 0, 1, 0], sizes = [2, 8, 8, 4], strides = [1, 1, 1, 1]} : vector<2x10x10x4xf32> to vector<2x8x8x4xf32>
    %21 = vector.shape_cast %20 : vector<2x8x8x4xf32> to vector<128x4xf32>
    %c0_37 = arith.constant 0 : index
    %c1_38 = arith.constant 1 : index
    %c0_39 = arith.constant 0 : index
    %c0_40 = arith.constant 0 : index
    %22 = vector.load %arg4[%c0_37, %c1_38, %c0_39, %c0_40] : memref<3x3x4x8xf32, #tpu.memory_space<vmem>>, vector<1x1x4x8xf32>
    %23 = vector.shape_cast %22 : vector<1x1x4x8xf32> to vector<4x8xf32>
    %cst_41 = arith.constant dense<0.000000e+00> : vector<128x8xf32>
    %24 = tpu.matmul %21, %23, %cst_41 {dimension_numbers = #tpu.dot_dimension_numbers<[1], [0], [0], [1], [0, 0, 1, 1], [], []>} : vector<128x4xf32>, vector<4x8xf32>, vector<128x8xf32> -> vector<128x8xf32>
    %25 = arith.addf %19, %24 : vector<128x8xf32>
    %26 = vector.extract_strided_slice %12 {offsets = [0, 0, 2, 0], sizes = [2, 8, 8, 4], strides = [1, 1, 1, 1]} : vector<2x10x10x4xf32> to vector<2x8x8x4xf32>
    %27 = vector.shape_cast %26 : vector<2x8x8x4xf32> to vector<128x4xf32>
    %c0_42 = arith.constant 0 : index
    %c2 = arith.constant 2 : index
    %c0_43 = arith.constant 0 : index
    %c0_44 = arith.constant 0 : index
    %28 = vector.load %arg4[%c0_42, %c2, %c0_43, %c0_44] : memref<3x3x4x8xf32, #tpu.memory_space<vmem>>, vector<1x1x4x8xf32>
    %29 = vector.shape_cast %28 : vector<1x1x4x8xf32> to vector<4x8xf32>
    %cst_45 = arith.constant dense<0.000000e+00> : vector<128x8xf32>
    %30 = tpu.matmul %27, %29, %cst_45 {dimension_numbers = #tpu.dot_dimension_numbers<[1], [0], [0], [1], [0, 0, 1, 1], [], []>} : vector<128x4xf32>, vector<4x8xf32>, vector<128x8xf32> -> vector<128x8xf32>
    %31 = arith.addf %25, %30 : vector<128x8xf32>
    %32 = vector.extract_strided_slice %12 {offsets = [0, 1, 0, 0], sizes = [2, 8, 8, 4], strides = [1, 1, 1, 1]} : vector<2x10x10x4xf32> to vector<2x8x8x4xf32>
    %33 = vector.shape_cast %32 : vector<2x8x8x4xf32> to vector<128x4xf32>
    %c1_46 = arith.constant 1 : index
    %c0_47 = arith.constant 0 : index
    %c0_48 = arith.constant 0 : index
    %c0_49 = arith.constant 0 : index
    %34 = vector.load %arg4[%c1_46, %c0_47, %c0_48, %c0_49] : memref<3x3x4x8xf32, #tpu.memory_space<vmem>>, vector<1x1x4x8xf32>
    %35 = vector.shape_cast %34 : vector<1x1x4x8xf32> to vector<4x8xf32>
    %cst_50 = arith.constant dense<0.000000e+00> : vector<128x8xf32>
    %36 = tpu.matmul %33, %35, %cst_50 {dimension_numbers = #tpu.dot_dimension_numbers<[1], [0], [0], [1], [0, 0, 1, 1], [], []>} : vector<128x4xf32>, vector<4x8xf32>, vector<128x8xf32> -> vector<128x8xf32>
    %37 = arith.addf %31, %36 : vector<128x8xf32>
    %38 = vector.extract_strided_slice %12 {offsets = [0, 1, 1, 0], sizes = [2, 8, 8, 4], strides = [1, 1, 1, 1]} : vector<2x10x10x4xf32> to vector<2x8x8x4xf32>
    %39 = vector.shape_cast %38 : vector<2x8x8x4xf32> to vector<128x4xf32>
    %c1_51 = arith.constant 1 : index
    %c1_52 = arith.constant 1 : index
    %c0_53 = arith.constant 0 : index
    %c0_54 = arith.constant 0 : index
    %40 = vector.load %arg4[%c1_51, %c1_52, %c0_53, %c0_54] : memref<3x3x4x8xf32, #tpu.memory_space<vmem>>, vector<1x1x4x8xf32>
    %41 = vector.shape_cast %40 : vector<1x1x4x8xf32> to vector<4x8xf32>
    %cst_55 = arith.constant dense<0.000000e+00> : vector<128x8xf32>
    %42 = tpu.matmul %39, %41, %cst_55 {dimension_numbers = #tpu.dot_dimension_numbers<[1], [0], [0], [1], [0, 0, 1, 1], [], []>} : vector<128x4xf32>, vector<4x8xf32>, vector<128x8xf32> -> vector<128x8xf32>
    %43 = arith.addf %37, %42 : vector<128x8xf32>
    %44 = vector.extract_strided_slice %12 {offsets = [0, 1, 2, 0], sizes = [2, 8, 8, 4], strides = [1, 1, 1, 1]} : vector<2x10x10x4xf32> to vector<2x8x8x4xf32>
    %45 = vector.shape_cast %44 : vector<2x8x8x4xf32> to vector<128x4xf32>
    %c1_56 = arith.constant 1 : index
    %c2_57 = arith.constant 2 : index
    %c0_58 = arith.constant 0 : index
    %c0_59 = arith.constant 0 : index
    %46 = vector.load %arg4[%c1_56, %c2_57, %c0_58, %c0_59] : memref<3x3x4x8xf32, #tpu.memory_space<vmem>>, vector<1x1x4x8xf32>
    %47 = vector.shape_cast %46 : vector<1x1x4x8xf32> to vector<4x8xf32>
    %cst_60 = arith.constant dense<0.000000e+00> : vector<128x8xf32>
    %48 = tpu.matmul %45, %47, %cst_60 {dimension_numbers = #tpu.dot_dimension_numbers<[1], [0], [0], [1], [0, 0, 1, 1], [], []>} : vector<128x4xf32>, vector<4x8xf32>, vector<128x8xf32> -> vector<128x8xf32>
    %49 = arith.addf %43, %48 : vector<128x8xf32>
    %50 = vector.extract_strided_slice %12 {offsets = [0, 2, 0, 0], sizes = [2, 8, 8, 4], strides = [1, 1, 1, 1]} : vector<2x10x10x4xf32> to vector<2x8x8x4xf32>
    %51 = vector.shape_cast %50 : vector<2x8x8x4xf32> to vector<128x4xf32>
    %c2_61 = arith.constant 2 : index
    %c0_62 = arith.constant 0 : index
    %c0_63 = arith.constant 0 : index
    %c0_64 = arith.constant 0 : index
    %52 = vector.load %arg4[%c2_61, %c0_62, %c0_63, %c0_64] : memref<3x3x4x8xf32, #tpu.memory_space<vmem>>, vector<1x1x4x8xf32>
    %53 = vector.shape_cast %52 : vector<1x1x4x8xf32> to vector<4x8xf32>
    %cst_65 = arith.constant dense<0.000000e+00> : vector<128x8xf32>
    %54 = tpu.matmul %51, %53, %cst_65 {dimension_numbers = #tpu.dot_dimension_numbers<[1], [0], [0], [1], [0, 0, 1, 1], [], []>} : vector<128x4xf32>, vector<4x8xf32>, vector<128x8xf32> -> vector<128x8xf32>
    %55 = arith.addf %49, %54 : vector<128x8xf32>
    %56 = vector.extract_strided_slice %12 {offsets = [0, 2, 1, 0], sizes = [2, 8, 8, 4], strides = [1, 1, 1, 1]} : vector<2x10x10x4xf32> to vector<2x8x8x4xf32>
    %57 = vector.shape_cast %56 : vector<2x8x8x4xf32> to vector<128x4xf32>
    %c2_66 = arith.constant 2 : index
    %c1_67 = arith.constant 1 : index
    %c0_68 = arith.constant 0 : index
    %c0_69 = arith.constant 0 : index
    %58 = vector.load %arg4[%c2_66, %c1_67, %c0_68, %c0_69] : memref<3x3x4x8xf32, #tpu.memory_space<vmem>>, vector<1x1x4x8xf32>
    %59 = vector.shape_cast %58 : vector<1x1x4x8xf32> to vector<4x8xf32>
    %cst_70 = arith.constant dense<0.000000e+00> : vector<128x8xf32>
    %60 = tpu.matmul %57, %59, %cst_70 {dimension_numbers = #tpu.dot_dimension_numbers<[1], [0], [0], [1], [0, 0, 1, 1], [], []>} : vector<128x4xf32>, vector<4x8xf32>, vector<128x8xf32> -> vector<128x8xf32>
    %61 = arith.addf %55, %60 : vector<128x8xf32>
    %62 = vector.extract_strided_slice %12 {offsets = [0, 2, 2, 0], sizes = [2, 8, 8, 4], strides = [1, 1, 1, 1]} : vector<2x10x10x4xf32> to vector<2x8x8x4xf32>
    %63 = vector.shape_cast %62 : vector<2x8x8x4xf32> to vector<128x4xf32>
    %c2_71 = arith.constant 2 : index
    %c2_72 = arith.constant 2 : index
    %c0_73 = arith.constant 0 : index
    %c0_74 = arith.constant 0 : index
    %64 = vector.load %arg4[%c2_71, %c2_72, %c0_73, %c0_74] : memref<3x3x4x8xf32, #tpu.memory_space<vmem>>, vector<1x1x4x8xf32>
    %65 = vector.shape_cast %64 : vector<1x1x4x8xf32> to vector<4x8xf32>
    %cst_75 = arith.constant dense<0.000000e+00> : vector<128x8xf32>
    %66 = tpu.matmul %63, %65, %cst_75 {dimension_numbers = #tpu.dot_dimension_numbers<[1], [0], [0], [1], [0, 0, 1, 1], [], []>} : vector<128x4xf32>, vector<4x8xf32>, vector<128x8xf32> -> vector<128x8xf32>
    %67 = arith.addf %61, %66 : vector<128x8xf32>
    %cst_76 = arith.constant dense<0.000000e+00> : vector<8xf32>
    %68 = vector.multi_reduction <add>, %67, %cst_76 [0] : vector<128x8xf32> to vector<8xf32>
    %69 = vector.shape_cast %68 : vector<8xf32> to vector<1x8xf32>
    %cst_77 = arith.constant 1.280000e+02 : f32
    %70 = vector.broadcast %cst_77 : f32 to vector<1x8xf32>
    %71 = arith.divf %69, %70 : vector<1x8xf32>
    %72 = arith.mulf %67, %67 : vector<128x8xf32>
    %cst_78 = arith.constant dense<0.000000e+00> : vector<8xf32>
    %73 = vector.multi_reduction <add>, %72, %cst_78 [0] : vector<128x8xf32> to vector<8xf32>
    %74 = vector.shape_cast %73 : vector<8xf32> to vector<1x8xf32>
    %cst_79 = arith.constant 1.280000e+02 : f32
    %75 = vector.broadcast %cst_79 : f32 to vector<1x8xf32>
    %76 = arith.divf %74, %75 : vector<1x8xf32>
    %77 = arith.mulf %71, %71 : vector<1x8xf32>
    %78 = arith.subf %76, %77 : vector<1x8xf32>
    %cst_80 = arith.constant 0.000000e+00 : f32
    %79 = vector.broadcast %cst_80 : f32 to vector<1x8xf32>
    %80 = arith.maximumf %78, %79 : vector<1x8xf32>
    %81 = vector.broadcast %71 : vector<1x8xf32> to vector<128x8xf32>
    %82 = arith.subf %67, %81 : vector<128x8xf32>
    %cst_81 = arith.constant 9.99999974E-6 : f32
    %83 = vector.broadcast %cst_81 : f32 to vector<1x8xf32>
    %84 = arith.addf %80, %83 : vector<1x8xf32>
    %85 = math.rsqrt %84 : vector<1x8xf32>
    %86 = vector.broadcast %85 : vector<1x8xf32> to vector<128x8xf32>
    %87 = arith.mulf %82, %86 : vector<128x8xf32>
    %c0_82 = arith.constant 0 : index
    %c0_83 = arith.constant 0 : index
    %88 = vector.load %arg5[%c0_82, %c0_83] : memref<1x8xf32, #tpu.memory_space<vmem>>, vector<1x8xf32>
    %89 = vector.broadcast %88 : vector<1x8xf32> to vector<128x8xf32>
    %90 = arith.mulf %87, %89 : vector<128x8xf32>
    %c0_84 = arith.constant 0 : index
    %c0_85 = arith.constant 0 : index
    %91 = vector.load %arg6[%c0_84, %c0_85] : memref<1x8xf32, #tpu.memory_space<vmem>>, vector<1x8xf32>
    %92 = vector.broadcast %91 : vector<1x8xf32> to vector<128x8xf32>
    %93 = arith.addf %90, %92 : vector<128x8xf32>
    %cst_86 = arith.constant 0.00999999977 : f32
    %94 = vector.broadcast %cst_86 : f32 to vector<128x8xf32>
    %95 = arith.mulf %94, %93 : vector<128x8xf32>
    %96 = arith.maximumf %93, %95 : vector<128x8xf32>
    %97 = vector.shape_cast %96 : vector<128x8xf32> to vector<2x8x8x8xf32>
    %c0_87 = arith.constant 0 : index
    %c1_88 = arith.constant 1 : index
    %c1_89 = arith.constant 1 : index
    %c0_90 = arith.constant 0 : index
    %98 = vector.load %arg20[%c0_87, %c1_88, %c1_89, %c0_90] : memref<2x10x10x8xf32, #tpu.memory_space<vmem>>, vector<2x8x8x8xf32>
    tpu.vector_store %arg20[%c0_87, %c1_88, %c1_89, %c0_90], %97 {strides = array<i32>} : memref<2x10x10x8xf32, #tpu.memory_space<vmem>>, vector<2x8x8x8xf32>,
    %c0_91 = arith.constant 0 : index
    %c0_92 = arith.constant 0 : index
    %c0_93 = arith.constant 0 : index
    %c0_94 = arith.constant 0 : index
    %99 = vector.load %arg20[%c0_91, %c0_92, %c0_93, %c0_94] : memref<2x10x10x8xf32, #tpu.memory_space<vmem>>, vector<2x10x10x8xf32>
    %cst_95 = arith.constant 0.000000e+00 : f32
    %100 = vector.broadcast %cst_95 : f32 to vector<128x8xf32>
    %101 = vector.extract_strided_slice %99 {offsets = [0, 0, 0, 0], sizes = [2, 8, 8, 8], strides = [1, 1, 1, 1]} : vector<2x10x10x8xf32> to vector<2x8x8x8xf32>
    %102 = vector.shape_cast %101 : vector<2x8x8x8xf32> to vector<128x8xf32>
    %c0_96 = arith.constant 0 : index
    %c0_97 = arith.constant 0 : index
    %c0_98 = arith.constant 0 : index
    %c0_99 = arith.constant 0 : index
    %103 = vector.load %arg7[%c0_96, %c0_97, %c0_98, %c0_99] : memref<3x3x8x8xf32, #tpu.memory_space<vmem>>, vector<1x1x8x8xf32>
    %104 = vector.shape_cast %103 : vector<1x1x8x8xf32> to vector<8x8xf32>
    %cst_100 = arith.constant dense<0.000000e+00> : vector<128x8xf32>
    %105 = tpu.matmul %102, %104, %cst_100 {dimension_numbers = #tpu.dot_dimension_numbers<[1], [0], [0], [1], [0, 0, 1, 1], [], []>} : vector<128x8xf32>, vector<8x8xf32>, vector<128x8xf32> -> vector<128x8xf32>
    %106 = arith.addf %100, %105 : vector<128x8xf32>
    %107 = vector.extract_strided_slice %99 {offsets = [0, 0, 1, 0], sizes = [2, 8, 8, 8], strides = [1, 1, 1, 1]} : vector<2x10x10x8xf32> to vector<2x8x8x8xf32>
    %108 = vector.shape_cast %107 : vector<2x8x8x8xf32> to vector<128x8xf32>
    %c0_101 = arith.constant 0 : index
    %c1_102 = arith.constant 1 : index
    %c0_103 = arith.constant 0 : index
    %c0_104 = arith.constant 0 : index
    %109 = vector.load %arg7[%c0_101, %c1_102, %c0_103, %c0_104] : memref<3x3x8x8xf32, #tpu.memory_space<vmem>>, vector<1x1x8x8xf32>
    %110 = vector.shape_cast %109 : vector<1x1x8x8xf32> to vector<8x8xf32>
    %cst_105 = arith.constant dense<0.000000e+00> : vector<128x8xf32>
    %111 = tpu.matmul %108, %110, %cst_105 {dimension_numbers = #tpu.dot_dimension_numbers<[1], [0], [0], [1], [0, 0, 1, 1], [], []>} : vector<128x8xf32>, vector<8x8xf32>, vector<128x8xf32> -> vector<128x8xf32>
    %112 = arith.addf %106, %111 : vector<128x8xf32>
    %113 = vector.extract_strided_slice %99 {offsets = [0, 0, 2, 0], sizes = [2, 8, 8, 8], strides = [1, 1, 1, 1]} : vector<2x10x10x8xf32> to vector<2x8x8x8xf32>
    %114 = vector.shape_cast %113 : vector<2x8x8x8xf32> to vector<128x8xf32>
    %c0_106 = arith.constant 0 : index
    %c2_107 = arith.constant 2 : index
    %c0_108 = arith.constant 0 : index
    %c0_109 = arith.constant 0 : index
    %115 = vector.load %arg7[%c0_106, %c2_107, %c0_108, %c0_109] : memref<3x3x8x8xf32, #tpu.memory_space<vmem>>, vector<1x1x8x8xf32>
    %116 = vector.shape_cast %115 : vector<1x1x8x8xf32> to vector<8x8xf32>
    %cst_110 = arith.constant dense<0.000000e+00> : vector<128x8xf32>
    %117 = tpu.matmul %114, %116, %cst_110 {dimension_numbers = #tpu.dot_dimension_numbers<[1], [0], [0], [1], [0, 0, 1, 1], [], []>} : vector<128x8xf32>, vector<8x8xf32>, vector<128x8xf32> -> vector<128x8xf32>
    %118 = arith.addf %112, %117 : vector<128x8xf32>
    %119 = vector.extract_strided_slice %99 {offsets = [0, 1, 0, 0], sizes = [2, 8, 8, 8], strides = [1, 1, 1, 1]} : vector<2x10x10x8xf32> to vector<2x8x8x8xf32>
    %120 = vector.shape_cast %119 : vector<2x8x8x8xf32> to vector<128x8xf32>
    %c1_111 = arith.constant 1 : index
    %c0_112 = arith.constant 0 : index
    %c0_113 = arith.constant 0 : index
    %c0_114 = arith.constant 0 : index
    %121 = vector.load %arg7[%c1_111, %c0_112, %c0_113, %c0_114] : memref<3x3x8x8xf32, #tpu.memory_space<vmem>>, vector<1x1x8x8xf32>
    %122 = vector.shape_cast %121 : vector<1x1x8x8xf32> to vector<8x8xf32>
    %cst_115 = arith.constant dense<0.000000e+00> : vector<128x8xf32>
    %123 = tpu.matmul %120, %122, %cst_115 {dimension_numbers = #tpu.dot_dimension_numbers<[1], [0], [0], [1], [0, 0, 1, 1], [], []>} : vector<128x8xf32>, vector<8x8xf32>, vector<128x8xf32> -> vector<128x8xf32>
    %124 = arith.addf %118, %123 : vector<128x8xf32>
    %125 = vector.extract_strided_slice %99 {offsets = [0, 1, 1, 0], sizes = [2, 8, 8, 8], strides = [1, 1, 1, 1]} : vector<2x10x10x8xf32> to vector<2x8x8x8xf32>
    %126 = vector.shape_cast %125 : vector<2x8x8x8xf32> to vector<128x8xf32>
    %c1_116 = arith.constant 1 : index
    %c1_117 = arith.constant 1 : index
    %c0_118 = arith.constant 0 : index
    %c0_119 = arith.constant 0 : index
    %127 = vector.load %arg7[%c1_116, %c1_117, %c0_118, %c0_119] : memref<3x3x8x8xf32, #tpu.memory_space<vmem>>, vector<1x1x8x8xf32>
    %128 = vector.shape_cast %127 : vector<1x1x8x8xf32> to vector<8x8xf32>
    %cst_120 = arith.constant dense<0.000000e+00> : vector<128x8xf32>
    %129 = tpu.matmul %126, %128, %cst_120 {dimension_numbers = #tpu.dot_dimension_numbers<[1], [0], [0], [1], [0, 0, 1, 1], [], []>} : vector<128x8xf32>, vector<8x8xf32>, vector<128x8xf32> -> vector<128x8xf32>
    %130 = arith.addf %124, %129 : vector<128x8xf32>
    %131 = vector.extract_strided_slice %99 {offsets = [0, 1, 2, 0], sizes = [2, 8, 8, 8], strides = [1, 1, 1, 1]} : vector<2x10x10x8xf32> to vector<2x8x8x8xf32>
    %132 = vector.shape_cast %131 : vector<2x8x8x8xf32> to vector<128x8xf32>
    %c1_121 = arith.constant 1 : index
    %c2_122 = arith.constant 2 : index
    %c0_123 = arith.constant 0 : index
    %c0_124 = arith.constant 0 : index
    %133 = vector.load %arg7[%c1_121, %c2_122, %c0_123, %c0_124] : memref<3x3x8x8xf32, #tpu.memory_space<vmem>>, vector<1x1x8x8xf32>
    %134 = vector.shape_cast %133 : vector<1x1x8x8xf32> to vector<8x8xf32>
    %cst_125 = arith.constant dense<0.000000e+00> : vector<128x8xf32>
    %135 = tpu.matmul %132, %134, %cst_125 {dimension_numbers = #tpu.dot_dimension_numbers<[1], [0], [0], [1], [0, 0, 1, 1], [], []>} : vector<128x8xf32>, vector<8x8xf32>, vector<128x8xf32> -> vector<128x8xf32>
    %136 = arith.addf %130, %135 : vector<128x8xf32>
    %137 = vector.extract_strided_slice %99 {offsets = [0, 2, 0, 0], sizes = [2, 8, 8, 8], strides = [1, 1, 1, 1]} : vector<2x10x10x8xf32> to vector<2x8x8x8xf32>
    %138 = vector.shape_cast %137 : vector<2x8x8x8xf32> to vector<128x8xf32>
    %c2_126 = arith.constant 2 : index
    %c0_127 = arith.constant 0 : index
    %c0_128 = arith.constant 0 : index
    %c0_129 = arith.constant 0 : index
    %139 = vector.load %arg7[%c2_126, %c0_127, %c0_128, %c0_129] : memref<3x3x8x8xf32, #tpu.memory_space<vmem>>, vector<1x1x8x8xf32>
    %140 = vector.shape_cast %139 : vector<1x1x8x8xf32> to vector<8x8xf32>
    %cst_130 = arith.constant dense<0.000000e+00> : vector<128x8xf32>
    %141 = tpu.matmul %138, %140, %cst_130 {dimension_numbers = #tpu.dot_dimension_numbers<[1], [0], [0], [1], [0, 0, 1, 1], [], []>} : vector<128x8xf32>, vector<8x8xf32>, vector<128x8xf32> -> vector<128x8xf32>
    %142 = arith.addf %136, %141 : vector<128x8xf32>
    %143 = vector.extract_strided_slice %99 {offsets = [0, 2, 1, 0], sizes = [2, 8, 8, 8], strides = [1, 1, 1, 1]} : vector<2x10x10x8xf32> to vector<2x8x8x8xf32>
    %144 = vector.shape_cast %143 : vector<2x8x8x8xf32> to vector<128x8xf32>
    %c2_131 = arith.constant 2 : index
    %c1_132 = arith.constant 1 : index
    %c0_133 = arith.constant 0 : index
    %c0_134 = arith.constant 0 : index
    %145 = vector.load %arg7[%c2_131, %c1_132, %c0_133, %c0_134] : memref<3x3x8x8xf32, #tpu.memory_space<vmem>>, vector<1x1x8x8xf32>
    %146 = vector.shape_cast %145 : vector<1x1x8x8xf32> to vector<8x8xf32>
    %cst_135 = arith.constant dense<0.000000e+00> : vector<128x8xf32>
    %147 = tpu.matmul %144, %146, %cst_135 {dimension_numbers = #tpu.dot_dimension_numbers<[1], [0], [0], [1], [0, 0, 1, 1], [], []>} : vector<128x8xf32>, vector<8x8xf32>, vector<128x8xf32> -> vector<128x8xf32>
    %148 = arith.addf %142, %147 : vector<128x8xf32>
    %149 = vector.extract_strided_slice %99 {offsets = [0, 2, 2, 0], sizes = [2, 8, 8, 8], strides = [1, 1, 1, 1]} : vector<2x10x10x8xf32> to vector<2x8x8x8xf32>
    %150 = vector.shape_cast %149 : vector<2x8x8x8xf32> to vector<128x8xf32>
    %c2_136 = arith.constant 2 : index
    %c2_137 = arith.constant 2 : index
    %c0_138 = arith.constant 0 : index
    %c0_139 = arith.constant 0 : index
    %151 = vector.load %arg7[%c2_136, %c2_137, %c0_138, %c0_139] : memref<3x3x8x8xf32, #tpu.memory_space<vmem>>, vector<1x1x8x8xf32>
    %152 = vector.shape_cast %151 : vector<1x1x8x8xf32> to vector<8x8xf32>
    %cst_140 = arith.constant dense<0.000000e+00> : vector<128x8xf32>
    %153 = tpu.matmul %150, %152, %cst_140 {dimension_numbers = #tpu.dot_dimension_numbers<[1], [0], [0], [1], [0, 0, 1, 1], [], []>} : vector<128x8xf32>, vector<8x8xf32>, vector<128x8xf32> -> vector<128x8xf32>
    %154 = arith.addf %148, %153 : vector<128x8xf32>
    %cst_141 = arith.constant dense<0.000000e+00> : vector<8xf32>
    %155 = vector.multi_reduction <add>, %154, %cst_141 [0] : vector<128x8xf32> to vector<8xf32>
    %156 = vector.shape_cast %155 : vector<8xf32> to vector<1x8xf32>
    %cst_142 = arith.constant 1.280000e+02 : f32
    %157 = vector.broadcast %cst_142 : f32 to vector<1x8xf32>
    %158 = arith.divf %156, %157 : vector<1x8xf32>
    %159 = arith.mulf %154, %154 : vector<128x8xf32>
    %cst_143 = arith.constant dense<0.000000e+00> : vector<8xf32>
    %160 = vector.multi_reduction <add>, %159, %cst_143 [0] : vector<128x8xf32> to vector<8xf32>
    %161 = vector.shape_cast %160 : vector<8xf32> to vector<1x8xf32>
    %cst_144 = arith.constant 1.280000e+02 : f32
    %162 = vector.broadcast %cst_144 : f32 to vector<1x8xf32>
    %163 = arith.divf %161, %162 : vector<1x8xf32>
    %164 = arith.mulf %158, %158 : vector<1x8xf32>
    %165 = arith.subf %163, %164 : vector<1x8xf32>
    %cst_145 = arith.constant 0.000000e+00 : f32
    %166 = vector.broadcast %cst_145 : f32 to vector<1x8xf32>
    %167 = arith.maximumf %165, %166 : vector<1x8xf32>
    %168 = vector.broadcast %158 : vector<1x8xf32> to vector<128x8xf32>
    %169 = arith.subf %154, %168 : vector<128x8xf32>
    %cst_146 = arith.constant 9.99999974E-6 : f32
    %170 = vector.broadcast %cst_146 : f32 to vector<1x8xf32>
    %171 = arith.addf %167, %170 : vector<1x8xf32>
    %172 = math.rsqrt %171 : vector<1x8xf32>
    %173 = vector.broadcast %172 : vector<1x8xf32> to vector<128x8xf32>
    %174 = arith.mulf %169, %173 : vector<128x8xf32>
    %c0_147 = arith.constant 0 : index
    %c0_148 = arith.constant 0 : index
    %175 = vector.load %arg8[%c0_147, %c0_148] : memref<1x8xf32, #tpu.memory_space<vmem>>, vector<1x8xf32>
    %176 = vector.broadcast %175 : vector<1x8xf32> to vector<128x8xf32>
    %177 = arith.mulf %174, %176 : vector<128x8xf32>
    %c0_149 = arith.constant 0 : index
    %c0_150 = arith.constant 0 : index
    %178 = vector.load %arg9[%c0_149, %c0_150] : memref<1x8xf32, #tpu.memory_space<vmem>>, vector<1x8xf32>
    %179 = vector.broadcast %178 : vector<1x8xf32> to vector<128x8xf32>
    %180 = arith.addf %177, %179 : vector<128x8xf32>
    %cst_151 = arith.constant 0.00999999977 : f32
    %181 = vector.broadcast %cst_151 : f32 to vector<128x8xf32>
    %182 = arith.mulf %181, %180 : vector<128x8xf32>
    %183 = arith.maximumf %180, %182 : vector<128x8xf32>
    %184 = vector.shape_cast %10 : vector<2x8x8x4xf32> to vector<128x4xf32>
    %c0_152 = arith.constant 0 : index
    %c0_153 = arith.constant 0 : index
    %185 = vector.load %arg10[%c0_152, %c0_153] : memref<4x8xf32, #tpu.memory_space<vmem>>, vector<4x8xf32>
    %cst_154 = arith.constant dense<0.000000e+00> : vector<128x8xf32>
    %186 = tpu.matmul %184, %185, %cst_154 {dimension_numbers = #tpu.dot_dimension_numbers<[1], [0], [0], [1], [0, 0, 1, 1], [], []>} : vector<128x4xf32>, vector<4x8xf32>, vector<128x8xf32> -> vector<128x8xf32>
    %c0_155 = arith.constant 0 : index
    %c0_156 = arith.constant 0 : index
    %187 = vector.load %arg11[%c0_155, %c0_156] : memref<1x8xf32, #tpu.memory_space<vmem>>, vector<1x8xf32>
    %188 = vector.broadcast %187 : vector<1x8xf32> to vector<128x8xf32>
    %189 = arith.addf %186, %188 : vector<128x8xf32>
    %190 = arith.addf %189, %183 : vector<128x8xf32>
    %cst_157 = arith.constant 0.00999999977 : f32
    %191 = vector.broadcast %cst_157 : f32 to vector<128x8xf32>
    %192 = arith.mulf %191, %190 : vector<128x8xf32>
    %193 = arith.maximumf %190, %192 : vector<128x8xf32>
    %194 = vector.shape_cast %193 : vector<128x8xf32> to vector<2x8x8x8xf32>
    %c0_158 = arith.constant 0 : index
    %c1_159 = arith.constant 1 : index
    %c1_160 = arith.constant 1 : index
    %c0_161 = arith.constant 0 : index
    %195 = vector.load %arg20[%c0_158, %c1_159, %c1_160, %c0_161] : memref<2x10x10x8xf32, #tpu.memory_space<vmem>>, vector<2x8x8x8xf32>
    tpu.vector_store %arg20[%c0_158, %c1_159, %c1_160, %c0_161], %194 {strides = array<i32>} : memref<2x10x10x8xf32, #tpu.memory_space<vmem>>, vector<2x8x8x8xf32>,
    %c0_162 = arith.constant 0 : index
    %c0_163 = arith.constant 0 : index
    %c0_164 = arith.constant 0 : index
    %c0_165 = arith.constant 0 : index
    %196 = vector.load %arg20[%c0_162, %c0_163, %c0_164, %c0_165] : memref<2x10x10x8xf32, #tpu.memory_space<vmem>>, vector<2x10x10x8xf32>
    %cst_166 = arith.constant 0.000000e+00 : f32
    %197 = vector.broadcast %cst_166 : f32 to vector<128x8xf32>
    %198 = vector.extract_strided_slice %196 {offsets = [0, 0, 0, 0], sizes = [2, 8, 8, 8], strides = [1, 1, 1, 1]} : vector<2x10x10x8xf32> to vector<2x8x8x8xf32>
    %199 = vector.shape_cast %198 : vector<2x8x8x8xf32> to vector<128x8xf32>
    %c0_167 = arith.constant 0 : index
    %c0_168 = arith.constant 0 : index
    %c0_169 = arith.constant 0 : index
    %c0_170 = arith.constant 0 : index
    %200 = vector.load %arg12[%c0_167, %c0_168, %c0_169, %c0_170] : memref<3x3x8x8xf32, #tpu.memory_space<vmem>>, vector<1x1x8x8xf32>
    %201 = vector.shape_cast %200 : vector<1x1x8x8xf32> to vector<8x8xf32>
    %cst_171 = arith.constant dense<0.000000e+00> : vector<128x8xf32>
    %202 = tpu.matmul %199, %201, %cst_171 {dimension_numbers = #tpu.dot_dimension_numbers<[1], [0], [0], [1], [0, 0, 1, 1], [], []>} : vector<128x8xf32>, vector<8x8xf32>, vector<128x8xf32> -> vector<128x8xf32>
    %203 = arith.addf %197, %202 : vector<128x8xf32>
    %204 = vector.extract_strided_slice %196 {offsets = [0, 0, 1, 0], sizes = [2, 8, 8, 8], strides = [1, 1, 1, 1]} : vector<2x10x10x8xf32> to vector<2x8x8x8xf32>
    %205 = vector.shape_cast %204 : vector<2x8x8x8xf32> to vector<128x8xf32>
    %c0_172 = arith.constant 0 : index
    %c1_173 = arith.constant 1 : index
    %c0_174 = arith.constant 0 : index
    %c0_175 = arith.constant 0 : index
    %206 = vector.load %arg12[%c0_172, %c1_173, %c0_174, %c0_175] : memref<3x3x8x8xf32, #tpu.memory_space<vmem>>, vector<1x1x8x8xf32>
    %207 = vector.shape_cast %206 : vector<1x1x8x8xf32> to vector<8x8xf32>
    %cst_176 = arith.constant dense<0.000000e+00> : vector<128x8xf32>
    %208 = tpu.matmul %205, %207, %cst_176 {dimension_numbers = #tpu.dot_dimension_numbers<[1], [0], [0], [1], [0, 0, 1, 1], [], []>} : vector<128x8xf32>, vector<8x8xf32>, vector<128x8xf32> -> vector<128x8xf32>
    %209 = arith.addf %203, %208 : vector<128x8xf32>
    %210 = vector.extract_strided_slice %196 {offsets = [0, 0, 2, 0], sizes = [2, 8, 8, 8], strides = [1, 1, 1, 1]} : vector<2x10x10x8xf32> to vector<2x8x8x8xf32>
    %211 = vector.shape_cast %210 : vector<2x8x8x8xf32> to vector<128x8xf32>
    %c0_177 = arith.constant 0 : index
    %c2_178 = arith.constant 2 : index
    %c0_179 = arith.constant 0 : index
    %c0_180 = arith.constant 0 : index
    %212 = vector.load %arg12[%c0_177, %c2_178, %c0_179, %c0_180] : memref<3x3x8x8xf32, #tpu.memory_space<vmem>>, vector<1x1x8x8xf32>
    %213 = vector.shape_cast %212 : vector<1x1x8x8xf32> to vector<8x8xf32>
    %cst_181 = arith.constant dense<0.000000e+00> : vector<128x8xf32>
    %214 = tpu.matmul %211, %213, %cst_181 {dimension_numbers = #tpu.dot_dimension_numbers<[1], [0], [0], [1], [0, 0, 1, 1], [], []>} : vector<128x8xf32>, vector<8x8xf32>, vector<128x8xf32> -> vector<128x8xf32>
    %215 = arith.addf %209, %214 : vector<128x8xf32>
    %216 = vector.extract_strided_slice %196 {offsets = [0, 1, 0, 0], sizes = [2, 8, 8, 8], strides = [1, 1, 1, 1]} : vector<2x10x10x8xf32> to vector<2x8x8x8xf32>
    %217 = vector.shape_cast %216 : vector<2x8x8x8xf32> to vector<128x8xf32>
    %c1_182 = arith.constant 1 : index
    %c0_183 = arith.constant 0 : index
    %c0_184 = arith.constant 0 : index
    %c0_185 = arith.constant 0 : index
    %218 = vector.load %arg12[%c1_182, %c0_183, %c0_184, %c0_185] : memref<3x3x8x8xf32, #tpu.memory_space<vmem>>, vector<1x1x8x8xf32>
    %219 = vector.shape_cast %218 : vector<1x1x8x8xf32> to vector<8x8xf32>
    %cst_186 = arith.constant dense<0.000000e+00> : vector<128x8xf32>
    %220 = tpu.matmul %217, %219, %cst_186 {dimension_numbers = #tpu.dot_dimension_numbers<[1], [0], [0], [1], [0, 0, 1, 1], [], []>} : vector<128x8xf32>, vector<8x8xf32>, vector<128x8xf32> -> vector<128x8xf32>
    %221 = arith.addf %215, %220 : vector<128x8xf32>
    %222 = vector.extract_strided_slice %196 {offsets = [0, 1, 1, 0], sizes = [2, 8, 8, 8], strides = [1, 1, 1, 1]} : vector<2x10x10x8xf32> to vector<2x8x8x8xf32>
    %223 = vector.shape_cast %222 : vector<2x8x8x8xf32> to vector<128x8xf32>
    %c1_187 = arith.constant 1 : index
    %c1_188 = arith.constant 1 : index
    %c0_189 = arith.constant 0 : index
    %c0_190 = arith.constant 0 : index
    %224 = vector.load %arg12[%c1_187, %c1_188, %c0_189, %c0_190] : memref<3x3x8x8xf32, #tpu.memory_space<vmem>>, vector<1x1x8x8xf32>
    %225 = vector.shape_cast %224 : vector<1x1x8x8xf32> to vector<8x8xf32>
    %cst_191 = arith.constant dense<0.000000e+00> : vector<128x8xf32>
    %226 = tpu.matmul %223, %225, %cst_191 {dimension_numbers = #tpu.dot_dimension_numbers<[1], [0], [0], [1], [0, 0, 1, 1], [], []>} : vector<128x8xf32>, vector<8x8xf32>, vector<128x8xf32> -> vector<128x8xf32>
    %227 = arith.addf %221, %226 : vector<128x8xf32>
    %228 = vector.extract_strided_slice %196 {offsets = [0, 1, 2, 0], sizes = [2, 8, 8, 8], strides = [1, 1, 1, 1]} : vector<2x10x10x8xf32> to vector<2x8x8x8xf32>
    %229 = vector.shape_cast %228 : vector<2x8x8x8xf32> to vector<128x8xf32>
    %c1_192 = arith.constant 1 : index
    %c2_193 = arith.constant 2 : index
    %c0_194 = arith.constant 0 : index
    %c0_195 = arith.constant 0 : index
    %230 = vector.load %arg12[%c1_192, %c2_193, %c0_194, %c0_195] : memref<3x3x8x8xf32, #tpu.memory_space<vmem>>, vector<1x1x8x8xf32>
    %231 = vector.shape_cast %230 : vector<1x1x8x8xf32> to vector<8x8xf32>
    %cst_196 = arith.constant dense<0.000000e+00> : vector<128x8xf32>
    %232 = tpu.matmul %229, %231, %cst_196 {dimension_numbers = #tpu.dot_dimension_numbers<[1], [0], [0], [1], [0, 0, 1, 1], [], []>} : vector<128x8xf32>, vector<8x8xf32>, vector<128x8xf32> -> vector<128x8xf32>
    %233 = arith.addf %227, %232 : vector<128x8xf32>
    %234 = vector.extract_strided_slice %196 {offsets = [0, 2, 0, 0], sizes = [2, 8, 8, 8], strides = [1, 1, 1, 1]} : vector<2x10x10x8xf32> to vector<2x8x8x8xf32>
    %235 = vector.shape_cast %234 : vector<2x8x8x8xf32> to vector<128x8xf32>
    %c2_197 = arith.constant 2 : index
    %c0_198 = arith.constant 0 : index
    %c0_199 = arith.constant 0 : index
    %c0_200 = arith.constant 0 : index
    %236 = vector.load %arg12[%c2_197, %c0_198, %c0_199, %c0_200] : memref<3x3x8x8xf32, #tpu.memory_space<vmem>>, vector<1x1x8x8xf32>
    %237 = vector.shape_cast %236 : vector<1x1x8x8xf32> to vector<8x8xf32>
    %cst_201 = arith.constant dense<0.000000e+00> : vector<128x8xf32>
    %238 = tpu.matmul %235, %237, %cst_201 {dimension_numbers = #tpu.dot_dimension_numbers<[1], [0], [0], [1], [0, 0, 1, 1], [], []>} : vector<128x8xf32>, vector<8x8xf32>, vector<128x8xf32> -> vector<128x8xf32>
    %239 = arith.addf %233, %238 : vector<128x8xf32>
    %240 = vector.extract_strided_slice %196 {offsets = [0, 2, 1, 0], sizes = [2, 8, 8, 8], strides = [1, 1, 1, 1]} : vector<2x10x10x8xf32> to vector<2x8x8x8xf32>
    %241 = vector.shape_cast %240 : vector<2x8x8x8xf32> to vector<128x8xf32>
    %c2_202 = arith.constant 2 : index
    %c1_203 = arith.constant 1 : index
    %c0_204 = arith.constant 0 : index
    %c0_205 = arith.constant 0 : index
    %242 = vector.load %arg12[%c2_202, %c1_203, %c0_204, %c0_205] : memref<3x3x8x8xf32, #tpu.memory_space<vmem>>, vector<1x1x8x8xf32>
    %243 = vector.shape_cast %242 : vector<1x1x8x8xf32> to vector<8x8xf32>
    %cst_206 = arith.constant dense<0.000000e+00> : vector<128x8xf32>
    %244 = tpu.matmul %241, %243, %cst_206 {dimension_numbers = #tpu.dot_dimension_numbers<[1], [0], [0], [1], [0, 0, 1, 1], [], []>} : vector<128x8xf32>, vector<8x8xf32>, vector<128x8xf32> -> vector<128x8xf32>
    %245 = arith.addf %239, %244 : vector<128x8xf32>
    %246 = vector.extract_strided_slice %196 {offsets = [0, 2, 2, 0], sizes = [2, 8, 8, 8], strides = [1, 1, 1, 1]} : vector<2x10x10x8xf32> to vector<2x8x8x8xf32>
    %247 = vector.shape_cast %246 : vector<2x8x8x8xf32> to vector<128x8xf32>
    %c2_207 = arith.constant 2 : index
    %c2_208 = arith.constant 2 : index
    %c0_209 = arith.constant 0 : index
    %c0_210 = arith.constant 0 : index
    %248 = vector.load %arg12[%c2_207, %c2_208, %c0_209, %c0_210] : memref<3x3x8x8xf32, #tpu.memory_space<vmem>>, vector<1x1x8x8xf32>
    %249 = vector.shape_cast %248 : vector<1x1x8x8xf32> to vector<8x8xf32>
    %cst_211 = arith.constant dense<0.000000e+00> : vector<128x8xf32>
    %250 = tpu.matmul %247, %249, %cst_211 {dimension_numbers = #tpu.dot_dimension_numbers<[1], [0], [0], [1], [0, 0, 1, 1], [], []>} : vector<128x8xf32>, vector<8x8xf32>, vector<128x8xf32> -> vector<128x8xf32>
    %251 = arith.addf %245, %250 : vector<128x8xf32>
    %cst_212 = arith.constant dense<0.000000e+00> : vector<8xf32>
    %252 = vector.multi_reduction <add>, %251, %cst_212 [0] : vector<128x8xf32> to vector<8xf32>
    %253 = vector.shape_cast %252 : vector<8xf32> to vector<1x8xf32>
    %cst_213 = arith.constant 1.280000e+02 : f32
    %254 = vector.broadcast %cst_213 : f32 to vector<1x8xf32>
    %255 = arith.divf %253, %254 : vector<1x8xf32>
    %256 = arith.mulf %251, %251 : vector<128x8xf32>
    %cst_214 = arith.constant dense<0.000000e+00> : vector<8xf32>
    %257 = vector.multi_reduction <add>, %256, %cst_214 [0] : vector<128x8xf32> to vector<8xf32>
    %258 = vector.shape_cast %257 : vector<8xf32> to vector<1x8xf32>
    %cst_215 = arith.constant 1.280000e+02 : f32
    %259 = vector.broadcast %cst_215 : f32 to vector<1x8xf32>
    %260 = arith.divf %258, %259 : vector<1x8xf32>
    %261 = arith.mulf %255, %255 : vector<1x8xf32>
    %262 = arith.subf %260, %261 : vector<1x8xf32>
    %cst_216 = arith.constant 0.000000e+00 : f32
    %263 = vector.broadcast %cst_216 : f32 to vector<1x8xf32>
    %264 = arith.maximumf %262, %263 : vector<1x8xf32>
    %265 = vector.broadcast %255 : vector<1x8xf32> to vector<128x8xf32>
    %266 = arith.subf %251, %265 : vector<128x8xf32>
    %cst_217 = arith.constant 9.99999974E-6 : f32
    %267 = vector.broadcast %cst_217 : f32 to vector<1x8xf32>
    %268 = arith.addf %264, %267 : vector<1x8xf32>
    %269 = math.rsqrt %268 : vector<1x8xf32>
    %270 = vector.broadcast %269 : vector<1x8xf32> to vector<128x8xf32>
    %271 = arith.mulf %266, %270 : vector<128x8xf32>
    %c0_218 = arith.constant 0 : index
    %c0_219 = arith.constant 0 : index
    %272 = vector.load %arg13[%c0_218, %c0_219] : memref<1x8xf32, #tpu.memory_space<vmem>>, vector<1x8xf32>
    %273 = vector.broadcast %272 : vector<1x8xf32> to vector<128x8xf32>
    %274 = arith.mulf %271, %273 : vector<128x8xf32>
    %c0_220 = arith.constant 0 : index
    %c0_221 = arith.constant 0 : index
    %275 = vector.load %arg14[%c0_220, %c0_221] : memref<1x8xf32, #tpu.memory_space<vmem>>, vector<1x8xf32>
    %276 = vector.broadcast %275 : vector<1x8xf32> to vector<128x8xf32>
    %277 = arith.addf %274, %276 : vector<128x8xf32>
    %cst_222 = arith.constant 0.00999999977 : f32
    %278 = vector.broadcast %cst_222 : f32 to vector<128x8xf32>
    %279 = arith.mulf %278, %277 : vector<128x8xf32>
    %280 = arith.maximumf %277, %279 : vector<128x8xf32>
    %281 = vector.shape_cast %280 : vector<128x8xf32> to vector<2x8x8x8xf32>
    %c0_223 = arith.constant 0 : index
    %c1_224 = arith.constant 1 : index
    %c1_225 = arith.constant 1 : index
    %c0_226 = arith.constant 0 : index
    %282 = vector.load %arg20[%c0_223, %c1_224, %c1_225, %c0_226] : memref<2x10x10x8xf32, #tpu.memory_space<vmem>>, vector<2x8x8x8xf32>
    tpu.vector_store %arg20[%c0_223, %c1_224, %c1_225, %c0_226], %281 {strides = array<i32>} : memref<2x10x10x8xf32, #tpu.memory_space<vmem>>, vector<2x8x8x8xf32>,
    %c0_227 = arith.constant 0 : index
    %c0_228 = arith.constant 0 : index
    %c0_229 = arith.constant 0 : index
    %c0_230 = arith.constant 0 : index
    %283 = vector.load %arg20[%c0_227, %c0_228, %c0_229, %c0_230] : memref<2x10x10x8xf32, #tpu.memory_space<vmem>>, vector<2x10x10x8xf32>
    %cst_231 = arith.constant 0.000000e+00 : f32
    %284 = vector.broadcast %cst_231 : f32 to vector<128x8xf32>
    %285 = vector.extract_strided_slice %283 {offsets = [0, 0, 0, 0], sizes = [2, 8, 8, 8], strides = [1, 1, 1, 1]} : vector<2x10x10x8xf32> to vector<2x8x8x8xf32>
    %286 = vector.shape_cast %285 : vector<2x8x8x8xf32> to vector<128x8xf32>
    %c0_232 = arith.constant 0 : index
    %c0_233 = arith.constant 0 : index
    %c0_234 = arith.constant 0 : index
    %c0_235 = arith.constant 0 : index
    %287 = vector.load %arg15[%c0_232, %c0_233, %c0_234, %c0_235] : memref<3x3x8x8xf32, #tpu.memory_space<vmem>>, vector<1x1x8x8xf32>
    %288 = vector.shape_cast %287 : vector<1x1x8x8xf32> to vector<8x8xf32>
    %cst_236 = arith.constant dense<0.000000e+00> : vector<128x8xf32>
    %289 = tpu.matmul %286, %288, %cst_236 {dimension_numbers = #tpu.dot_dimension_numbers<[1], [0], [0], [1], [0, 0, 1, 1], [], []>} : vector<128x8xf32>, vector<8x8xf32>, vector<128x8xf32> -> vector<128x8xf32>
    %290 = arith.addf %284, %289 : vector<128x8xf32>
    %291 = vector.extract_strided_slice %283 {offsets = [0, 0, 1, 0], sizes = [2, 8, 8, 8], strides = [1, 1, 1, 1]} : vector<2x10x10x8xf32> to vector<2x8x8x8xf32>
    %292 = vector.shape_cast %291 : vector<2x8x8x8xf32> to vector<128x8xf32>
    %c0_237 = arith.constant 0 : index
    %c1_238 = arith.constant 1 : index
    %c0_239 = arith.constant 0 : index
    %c0_240 = arith.constant 0 : index
    %293 = vector.load %arg15[%c0_237, %c1_238, %c0_239, %c0_240] : memref<3x3x8x8xf32, #tpu.memory_space<vmem>>, vector<1x1x8x8xf32>
    %294 = vector.shape_cast %293 : vector<1x1x8x8xf32> to vector<8x8xf32>
    %cst_241 = arith.constant dense<0.000000e+00> : vector<128x8xf32>
    %295 = tpu.matmul %292, %294, %cst_241 {dimension_numbers = #tpu.dot_dimension_numbers<[1], [0], [0], [1], [0, 0, 1, 1], [], []>} : vector<128x8xf32>, vector<8x8xf32>, vector<128x8xf32> -> vector<128x8xf32>
    %296 = arith.addf %290, %295 : vector<128x8xf32>
    %297 = vector.extract_strided_slice %283 {offsets = [0, 0, 2, 0], sizes = [2, 8, 8, 8], strides = [1, 1, 1, 1]} : vector<2x10x10x8xf32> to vector<2x8x8x8xf32>
    %298 = vector.shape_cast %297 : vector<2x8x8x8xf32> to vector<128x8xf32>
    %c0_242 = arith.constant 0 : index
    %c2_243 = arith.constant 2 : index
    %c0_244 = arith.constant 0 : index
    %c0_245 = arith.constant 0 : index
    %299 = vector.load %arg15[%c0_242, %c2_243, %c0_244, %c0_245] : memref<3x3x8x8xf32, #tpu.memory_space<vmem>>, vector<1x1x8x8xf32>
    %300 = vector.shape_cast %299 : vector<1x1x8x8xf32> to vector<8x8xf32>
    %cst_246 = arith.constant dense<0.000000e+00> : vector<128x8xf32>
    %301 = tpu.matmul %298, %300, %cst_246 {dimension_numbers = #tpu.dot_dimension_numbers<[1], [0], [0], [1], [0, 0, 1, 1], [], []>} : vector<128x8xf32>, vector<8x8xf32>, vector<128x8xf32> -> vector<128x8xf32>
    %302 = arith.addf %296, %301 : vector<128x8xf32>
    %303 = vector.extract_strided_slice %283 {offsets = [0, 1, 0, 0], sizes = [2, 8, 8, 8], strides = [1, 1, 1, 1]} : vector<2x10x10x8xf32> to vector<2x8x8x8xf32>
    %304 = vector.shape_cast %303 : vector<2x8x8x8xf32> to vector<128x8xf32>
    %c1_247 = arith.constant 1 : index
    %c0_248 = arith.constant 0 : index
    %c0_249 = arith.constant 0 : index
    %c0_250 = arith.constant 0 : index
    %305 = vector.load %arg15[%c1_247, %c0_248, %c0_249, %c0_250] : memref<3x3x8x8xf32, #tpu.memory_space<vmem>>, vector<1x1x8x8xf32>
    %306 = vector.shape_cast %305 : vector<1x1x8x8xf32> to vector<8x8xf32>
    %cst_251 = arith.constant dense<0.000000e+00> : vector<128x8xf32>
    %307 = tpu.matmul %304, %306, %cst_251 {dimension_numbers = #tpu.dot_dimension_numbers<[1], [0], [0], [1], [0, 0, 1, 1], [], []>} : vector<128x8xf32>, vector<8x8xf32>, vector<128x8xf32> -> vector<128x8xf32>
    %308 = arith.addf %302, %307 : vector<128x8xf32>
    %309 = vector.extract_strided_slice %283 {offsets = [0, 1, 1, 0], sizes = [2, 8, 8, 8], strides = [1, 1, 1, 1]} : vector<2x10x10x8xf32> to vector<2x8x8x8xf32>
    %310 = vector.shape_cast %309 : vector<2x8x8x8xf32> to vector<128x8xf32>
    %c1_252 = arith.constant 1 : index
    %c1_253 = arith.constant 1 : index
    %c0_254 = arith.constant 0 : index
    %c0_255 = arith.constant 0 : index
    %311 = vector.load %arg15[%c1_252, %c1_253, %c0_254, %c0_255] : memref<3x3x8x8xf32, #tpu.memory_space<vmem>>, vector<1x1x8x8xf32>
    %312 = vector.shape_cast %311 : vector<1x1x8x8xf32> to vector<8x8xf32>
    %cst_256 = arith.constant dense<0.000000e+00> : vector<128x8xf32>
    %313 = tpu.matmul %310, %312, %cst_256 {dimension_numbers = #tpu.dot_dimension_numbers<[1], [0], [0], [1], [0, 0, 1, 1], [], []>} : vector<128x8xf32>, vector<8x8xf32>, vector<128x8xf32> -> vector<128x8xf32>
    %314 = arith.addf %308, %313 : vector<128x8xf32>
    %315 = vector.extract_strided_slice %283 {offsets = [0, 1, 2, 0], sizes = [2, 8, 8, 8], strides = [1, 1, 1, 1]} : vector<2x10x10x8xf32> to vector<2x8x8x8xf32>
    %316 = vector.shape_cast %315 : vector<2x8x8x8xf32> to vector<128x8xf32>
    %c1_257 = arith.constant 1 : index
    %c2_258 = arith.constant 2 : index
    %c0_259 = arith.constant 0 : index
    %c0_260 = arith.constant 0 : index
    %317 = vector.load %arg15[%c1_257, %c2_258, %c0_259, %c0_260] : memref<3x3x8x8xf32, #tpu.memory_space<vmem>>, vector<1x1x8x8xf32>
    %318 = vector.shape_cast %317 : vector<1x1x8x8xf32> to vector<8x8xf32>
    %cst_261 = arith.constant dense<0.000000e+00> : vector<128x8xf32>
    %319 = tpu.matmul %316, %318, %cst_261 {dimension_numbers = #tpu.dot_dimension_numbers<[1], [0], [0], [1], [0, 0, 1, 1], [], []>} : vector<128x8xf32>, vector<8x8xf32>, vector<128x8xf32> -> vector<128x8xf32>
    %320 = arith.addf %314, %319 : vector<128x8xf32>
    %321 = vector.extract_strided_slice %283 {offsets = [0, 2, 0, 0], sizes = [2, 8, 8, 8], strides = [1, 1, 1, 1]} : vector<2x10x10x8xf32> to vector<2x8x8x8xf32>
    %322 = vector.shape_cast %321 : vector<2x8x8x8xf32> to vector<128x8xf32>
    %c2_262 = arith.constant 2 : index
    %c0_263 = arith.constant 0 : index
    %c0_264 = arith.constant 0 : index
    %c0_265 = arith.constant 0 : index
    %323 = vector.load %arg15[%c2_262, %c0_263, %c0_264, %c0_265] : memref<3x3x8x8xf32, #tpu.memory_space<vmem>>, vector<1x1x8x8xf32>
    %324 = vector.shape_cast %323 : vector<1x1x8x8xf32> to vector<8x8xf32>
    %cst_266 = arith.constant dense<0.000000e+00> : vector<128x8xf32>
    %325 = tpu.matmul %322, %324, %cst_266 {dimension_numbers = #tpu.dot_dimension_numbers<[1], [0], [0], [1], [0, 0, 1, 1], [], []>} : vector<128x8xf32>, vector<8x8xf32>, vector<128x8xf32> -> vector<128x8xf32>
    %326 = arith.addf %320, %325 : vector<128x8xf32>
    %327 = vector.extract_strided_slice %283 {offsets = [0, 2, 1, 0], sizes = [2, 8, 8, 8], strides = [1, 1, 1, 1]} : vector<2x10x10x8xf32> to vector<2x8x8x8xf32>
    %328 = vector.shape_cast %327 : vector<2x8x8x8xf32> to vector<128x8xf32>
    %c2_267 = arith.constant 2 : index
    %c1_268 = arith.constant 1 : index
    %c0_269 = arith.constant 0 : index
    %c0_270 = arith.constant 0 : index
    %329 = vector.load %arg15[%c2_267, %c1_268, %c0_269, %c0_270] : memref<3x3x8x8xf32, #tpu.memory_space<vmem>>, vector<1x1x8x8xf32>
    %330 = vector.shape_cast %329 : vector<1x1x8x8xf32> to vector<8x8xf32>
    %cst_271 = arith.constant dense<0.000000e+00> : vector<128x8xf32>
    %331 = tpu.matmul %328, %330, %cst_271 {dimension_numbers = #tpu.dot_dimension_numbers<[1], [0], [0], [1], [0, 0, 1, 1], [], []>} : vector<128x8xf32>, vector<8x8xf32>, vector<128x8xf32> -> vector<128x8xf32>
    %332 = arith.addf %326, %331 : vector<128x8xf32>
    %333 = vector.extract_strided_slice %283 {offsets = [0, 2, 2, 0], sizes = [2, 8, 8, 8], strides = [1, 1, 1, 1]} : vector<2x10x10x8xf32> to vector<2x8x8x8xf32>
    %334 = vector.shape_cast %333 : vector<2x8x8x8xf32> to vector<128x8xf32>
    %c2_272 = arith.constant 2 : index
    %c2_273 = arith.constant 2 : index
    %c0_274 = arith.constant 0 : index
    %c0_275 = arith.constant 0 : index
    %335 = vector.load %arg15[%c2_272, %c2_273, %c0_274, %c0_275] : memref<3x3x8x8xf32, #tpu.memory_space<vmem>>, vector<1x1x8x8xf32>
    %336 = vector.shape_cast %335 : vector<1x1x8x8xf32> to vector<8x8xf32>
    %cst_276 = arith.constant dense<0.000000e+00> : vector<128x8xf32>
    %337 = tpu.matmul %334, %336, %cst_276 {dimension_numbers = #tpu.dot_dimension_numbers<[1], [0], [0], [1], [0, 0, 1, 1], [], []>} : vector<128x8xf32>, vector<8x8xf32>, vector<128x8xf32> -> vector<128x8xf32>
    %338 = arith.addf %332, %337 : vector<128x8xf32>
    %cst_277 = arith.constant dense<0.000000e+00> : vector<8xf32>
    %339 = vector.multi_reduction <add>, %338, %cst_277 [0] : vector<128x8xf32> to vector<8xf32>
    %340 = vector.shape_cast %339 : vector<8xf32> to vector<1x8xf32>
    %cst_278 = arith.constant 1.280000e+02 : f32
    %341 = vector.broadcast %cst_278 : f32 to vector<1x8xf32>
    %342 = arith.divf %340, %341 : vector<1x8xf32>
    %343 = arith.mulf %338, %338 : vector<128x8xf32>
    %cst_279 = arith.constant dense<0.000000e+00> : vector<8xf32>
    %344 = vector.multi_reduction <add>, %343, %cst_279 [0] : vector<128x8xf32> to vector<8xf32>
    %345 = vector.shape_cast %344 : vector<8xf32> to vector<1x8xf32>
    %cst_280 = arith.constant 1.280000e+02 : f32
    %346 = vector.broadcast %cst_280 : f32 to vector<1x8xf32>
    %347 = arith.divf %345, %346 : vector<1x8xf32>
    %348 = arith.mulf %342, %342 : vector<1x8xf32>
    %349 = arith.subf %347, %348 : vector<1x8xf32>
    %cst_281 = arith.constant 0.000000e+00 : f32
    %350 = vector.broadcast %cst_281 : f32 to vector<1x8xf32>
    %351 = arith.maximumf %349, %350 : vector<1x8xf32>
    %352 = vector.broadcast %342 : vector<1x8xf32> to vector<128x8xf32>
    %353 = arith.subf %338, %352 : vector<128x8xf32>
    %cst_282 = arith.constant 9.99999974E-6 : f32
    %354 = vector.broadcast %cst_282 : f32 to vector<1x8xf32>
    %355 = arith.addf %351, %354 : vector<1x8xf32>
    %356 = math.rsqrt %355 : vector<1x8xf32>
    %357 = vector.broadcast %356 : vector<1x8xf32> to vector<128x8xf32>
    %358 = arith.mulf %353, %357 : vector<128x8xf32>
    %c0_283 = arith.constant 0 : index
    %c0_284 = arith.constant 0 : index
    %359 = vector.load %arg16[%c0_283, %c0_284] : memref<1x8xf32, #tpu.memory_space<vmem>>, vector<1x8xf32>
    %360 = vector.broadcast %359 : vector<1x8xf32> to vector<128x8xf32>
    %361 = arith.mulf %358, %360 : vector<128x8xf32>
    %c0_285 = arith.constant 0 : index
    %c0_286 = arith.constant 0 : index
    %362 = vector.load %arg17[%c0_285, %c0_286] : memref<1x8xf32, #tpu.memory_space<vmem>>, vector<1x8xf32>
    %363 = vector.broadcast %362 : vector<1x8xf32> to vector<128x8xf32>
    %364 = arith.addf %361, %363 : vector<128x8xf32>
    %cst_287 = arith.constant 0.00999999977 : f32
    %365 = vector.broadcast %cst_287 : f32 to vector<128x8xf32>
    %366 = arith.mulf %365, %364 : vector<128x8xf32>
    %367 = arith.maximumf %364, %366 : vector<128x8xf32>
    %368 = arith.addf %193, %367 : vector<128x8xf32>
    %cst_288 = arith.constant 0.00999999977 : f32
    %369 = vector.broadcast %cst_288 : f32 to vector<128x8xf32>
    %370 = arith.mulf %369, %368 : vector<128x8xf32>
    %371 = arith.maximumf %368, %370 : vector<128x8xf32>
    %c0_289 = arith.constant 0 : index
    %c0_290 = arith.constant 0 : index
    %372 = vector.load %arg18[%c0_289, %c0_290] : memref<128x8xf32, #tpu.memory_space<vmem>>, vector<128x8xf32>
    tpu.vector_store %arg18[%c0_289, %c0_290], %371 {strides = array<i32>} : memref<128x8xf32, #tpu.memory_space<vmem>>, vector<128x8xf32>,
    return
  }
}

</mosaic_0001>

<llo_original>
// kernel: tpu_custom_call.1
$region0: #{tpu_custom_call.1}
  #allocation0 [shape = 'u32[]', space=smem, size = 0x4, offset = 0x4, fixed_abs, tag = 'smem constant byte address 0x4 - core index']
  #allocation1 [shape = 'u32[144,128]{1,0:T(1,128)}', space=vmem, size = 0x12000, scoped, tag = 'internal scratch']
  #allocation2 [shape = 'f32[2,10,10,4]{3,2,1,0:T(8,128)}', space=vmem, size = 0x28000, scoped, tag = 'scratch operand']
  #allocation3 [shape = 'f32[2,10,10,8]{3,2,1,0:T(8,128)}', space=vmem, size = 0x28000, scoped, tag = 'scratch operand']
  %s0 = inlined_call_operand.vmem [shape: f32[2,8,8,4], index: 0, kind: input, shape index: {}]
  %s1 = inlined_call_operand.vmem [shape: f32[2,8,8,4], index: 1, kind: input, shape index: {}]
  %s2 = inlined_call_operand.vmem [shape: f32[2,8,8,4], index: 2, kind: input, shape index: {}]
  %s3 = inlined_call_operand.vmem [shape: f32[2,8,8,4], index: 3, kind: input, shape index: {}]
  %s4 = inlined_call_operand.vmem [shape: f32[3,3,4,8], index: 4, kind: input, shape index: {}]
  %s5 = inlined_call_operand.vmem [shape: f32[1,8], index: 5, kind: input, shape index: {}]
  %s6 = inlined_call_operand.vmem [shape: f32[1,8], index: 6, kind: input, shape index: {}]
  %s7 = inlined_call_operand.vmem [shape: f32[3,3,8,8], index: 7, kind: input, shape index: {}]
  %s8 = inlined_call_operand.vmem [shape: f32[1,8], index: 8, kind: input, shape index: {}]
  %s9 = inlined_call_operand.vmem [shape: f32[1,8], index: 9, kind: input, shape index: {}]
  %s10 = inlined_call_operand.vmem [shape: f32[4,8], index: 10, kind: input, shape index: {}]
  %s11 = inlined_call_operand.vmem [shape: f32[1,8], index: 11, kind: input, shape index: {}]
  %s12 = inlined_call_operand.vmem [shape: f32[3,3,8,8], index: 12, kind: input, shape index: {}]
  %s13 = inlined_call_operand.vmem [shape: f32[1,8], index: 13, kind: input, shape index: {}]
  %s14 = inlined_call_operand.vmem [shape: f32[1,8], index: 14, kind: input, shape index: {}]
  %s15 = inlined_call_operand.vmem [shape: f32[3,3,8,8], index: 15, kind: input, shape index: {}]
  %s16 = inlined_call_operand.vmem [shape: f32[1,8], index: 16, kind: input, shape index: {}]
  %s17 = inlined_call_operand.vmem [shape: f32[1,8], index: 17, kind: input, shape index: {}]
  %s18 = inlined_call_operand.vmem [shape: f32[128,8], index: 18, kind: output, shape index: {}]
  %s19 = sld [smem:[#allocation0]]
  $region82: #{tpu_custom_call.1} parent=0
    _
  %s21 = ssub.s32 1, %s19
  %s22 = scalar_select 0, %s21, %s19
  // Predicated region
  $region2: #{tpu_custom_call.1} parent=0 // pred_check
    _
  $region3: #{tpu_custom_call.1} parent=0 // pred_check_branch
    %24 = sbr.rel (0) target = $region5
  $region4: #{tpu_custom_call.1} parent=0 // pred_region
    _
  $region5: #{tpu_custom_call.1} parent=0 // pred_fallthru
    _
  // Predicated region
  $region6: #{tpu_custom_call.1} parent=0 // pred_check
    _
  $region7: #{tpu_custom_call.1} parent=0 // pred_check_branch
    %26 = sbr.rel (0) target = $region9
  $region8: #{tpu_custom_call.1} parent=0 // pred_region
    _
  $region9: #{tpu_custom_call.1} parent=0 // pred_fallthru
    _
  // Predicated region
  $region10: #{tpu_custom_call.1} parent=0 // pred_check
    _
  $region11: #{tpu_custom_call.1} parent=0 // pred_check_branch
    %28 = sbr.rel (0) target = $region13
  $region12: #{tpu_custom_call.1} parent=0 // pred_region
    _
  $region13: #{tpu_custom_call.1} parent=0 // pred_fallthru
    _
  // Predicated region
  $region14: #{tpu_custom_call.1} parent=0 // pred_check
    _
  $region15: #{tpu_custom_call.1} parent=0 // pred_check_branch
    %30 = sbr.rel (0) target = $region17
  $region16: #{tpu_custom_call.1} parent=0 // pred_region
    _
  $region17: #{tpu_custom_call.1} parent=0 // pred_fallthru
    _
  // Predicated region
  $region18: #{tpu_custom_call.1} parent=0 // pred_check
    _
  $region19: #{tpu_custom_call.1} parent=0 // pred_check_branch
    %32 = sbr.rel (0) target = $region21
  $region20: #{tpu_custom_call.1} parent=0 // pred_region
    _
  $region21: #{tpu_custom_call.1} parent=0 // pred_fallthru
    _
  // Predicated region
  $region22: #{tpu_custom_call.1} parent=0 // pred_check
    _
  $region23: #{tpu_custom_call.1} parent=0 // pred_check_branch
    %34 = sbr.rel (0) target = $region25
  $region24: #{tpu_custom_call.1} parent=0 // pred_region
    _
  $region25: #{tpu_custom_call.1} parent=0 // pred_fallthru
    _
  // Predicated region
  $region26: #{tpu_custom_call.1} parent=0 // pred_check
    _
  $region27: #{tpu_custom_call.1} parent=0 // pred_check_branch
    %36 = sbr.rel (0) target = $region29
  $region28: #{tpu_custom_call.1} parent=0 // pred_region
    _
  $region29: #{tpu_custom_call.1} parent=0 // pred_fallthru
    _
  // Predicated region
  $region30: #{tpu_custom_call.1} parent=0 // pred_check
    _
  $region31: #{tpu_custom_call.1} parent=0 // pred_check_branch
    %38 = sbr.rel (0) target = $region33
  $region32: #{tpu_custom_call.1} parent=0 // pred_region
    _
  $region33: #{tpu_custom_call.1} parent=0 // pred_fallthru
    _
  // Predicated region
  $region34: #{tpu_custom_call.1} parent=0 // pred_check
    _
  $region35: #{tpu_custom_call.1} parent=0 // pred_check_branch
    %40 = sbr.rel (0) target = $region37
  $region36: #{tpu_custom_call.1} parent=0 // pred_region
    _
  $region37: #{tpu_custom_call.1} parent=0 // pred_fallthru
    _
  // Predicated region
  $region38: #{tpu_custom_call.1} parent=0 // pred_check
    _
  $region39: #{tpu_custom_call.1} parent=0 // pred_check_branch
    %42 = sbr.rel (0) target = $region41
  $region40: #{tpu_custom_call.1} parent=0 // pred_region
    _
  $region41: #{tpu_custom_call.1} parent=0 // pred_fallthru
    _
  // Predicated region
  $region42: #{tpu_custom_call.1} parent=0 // pred_check
    _
  $region43: #{tpu_custom_call.1} parent=0 // pred_check_branch
    %44 = sbr.rel (0) target = $region45
  $region44: #{tpu_custom_call.1} parent=0 // pred_region
    _
  $region45: #{tpu_custom_call.1} parent=0 // pred_fallthru
    _
  // Predicated region
  $region46: #{tpu_custom_call.1} parent=0 // pred_check
    _
  $region47: #{tpu_custom_call.1} parent=0 // pred_check_branch
    %46 = sbr.rel (0) target = $region49
  $region48: #{tpu_custom_call.1} parent=0 // pred_region
    _
  $region49: #{tpu_custom_call.1} parent=0 // pred_fallthru
    _
  // Predicated region
  $region50: #{tpu_custom_call.1} parent=0 // pred_check
    _
  $region51: #{tpu_custom_call.1} parent=0 // pred_check_branch
    %48 = sbr.rel (0) target = $region53
  $region52: #{tpu_custom_call.1} parent=0 // pred_region
    _
  $region53: #{tpu_custom_call.1} parent=0 // pred_fallthru
    _
  // Predicated region
  $region54: #{tpu_custom_call.1} parent=0 // pred_check
    _
  $region55: #{tpu_custom_call.1} parent=0 // pred_check_branch
    %50 = sbr.rel (0) target = $region57
  $region56: #{tpu_custom_call.1} parent=0 // pred_region
    _
  $region57: #{tpu_custom_call.1} parent=0 // pred_fallthru
    _
  // Predicated region
  $region58: #{tpu_custom_call.1} parent=0 // pred_check
    _
  $region59: #{tpu_custom_call.1} parent=0 // pred_check_branch
    %52 = sbr.rel (0) target = $region61
  $region60: #{tpu_custom_call.1} parent=0 // pred_region
    _
  $region61: #{tpu_custom_call.1} parent=0 // pred_fallthru
    _
  // Predicated region
  $region62: #{tpu_custom_call.1} parent=0 // pred_check
    _
  $region63: #{tpu_custom_call.1} parent=0 // pred_check_branch
    %54 = sbr.rel (0) target = $region65
  $region64: #{tpu_custom_call.1} parent=0 // pred_region
    _
  $region65: #{tpu_custom_call.1} parent=0 // pred_fallthru
    _
  // Predicated region
  $region66: #{tpu_custom_call.1} parent=0 // pred_check
    _
  $region67: #{tpu_custom_call.1} parent=0 // pred_check_branch
    %56 = sbr.rel (0) target = $region69
  $region68: #{tpu_custom_call.1} parent=0 // pred_region
    _
  $region69: #{tpu_custom_call.1} parent=0 // pred_fallthru
    _
  // Predicated region
  $region70: #{tpu_custom_call.1} parent=0 // pred_check
    _
  $region71: #{tpu_custom_call.1} parent=0 // pred_check_branch
    %58 = sbr.rel (0) target = $region73
  $region72: #{tpu_custom_call.1} parent=0 // pred_region
    _
  $region73: #{tpu_custom_call.1} parent=0 // pred_fallthru
    _
  %vm59 = vcmask 31744
  %60 = vst.msk [vmem:[#allocation2] sm:$0xff] %vm59, 0.0
  %vm61 = vcmask 25600
  %62 = vst.msk [vmem:[#allocation2 + $0x8] sm:$0x3] %vm61, 0.0
  %63 = vst.msk [vmem:[#allocation2 + $0x10] sm:$0xff] %vm59, 0.0
  %64 = vst.msk [vmem:[#allocation2 + $0x18] sm:$0x3] %vm61, 0.0
  %65 = vst.msk [vmem:[#allocation2 + $0x20] sm:$0xff] %vm59, 0.0
  %66 = vst.msk [vmem:[#allocation2 + $0x28] sm:$0x3] %vm61, 0.0
  %67 = vst.msk [vmem:[#allocation2 + $0x30] sm:$0xff] %vm59, 0.0
  %68 = vst.msk [vmem:[#allocation2 + $0x38] sm:$0x3] %vm61, 0.0
  %69 = vst.msk [vmem:[#allocation2 + $0x40] sm:$0xff] %vm59, 0.0
  %70 = vst.msk [vmem:[#allocation2 + $0x48] sm:$0x3] %vm61, 0.0
  %71 = vst.msk [vmem:[#allocation2 + $0x50] sm:$0xff] %vm59, 0.0
  %72 = vst.msk [vmem:[#allocation2 + $0x58] sm:$0x3] %vm61, 0.0
  %73 = vst.msk [vmem:[#allocation2 + $0x60] sm:$0xff] %vm59, 0.0
  %74 = vst.msk [vmem:[#allocation2 + $0x68] sm:$0x3] %vm61, 0.0
  %75 = vst.msk [vmem:[#allocation2 + $0x70] sm:$0xff] %vm59, 0.0
  %76 = vst.msk [vmem:[#allocation2 + $0x78] sm:$0x3] %vm61, 0.0
  %77 = vst.msk [vmem:[#allocation2 + $0x80] sm:$0xff] %vm59, 0.0
  %78 = vst.msk [vmem:[#allocation2 + $0x88] sm:$0x3] %vm61, 0.0
  %79 = vst.msk [vmem:[#allocation2 + $0x90] sm:$0xff] %vm59, 0.0
  %80 = vst.msk [vmem:[#allocation2 + $0x98] sm:$0x3] %vm61, 0.0
  %81 = vst.msk [vmem:[#allocation2 + $0xa0] sm:$0xff] %vm59, 0.0
  %82 = vst.msk [vmem:[#allocation2 + $0xa8] sm:$0x3] %vm61, 0.0
  %83 = vst.msk [vmem:[#allocation2 + $0xb0] sm:$0xff] %vm59, 0.0
  %84 = vst.msk [vmem:[#allocation2 + $0xb8] sm:$0x3] %vm61, 0.0
  %85 = vst.msk [vmem:[#allocation2 + $0xc0] sm:$0xff] %vm59, 0.0
  %86 = vst.msk [vmem:[#allocation2 + $0xc8] sm:$0x3] %vm61, 0.0
  %87 = vst.msk [vmem:[#allocation2 + $0xd0] sm:$0xff] %vm59, 0.0
  %88 = vst.msk [vmem:[#allocation2 + $0xd8] sm:$0x3] %vm61, 0.0
  %89 = vst.msk [vmem:[#allocation2 + $0xe0] sm:$0xff] %vm59, 0.0
  %90 = vst.msk [vmem:[#allocation2 + $0xe8] sm:$0x3] %vm61, 0.0
  %91 = vst.msk [vmem:[#allocation2 + $0xf0] sm:$0xff] %vm59, 0.0
  %92 = vst.msk [vmem:[#allocation2 + $0xf8] sm:$0x3] %vm61, 0.0
  %93 = vst.msk [vmem:[#allocation2 + $0x100] sm:$0xff] %vm59, 0.0
  %94 = vst.msk [vmem:[#allocation2 + $0x108] sm:$0x3] %vm61, 0.0
  %95 = vst.msk [vmem:[#allocation2 + $0x110] sm:$0xff] %vm59, 0.0
  %96 = vst.msk [vmem:[#allocation2 + $0x118] sm:$0x3] %vm61, 0.0
  %97 = vst.msk [vmem:[#allocation2 + $0x120] sm:$0xff] %vm59, 0.0
  %98 = vst.msk [vmem:[#allocation2 + $0x128] sm:$0x3] %vm61, 0.0
  %99 = vst.msk [vmem:[#allocation2 + $0x130] sm:$0xff] %vm59, 0.0
  %100 = vst.msk [vmem:[#allocation2 + $0x138] sm:$0x3] %vm61, 0.0
  %vm101 = vcmask 64512
  %102 = vst.msk [vmem:[#allocation3] sm:$0xff] %vm101, 0.0
  %vm103 = vcmask 58368
  %104 = vst.msk [vmem:[#allocation3 + $0x8] sm:$0x3] %vm103, 0.0
  %105 = vst.msk [vmem:[#allocation3 + $0x10] sm:$0xff] %vm101, 0.0
  %106 = vst.msk [vmem:[#allocation3 + $0x18] sm:$0x3] %vm103, 0.0
  %107 = vst.msk [vmem:[#allocation3 + $0x20] sm:$0xff] %vm101, 0.0
  %108 = vst.msk [vmem:[#allocation3 + $0x28] sm:$0x3] %vm103, 0.0
  %109 = vst.msk [vmem:[#allocation3 + $0x30] sm:$0xff] %vm101, 0.0
  %110 = vst.msk [vmem:[#allocation3 + $0x38] sm:$0x3] %vm103, 0.0
  %111 = vst.msk [vmem:[#allocation3 + $0x40] sm:$0xff] %vm101, 0.0
  %112 = vst.msk [vmem:[#allocation3 + $0x48] sm:$0x3] %vm103, 0.0
  %113 = vst.msk [vmem:[#allocation3 + $0x50] sm:$0xff] %vm101, 0.0
  %114 = vst.msk [vmem:[#allocation3 + $0x58] sm:$0x3] %vm103, 0.0
  %115 = vst.msk [vmem:[#allocation3 + $0x60] sm:$0xff] %vm101, 0.0
  %116 = vst.msk [vmem:[#allocation3 + $0x68] sm:$0x3] %vm103, 0.0
  %117 = vst.msk [vmem:[#allocation3 + $0x70] sm:$0xff] %vm101, 0.0
  %118 = vst.msk [vmem:[#allocation3 + $0x78] sm:$0x3] %vm103, 0.0
  %119 = vst.msk [vmem:[#allocation3 + $0x80] sm:$0xff] %vm101, 0.0
  %120 = vst.msk [vmem:[#allocation3 + $0x88] sm:$0x3] %vm103, 0.0
  %121 = vst.msk [vmem:[#allocation3 + $0x90] sm:$0xff] %vm101, 0.0
  %122 = vst.msk [vmem:[#allocation3 + $0x98] sm:$0x3] %vm103, 0.0
  %123 = vst.msk [vmem:[#allocation3 + $0xa0] sm:$0xff] %vm101, 0.0
  %124 = vst.msk [vmem:[#allocation3 + $0xa8] sm:$0x3] %vm103, 0.0
  %125 = vst.msk [vmem:[#allocation3 + $0xb0] sm:$0xff] %vm101, 0.0
  %126 = vst.msk [vmem:[#allocation3 + $0xb8] sm:$0x3] %vm103, 0.0
  %127 = vst.msk [vmem:[#allocation3 + $0xc0] sm:$0xff] %vm101, 0.0
  %128 = vst.msk [vmem:[#allocation3 + $0xc8] sm:$0x3] %vm103, 0.0
  %129 = vst.msk [vmem:[#allocation3 + $0xd0] sm:$0xff] %vm101, 0.0
  %130 = vst.msk [vmem:[#allocation3 + $0xd8] sm:$0x3] %vm103, 0.0
  %131 = vst.msk [vmem:[#allocation3 + $0xe0] sm:$0xff] %vm101, 0.0
  %132 = vst.msk [vmem:[#allocation3 + $0xe8] sm:$0x3] %vm103, 0.0
  %133 = vst.msk [vmem:[#allocation3 + $0xf0] sm:$0xff] %vm101, 0.0
  %134 = vst.msk [vmem:[#allocation3 + $0xf8] sm:$0x3] %vm103, 0.0
  %135 = vst.msk [vmem:[#allocation3 + $0x100] sm:$0xff] %vm101, 0.0
  %136 = vst.msk [vmem:[#allocation3 + $0x108] sm:$0x3] %vm103, 0.0
  %137 = vst.msk [vmem:[#allocation3 + $0x110] sm:$0xff] %vm101, 0.0
  %138 = vst.msk [vmem:[#allocation3 + $0x118] sm:$0x3] %vm103, 0.0
  %139 = vst.msk [vmem:[#allocation3 + $0x120] sm:$0xff] %vm101, 0.0
  %140 = vst.msk [vmem:[#allocation3 + $0x128] sm:$0x3] %vm103, 0.0
  %141 = vst.msk [vmem:[#allocation3 + $0x130] sm:$0xff] %vm101, 0.0
  %142 = vst.msk [vmem:[#allocation3 + $0x138] sm:$0x3] %vm103, 0.0
  %v143 = vld [vmem:[%s0] sm:$0xff]
  %v144 = vld [vmem:[%s0 + $0x8] sm:$0xff]
  %v145 = vld [vmem:[%s0 + $0x10] sm:$0xff]
  %v146 = vld [vmem:[%s0 + $0x18] sm:$0xff]
  %v147 = vld [vmem:[%s0 + $0x20] sm:$0xff]
  %v148 = vld [vmem:[%s0 + $0x28] sm:$0xff]
  %v149 = vld [vmem:[%s0 + $0x30] sm:$0xff]
  %v150 = vld [vmem:[%s0 + $0x38] sm:$0xff]
  %v151 = vld [vmem:[%s0 + $0x40] sm:$0xff]
  %v152 = vld [vmem:[%s0 + $0x48] sm:$0xff]
  %v153 = vld [vmem:[%s0 + $0x50] sm:$0xff]
  %v154 = vld [vmem:[%s0 + $0x58] sm:$0xff]
  %v155 = vld [vmem:[%s0 + $0x60] sm:$0xff]
  %v156 = vld [vmem:[%s0 + $0x68] sm:$0xff]
  %v157 = vld [vmem:[%s0 + $0x70] sm:$0xff]
  %v158 = vld [vmem:[%s0 + $0x78] sm:$0xff]
  %v159 = vld [vmem:[%s1] sm:$0xff]
  %v160 = vld [vmem:[%s1 + $0x8] sm:$0xff]
  %v161 = vld [vmem:[%s1 + $0x10] sm:$0xff]
  %v162 = vld [vmem:[%s1 + $0x18] sm:$0xff]
  %v163 = vld [vmem:[%s1 + $0x20] sm:$0xff]
  %v164 = vld [vmem:[%s1 + $0x28] sm:$0xff]
  %v165 = vld [vmem:[%s1 + $0x30] sm:$0xff]
  %v166 = vld [vmem:[%s1 + $0x38] sm:$0xff]
  %v167 = vld [vmem:[%s1 + $0x40] sm:$0xff]
  %v168 = vld [vmem:[%s1 + $0x48] sm:$0xff]
  %v169 = vld [vmem:[%s1 + $0x50] sm:$0xff]
  %v170 = vld [vmem:[%s1 + $0x58] sm:$0xff]
  %v171 = vld [vmem:[%s1 + $0x60] sm:$0xff]
  %v172 = vld [vmem:[%s1 + $0x68] sm:$0xff]
  %v173 = vld [vmem:[%s1 + $0x70] sm:$0xff]
  %v174 = vld [vmem:[%s1 + $0x78] sm:$0xff]
  %v175 = vmax.f32 %v143, %v159
  %v176 = vmax.f32 %v144, %v160
  %v177 = vmax.f32 %v145, %v161
  %v178 = vmax.f32 %v146, %v162
  %v179 = vmax.f32 %v147, %v163
  %v180 = vmax.f32 %v148, %v164
  %v181 = vmax.f32 %v149, %v165
  %v182 = vmax.f32 %v150, %v166
  %v183 = vmax.f32 %v151, %v167
  %v184 = vmax.f32 %v152, %v168
  %v185 = vmax.f32 %v153, %v169
  %v186 = vmax.f32 %v154, %v170
  %v187 = vmax.f32 %v155, %v171
  %v188 = vmax.f32 %v156, %v172
  %v189 = vmax.f32 %v157, %v173
  %v190 = vmax.f32 %v158, %v174
  %v191 = vld [vmem:[%s2] sm:$0xff]
  %v192 = vld [vmem:[%s2 + $0x8] sm:$0xff]
  %v193 = vld [vmem:[%s2 + $0x10] sm:$0xff]
  %v194 = vld [vmem:[%s2 + $0x18] sm:$0xff]
  %v195 = vld [vmem:[%s2 + $0x20] sm:$0xff]
  %v196 = vld [vmem:[%s2 + $0x28] sm:$0xff]
  %v197 = vld [vmem:[%s2 + $0x30] sm:$0xff]
  %v198 = vld [vmem:[%s2 + $0x38] sm:$0xff]
  %v199 = vld [vmem:[%s2 + $0x40] sm:$0xff]
  %v200 = vld [vmem:[%s2 + $0x48] sm:$0xff]
  %v201 = vld [vmem:[%s2 + $0x50] sm:$0xff]
  %v202 = vld [vmem:[%s2 + $0x58] sm:$0xff]
  %v203 = vld [vmem:[%s2 + $0x60] sm:$0xff]
  %v204 = vld [vmem:[%s2 + $0x68] sm:$0xff]
  %v205 = vld [vmem:[%s2 + $0x70] sm:$0xff]
  %v206 = vld [vmem:[%s2 + $0x78] sm:$0xff]
  %v207 = vld [vmem:[%s3] sm:$0xff]
  %v208 = vld [vmem:[%s3 + $0x8] sm:$0xff]
  %v209 = vld [vmem:[%s3 + $0x10] sm:$0xff]
  %v210 = vld [vmem:[%s3 + $0x18] sm:$0xff]
  %v211 = vld [vmem:[%s3 + $0x20] sm:$0xff]
  %v212 = vld [vmem:[%s3 + $0x28] sm:$0xff]
  %v213 = vld [vmem:[%s3 + $0x30] sm:$0xff]
  %v214 = vld [vmem:[%s3 + $0x38] sm:$0xff]
  %v215 = vld [vmem:[%s3 + $0x40] sm:$0xff]
  %v216 = vld [vmem:[%s3 + $0x48] sm:$0xff]
  %v217 = vld [vmem:[%s3 + $0x50] sm:$0xff]
  %v218 = vld [vmem:[%s3 + $0x58] sm:$0xff]
  %v219 = vld [vmem:[%s3 + $0x60] sm:$0xff]
  %v220 = vld [vmem:[%s3 + $0x68] sm:$0xff]
  %v221 = vld [vmem:[%s3 + $0x70] sm:$0xff]
  %v222 = vld [vmem:[%s3 + $0x78] sm:$0xff]
  %v223 = vmax.f32 %v191, %v207
  %v224 = vmax.f32 %v192, %v208
  %v225 = vmax.f32 %v193, %v209
  %v226 = vmax.f32 %v194, %v210
  %v227 = vmax.f32 %v195, %v211
  %v228 = vmax.f32 %v196, %v212
  %v229 = vmax.f32 %v197, %v213
  %v230 = vmax.f32 %v198, %v214
  %v231 = vmax.f32 %v199, %v215
  %v232 = vmax.f32 %v200, %v216
  %v233 = vmax.f32 %v201, %v217
  %v234 = vmax.f32 %v202, %v218
  %v235 = vmax.f32 %v203, %v219
  %v236 = vmax.f32 %v204, %v220
  %v237 = vmax.f32 %v205, %v221
  %v238 = vmax.f32 %v206, %v222
  %v239 = vmax.f32 %v175, %v223
  %v240 = vmax.f32 %v176, %v224
  %v241 = vmax.f32 %v177, %v225
  %v242 = vmax.f32 %v178, %v226
  %v243 = vmax.f32 %v179, %v227
  %v244 = vmax.f32 %v180, %v228
  %v245 = vmax.f32 %v181, %v229
  %v246 = vmax.f32 %v182, %v230
  %v247 = vmax.f32 %v183, %v231
  %v248 = vmax.f32 %v184, %v232
  %v249 = vmax.f32 %v185, %v233
  %v250 = vmax.f32 %v186, %v234
  %v251 = vmax.f32 %v187, %v235
  %v252 = vmax.f32 %v188, %v236
  %v253 = vmax.f32 %v189, %v237
  %v254 = vmax.f32 %v190, %v238
  %s255 = scalar_lea.vmem [#allocation2], 16
  %256 = vst.msk [vmem:[%s255 + $0x1] sm:$0xff] %vm59, %v239
  %257 = vst.msk [vmem:[%s255 + $0x11] sm:$0xff] %vm59, %v240
  %258 = vst.msk [vmem:[%s255 + $0x21] sm:$0xff] %vm59, %v241
  %259 = vst.msk [vmem:[%s255 + $0x31] sm:$0xff] %vm59, %v242
  %260 = vst.msk [vmem:[%s255 + $0x41] sm:$0xff] %vm59, %v243
  %261 = vst.msk [vmem:[%s255 + $0x51] sm:$0xff] %vm59, %v244
  %262 = vst.msk [vmem:[%s255 + $0x61] sm:$0xff] %vm59, %v245
  %263 = vst.msk [vmem:[%s255 + $0x71] sm:$0xff] %vm59, %v246
  %264 = vst.msk [vmem:[%s255 + $0xa1] sm:$0xff] %vm59, %v247
  %265 = vst.msk [vmem:[%s255 + $0xb1] sm:$0xff] %vm59, %v248
  %266 = vst.msk [vmem:[%s255 + $0xc1] sm:$0xff] %vm59, %v249
  %267 = vst.msk [vmem:[%s255 + $0xd1] sm:$0xff] %vm59, %v250
  %268 = vst.msk [vmem:[%s255 + $0xe1] sm:$0xff] %vm59, %v251
  %269 = vst.msk [vmem:[%s255 + $0xf1] sm:$0xff] %vm59, %v252
  %270 = vst.msk [vmem:[%s255 + $0x101] sm:$0xff] %vm59, %v253
  %271 = vst.msk [vmem:[%s255 + $0x111] sm:$0xff] %vm59, %v254
  %v272 = vld [vmem:[#allocation2] sm:$0xff]
  %v273 = vld [vmem:[#allocation2 + $0x8] sm:$0x3]
  %v274 = vld [vmem:[#allocation2 + $0x10] sm:$0xff]
  %v275 = vld [vmem:[#allocation2 + $0x18] sm:$0x3]
  %v276 = vld [vmem:[#allocation2 + $0x20] sm:$0xff]
  %v277 = vld [vmem:[#allocation2 + $0x28] sm:$0x3]
  %v278 = vld [vmem:[#allocation2 + $0x30] sm:$0xff]
  %v279 = vld [vmem:[#allocation2 + $0x38] sm:$0x3]
  %v280 = vld [vmem:[#allocation2 + $0x40] sm:$0xff]
  %v281 = vld [vmem:[#allocation2 + $0x48] sm:$0x3]
  %v282 = vld [vmem:[#allocation2 + $0x50] sm:$0xff]
  %v283 = vld [vmem:[#allocation2 + $0x58] sm:$0x3]
  %v284 = vld [vmem:[#allocation2 + $0x60] sm:$0xff]
  %v285 = vld [vmem:[#allocation2 + $0x68] sm:$0x3]
  %v286 = vld [vmem:[#allocation2 + $0x70] sm:$0xff]
  %v287 = vld [vmem:[#allocation2 + $0x78] sm:$0x3]
  %v288 = vld [vmem:[#allocation2 + $0x80] sm:$0xff]
  %v289 = vld [vmem:[#allocation2 + $0x88] sm:$0x3]
  %v290 = vld [vmem:[#allocation2 + $0x90] sm:$0xff]
  %v291 = vld [vmem:[#allocation2 + $0x98] sm:$0x3]
  %v292 = vld [vmem:[#allocation2 + $0xa0] sm:$0xff]
  %v293 = vld [vmem:[#allocation2 + $0xa8] sm:$0x3]
  %v294 = vld [vmem:[#allocation2 + $0xb0] sm:$0xff]
  %v295 = vld [vmem:[#allocation2 + $0xb8] sm:$0x3]
  %v296 = vld [vmem:[#allocation2 + $0xc0] sm:$0xff]
  %v297 = vld [vmem:[#allocation2 + $0xc8] sm:$0x3]
  %v298 = vld [vmem:[#allocation2 + $0xd0] sm:$0xff]
  %v299 = vld [vmem:[#allocation2 + $0xd8] sm:$0x3]
  %v300 = vld [vmem:[#allocation2 + $0xe0] sm:$0xff]
  %v301 = vld [vmem:[#allocation2 + $0xe8] sm:$0x3]
  %v302 = vld [vmem:[#allocation2 + $0xf0] sm:$0xff]
  %v303 = vld [vmem:[#allocation2 + $0xf8] sm:$0x3]
  %v304 = vld [vmem:[#allocation2 + $0x100] sm:$0xff]
  %v305 = vld [vmem:[#allocation2 + $0x108] sm:$0x3]
  %v306 = vld [vmem:[#allocation2 + $0x110] sm:$0xff]
  %v307 = vld [vmem:[#allocation2 + $0x118] sm:$0x3]
  %v308 = vld [vmem:[#allocation2 + $0x120] sm:$0xff]
  %v309 = vld [vmem:[#allocation2 + $0x128] sm:$0x3]
  %v310 = vld [vmem:[#allocation2 + $0x130] sm:$0xff]
  %v311 = vld [vmem:[#allocation2 + $0x138] sm:$0x3]
  %v312 = vld [vmem:[%s4] sm:$0xf]
  %vm345 = vcmask 1046528
  %v346 = vrot.slane %v272, 1
  %v347 = vrot.slane %v273, 1
  %v348 = vsel %vm345, %v346, %v347
  %v349 = vrot.slane %v274, 1
  %v350 = vrot.slane %v275, 1
  %v351 = vsel %vm345, %v349, %v350
  %v352 = vrot.slane %v276, 1
  %v353 = vrot.slane %v277, 1
  %v354 = vsel %vm345, %v352, %v353
  %v355 = vrot.slane %v278, 1
  %v356 = vrot.slane %v279, 1
  %v357 = vsel %vm345, %v355, %v356
  %v358 = vrot.slane %v280, 1
  %v359 = vrot.slane %v281, 1
  %v360 = vsel %vm345, %v358, %v359
  %v361 = vrot.slane %v282, 1
  %v362 = vrot.slane %v283, 1
  %v363 = vsel %vm345, %v361, %v362
  %v364 = vrot.slane %v284, 1
  %v365 = vrot.slane %v285, 1
  %v366 = vsel %vm345, %v364, %v365
  %v367 = vrot.slane %v286, 1
  %v368 = vrot.slane %v287, 1
  %v369 = vsel %vm345, %v367, %v368
  %v370 = vrot.slane %v292, 1
  %v371 = vrot.slane %v293, 1
  %v372 = vsel %vm345, %v370, %v371
  %v373 = vrot.slane %v294, 1
  %v374 = vrot.slane %v295, 1
  %v375 = vsel %vm345, %v373, %v374
  %v376 = vrot.slane %v296, 1
  %v377 = vrot.slane %v297, 1
  %v378 = vsel %vm345, %v376, %v377
  %v379 = vrot.slane %v298, 1
  %v380 = vrot.slane %v299, 1
  %v381 = vsel %vm345, %v379, %v380
  %v382 = vrot.slane %v300, 1
  %v383 = vrot.slane %v301, 1
  %v384 = vsel %vm345, %v382, %v383
  %v385 = vrot.slane %v302, 1
  %v386 = vrot.slane %v303, 1
  %v387 = vsel %vm345, %v385, %v386
  %v388 = vrot.slane %v304, 1
  %v389 = vrot.slane %v305, 1
  %v390 = vsel %vm345, %v388, %v389
  %v391 = vrot.slane %v306, 1
  %v392 = vrot.slane %v307, 1
  %v393 = vsel %vm345, %v391, %v392
  %s394 = scalar_lea.vmem %s4, 4
  %v395 = vld [vmem:[%s394] sm:$0xf]
  %v396 = vsel %vm59, %v348, 0
  %v398 = vsel %vm59, %v351, 0
  %v400 = vsel %vm59, %v354, 0
  %v402 = vsel %vm59, %v357, 0
  %v404 = vsel %vm59, %v360, 0
  %v406 = vsel %vm59, %v363, 0
  %v408 = vsel %vm59, %v366, 0
  %v410 = vsel %vm59, %v369, 0
  %v412 = vsel %vm59, %v372, 0
  %v414 = vsel %vm59, %v375, 0
  %v416 = vsel %vm59, %v378, 0
  %v418 = vsel %vm59, %v381, 0
  %v420 = vsel %vm59, %v384, 0
  %v422 = vsel %vm59, %v387, 0
  %v424 = vsel %vm59, %v390, 0
  %v426 = vsel %vm59, %v393, 0
  %vm428 = vcmask 1043456
  %v430 = vsel %vm428, %v395, 0
  %432 = vmatprep.subr.mxu0 0.0
  %433 = vmatpush1.msra.mxu0 0.0
  %434 = vmatprep.subr.mxu0 0.0
  %435 = vmatpush1.msra.mxu0 0.0
  %436 = vmatprep.subr.mxu0 0.0
  %437 = vmatpush1.msra.mxu0 0.0
  %438 = vmatprep.subr.mxu0 0.0
  %439 = vmatpush1.msra.mxu0 0.0
  %440 = vmatprep.subr.mxu0 0.0
  %441 = vmatpush1.msra.mxu0 0.0
  %442 = vmatprep.subr.mxu0 0.0
  %443 = vmatpush1.msra.mxu0 0.0
  %444 = vmatprep.subr.mxu0 0.0
  %445 = vmatpush1.msra.mxu0 0.0
  %446 = vmatprep.subr.mxu0 0.0
  %447 = vmatpush1.msra.mxu0 0.0
  %448 = vmatprep.subr.mxu0 0.0
  %449 = vmatpush1.msra.mxu0 0.0
  %450 = vmatprep.subr.mxu0 0.0
  %451 = vmatpush1.msra.mxu0 0.0
  %452 = vmatprep.subr.mxu0 0.0
  %453 = vmatpush1.msra.mxu0 0.0
  %454 = vmatprep.subr.mxu0 0.0
  %455 = vmatpush1.msra.mxu0 0.0
  %456 = vmatprep.subr.mxu0 0.0
  %457 = vmatpush1.msra.mxu0 0.0
  %458 = vmatprep.subr.mxu0 0.0
  %459 = vmatpush1.msra.mxu0 0.0
  %460 = vmatprep.subr.mxu0 0.0
  %461 = vmatpush1.msra.mxu0 0.0
  %462 = vmatprep.subr.mxu0 0.0
  %463 = vmatpush1.msra.mxu0 %v430
  %464 = vmatprep.subr.mxu0 0.0
  %465 = vmatpush2.msra.mxu0 0.0
  %466 = vmatprep.subr.mxu0 0.0
  %467 = vmatpush2.msra.mxu0 0.0
  %468 = vmatprep.subr.mxu0 0.0
  %469 = vmatpush2.msra.mxu0 0.0
  %470 = vmatprep.subr.mxu0 0.0
  %471 = vmatpush2.msra.mxu0 0.0
  %472 = vmatprep.subr.mxu0 0.0
  %473 = vmatpush2.msra.mxu0 0.0
  %474 = vmatprep.subr.mxu0 0.0
  %475 = vmatpush2.msra.mxu0 0.0
  %476 = vmatprep.subr.mxu0 0.0
  %477 = vmatpush2.msra.mxu0 0.0
  %478 = vmatprep.subr.mxu0 0.0
  %479 = vmatpush2.msra.mxu0 0.0
  %480 = vmatprep.subr.mxu0 0.0
  %481 = vmatpush2.msra.mxu0 0.0
  %482 = vmatprep.subr.mxu0 0.0
  %483 = vmatpush2.msra.mxu0 0.0
  %484 = vmatprep.subr.mxu0 0.0
  %485 = vmatpush2.msra.mxu0 0.0
  %486 = vmatprep.subr.mxu0 0.0
  %487 = vmatpush2.msra.mxu0 0.0
  %488 = vmatprep.subr.mxu0 0.0
  %489 = vmatpush2.msra.mxu0 0.0
  %490 = vmatprep.subr.mxu0 0.0
  %491 = vmatpush2.msra.mxu0 0.0
  %492 = vmatprep.subr.mxu0 0.0
  %493 = vmatpush2.msra.mxu0 0.0
  %494 = vmatprep.subr.mxu0 0.0
  %495 = vmatpush2.msra.mxu0 0.0
  %496 = vmatprep.mubr.f32.mxu0 0.0
  %497 = vmatmul.mubr.f32.gmra.mxu0 %v396
  %v498 = vpop.f32.mrf.mxu0
  %v499 = vadd.f32 0.0, %v498
  %v500 = vpop.f32.mrf.mxu0
  %501 = vmatprep.mubr.f32.mxu0 0.0
  %502 = vmatmul.mubr.f32.gmra.mxu0 %v398
  %v503 = vpop.f32.mrf.mxu0
  %v504 = vadd.f32 0.0, %v503
  %v505 = vpop.f32.mrf.mxu0
  %506 = vmatprep.mubr.f32.mxu0 0.0
  %507 = vmatmul.mubr.f32.gmra.mxu0 %v400
  %v508 = vpop.f32.mrf.mxu0
  %v509 = vadd.f32 0.0, %v508
  %v510 = vpop.f32.mrf.mxu0
  %511 = vmatprep.mubr.f32.mxu0 0.0
  %512 = vmatmul.mubr.f32.gmra.mxu0 %v402
  %v513 = vpop.f32.mrf.mxu0
  %v514 = vadd.f32 0.0, %v513
  %v515 = vpop.f32.mrf.mxu0
  %516 = vmatprep.mubr.f32.mxu0 0.0
  %517 = vmatmul.mubr.f32.gmra.mxu0 %v404
  %v518 = vpop.f32.mrf.mxu0
  %v519 = vadd.f32 0.0, %v518
  %v520 = vpop.f32.mrf.mxu0
  %521 = vmatprep.mubr.f32.mxu0 0.0
  %522 = vmatmul.mubr.f32.gmra.mxu0 %v406
  %v523 = vpop.f32.mrf.mxu0
  %v524 = vadd.f32 0.0, %v523
  %v525 = vpop.f32.mrf.mxu0
  %526 = vmatprep.mubr.f32.mxu0 0.0
  %527 = vmatmul.mubr.f32.gmra.mxu0 %v408
  %v528 = vpop.f32.mrf.mxu0
  %v529 = vadd.f32 0.0, %v528
  %v530 = vpop.f32.mrf.mxu0
  %531 = vmatprep.mubr.f32.mxu0 0.0
  %532 = vmatmul.mubr.f32.gmra.mxu0 %v410
  %v533 = vpop.f32.mrf.mxu0
  %v534 = vadd.f32 0.0, %v533
  %v535 = vpop.f32.mrf.mxu0
  %536 = vmatprep.mubr.f32.mxu0 0.0
  %537 = vmatmul.mubr.f32.gmra.mxu0 %v412
  %v538 = vpop.f32.mrf.mxu0
  %v539 = vadd.f32 0.0, %v538
  %v540 = vpop.f32.mrf.mxu0
  %541 = vmatprep.mubr.f32.mxu0 0.0
  %542 = vmatmul.mubr.f32.gmra.mxu0 %v414
  %v543 = vpop.f32.mrf.mxu0
  %v544 = vadd.f32 0.0, %v543
  %v545 = vpop.f32.mrf.mxu0
  %546 = vmatprep.mubr.f32.mxu0 0.0
  %547 = vmatmul.mubr.f32.gmra.mxu0 %v416
  %v548 = vpop.f32.mrf.mxu0
  %v549 = vadd.f32 0.0, %v548
  %v550 = vpop.f32.mrf.mxu0
  %551 = vmatprep.mubr.f32.mxu0 0.0
  %552 = vmatmul.mubr.f32.gmra.mxu0 %v418
  %v553 = vpop.f32.mrf.mxu0
  %v554 = vadd.f32 0.0, %v553
  %v555 = vpop.f32.mrf.mxu0
  %556 = vmatprep.mubr.f32.mxu0 0.0
  %557 = vmatmul.mubr.f32.gmra.mxu0 %v420
  %v558 = vpop.f32.mrf.mxu0
  %v559 = vadd.f32 0.0, %v558
  %v560 = vpop.f32.mrf.mxu0
  %561 = vmatprep.mubr.f32.mxu0 0.0
  %562 = vmatmul.mubr.f32.gmra.mxu0 %v422
  %v563 = vpop.f32.mrf.mxu0
  %v564 = vadd.f32 0.0, %v563
  %v565 = vpop.f32.mrf.mxu0
  %566 = vmatprep.mubr.f32.mxu0 0.0
  %567 = vmatmul.mubr.f32.gmra.mxu0 %v424
  %v568 = vpop.f32.mrf.mxu0
  %v569 = vadd.f32 0.0, %v568
  %v570 = vpop.f32.mrf.mxu0
  %571 = vmatprep.mubr.f32.mxu0 0.0
  %572 = vmatmul.mubr.f32.gmra.mxu0 %v426
  %v573 = vpop.f32.mrf.mxu0
  %v574 = vadd.f32 0.0, %v573
  %v575 = vpop.f32.mrf.mxu0
  %576 = vdwg.mxu0
  %v577 = vsel %vm59, %v272, 0
  %v579 = vsel %vm59, %v274, 0
  %v581 = vsel %vm59, %v276, 0
  %v583 = vsel %vm59, %v278, 0
  %v585 = vsel %vm59, %v280, 0
  %v587 = vsel %vm59, %v282, 0
  %v589 = vsel %vm59, %v284, 0
  %v591 = vsel %vm59, %v286, 0
  %v593 = vsel %vm59, %v292, 0
  %v595 = vsel %vm59, %v294, 0
  %v597 = vsel %vm59, %v296, 0
  %v599 = vsel %vm59, %v298, 0
  %v601 = vsel %vm59, %v300, 0
  %v603 = vsel %vm59, %v302, 0
  %v605 = vsel %vm59, %v304, 0
  %v607 = vsel %vm59, %v306, 0
  %v610 = vsel %vm428, %v312, 0
  %612 = vmatprep.subr.mxu0 0.0
  %613 = vmatpush1.msra.mxu0 0.0
  %614 = vmatprep.subr.mxu0 0.0
  %615 = vmatpush1.msra.mxu0 0.0
  %616 = vmatprep.subr.mxu0 0.0
  %617 = vmatpush1.msra.mxu0 0.0
  %618 = vmatprep.subr.mxu0 0.0
  %619 = vmatpush1.msra.mxu0 0.0
  %620 = vmatprep.subr.mxu0 0.0
  %621 = vmatpush1.msra.mxu0 0.0
  %622 = vmatprep.subr.mxu0 0.0
  %623 = vmatpush1.msra.mxu0 0.0
  %624 = vmatprep.subr.mxu0 0.0
  %625 = vmatpush1.msra.mxu0 0.0
  %626 = vmatprep.subr.mxu0 0.0
  %627 = vmatpush1.msra.mxu0 0.0
  %628 = vmatprep.subr.mxu0 0.0
  %629 = vmatpush1.msra.mxu0 0.0
  %630 = vmatprep.subr.mxu0 0.0
  %631 = vmatpush1.msra.mxu0 0.0
  %632 = vmatprep.subr.mxu0 0.0
  %633 = vmatpush1.msra.mxu0 0.0
  %634 = vmatprep.subr.mxu0 0.0
  %635 = vmatpush1.msra.mxu0 0.0
  %636 = vmatprep.subr.mxu0 0.0
  %637 = vmatpush1.msra.mxu0 0.0
  %638 = vmatprep.subr.mxu0 0.0
  %639 = vmatpush1.msra.mxu0 0.0
  %640 = vmatprep.subr.mxu0 0.0
  %641 = vmatpush1.msra.mxu0 0.0
  %642 = vmatprep.subr.mxu0 0.0
  %643 = vmatpush1.msra.mxu0 %v610
  %644 = vmatprep.subr.mxu0 0.0
  %645 = vmatpush2.msra.mxu0 0.0
  %646 = vmatprep.subr.mxu0 0.0
  %647 = vmatpush2.msra.mxu0 0.0
  %648 = vmatprep.subr.mxu0 0.0
  %649 = vmatpush2.msra.mxu0 0.0
  %650 = vmatprep.subr.mxu0 0.0
  %651 = vmatpush2.msra.mxu0 0.0
  %652 = vmatprep.subr.mxu0 0.0
  %653 = vmatpush2.msra.mxu0 0.0
  %654 = vmatprep.subr.mxu0 0.0
  %655 = vmatpush2.msra.mxu0 0.0
  %656 = vmatprep.subr.mxu0 0.0
  %657 = vmatpush2.msra.mxu0 0.0
  %658 = vmatprep.subr.mxu0 0.0
  %659 = vmatpush2.msra.mxu0 0.0
  %660 = vmatprep.subr.mxu0 0.0
  %661 = vmatpush2.msra.mxu0 0.0
  %662 = vmatprep.subr.mxu0 0.0
  %663 = vmatpush2.msra.mxu0 0.0
  %664 = vmatprep.subr.mxu0 0.0
  %665 = vmatpush2.msra.mxu0 0.0
  %666 = vmatprep.subr.mxu0 0.0
  %667 = vmatpush2.msra.mxu0 0.0
  %668 = vmatprep.subr.mxu0 0.0
  %669 = vmatpush2.msra.mxu0 0.0
  %670 = vmatprep.subr.mxu0 0.0
  %671 = vmatpush2.msra.mxu0 0.0
  %672 = vmatprep.subr.mxu0 0.0
  %673 = vmatpush2.msra.mxu0 0.0
  %674 = vmatprep.subr.mxu0 0.0
  %675 = vmatpush2.msra.mxu0 0.0
  %676 = vmatprep.mubr.f32.mxu0 0.0
  %677 = vmatmul.mubr.f32.gmra.mxu0 %v577
  %v678 = vpop.f32.mrf.mxu0
  %v679 = vadd.f32 %v499, %v678
  %v680 = vpop.f32.mrf.mxu0
  %681 = vmatprep.mubr.f32.mxu0 0.0
  %682 = vmatmul.mubr.f32.gmra.mxu0 %v579
  %v683 = vpop.f32.mrf.mxu0
  %v684 = vadd.f32 %v504, %v683
  %v685 = vpop.f32.mrf.mxu0
  %686 = vmatprep.mubr.f32.mxu0 0.0
  %687 = vmatmul.mubr.f32.gmra.mxu0 %v581
  %v688 = vpop.f32.mrf.mxu0
  %v689 = vadd.f32 %v509, %v688
  %v690 = vpop.f32.mrf.mxu0
  %691 = vmatprep.mubr.f32.mxu0 0.0
  %692 = vmatmul.mubr.f32.gmra.mxu0 %v583
  %v693 = vpop.f32.mrf.mxu0
  %v694 = vadd.f32 %v514, %v693
  %v695 = vpop.f32.mrf.mxu0
  %696 = vmatprep.mubr.f32.mxu0 0.0
  %697 = vmatmul.mubr.f32.gmra.mxu0 %v585
  %v698 = vpop.f32.mrf.mxu0
  %v699 = vadd.f32 %v519, %v698
  %v700 = vpop.f32.mrf.mxu0
  %701 = vmatprep.mubr.f32.mxu0 0.0
  %702 = vmatmul.mubr.f32.gmra.mxu0 %v587
  %v703 = vpop.f32.mrf.mxu0
  %v704 = vadd.f32 %v524, %v703
  %v705 = vpop.f32.mrf.mxu0
  %706 = vmatprep.mubr.f32.mxu0 0.0
  %707 = vmatmul.mubr.f32.gmra.mxu0 %v589
  %v708 = vpop.f32.mrf.mxu0
  %v709 = vadd.f32 %v529, %v708
  %v710 = vpop.f32.mrf.mxu0
  %711 = vmatprep.mubr.f32.mxu0 0.0
  %712 = vmatmul.mubr.f32.gmra.mxu0 %v591
  %v713 = vpop.f32.mrf.mxu0
  %v714 = vadd.f32 %v534, %v713
  %v715 = vpop.f32.mrf.mxu0
  %716 = vmatprep.mubr.f32.mxu0 0.0
  %717 = vmatmul.mubr.f32.gmra.mxu0 %v593
  %v718 = vpop.f32.mrf.mxu0
  %v719 = vadd.f32 %v539, %v718
  %v720 = vpop.f32.mrf.mxu0
  %721 = vmatprep.mubr.f32.mxu0 0.0
  %722 = vmatmul.mubr.f32.gmra.mxu0 %v595
  %v723 = vpop.f32.mrf.mxu0
  %v724 = vadd.f32 %v544, %v723
  %v725 = vpop.f32.mrf.mxu0
  %726 = vmatprep.mubr.f32.mxu0 0.0
  %727 = vmatmul.mubr.f32.gmra.mxu0 %v597
  %v728 = vpop.f32.mrf.mxu0
  %v729 = vadd.f32 %v549, %v728
  %v730 = vpop.f32.mrf.mxu0
  %731 = vmatprep.mubr.f32.mxu0 0.0
  %732 = vmatmul.mubr.f32.gmra.mxu0 %v599
  %v733 = vpop.f32.mrf.mxu0
  %v734 = vadd.f32 %v554, %v733
  %v735 = vpop.f32.mrf.mxu0
  %736 = vmatprep.mubr.f32.mxu0 0.0
  %737 = vmatmul.mubr.f32.gmra.mxu0 %v601
  %v738 = vpop.f32.mrf.mxu0
  %v739 = vadd.f32 %v559, %v738
  %v740 = vpop.f32.mrf.mxu0
  %741 = vmatprep.mubr.f32.mxu0 0.0
  %742 = vmatmul.mubr.f32.gmra.mxu0 %v603
  %v743 = vpop.f32.mrf.mxu0
  %v744 = vadd.f32 %v564, %v743
  %v745 = vpop.f32.mrf.mxu0
  %746 = vmatprep.mubr.f32.mxu0 0.0
  %747 = vmatmul.mubr.f32.gmra.mxu0 %v605
  %v748 = vpop.f32.mrf.mxu0
  %v749 = vadd.f32 %v569, %v748
  %v750 = vpop.f32.mrf.mxu0
  %751 = vmatprep.mubr.f32.mxu0 0.0
  %752 = vmatmul.mubr.f32.gmra.mxu0 %v607
  %v753 = vpop.f32.mrf.mxu0
  %v754 = vadd.f32 %v574, %v753
  %v755 = vpop.f32.mrf.mxu0
  %756 = vdwg.mxu0
  %vm757 = vcmask 1045504
  %v758 = vrot.slane %v272, 2
  %v759 = vrot.slane %v273, 2
  %v760 = vsel %vm757, %v758, %v759
  %v761 = vrot.slane %v274, 2
  %v762 = vrot.slane %v275, 2
  %v763 = vsel %vm757, %v761, %v762
  %v764 = vrot.slane %v276, 2
  %v765 = vrot.slane %v277, 2
  %v766 = vsel %vm757, %v764, %v765
  %v767 = vrot.slane %v278, 2
  %v768 = vrot.slane %v279, 2
  %v769 = vsel %vm757, %v767, %v768
  %v770 = vrot.slane %v280, 2
  %v771 = vrot.slane %v281, 2
  %v772 = vsel %vm757, %v770, %v771
  %v773 = vrot.slane %v282, 2
  %v774 = vrot.slane %v283, 2
  %v775 = vsel %vm757, %v773, %v774
  %v776 = vrot.slane %v284, 2
  %v777 = vrot.slane %v285, 2
  %v778 = vsel %vm757, %v776, %v777
  %v779 = vrot.slane %v286, 2
  %v780 = vrot.slane %v287, 2
  %v781 = vsel %vm757, %v779, %v780
  %v782 = vrot.slane %v292, 2
  %v783 = vrot.slane %v293, 2
  %v784 = vsel %vm757, %v782, %v783
  %v785 = vrot.slane %v294, 2
  %v786 = vrot.slane %v295, 2
  %v787 = vsel %vm757, %v785, %v786
  %v788 = vrot.slane %v296, 2
  %v789 = vrot.slane %v297, 2
  %v790 = vsel %vm757, %v788, %v789
  %v791 = vrot.slane %v298, 2
  %v792 = vrot.slane %v299, 2
  %v793 = vsel %vm757, %v791, %v792
  %v794 = vrot.slane %v300, 2
  %v795 = vrot.slane %v301, 2
  %v796 = vsel %vm757, %v794, %v795
  %v797 = vrot.slane %v302, 2
  %v798 = vrot.slane %v303, 2
  %v799 = vsel %vm757, %v797, %v798
  %v800 = vrot.slane %v304, 2
  %v801 = vrot.slane %v305, 2
  %v802 = vsel %vm757, %v800, %v801
  %v803 = vrot.slane %v306, 2
  %v804 = vrot.slane %v307, 2
  %v805 = vsel %vm757, %v803, %v804
  %s806 = scalar_lea.vmem %s4, 8
  %v807 = vld [vmem:[%s806] sm:$0xf]
  %v808 = vsel %vm59, %v760, 0
  %v810 = vsel %vm59, %v763, 0
  %v812 = vsel %vm59, %v766, 0
  %v814 = vsel %vm59, %v769, 0
  %v816 = vsel %vm59, %v772, 0
  %v818 = vsel %vm59, %v775, 0
  %v820 = vsel %vm59, %v778, 0
  %v822 = vsel %vm59, %v781, 0
  %v824 = vsel %vm59, %v784, 0
  %v826 = vsel %vm59, %v787, 0
  %v828 = vsel %vm59, %v790, 0
  %v830 = vsel %vm59, %v793, 0
  %v832 = vsel %vm59, %v796, 0
  %v834 = vsel %vm59, %v799, 0
  %v836 = vsel %vm59, %v802, 0
  %v838 = vsel %vm59, %v805, 0
  %v841 = vsel %vm428, %v807, 0
  %843 = vmatprep.subr.mxu0 0.0
  %844 = vmatpush1.msra.mxu0 0.0
  %845 = vmatprep.subr.mxu0 0.0
  %846 = vmatpush1.msra.mxu0 0.0
  %847 = vmatprep.subr.mxu0 0.0
  %848 = vmatpush1.msra.mxu0 0.0
  %849 = vmatprep.subr.mxu0 0.0
  %850 = vmatpush1.msra.mxu0 0.0
  %851 = vmatprep.subr.mxu0 0.0
  %852 = vmatpush1.msra.mxu0 0.0
  %853 = vmatprep.subr.mxu0 0.0
  %854 = vmatpush1.msra.mxu0 0.0
  %855 = vmatprep.subr.mxu0 0.0
  %856 = vmatpush1.msra.mxu0 0.0
  %857 = vmatprep.subr.mxu0 0.0
  %858 = vmatpush1.msra.mxu0 0.0
  %859 = vmatprep.subr.mxu0 0.0
  %860 = vmatpush1.msra.mxu0 0.0
  %861 = vmatprep.subr.mxu0 0.0
  %862 = vmatpush1.msra.mxu0 0.0
  %863 = vmatprep.subr.mxu0 0.0
  %864 = vmatpush1.msra.mxu0 0.0
  %865 = vmatprep.subr.mxu0 0.0
  %866 = vmatpush1.msra.mxu0 0.0
  %867 = vmatprep.subr.mxu0 0.0
  %868 = vmatpush1.msra.mxu0 0.0
  %869 = vmatprep.subr.mxu0 0.0
  %870 = vmatpush1.msra.mxu0 0.0
  %871 = vmatprep.subr.mxu0 0.0
  %872 = vmatpush1.msra.mxu0 0.0
  %873 = vmatprep.subr.mxu0 0.0
  %874 = vmatpush1.msra.mxu0 %v841
  %875 = vmatprep.subr.mxu0 0.0
  %876 = vmatpush2.msra.mxu0 0.0
  %877 = vmatprep.subr.mxu0 0.0
  %878 = vmatpush2.msra.mxu0 0.0
  %879 = vmatprep.subr.mxu0 0.0
  %880 = vmatpush2.msra.mxu0 0.0
  %881 = vmatprep.subr.mxu0 0.0
  %882 = vmatpush2.msra.mxu0 0.0
  %883 = vmatprep.subr.mxu0 0.0
  %884 = vmatpush2.msra.mxu0 0.0
  %885 = vmatprep.subr.mxu0 0.0
  %886 = vmatpush2.msra.mxu0 0.0
  %887 = vmatprep.subr.mxu0 0.0
  %888 = vmatpush2.msra.mxu0 0.0
  %889 = vmatprep.subr.mxu0 0.0
  %890 = vmatpush2.msra.mxu0 0.0
  %891 = vmatprep.subr.mxu0 0.0
  %892 = vmatpush2.msra.mxu0 0.0
  %893 = vmatprep.subr.mxu0 0.0
  %894 = vmatpush2.msra.mxu0 0.0
  %895 = vmatprep.subr.mxu0 0.0
  %896 = vmatpush2.msra.mxu0 0.0
  %897 = vmatprep.subr.mxu0 0.0
  %898 = vmatpush2.msra.mxu0 0.0
  %899 = vmatprep.subr.mxu0 0.0
  %900 = vmatpush2.msra.mxu0 0.0
  %901 = vmatprep.subr.mxu0 0.0
  %902 = vmatpush2.msra.mxu0 0.0
  %903 = vmatprep.subr.mxu0 0.0
  %904 = vmatpush2.msra.mxu0 0.0
  %905 = vmatprep.subr.mxu0 0.0
  %906 = vmatpush2.msra.mxu0 0.0
  %907 = vmatprep.mubr.f32.mxu0 0.0
  %908 = vmatmul.mubr.f32.gmra.mxu0 %v808
  %v909 = vpop.f32.mrf.mxu0
  %v910 = vadd.f32 0.0, %v909
  %v911 = vpop.f32.mrf.mxu0
  %912 = vmatprep.mubr.f32.mxu0 0.0
  %913 = vmatmul.mubr.f32.gmra.mxu0 %v810
  %v914 = vpop.f32.mrf.mxu0
  %v915 = vadd.f32 0.0, %v914
  %v916 = vpop.f32.mrf.mxu0
  %917 = vmatprep.mubr.f32.mxu0 0.0
  %918 = vmatmul.mubr.f32.gmra.mxu0 %v812
  %v919 = vpop.f32.mrf.mxu0
  %v920 = vadd.f32 0.0, %v919
  %v921 = vpop.f32.mrf.mxu0
  %922 = vmatprep.mubr.f32.mxu0 0.0
  %923 = vmatmul.mubr.f32.gmra.mxu0 %v814
  %v924 = vpop.f32.mrf.mxu0
  %v925 = vadd.f32 0.0, %v924
  %v926 = vpop.f32.mrf.mxu0
  %927 = vmatprep.mubr.f32.mxu0 0.0
  %928 = vmatmul.mubr.f32.gmra.mxu0 %v816
  %v929 = vpop.f32.mrf.mxu0
  %v930 = vadd.f32 0.0, %v929
  %v931 = vpop.f32.mrf.mxu0
  %932 = vmatprep.mubr.f32.mxu0 0.0
  %933 = vmatmul.mubr.f32.gmra.mxu0 %v818
  %v934 = vpop.f32.mrf.mxu0
  %v935 = vadd.f32 0.0, %v934
  %v936 = vpop.f32.mrf.mxu0
  %937 = vmatprep.mubr.f32.mxu0 0.0
  %938 = vmatmul.mubr.f32.gmra.mxu0 %v820
  %v939 = vpop.f32.mrf.mxu0
  %v940 = vadd.f32 0.0, %v939
  %v941 = vpop.f32.mrf.mxu0
  %942 = vmatprep.mubr.f32.mxu0 0.0
  %943 = vmatmul.mubr.f32.gmra.mxu0 %v822
  %v944 = vpop.f32.mrf.mxu0
  %v945 = vadd.f32 0.0, %v944
  %v946 = vpop.f32.mrf.mxu0
  %947 = vmatprep.mubr.f32.mxu0 0.0
  %948 = vmatmul.mubr.f32.gmra.mxu0 %v824
  %v949 = vpop.f32.mrf.mxu0
  %v950 = vadd.f32 0.0, %v949
  %v951 = vpop.f32.mrf.mxu0
  %952 = vmatprep.mubr.f32.mxu0 0.0
  %953 = vmatmul.mubr.f32.gmra.mxu0 %v826
  %v954 = vpop.f32.mrf.mxu0
  %v955 = vadd.f32 0.0, %v954
  %v956 = vpop.f32.mrf.mxu0
  %957 = vmatprep.mubr.f32.mxu0 0.0
  %958 = vmatmul.mubr.f32.gmra.mxu0 %v828
  %v959 = vpop.f32.mrf.mxu0
  %v960 = vadd.f32 0.0, %v959
  %v961 = vpop.f32.mrf.mxu0
  %962 = vmatprep.mubr.f32.mxu0 0.0
  %963 = vmatmul.mubr.f32.gmra.mxu0 %v830
  %v964 = vpop.f32.mrf.mxu0
  %v965 = vadd.f32 0.0, %v964
  %v966 = vpop.f32.mrf.mxu0
  %967 = vmatprep.mubr.f32.mxu0 0.0
  %968 = vmatmul.mubr.f32.gmra.mxu0 %v832
  %v969 = vpop.f32.mrf.mxu0
  %v970 = vadd.f32 0.0, %v969
  %v971 = vpop.f32.mrf.mxu0
  %972 = vmatprep.mubr.f32.mxu0 0.0
  %973 = vmatmul.mubr.f32.gmra.mxu0 %v834
  %v974 = vpop.f32.mrf.mxu0
  %v975 = vadd.f32 0.0, %v974
  %v976 = vpop.f32.mrf.mxu0
  %977 = vmatprep.mubr.f32.mxu0 0.0
  %978 = vmatmul.mubr.f32.gmra.mxu0 %v836
  %v979 = vpop.f32.mrf.mxu0
  %v980 = vadd.f32 0.0, %v979
  %v981 = vpop.f32.mrf.mxu0
  %982 = vmatprep.mubr.f32.mxu0 0.0
  %983 = vmatmul.mubr.f32.gmra.mxu0 %v838
  %v984 = vpop.f32.mrf.mxu0
  %v985 = vadd.f32 0.0, %v984
  %v986 = vpop.f32.mrf.mxu0
  %987 = vdwg.mxu0
  %v988 = vadd.f32 %v679, %v910
  %v989 = vadd.f32 %v684, %v915
  %v990 = vadd.f32 %v689, %v920
  %v991 = vadd.f32 %v694, %v925
  %v992 = vadd.f32 %v699, %v930
  %v993 = vadd.f32 %v704, %v935
  %v994 = vadd.f32 %v709, %v940
  %v995 = vadd.f32 %v714, %v945
  %v996 = vadd.f32 %v719, %v950
  %v997 = vadd.f32 %v724, %v955
  %v998 = vadd.f32 %v729, %v960
  %v999 = vadd.f32 %v734, %v965
  %v1000 = vadd.f32 %v739, %v970
  %v1001 = vadd.f32 %v744, %v975
  %v1002 = vadd.f32 %v749, %v980
  %v1003 = vadd.f32 %v754, %v985
  %s1004 = scalar_lea.vmem %s4, 12
  %v1005 = vld [vmem:[%s1004] sm:$0xf]
  %v1007 = vsel %vm59, %v288, 0
  %v1010 = vsel %vm59, %v308, 0
  %v1013 = vsel %vm428, %v1005, 0
  %1015 = vmatprep.subr.mxu0 0.0
  %1016 = vmatpush1.msra.mxu0 0.0
  %1017 = vmatprep.subr.mxu0 0.0
  %1018 = vmatpush1.msra.mxu0 0.0
  %1019 = vmatprep.subr.mxu0 0.0
  %1020 = vmatpush1.msra.mxu0 0.0
  %1021 = vmatprep.subr.mxu0 0.0
  %1022 = vmatpush1.msra.mxu0 0.0
  %1023 = vmatprep.subr.mxu0 0.0
  %1024 = vmatpush1.msra.mxu0 0.0
  %1025 = vmatprep.subr.mxu0 0.0
  %1026 = vmatpush1.msra.mxu0 0.0
  %1027 = vmatprep.subr.mxu0 0.0
  %1028 = vmatpush1.msra.mxu0 0.0
  %1029 = vmatprep.subr.mxu0 0.0
  %1030 = vmatpush1.msra.mxu0 0.0
  %1031 = vmatprep.subr.mxu0 0.0
  %1032 = vmatpush1.msra.mxu0 0.0
  %1033 = vmatprep.subr.mxu0 0.0
  %1034 = vmatpush1.msra.mxu0 0.0
  %1035 = vmatprep.subr.mxu0 0.0
  %1036 = vmatpush1.msra.mxu0 0.0
  %1037 = vmatprep.subr.mxu0 0.0
  %1038 = vmatpush1.msra.mxu0 0.0
  %1039 = vmatprep.subr.mxu0 0.0
  %1040 = vmatpush1.msra.mxu0 0.0
  %1041 = vmatprep.subr.mxu0 0.0
  %1042 = vmatpush1.msra.mxu0 0.0
  %1043 = vmatprep.subr.mxu0 0.0
  %1044 = vmatpush1.msra.mxu0 0.0
  %1045 = vmatprep.subr.mxu0 0.0
  %1046 = vmatpush1.msra.mxu0 %v1013
  %1047 = vmatprep.subr.mxu0 0.0
  %1048 = vmatpush2.msra.mxu0 0.0
  %1049 = vmatprep.subr.mxu0 0.0
  %1050 = vmatpush2.msra.mxu0 0.0
  %1051 = vmatprep.subr.mxu0 0.0
  %1052 = vmatpush2.msra.mxu0 0.0
  %1053 = vmatprep.subr.mxu0 0.0
  %1054 = vmatpush2.msra.mxu0 0.0
  %1055 = vmatprep.subr.mxu0 0.0
  %1056 = vmatpush2.msra.mxu0 0.0
  %1057 = vmatprep.subr.mxu0 0.0
  %1058 = vmatpush2.msra.mxu0 0.0
  %1059 = vmatprep.subr.mxu0 0.0
  %1060 = vmatpush2.msra.mxu0 0.0
  %1061 = vmatprep.subr.mxu0 0.0
  %1062 = vmatpush2.msra.mxu0 0.0
  %1063 = vmatprep.subr.mxu0 0.0
  %1064 = vmatpush2.msra.mxu0 0.0
  %1065 = vmatprep.subr.mxu0 0.0
  %1066 = vmatpush2.msra.mxu0 0.0
  %1067 = vmatprep.subr.mxu0 0.0
  %1068 = vmatpush2.msra.mxu0 0.0
  %1069 = vmatprep.subr.mxu0 0.0
  %1070 = vmatpush2.msra.mxu0 0.0
  %1071 = vmatprep.subr.mxu0 0.0
  %1072 = vmatpush2.msra.mxu0 0.0
  %1073 = vmatprep.subr.mxu0 0.0
  %1074 = vmatpush2.msra.mxu0 0.0
  %1075 = vmatprep.subr.mxu0 0.0
  %1076 = vmatpush2.msra.mxu0 0.0
  %1077 = vmatprep.subr.mxu0 0.0
  %1078 = vmatpush2.msra.mxu0 0.0
  %1079 = vmatprep.mubr.f32.mxu0 0.0
  %1080 = vmatmul.mubr.f32.gmra.mxu0 %v579
  %v1081 = vpop.f32.mrf.mxu0
  %v1082 = vadd.f32 0.0, %v1081
  %v1083 = vpop.f32.mrf.mxu0
  %1084 = vmatprep.mubr.f32.mxu0 0.0
  %1085 = vmatmul.mubr.f32.gmra.mxu0 %v581
  %v1086 = vpop.f32.mrf.mxu0
  %v1087 = vadd.f32 0.0, %v1086
  %v1088 = vpop.f32.mrf.mxu0
  %1089 = vmatprep.mubr.f32.mxu0 0.0
  %1090 = vmatmul.mubr.f32.gmra.mxu0 %v583
  %v1091 = vpop.f32.mrf.mxu0
  %v1092 = vadd.f32 0.0, %v1091
  %v1093 = vpop.f32.mrf.mxu0
  %1094 = vmatprep.mubr.f32.mxu0 0.0
  %1095 = vmatmul.mubr.f32.gmra.mxu0 %v585
  %v1096 = vpop.f32.mrf.mxu0
  %v1097 = vadd.f32 0.0, %v1096
  %v1098 = vpop.f32.mrf.mxu0
  %1099 = vmatprep.mubr.f32.mxu0 0.0
  %1100 = vmatmul.mubr.f32.gmra.mxu0 %v587
  %v1101 = vpop.f32.mrf.mxu0
  %v1102 = vadd.f32 0.0, %v1101
  %v1103 = vpop.f32.mrf.mxu0
  %1104 = vmatprep.mubr.f32.mxu0 0.0
  %1105 = vmatmul.mubr.f32.gmra.mxu0 %v589
  %v1106 = vpop.f32.mrf.mxu0
  %v1107 = vadd.f32 0.0, %v1106
  %v1108 = vpop.f32.mrf.mxu0
  %1109 = vmatprep.mubr.f32.mxu0 0.0
  %1110 = vmatmul.mubr.f32.gmra.mxu0 %v591
  %v1111 = vpop.f32.mrf.mxu0
  %v1112 = vadd.f32 0.0, %v1111
  %v1113 = vpop.f32.mrf.mxu0
  %1114 = vmatprep.mubr.f32.mxu0 0.0
  %1115 = vmatmul.mubr.f32.gmra.mxu0 %v1007
  %v1116 = vpop.f32.mrf.mxu0
  %v1117 = vadd.f32 0.0, %v1116
  %v1118 = vpop.f32.mrf.mxu0
  %1119 = vmatprep.mubr.f32.mxu0 0.0
  %1120 = vmatmul.mubr.f32.gmra.mxu0 %v595
  %v1121 = vpop.f32.mrf.mxu0
  %v1122 = vadd.f32 0.0, %v1121
  %v1123 = vpop.f32.mrf.mxu0
  %1124 = vmatprep.mubr.f32.mxu0 0.0
  %1125 = vmatmul.mubr.f32.gmra.mxu0 %v597
  %v1126 = vpop.f32.mrf.mxu0
  %v1127 = vadd.f32 0.0, %v1126
  %v1128 = vpop.f32.mrf.mxu0
  %1129 = vmatprep.mubr.f32.mxu0 0.0
  %1130 = vmatmul.mubr.f32.gmra.mxu0 %v599
  %v1131 = vpop.f32.mrf.mxu0
  %v1132 = vadd.f32 0.0, %v1131
  %v1133 = vpop.f32.mrf.mxu0
  %1134 = vmatprep.mubr.f32.mxu0 0.0
  %1135 = vmatmul.mubr.f32.gmra.mxu0 %v601
  %v1136 = vpop.f32.mrf.mxu0
  %v1137 = vadd.f32 0.0, %v1136
  %v1138 = vpop.f32.mrf.mxu0
  %1139 = vmatprep.mubr.f32.mxu0 0.0
  %1140 = vmatmul.mubr.f32.gmra.mxu0 %v603
  %v1141 = vpop.f32.mrf.mxu0
  %v1142 = vadd.f32 0.0, %v1141
  %v1143 = vpop.f32.mrf.mxu0
  %1144 = vmatprep.mubr.f32.mxu0 0.0
  %1145 = vmatmul.mubr.f32.gmra.mxu0 %v605
  %v1146 = vpop.f32.mrf.mxu0
  %v1147 = vadd.f32 0.0, %v1146
  %v1148 = vpop.f32.mrf.mxu0
  %1149 = vmatprep.mubr.f32.mxu0 0.0
  %1150 = vmatmul.mubr.f32.gmra.mxu0 %v607
  %v1151 = vpop.f32.mrf.mxu0
  %v1152 = vadd.f32 0.0, %v1151
  %v1153 = vpop.f32.mrf.mxu0
  %1154 = vmatprep.mubr.f32.mxu0 0.0
  %1155 = vmatmul.mubr.f32.gmra.mxu0 %v1010
  %v1156 = vpop.f32.mrf.mxu0
  %v1157 = vadd.f32 0.0, %v1156
  %v1158 = vpop.f32.mrf.mxu0
  %1159 = vdwg.mxu0
  %v1160 = vadd.f32 %v988, %v1082
  %v1161 = vadd.f32 %v989, %v1087
  %v1162 = vadd.f32 %v990, %v1092
  %v1163 = vadd.f32 %v991, %v1097
  %v1164 = vadd.f32 %v992, %v1102
  %v1165 = vadd.f32 %v993, %v1107
  %v1166 = vadd.f32 %v994, %v1112
  %v1167 = vadd.f32 %v995, %v1117
  %v1168 = vadd.f32 %v996, %v1122
  %v1169 = vadd.f32 %v997, %v1127
  %v1170 = vadd.f32 %v998, %v1132
  %v1171 = vadd.f32 %v999, %v1137
  %v1172 = vadd.f32 %v1000, %v1142
  %v1173 = vadd.f32 %v1001, %v1147
  %v1174 = vadd.f32 %v1002, %v1152
  %v1175 = vadd.f32 %v1003, %v1157
  %v1178 = vrot.slane %v288, 1
  %v1179 = vrot.slane %v289, 1
  %v1180 = vsel %vm345, %v1178, %v1179
  %v1181 = vrot.slane %v308, 1
  %v1182 = vrot.slane %v309, 1
  %v1183 = vsel %vm345, %v1181, %v1182
  %s1184 = scalar_lea.vmem %s4, 16
  %v1185 = vld [vmem:[%s1184] sm:$0xf]
  %v1186 = vsel %vm59, %v1180, 0
  %v1188 = vsel %vm59, %v1183, 0
  %v1191 = vsel %vm428, %v1185, 0
  %1193 = vmatprep.subr.mxu0 0.0
  %1194 = vmatpush1.msra.mxu0 0.0
  %1195 = vmatprep.subr.mxu0 0.0
  %1196 = vmatpush1.msra.mxu0 0.0
  %1197 = vmatprep.subr.mxu0 0.0
  %1198 = vmatpush1.msra.mxu0 0.0
  %1199 = vmatprep.subr.mxu0 0.0
  %1200 = vmatpush1.msra.mxu0 0.0
  %1201 = vmatprep.subr.mxu0 0.0
  %1202 = vmatpush1.msra.mxu0 0.0
  %1203 = vmatprep.subr.mxu0 0.0
  %1204 = vmatpush1.msra.mxu0 0.0
  %1205 = vmatprep.subr.mxu0 0.0
  %1206 = vmatpush1.msra.mxu0 0.0
  %1207 = vmatprep.subr.mxu0 0.0
  %1208 = vmatpush1.msra.mxu0 0.0
  %1209 = vmatprep.subr.mxu0 0.0
  %1210 = vmatpush1.msra.mxu0 0.0
  %1211 = vmatprep.subr.mxu0 0.0
  %1212 = vmatpush1.msra.mxu0 0.0
  %1213 = vmatprep.subr.mxu0 0.0
  %1214 = vmatpush1.msra.mxu0 0.0
  %1215 = vmatprep.subr.mxu0 0.0
  %1216 = vmatpush1.msra.mxu0 0.0
  %1217 = vmatprep.subr.mxu0 0.0
  %1218 = vmatpush1.msra.mxu0 0.0
  %1219 = vmatprep.subr.mxu0 0.0
  %1220 = vmatpush1.msra.mxu0 0.0
  %1221 = vmatprep.subr.mxu0 0.0
  %1222 = vmatpush1.msra.mxu0 0.0
  %1223 = vmatprep.subr.mxu0 0.0
  %1224 = vmatpush1.msra.mxu0 %v1191
  %1225 = vmatprep.subr.mxu0 0.0
  %1226 = vmatpush2.msra.mxu0 0.0
  %1227 = vmatprep.subr.mxu0 0.0
  %1228 = vmatpush2.msra.mxu0 0.0
  %1229 = vmatprep.subr.mxu0 0.0
  %1230 = vmatpush2.msra.mxu0 0.0
  %1231 = vmatprep.subr.mxu0 0.0
  %1232 = vmatpush2.msra.mxu0 0.0
  %1233 = vmatprep.subr.mxu0 0.0
  %1234 = vmatpush2.msra.mxu0 0.0
  %1235 = vmatprep.subr.mxu0 0.0
  %1236 = vmatpush2.msra.mxu0 0.0
  %1237 = vmatprep.subr.mxu0 0.0
  %1238 = vmatpush2.msra.mxu0 0.0
  %1239 = vmatprep.subr.mxu0 0.0
  %1240 = vmatpush2.msra.mxu0 0.0
  %1241 = vmatprep.subr.mxu0 0.0
  %1242 = vmatpush2.msra.mxu0 0.0
  %1243 = vmatprep.subr.mxu0 0.0
  %1244 = vmatpush2.msra.mxu0 0.0
  %1245 = vmatprep.subr.mxu0 0.0
  %1246 = vmatpush2.msra.mxu0 0.0
  %1247 = vmatprep.subr.mxu0 0.0
  %1248 = vmatpush2.msra.mxu0 0.0
  %1249 = vmatprep.subr.mxu0 0.0
  %1250 = vmatpush2.msra.mxu0 0.0
  %1251 = vmatprep.subr.mxu0 0.0
  %1252 = vmatpush2.msra.mxu0 0.0
  %1253 = vmatprep.subr.mxu0 0.0
  %1254 = vmatpush2.msra.mxu0 0.0
  %1255 = vmatprep.subr.mxu0 0.0
  %1256 = vmatpush2.msra.mxu0 0.0
  %1257 = vmatprep.mubr.f32.mxu0 0.0
  %1258 = vmatmul.mubr.f32.gmra.mxu0 %v398
  %v1259 = vpop.f32.mrf.mxu0
  %v1260 = vadd.f32 0.0, %v1259
  %v1261 = vpop.f32.mrf.mxu0
  %1262 = vmatprep.mubr.f32.mxu0 0.0
  %1263 = vmatmul.mubr.f32.gmra.mxu0 %v400
  %v1264 = vpop.f32.mrf.mxu0
  %v1265 = vadd.f32 0.0, %v1264
  %v1266 = vpop.f32.mrf.mxu0
  %1267 = vmatprep.mubr.f32.mxu0 0.0
  %1268 = vmatmul.mubr.f32.gmra.mxu0 %v402
  %v1269 = vpop.f32.mrf.mxu0
  %v1270 = vadd.f32 0.0, %v1269
  %v1271 = vpop.f32.mrf.mxu0
  %1272 = vmatprep.mubr.f32.mxu0 0.0
  %1273 = vmatmul.mubr.f32.gmra.mxu0 %v404
  %v1274 = vpop.f32.mrf.mxu0
  %v1275 = vadd.f32 0.0, %v1274
  %v1276 = vpop.f32.mrf.mxu0
  %1277 = vmatprep.mubr.f32.mxu0 0.0
  %1278 = vmatmul.mubr.f32.gmra.mxu0 %v406
  %v1279 = vpop.f32.mrf.mxu0
  %v1280 = vadd.f32 0.0, %v1279
  %v1281 = vpop.f32.mrf.mxu0
  %1282 = vmatprep.mubr.f32.mxu0 0.0
  %1283 = vmatmul.mubr.f32.gmra.mxu0 %v408
  %v1284 = vpop.f32.mrf.mxu0
  %v1285 = vadd.f32 0.0, %v1284
  %v1286 = vpop.f32.mrf.mxu0
  %1287 = vmatprep.mubr.f32.mxu0 0.0
  %1288 = vmatmul.mubr.f32.gmra.mxu0 %v410
  %v1289 = vpop.f32.mrf.mxu0
  %v1290 = vadd.f32 0.0, %v1289
  %v1291 = vpop.f32.mrf.mxu0
  %1292 = vmatprep.mubr.f32.mxu0 0.0
  %1293 = vmatmul.mubr.f32.gmra.mxu0 %v1186
  %v1294 = vpop.f32.mrf.mxu0
  %v1295 = vadd.f32 0.0, %v1294
  %v1296 = vpop.f32.mrf.mxu0
  %1297 = vmatprep.mubr.f32.mxu0 0.0
  %1298 = vmatmul.mubr.f32.gmra.mxu0 %v414
  %v1299 = vpop.f32.mrf.mxu0
  %v1300 = vadd.f32 0.0, %v1299
  %v1301 = vpop.f32.mrf.mxu0
  %1302 = vmatprep.mubr.f32.mxu0 0.0
  %1303 = vmatmul.mubr.f32.gmra.mxu0 %v416
  %v1304 = vpop.f32.mrf.mxu0
  %v1305 = vadd.f32 0.0, %v1304
  %v1306 = vpop.f32.mrf.mxu0
  %1307 = vmatprep.mubr.f32.mxu0 0.0
  %1308 = vmatmul.mubr.f32.gmra.mxu0 %v418
  %v1309 = vpop.f32.mrf.mxu0
  %v1310 = vadd.f32 0.0, %v1309
  %v1311 = vpop.f32.mrf.mxu0
  %1312 = vmatprep.mubr.f32.mxu0 0.0
  %1313 = vmatmul.mubr.f32.gmra.mxu0 %v420
  %v1314 = vpop.f32.mrf.mxu0
  %v1315 = vadd.f32 0.0, %v1314
  %v1316 = vpop.f32.mrf.mxu0
  %1317 = vmatprep.mubr.f32.mxu0 0.0
  %1318 = vmatmul.mubr.f32.gmra.mxu0 %v422
  %v1319 = vpop.f32.mrf.mxu0
  %v1320 = vadd.f32 0.0, %v1319
  %v1321 = vpop.f32.mrf.mxu0
  %1322 = vmatprep.mubr.f32.mxu0 0.0
  %1323 = vmatmul.mubr.f32.gmra.mxu0 %v424
  %v1324 = vpop.f32.mrf.mxu0
  %v1325 = vadd.f32 0.0, %v1324
  %v1326 = vpop.f32.mrf.mxu0
  %1327 = vmatprep.mubr.f32.mxu0 0.0
  %1328 = vmatmul.mubr.f32.gmra.mxu0 %v426
  %v1329 = vpop.f32.mrf.mxu0
  %v1330 = vadd.f32 0.0, %v1329
  %v1331 = vpop.f32.mrf.mxu0
  %1332 = vmatprep.mubr.f32.mxu0 0.0
  %1333 = vmatmul.mubr.f32.gmra.mxu0 %v1188
  %v1334 = vpop.f32.mrf.mxu0
  %v1335 = vadd.f32 0.0, %v1334
  %v1336 = vpop.f32.mrf.mxu0
  %1337 = vdwg.mxu0
  %v1338 = vadd.f32 %v1160, %v1260
  %v1339 = vadd.f32 %v1161, %v1265
  %v1340 = vadd.f32 %v1162, %v1270
  %v1341 = vadd.f32 %v1163, %v1275
  %v1342 = vadd.f32 %v1164, %v1280
  %v1343 = vadd.f32 %v1165, %v1285
  %v1344 = vadd.f32 %v1166, %v1290
  %v1345 = vadd.f32 %v1167, %v1295
  %v1346 = vadd.f32 %v1168, %v1300
  %v1347 = vadd.f32 %v1169, %v1305
  %v1348 = vadd.f32 %v1170, %v1310
  %v1349 = vadd.f32 %v1171, %v1315
  %v1350 = vadd.f32 %v1172, %v1320
  %v1351 = vadd.f32 %v1173, %v1325
  %v1352 = vadd.f32 %v1174, %v1330
  %v1353 = vadd.f32 %v1175, %v1335
  %v1354 = vrot.slane %v288, 2
  %v1355 = vrot.slane %v289, 2
  %v1356 = vsel %vm757, %v1354, %v1355
  %v1357 = vrot.slane %v308, 2
  %v1358 = vrot.slane %v309, 2
  %v1359 = vsel %vm757, %v1357, %v1358
  %s1360 = scalar_lea.vmem %s4, 20
  %v1361 = vld [vmem:[%s1360] sm:$0xf]
  %v1362 = vsel %vm59, %v1356, 0
  %v1364 = vsel %vm59, %v1359, 0
  %v1367 = vsel %vm428, %v1361, 0
  %1369 = vmatprep.subr.mxu0 0.0
  %1370 = vmatpush1.msra.mxu0 0.0
  %1371 = vmatprep.subr.mxu0 0.0
  %1372 = vmatpush1.msra.mxu0 0.0
  %1373 = vmatprep.subr.mxu0 0.0
  %1374 = vmatpush1.msra.mxu0 0.0
  %1375 = vmatprep.subr.mxu0 0.0
  %1376 = vmatpush1.msra.mxu0 0.0
  %1377 = vmatprep.subr.mxu0 0.0
  %1378 = vmatpush1.msra.mxu0 0.0
  %1379 = vmatprep.subr.mxu0 0.0
  %1380 = vmatpush1.msra.mxu0 0.0
  %1381 = vmatprep.subr.mxu0 0.0
  %1382 = vmatpush1.msra.mxu0 0.0
  %1383 = vmatprep.subr.mxu0 0.0
  %1384 = vmatpush1.msra.mxu0 0.0
  %1385 = vmatprep.subr.mxu0 0.0
  %1386 = vmatpush1.msra.mxu0 0.0
  %1387 = vmatprep.subr.mxu0 0.0
  %1388 = vmatpush1.msra.mxu0 0.0
  %1389 = vmatprep.subr.mxu0 0.0
  %1390 = vmatpush1.msra.mxu0 0.0
  %1391 = vmatprep.subr.mxu0 0.0
  %1392 = vmatpush1.msra.mxu0 0.0
  %1393 = vmatprep.subr.mxu0 0.0
  %1394 = vmatpush1.msra.mxu0 0.0
  %1395 = vmatprep.subr.mxu0 0.0
  %1396 = vmatpush1.msra.mxu0 0.0
  %1397 = vmatprep.subr.mxu0 0.0
  %1398 = vmatpush1.msra.mxu0 0.0
  %1399 = vmatprep.subr.mxu0 0.0
  %1400 = vmatpush1.msra.mxu0 %v1367
  %1401 = vmatprep.subr.mxu0 0.0
  %1402 = vmatpush2.msra.mxu0 0.0
  %1403 = vmatprep.subr.mxu0 0.0
  %1404 = vmatpush2.msra.mxu0 0.0
  %1405 = vmatprep.subr.mxu0 0.0
  %1406 = vmatpush2.msra.mxu0 0.0
  %1407 = vmatprep.subr.mxu0 0.0
  %1408 = vmatpush2.msra.mxu0 0.0
  %1409 = vmatprep.subr.mxu0 0.0
  %1410 = vmatpush2.msra.mxu0 0.0
  %1411 = vmatprep.subr.mxu0 0.0
  %1412 = vmatpush2.msra.mxu0 0.0
  %1413 = vmatprep.subr.mxu0 0.0
  %1414 = vmatpush2.msra.mxu0 0.0
  %1415 = vmatprep.subr.mxu0 0.0
  %1416 = vmatpush2.msra.mxu0 0.0
  %1417 = vmatprep.subr.mxu0 0.0
  %1418 = vmatpush2.msra.mxu0 0.0
  %1419 = vmatprep.subr.mxu0 0.0
  %1420 = vmatpush2.msra.mxu0 0.0
  %1421 = vmatprep.subr.mxu0 0.0
  %1422 = vmatpush2.msra.mxu0 0.0
  %1423 = vmatprep.subr.mxu0 0.0
  %1424 = vmatpush2.msra.mxu0 0.0
  %1425 = vmatprep.subr.mxu0 0.0
  %1426 = vmatpush2.msra.mxu0 0.0
  %1427 = vmatprep.subr.mxu0 0.0
  %1428 = vmatpush2.msra.mxu0 0.0
  %1429 = vmatprep.subr.mxu0 0.0
  %1430 = vmatpush2.msra.mxu0 0.0
  %1431 = vmatprep.subr.mxu0 0.0
  %1432 = vmatpush2.msra.mxu0 0.0
  %1433 = vmatprep.mubr.f32.mxu0 0.0
  %1434 = vmatmul.mubr.f32.gmra.mxu0 %v810
  %v1435 = vpop.f32.mrf.mxu0
  %v1436 = vadd.f32 0.0, %v1435
  %v1437 = vpop.f32.mrf.mxu0
  %1438 = vmatprep.mubr.f32.mxu0 0.0
  %1439 = vmatmul.mubr.f32.gmra.mxu0 %v812
  %v1440 = vpop.f32.mrf.mxu0
  %v1441 = vadd.f32 0.0, %v1440
  %v1442 = vpop.f32.mrf.mxu0
  %1443 = vmatprep.mubr.f32.mxu0 0.0
  %1444 = vmatmul.mubr.f32.gmra.mxu0 %v814
  %v1445 = vpop.f32.mrf.mxu0
  %v1446 = vadd.f32 0.0, %v1445
  %v1447 = vpop.f32.mrf.mxu0
  %1448 = vmatprep.mubr.f32.mxu0 0.0
  %1449 = vmatmul.mubr.f32.gmra.mxu0 %v816
  %v1450 = vpop.f32.mrf.mxu0
  %v1451 = vadd.f32 0.0, %v1450
  %v1452 = vpop.f32.mrf.mxu0
  %1453 = vmatprep.mubr.f32.mxu0 0.0
  %1454 = vmatmul.mubr.f32.gmra.mxu0 %v818
  %v1455 = vpop.f32.mrf.mxu0
  %v1456 = vadd.f32 0.0, %v1455
  %v1457 = vpop.f32.mrf.mxu0
  %1458 = vmatprep.mubr.f32.mxu0 0.0
  %1459 = vmatmul.mubr.f32.gmra.mxu0 %v820
  %v1460 = vpop.f32.mrf.mxu0
  %v1461 = vadd.f32 0.0, %v1460
  %v1462 = vpop.f32.mrf.mxu0
  %1463 = vmatprep.mubr.f32.mxu0 0.0
  %1464 = vmatmul.mubr.f32.gmra.mxu0 %v822
  %v1465 = vpop.f32.mrf.mxu0
  %v1466 = vadd.f32 0.0, %v1465
  %v1467 = vpop.f32.mrf.mxu0
  %1468 = vmatprep.mubr.f32.mxu0 0.0
  %1469 = vmatmul.mubr.f32.gmra.mxu0 %v1362
  %v1470 = vpop.f32.mrf.mxu0
  %v1471 = vadd.f32 0.0, %v1470
  %v1472 = vpop.f32.mrf.mxu0
  %1473 = vmatprep.mubr.f32.mxu0 0.0
  %1474 = vmatmul.mubr.f32.gmra.mxu0 %v826
  %v1475 = vpop.f32.mrf.mxu0
  %v1476 = vadd.f32 0.0, %v1475
  %v1477 = vpop.f32.mrf.mxu0
  %1478 = vmatprep.mubr.f32.mxu0 0.0
  %1479 = vmatmul.mubr.f32.gmra.mxu0 %v828
  %v1480 = vpop.f32.mrf.mxu0
  %v1481 = vadd.f32 0.0, %v1480
  %v1482 = vpop.f32.mrf.mxu0
  %1483 = vmatprep.mubr.f32.mxu0 0.0
  %1484 = vmatmul.mubr.f32.gmra.mxu0 %v830
  %v1485 = vpop.f32.mrf.mxu0
  %v1486 = vadd.f32 0.0, %v1485
  %v1487 = vpop.f32.mrf.mxu0
  %1488 = vmatprep.mubr.f32.mxu0 0.0
  %1489 = vmatmul.mubr.f32.gmra.mxu0 %v832
  %v1490 = vpop.f32.mrf.mxu0
  %v1491 = vadd.f32 0.0, %v1490
  %v1492 = vpop.f32.mrf.mxu0
  %1493 = vmatprep.mubr.f32.mxu0 0.0
  %1494 = vmatmul.mubr.f32.gmra.mxu0 %v834
  %v1495 = vpop.f32.mrf.mxu0
  %v1496 = vadd.f32 0.0, %v1495
  %v1497 = vpop.f32.mrf.mxu0
  %1498 = vmatprep.mubr.f32.mxu0 0.0
  %1499 = vmatmul.mubr.f32.gmra.mxu0 %v836
  %v1500 = vpop.f32.mrf.mxu0
  %v1501 = vadd.f32 0.0, %v1500
  %v1502 = vpop.f32.mrf.mxu0
  %1503 = vmatprep.mubr.f32.mxu0 0.0
  %1504 = vmatmul.mubr.f32.gmra.mxu0 %v838
  %v1505 = vpop.f32.mrf.mxu0
  %v1506 = vadd.f32 0.0, %v1505
  %v1507 = vpop.f32.mrf.mxu0
  %1508 = vmatprep.mubr.f32.mxu0 0.0
  %1509 = vmatmul.mubr.f32.gmra.mxu0 %v1364
  %v1510 = vpop.f32.mrf.mxu0
  %v1511 = vadd.f32 0.0, %v1510
  %v1512 = vpop.f32.mrf.mxu0
  %1513 = vdwg.mxu0
  %v1514 = vadd.f32 %v1338, %v1436
  %v1515 = vadd.f32 %v1339, %v1441
  %v1516 = vadd.f32 %v1340, %v1446
  %v1517 = vadd.f32 %v1341, %v1451
  %v1518 = vadd.f32 %v1342, %v1456
  %v1519 = vadd.f32 %v1343, %v1461
  %v1520 = vadd.f32 %v1344, %v1466
  %v1521 = vadd.f32 %v1345, %v1471
  %v1522 = vadd.f32 %v1346, %v1476
  %v1523 = vadd.f32 %v1347, %v1481
  %v1524 = vadd.f32 %v1348, %v1486
  %v1525 = vadd.f32 %v1349, %v1491
  %v1526 = vadd.f32 %v1350, %v1496
  %v1527 = vadd.f32 %v1351, %v1501
  %v1528 = vadd.f32 %v1352, %v1506
  %v1529 = vadd.f32 %v1353, %v1511
  %s1530 = scalar_lea.vmem %s4, 24
  %v1531 = vld [vmem:[%s1530] sm:$0xf]
  %v1533 = vsel %vm59, %v290, 0
  %v1536 = vsel %vm59, %v310, 0
  %v1539 = vsel %vm428, %v1531, 0
  %1541 = vmatprep.subr.mxu0 0.0
  %1542 = vmatpush1.msra.mxu0 0.0
  %1543 = vmatprep.subr.mxu0 0.0
  %1544 = vmatpush1.msra.mxu0 0.0
  %1545 = vmatprep.subr.mxu0 0.0
  %1546 = vmatpush1.msra.mxu0 0.0
  %1547 = vmatprep.subr.mxu0 0.0
  %1548 = vmatpush1.msra.mxu0 0.0
  %1549 = vmatprep.subr.mxu0 0.0
  %1550 = vmatpush1.msra.mxu0 0.0
  %1551 = vmatprep.subr.mxu0 0.0
  %1552 = vmatpush1.msra.mxu0 0.0
  %1553 = vmatprep.subr.mxu0 0.0
  %1554 = vmatpush1.msra.mxu0 0.0
  %1555 = vmatprep.subr.mxu0 0.0
  %1556 = vmatpush1.msra.mxu0 0.0
  %1557 = vmatprep.subr.mxu0 0.0
  %1558 = vmatpush1.msra.mxu0 0.0
  %1559 = vmatprep.subr.mxu0 0.0
  %1560 = vmatpush1.msra.mxu0 0.0
  %1561 = vmatprep.subr.mxu0 0.0
  %1562 = vmatpush1.msra.mxu0 0.0
  %1563 = vmatprep.subr.mxu0 0.0
  %1564 = vmatpush1.msra.mxu0 0.0
  %1565 = vmatprep.subr.mxu0 0.0
  %1566 = vmatpush1.msra.mxu0 0.0
  %1567 = vmatprep.subr.mxu0 0.0
  %1568 = vmatpush1.msra.mxu0 0.0
  %1569 = vmatprep.subr.mxu0 0.0
  %1570 = vmatpush1.msra.mxu0 0.0
  %1571 = vmatprep.subr.mxu0 0.0
  %1572 = vmatpush1.msra.mxu0 %v1539
  %1573 = vmatprep.subr.mxu0 0.0
  %1574 = vmatpush2.msra.mxu0 0.0
  %1575 = vmatprep.subr.mxu0 0.0
  %1576 = vmatpush2.msra.mxu0 0.0
  %1577 = vmatprep.subr.mxu0 0.0
  %1578 = vmatpush2.msra.mxu0 0.0
  %1579 = vmatprep.subr.mxu0 0.0
  %1580 = vmatpush2.msra.mxu0 0.0
  %1581 = vmatprep.subr.mxu0 0.0
  %1582 = vmatpush2.msra.mxu0 0.0
  %1583 = vmatprep.subr.mxu0 0.0
  %1584 = vmatpush2.msra.mxu0 0.0
  %1585 = vmatprep.subr.mxu0 0.0
  %1586 = vmatpush2.msra.mxu0 0.0
  %1587 = vmatprep.subr.mxu0 0.0
  %1588 = vmatpush2.msra.mxu0 0.0
  %1589 = vmatprep.subr.mxu0 0.0
  %1590 = vmatpush2.msra.mxu0 0.0
  %1591 = vmatprep.subr.mxu0 0.0
  %1592 = vmatpush2.msra.mxu0 0.0
  %1593 = vmatprep.subr.mxu0 0.0
  %1594 = vmatpush2.msra.mxu0 0.0
  %1595 = vmatprep.subr.mxu0 0.0
  %1596 = vmatpush2.msra.mxu0 0.0
  %1597 = vmatprep.subr.mxu0 0.0
  %1598 = vmatpush2.msra.mxu0 0.0
  %1599 = vmatprep.subr.mxu0 0.0
  %1600 = vmatpush2.msra.mxu0 0.0
  %1601 = vmatprep.subr.mxu0 0.0
  %1602 = vmatpush2.msra.mxu0 0.0
  %1603 = vmatprep.subr.mxu0 0.0
  %1604 = vmatpush2.msra.mxu0 0.0
  %1605 = vmatprep.mubr.f32.mxu0 0.0
  %1606 = vmatmul.mubr.f32.gmra.mxu0 %v581
  %v1607 = vpop.f32.mrf.mxu0
  %v1608 = vadd.f32 0.0, %v1607
  %v1609 = vpop.f32.mrf.mxu0
  %1610 = vmatprep.mubr.f32.mxu0 0.0
  %1611 = vmatmul.mubr.f32.gmra.mxu0 %v583
  %v1612 = vpop.f32.mrf.mxu0
  %v1613 = vadd.f32 0.0, %v1612
  %v1614 = vpop.f32.mrf.mxu0
  %1615 = vmatprep.mubr.f32.mxu0 0.0
  %1616 = vmatmul.mubr.f32.gmra.mxu0 %v585
  %v1617 = vpop.f32.mrf.mxu0
  %v1618 = vadd.f32 0.0, %v1617
  %v1619 = vpop.f32.mrf.mxu0
  %1620 = vmatprep.mubr.f32.mxu0 0.0
  %1621 = vmatmul.mubr.f32.gmra.mxu0 %v587
  %v1622 = vpop.f32.mrf.mxu0
  %v1623 = vadd.f32 0.0, %v1622
  %v1624 = vpop.f32.mrf.mxu0
  %1625 = vmatprep.mubr.f32.mxu0 0.0
  %1626 = vmatmul.mubr.f32.gmra.mxu0 %v589
  %v1627 = vpop.f32.mrf.mxu0
  %v1628 = vadd.f32 0.0, %v1627
  %v1629 = vpop.f32.mrf.mxu0
  %1630 = vmatprep.mubr.f32.mxu0 0.0
  %1631 = vmatmul.mubr.f32.gmra.mxu0 %v591
  %v1632 = vpop.f32.mrf.mxu0
  %v1633 = vadd.f32 0.0, %v1632
  %v1634 = vpop.f32.mrf.mxu0
  %1635 = vmatprep.mubr.f32.mxu0 0.0
  %1636 = vmatmul.mubr.f32.gmra.mxu0 %v1007
  %v1637 = vpop.f32.mrf.mxu0
  %v1638 = vadd.f32 0.0, %v1637
  %v1639 = vpop.f32.mrf.mxu0
  %1640 = vmatprep.mubr.f32.mxu0 0.0
  %1641 = vmatmul.mubr.f32.gmra.mxu0 %v1533
  %v1642 = vpop.f32.mrf.mxu0
  %v1643 = vadd.f32 0.0, %v1642
  %v1644 = vpop.f32.mrf.mxu0
  %1645 = vmatprep.mubr.f32.mxu0 0.0
  %1646 = vmatmul.mubr.f32.gmra.mxu0 %v597
  %v1647 = vpop.f32.mrf.mxu0
  %v1648 = vadd.f32 0.0, %v1647
  %v1649 = vpop.f32.mrf.mxu0
  %1650 = vmatprep.mubr.f32.mxu0 0.0
  %1651 = vmatmul.mubr.f32.gmra.mxu0 %v599
  %v1652 = vpop.f32.mrf.mxu0
  %v1653 = vadd.f32 0.0, %v1652
  %v1654 = vpop.f32.mrf.mxu0
  %1655 = vmatprep.mubr.f32.mxu0 0.0
  %1656 = vmatmul.mubr.f32.gmra.mxu0 %v601
  %v1657 = vpop.f32.mrf.mxu0
  %v1658 = vadd.f32 0.0, %v1657
  %v1659 = vpop.f32.mrf.mxu0
  %1660 = vmatprep.mubr.f32.mxu0 0.0
  %1661 = vmatmul.mubr.f32.gmra.mxu0 %v603
  %v1662 = vpop.f32.mrf.mxu0
  %v1663 = vadd.f32 0.0, %v1662
  %v1664 = vpop.f32.mrf.mxu0
  %1665 = vmatprep.mubr.f32.mxu0 0.0
  %1666 = vmatmul.mubr.f32.gmra.mxu0 %v605
  %v1667 = vpop.f32.mrf.mxu0
  %v1668 = vadd.f32 0.0, %v1667
  %v1669 = vpop.f32.mrf.mxu0
  %1670 = vmatprep.mubr.f32.mxu0 0.0
  %1671 = vmatmul.mubr.f32.gmra.mxu0 %v607
  %v1672 = vpop.f32.mrf.mxu0
  %v1673 = vadd.f32 0.0, %v1672
  %v1674 = vpop.f32.mrf.mxu0
  %1675 = vmatprep.mubr.f32.mxu0 0.0
  %1676 = vmatmul.mubr.f32.gmra.mxu0 %v1010
  %v1677 = vpop.f32.mrf.mxu0
  %v1678 = vadd.f32 0.0, %v1677
  %v1679 = vpop.f32.mrf.mxu0
  %1680 = vmatprep.mubr.f32.mxu0 0.0
  %1681 = vmatmul.mubr.f32.gmra.mxu0 %v1536
  %v1682 = vpop.f32.mrf.mxu0
  %v1683 = vadd.f32 0.0, %v1682
  %v1684 = vpop.f32.mrf.mxu0
  %1685 = vdwg.mxu0
  %v1686 = vadd.f32 %v1514, %v1608
  %v1687 = vadd.f32 %v1515, %v1613
  %v1688 = vadd.f32 %v1516, %v1618
  %v1689 = vadd.f32 %v1517, %v1623
  %v1690 = vadd.f32 %v1518, %v1628
  %v1691 = vadd.f32 %v1519, %v1633
  %v1692 = vadd.f32 %v1520, %v1638
  %v1693 = vadd.f32 %v1521, %v1643
  %v1694 = vadd.f32 %v1522, %v1648
  %v1695 = vadd.f32 %v1523, %v1653
  %v1696 = vadd.f32 %v1524, %v1658
  %v1697 = vadd.f32 %v1525, %v1663
  %v1698 = vadd.f32 %v1526, %v1668
  %v1699 = vadd.f32 %v1527, %v1673
  %v1700 = vadd.f32 %v1528, %v1678
  %v1701 = vadd.f32 %v1529, %v1683
  %v1704 = vrot.slane %v290, 1
  %v1705 = vrot.slane %v291, 1
  %v1706 = vsel %vm345, %v1704, %v1705
  %v1707 = vrot.slane %v310, 1
  %v1708 = vrot.slane %v311, 1
  %v1709 = vsel %vm345, %v1707, %v1708
  %s1710 = scalar_lea.vmem %s4, 28
  %v1711 = vld [vmem:[%s1710] sm:$0xf]
  %v1712 = vsel %vm59, %v1706, 0
  %v1714 = vsel %vm59, %v1709, 0
  %v1717 = vsel %vm428, %v1711, 0
  %1719 = vmatprep.subr.mxu0 0.0
  %1720 = vmatpush1.msra.mxu0 0.0
  %1721 = vmatprep.subr.mxu0 0.0
  %1722 = vmatpush1.msra.mxu0 0.0
  %1723 = vmatprep.subr.mxu0 0.0
  %1724 = vmatpush1.msra.mxu0 0.0
  %1725 = vmatprep.subr.mxu0 0.0
  %1726 = vmatpush1.msra.mxu0 0.0
  %1727 = vmatprep.subr.mxu0 0.0
  %1728 = vmatpush1.msra.mxu0 0.0
  %1729 = vmatprep.subr.mxu0 0.0
  %1730 = vmatpush1.msra.mxu0 0.0
  %1731 = vmatprep.subr.mxu0 0.0
  %1732 = vmatpush1.msra.mxu0 0.0
  %1733 = vmatprep.subr.mxu0 0.0
  %1734 = vmatpush1.msra.mxu0 0.0
  %1735 = vmatprep.subr.mxu0 0.0
  %1736 = vmatpush1.msra.mxu0 0.0
  %1737 = vmatprep.subr.mxu0 0.0
  %1738 = vmatpush1.msra.mxu0 0.0
  %1739 = vmatprep.subr.mxu0 0.0
  %1740 = vmatpush1.msra.mxu0 0.0
  %1741 = vmatprep.subr.mxu0 0.0
  %1742 = vmatpush1.msra.mxu0 0.0
  %1743 = vmatprep.subr.mxu0 0.0
  %1744 = vmatpush1.msra.mxu0 0.0
  %1745 = vmatprep.subr.mxu0 0.0
  %1746 = vmatpush1.msra.mxu0 0.0
  %1747 = vmatprep.subr.mxu0 0.0
  %1748 = vmatpush1.msra.mxu0 0.0
  %1749 = vmatprep.subr.mxu0 0.0
  %1750 = vmatpush1.msra.mxu0 %v1717
  %1751 = vmatprep.subr.mxu0 0.0
  %1752 = vmatpush2.msra.mxu0 0.0
  %1753 = vmatprep.subr.mxu0 0.0
  %1754 = vmatpush2.msra.mxu0 0.0
  %1755 = vmatprep.subr.mxu0 0.0
  %1756 = vmatpush2.msra.mxu0 0.0
  %1757 = vmatprep.subr.mxu0 0.0
  %1758 = vmatpush2.msra.mxu0 0.0
  %1759 = vmatprep.subr.mxu0 0.0
  %1760 = vmatpush2.msra.mxu0 0.0
  %1761 = vmatprep.subr.mxu0 0.0
  %1762 = vmatpush2.msra.mxu0 0.0
  %1763 = vmatprep.subr.mxu0 0.0
  %1764 = vmatpush2.msra.mxu0 0.0
  %1765 = vmatprep.subr.mxu0 0.0
  %1766 = vmatpush2.msra.mxu0 0.0
  %1767 = vmatprep.subr.mxu0 0.0
  %1768 = vmatpush2.msra.mxu0 0.0
  %1769 = vmatprep.subr.mxu0 0.0
  %1770 = vmatpush2.msra.mxu0 0.0
  %1771 = vmatprep.subr.mxu0 0.0
  %1772 = vmatpush2.msra.mxu0 0.0
  %1773 = vmatprep.subr.mxu0 0.0
  %1774 = vmatpush2.msra.mxu0 0.0
  %1775 = vmatprep.subr.mxu0 0.0
  %1776 = vmatpush2.msra.mxu0 0.0
  %1777 = vmatprep.subr.mxu0 0.0
  %1778 = vmatpush2.msra.mxu0 0.0
  %1779 = vmatprep.subr.mxu0 0.0
  %1780 = vmatpush2.msra.mxu0 0.0
  %1781 = vmatprep.subr.mxu0 0.0
  %1782 = vmatpush2.msra.mxu0 0.0
  %1783 = vmatprep.mubr.f32.mxu0 0.0
  %1784 = vmatmul.mubr.f32.gmra.mxu0 %v400
  %v1785 = vpop.f32.mrf.mxu0
  %v1786 = vadd.f32 0.0, %v1785
  %v1787 = vpop.f32.mrf.mxu0
  %1788 = vmatprep.mubr.f32.mxu0 0.0
  %1789 = vmatmul.mubr.f32.gmra.mxu0 %v402
  %v1790 = vpop.f32.mrf.mxu0
  %v1791 = vadd.f32 0.0, %v1790
  %v1792 = vpop.f32.mrf.mxu0
  %1793 = vmatprep.mubr.f32.mxu0 0.0
  %1794 = vmatmul.mubr.f32.gmra.mxu0 %v404
  %v1795 = vpop.f32.mrf.mxu0
  %v1796 = vadd.f32 0.0, %v1795
  %v1797 = vpop.f32.mrf.mxu0
  %1798 = vmatprep.mubr.f32.mxu0 0.0
  %1799 = vmatmul.mubr.f32.gmra.mxu0 %v406
  %v1800 = vpop.f32.mrf.mxu0
  %v1801 = vadd.f32 0.0, %v1800
  %v1802 = vpop.f32.mrf.mxu0
  %1803 = vmatprep.mubr.f32.mxu0 0.0
  %1804 = vmatmul.mubr.f32.gmra.mxu0 %v408
  %v1805 = vpop.f32.mrf.mxu0
  %v1806 = vadd.f32 0.0, %v1805
  %v1807 = vpop.f32.mrf.mxu0
  %1808 = vmatprep.mubr.f32.mxu0 0.0
  %1809 = vmatmul.mubr.f32.gmra.mxu0 %v410
  %v1810 = vpop.f32.mrf.mxu0
  %v1811 = vadd.f32 0.0, %v1810
  %v1812 = vpop.f32.mrf.mxu0
  %1813 = vmatprep.mubr.f32.mxu0 0.0
  %1814 = vmatmul.mubr.f32.gmra.mxu0 %v1186
  %v1815 = vpop.f32.mrf.mxu0
  %v1816 = vadd.f32 0.0, %v1815
  %v1817 = vpop.f32.mrf.mxu0
  %1818 = vmatprep.mubr.f32.mxu0 0.0
  %1819 = vmatmul.mubr.f32.gmra.mxu0 %v1712
  %v1820 = vpop.f32.mrf.mxu0
  %v1821 = vadd.f32 0.0, %v1820
  %v1822 = vpop.f32.mrf.mxu0
  %1823 = vmatprep.mubr.f32.mxu0 0.0
  %1824 = vmatmul.mubr.f32.gmra.mxu0 %v416
  %v1825 = vpop.f32.mrf.mxu0
  %v1826 = vadd.f32 0.0, %v1825
  %v1827 = vpop.f32.mrf.mxu0
  %1828 = vmatprep.mubr.f32.mxu0 0.0
  %1829 = vmatmul.mubr.f32.gmra.mxu0 %v418
  %v1830 = vpop.f32.mrf.mxu0
  %v1831 = vadd.f32 0.0, %v1830
  %v1832 = vpop.f32.mrf.mxu0
  %1833 = vmatprep.mubr.f32.mxu0 0.0
  %1834 = vmatmul.mubr.f32.gmra.mxu0 %v420
  %v1835 = vpop.f32.mrf.mxu0
  %v1836 = vadd.f32 0.0, %v1835
  %v1837 = vpop.f32.mrf.mxu0
  %1838 = vmatprep.mubr.f32.mxu0 0.0
  %1839 = vmatmul.mubr.f32.gmra.mxu0 %v422
  %v1840 = vpop.f32.mrf.mxu0
  %v1841 = vadd.f32 0.0, %v1840
  %v1842 = vpop.f32.mrf.mxu0
  %1843 = vmatprep.mubr.f32.mxu0 0.0
  %1844 = vmatmul.mubr.f32.gmra.mxu0 %v424
  %v1845 = vpop.f32.mrf.mxu0
  %v1846 = vadd.f32 0.0, %v1845
  %v1847 = vpop.f32.mrf.mxu0
  %1848 = vmatprep.mubr.f32.mxu0 0.0
  %1849 = vmatmul.mubr.f32.gmra.mxu0 %v426
  %v1850 = vpop.f32.mrf.mxu0
  %v1851 = vadd.f32 0.0, %v1850
  %v1852 = vpop.f32.mrf.mxu0
  %1853 = vmatprep.mubr.f32.mxu0 0.0
  %1854 = vmatmul.mubr.f32.gmra.mxu0 %v1188
  %v1855 = vpop.f32.mrf.mxu0
  %v1856 = vadd.f32 0.0, %v1855
  %v1857 = vpop.f32.mrf.mxu0
  %1858 = vmatprep.mubr.f32.mxu0 0.0
  %1859 = vmatmul.mubr.f32.gmra.mxu0 %v1714
  %v1860 = vpop.f32.mrf.mxu0
  %v1861 = vadd.f32 0.0, %v1860
  %v1862 = vpop.f32.mrf.mxu0
  %1863 = vdwg.mxu0
  %v1864 = vadd.f32 %v1686, %v1786
  %v1865 = vadd.f32 %v1687, %v1791
  %v1866 = vadd.f32 %v1688, %v1796
  %v1867 = vadd.f32 %v1689, %v1801
  %v1868 = vadd.f32 %v1690, %v1806
  %v1869 = vadd.f32 %v1691, %v1811
  %v1870 = vadd.f32 %v1692, %v1816
  %v1871 = vadd.f32 %v1693, %v1821
  %v1872 = vadd.f32 %v1694, %v1826
  %v1873 = vadd.f32 %v1695, %v1831
  %v1874 = vadd.f32 %v1696, %v1836
  %v1875 = vadd.f32 %v1697, %v1841
  %v1876 = vadd.f32 %v1698, %v1846
  %v1877 = vadd.f32 %v1699, %v1851
  %v1878 = vadd.f32 %v1700, %v1856
  %v1879 = vadd.f32 %v1701, %v1861
  %v1880 = vrot.slane %v290, 2
  %v1881 = vrot.slane %v291, 2
  %v1882 = vsel %vm757, %v1880, %v1881
  %v1883 = vrot.slane %v310, 2
  %v1884 = vrot.slane %v311, 2
  %v1885 = vsel %vm757, %v1883, %v1884
  %s1886 = scalar_lea.vmem %s4, 32
  %v1887 = vld [vmem:[%s1886] sm:$0xf]
  %v1888 = vsel %vm59, %v1882, 0
  %v1890 = vsel %vm59, %v1885, 0
  %v1893 = vsel %vm428, %v1887, 0
  %1895 = vmatprep.subr.mxu0 0.0
  %1896 = vmatpush1.msra.mxu0 0.0
  %1897 = vmatprep.subr.mxu0 0.0
  %1898 = vmatpush1.msra.mxu0 0.0
  %1899 = vmatprep.subr.mxu0 0.0
  %1900 = vmatpush1.msra.mxu0 0.0
  %1901 = vmatprep.subr.mxu0 0.0
  %1902 = vmatpush1.msra.mxu0 0.0
  %1903 = vmatprep.subr.mxu0 0.0
  %1904 = vmatpush1.msra.mxu0 0.0
  %1905 = vmatprep.subr.mxu0 0.0
  %1906 = vmatpush1.msra.mxu0 0.0
  %1907 = vmatprep.subr.mxu0 0.0
  %1908 = vmatpush1.msra.mxu0 0.0
  %1909 = vmatprep.subr.mxu0 0.0
  %1910 = vmatpush1.msra.mxu0 0.0
  %1911 = vmatprep.subr.mxu0 0.0
  %1912 = vmatpush1.msra.mxu0 0.0
  %1913 = vmatprep.subr.mxu0 0.0
  %1914 = vmatpush1.msra.mxu0 0.0
  %1915 = vmatprep.subr.mxu0 0.0
  %1916 = vmatpush1.msra.mxu0 0.0
  %1917 = vmatprep.subr.mxu0 0.0
  %1918 = vmatpush1.msra.mxu0 0.0
  %1919 = vmatprep.subr.mxu0 0.0
  %1920 = vmatpush1.msra.mxu0 0.0
  %1921 = vmatprep.subr.mxu0 0.0
  %1922 = vmatpush1.msra.mxu0 0.0
  %1923 = vmatprep.subr.mxu0 0.0
  %1924 = vmatpush1.msra.mxu0 0.0
  %1925 = vmatprep.subr.mxu0 0.0
  %1926 = vmatpush1.msra.mxu0 %v1893
  %1927 = vmatprep.subr.mxu0 0.0
  %1928 = vmatpush2.msra.mxu0 0.0
  %1929 = vmatprep.subr.mxu0 0.0
  %1930 = vmatpush2.msra.mxu0 0.0
  %1931 = vmatprep.subr.mxu0 0.0
  %1932 = vmatpush2.msra.mxu0 0.0
  %1933 = vmatprep.subr.mxu0 0.0
  %1934 = vmatpush2.msra.mxu0 0.0
  %1935 = vmatprep.subr.mxu0 0.0
  %1936 = vmatpush2.msra.mxu0 0.0
  %1937 = vmatprep.subr.mxu0 0.0
  %1938 = vmatpush2.msra.mxu0 0.0
  %1939 = vmatprep.subr.mxu0 0.0
  %1940 = vmatpush2.msra.mxu0 0.0
  %1941 = vmatprep.subr.mxu0 0.0
  %1942 = vmatpush2.msra.mxu0 0.0
  %1943 = vmatprep.subr.mxu0 0.0
  %1944 = vmatpush2.msra.mxu0 0.0
  %1945 = vmatprep.subr.mxu0 0.0
  %1946 = vmatpush2.msra.mxu0 0.0
  %1947 = vmatprep.subr.mxu0 0.0
  %1948 = vmatpush2.msra.mxu0 0.0
  %1949 = vmatprep.subr.mxu0 0.0
  %1950 = vmatpush2.msra.mxu0 0.0
  %1951 = vmatprep.subr.mxu0 0.0
  %1952 = vmatpush2.msra.mxu0 0.0
  %1953 = vmatprep.subr.mxu0 0.0
  %1954 = vmatpush2.msra.mxu0 0.0
  %1955 = vmatprep.subr.mxu0 0.0
  %1956 = vmatpush2.msra.mxu0 0.0
  %1957 = vmatprep.subr.mxu0 0.0
  %1958 = vmatpush2.msra.mxu0 0.0
  %1959 = vmatprep.mubr.f32.mxu0 0.0
  %1960 = vmatmul.mubr.f32.gmra.mxu0 %v812
  %v1961 = vpop.f32.mrf.mxu0
  %v1962 = vadd.f32 0.0, %v1961
  %v1963 = vpop.f32.mrf.mxu0
  %1964 = vmatprep.mubr.f32.mxu0 0.0
  %1965 = vmatmul.mubr.f32.gmra.mxu0 %v814
  %v1966 = vpop.f32.mrf.mxu0
  %v1967 = vadd.f32 0.0, %v1966
  %v1968 = vpop.f32.mrf.mxu0
  %1969 = vmatprep.mubr.f32.mxu0 0.0
  %1970 = vmatmul.mubr.f32.gmra.mxu0 %v816
  %v1971 = vpop.f32.mrf.mxu0
  %v1972 = vadd.f32 0.0, %v1971
  %v1973 = vpop.f32.mrf.mxu0
  %1974 = vmatprep.mubr.f32.mxu0 0.0
  %1975 = vmatmul.mubr.f32.gmra.mxu0 %v818
  %v1976 = vpop.f32.mrf.mxu0
  %v1977 = vadd.f32 0.0, %v1976
  %v1978 = vpop.f32.mrf.mxu0
  %1979 = vmatprep.mubr.f32.mxu0 0.0
  %1980 = vmatmul.mubr.f32.gmra.mxu0 %v820
  %v1981 = vpop.f32.mrf.mxu0
  %v1982 = vadd.f32 0.0, %v1981
  %v1983 = vpop.f32.mrf.mxu0
  %1984 = vmatprep.mubr.f32.mxu0 0.0
  %1985 = vmatmul.mubr.f32.gmra.mxu0 %v822
  %v1986 = vpop.f32.mrf.mxu0
  %v1987 = vadd.f32 0.0, %v1986
  %v1988 = vpop.f32.mrf.mxu0
  %1989 = vmatprep.mubr.f32.mxu0 0.0
  %1990 = vmatmul.mubr.f32.gmra.mxu0 %v1362
  %v1991 = vpop.f32.mrf.mxu0
  %v1992 = vadd.f32 0.0, %v1991
  %v1993 = vpop.f32.mrf.mxu0
  %1994 = vmatprep.mubr.f32.mxu0 0.0
  %1995 = vmatmul.mubr.f32.gmra.mxu0 %v1888
  %v1996 = vpop.f32.mrf.mxu0
  %v1997 = vadd.f32 0.0, %v1996
  %v1998 = vpop.f32.mrf.mxu0
  %1999 = vmatprep.mubr.f32.mxu0 0.0
  %2000 = vmatmul.mubr.f32.gmra.mxu0 %v828
  %v2001 = vpop.f32.mrf.mxu0
  %v2002 = vadd.f32 0.0, %v2001
  %v2003 = vpop.f32.mrf.mxu0
  %2004 = vmatprep.mubr.f32.mxu0 0.0
  %2005 = vmatmul.mubr.f32.gmra.mxu0 %v830
  %v2006 = vpop.f32.mrf.mxu0
  %v2007 = vadd.f32 0.0, %v2006
  %v2008 = vpop.f32.mrf.mxu0
  %2009 = vmatprep.mubr.f32.mxu0 0.0
  %2010 = vmatmul.mubr.f32.gmra.mxu0 %v832
  %v2011 = vpop.f32.mrf.mxu0
  %v2012 = vadd.f32 0.0, %v2011
  %v2013 = vpop.f32.mrf.mxu0
  %2014 = vmatprep.mubr.f32.mxu0 0.0
  %2015 = vmatmul.mubr.f32.gmra.mxu0 %v834
  %v2016 = vpop.f32.mrf.mxu0
  %v2017 = vadd.f32 0.0, %v2016
  %v2018 = vpop.f32.mrf.mxu0
  %2019 = vmatprep.mubr.f32.mxu0 0.0
  %2020 = vmatmul.mubr.f32.gmra.mxu0 %v836
  %v2021 = vpop.f32.mrf.mxu0
  %v2022 = vadd.f32 0.0, %v2021
  %v2023 = vpop.f32.mrf.mxu0
  %2024 = vmatprep.mubr.f32.mxu0 0.0
  %2025 = vmatmul.mubr.f32.gmra.mxu0 %v838
  %v2026 = vpop.f32.mrf.mxu0
  %v2027 = vadd.f32 0.0, %v2026
  %v2028 = vpop.f32.mrf.mxu0
  %2029 = vmatprep.mubr.f32.mxu0 0.0
  %2030 = vmatmul.mubr.f32.gmra.mxu0 %v1364
  %v2031 = vpop.f32.mrf.mxu0
  %v2032 = vadd.f32 0.0, %v2031
  %v2033 = vpop.f32.mrf.mxu0
  %2034 = vmatprep.mubr.f32.mxu0 0.0
  %2035 = vmatmul.mubr.f32.gmra.mxu0 %v1890
  %v2036 = vpop.f32.mrf.mxu0
  %v2037 = vadd.f32 0.0, %v2036
  %v2038 = vpop.f32.mrf.mxu0
  %2039 = vdwg.mxu0
  %v2040 = vadd.f32 %v1864, %v1962
  %v2041 = vadd.f32 %v1865, %v1967
  %v2042 = vadd.f32 %v1866, %v1972
  %v2043 = vadd.f32 %v1867, %v1977
  %v2044 = vadd.f32 %v1868, %v1982
  %v2045 = vadd.f32 %v1869, %v1987
  %v2046 = vadd.f32 %v1870, %v1992
  %v2047 = vadd.f32 %v1871, %v1997
  %v2048 = vadd.f32 %v1872, %v2002
  %v2049 = vadd.f32 %v1873, %v2007
  %v2050 = vadd.f32 %v1874, %v2012
  %v2051 = vadd.f32 %v1875, %v2017
  %v2052 = vadd.f32 %v1876, %v2022
  %v2053 = vadd.f32 %v1877, %v2027
  %v2054 = vadd.f32 %v1878, %v2032
  %v2055 = vadd.f32 %v1879, %v2037
  %v2056 = vsel %vm101, %v2040, 0.0
  %v2057 = vsel %vm101, %v2041, 0.0
  %v2058 = vadd.f32 %v2056, %v2057
  %v2059 = vsel %vm101, %v2042, 0.0
  %v2060 = vadd.f32 %v2058, %v2059
  %v2061 = vsel %vm101, %v2043, 0.0
  %v2062 = vadd.f32 %v2060, %v2061
  %v2063 = vsel %vm101, %v2044, 0.0
  %v2064 = vadd.f32 %v2062, %v2063
  %v2065 = vsel %vm101, %v2045, 0.0
  %v2066 = vadd.f32 %v2064, %v2065
  %v2067 = vsel %vm101, %v2046, 0.0
  %v2068 = vadd.f32 %v2066, %v2067
  %v2069 = vsel %vm101, %v2047, 0.0
  %v2070 = vadd.f32 %v2068, %v2069
  %v2071 = vsel %vm101, %v2048, 0.0
  %v2072 = vadd.f32 %v2070, %v2071
  %v2073 = vsel %vm101, %v2049, 0.0
  %v2074 = vadd.f32 %v2072, %v2073
  %v2075 = vsel %vm101, %v2050, 0.0
  %v2076 = vadd.f32 %v2074, %v2075
  %v2077 = vsel %vm101, %v2051, 0.0
  %v2078 = vadd.f32 %v2076, %v2077
  %v2079 = vsel %vm101, %v2052, 0.0
  %v2080 = vadd.f32 %v2078, %v2079
  %v2081 = vsel %vm101, %v2053, 0.0
  %v2082 = vadd.f32 %v2080, %v2081
  %v2083 = vsel %vm101, %v2054, 0.0
  %v2084 = vadd.f32 %v2082, %v2083
  %v2085 = vsel %vm101, %v2055, 0.0
  %v2086 = vadd.f32 %v2084, %v2085
  %v2087 = vrot.slane %v2086, 4
  %v2088 = vadd.f32 %v2086, %v2087
  %v2089 = vrot.slane %v2088, 2
  %v2090 = vadd.f32 %v2088, %v2089
  %v2091 = vrot.slane %v2090, 1
  %v2092 = vadd.f32 %v2090, %v2091
  %v2093 = vrcp.pop 128.0
  %v2094 = vmul.f32 %v2092, %v2093
  %v2095 = vmul.f32 %v2040, %v2040
  %v2096 = vmul.f32 %v2041, %v2041
  %v2097 = vmul.f32 %v2042, %v2042
  %v2098 = vmul.f32 %v2043, %v2043
  %v2099 = vmul.f32 %v2044, %v2044
  %v2100 = vmul.f32 %v2045, %v2045
  %v2101 = vmul.f32 %v2046, %v2046
  %v2102 = vmul.f32 %v2047, %v2047
  %v2103 = vmul.f32 %v2048, %v2048
  %v2104 = vmul.f32 %v2049, %v2049
  %v2105 = vmul.f32 %v2050, %v2050
  %v2106 = vmul.f32 %v2051, %v2051
  %v2107 = vmul.f32 %v2052, %v2052
  %v2108 = vmul.f32 %v2053, %v2053
  %v2109 = vmul.f32 %v2054, %v2054
  %v2110 = vmul.f32 %v2055, %v2055
  %v2111 = vsel %vm101, %v2095, 0.0
  %v2112 = vsel %vm101, %v2096, 0.0
  %v2113 = vadd.f32 %v2111, %v2112
  %v2114 = vsel %vm101, %v2097, 0.0
  %v2115 = vadd.f32 %v2113, %v2114
  %v2116 = vsel %vm101, %v2098, 0.0
  %v2117 = vadd.f32 %v2115, %v2116
  %v2118 = vsel %vm101, %v2099, 0.0
  %v2119 = vadd.f32 %v2117, %v2118
  %v2120 = vsel %vm101, %v2100, 0.0
  %v2121 = vadd.f32 %v2119, %v2120
  %v2122 = vsel %vm101, %v2101, 0.0
  %v2123 = vadd.f32 %v2121, %v2122
  %v2124 = vsel %vm101, %v2102, 0.0
  %v2125 = vadd.f32 %v2123, %v2124
  %v2126 = vsel %vm101, %v2103, 0.0
  %v2127 = vadd.f32 %v2125, %v2126
  %v2128 = vsel %vm101, %v2104, 0.0
  %v2129 = vadd.f32 %v2127, %v2128
  %v2130 = vsel %vm101, %v2105, 0.0
  %v2131 = vadd.f32 %v2129, %v2130
  %v2132 = vsel %vm101, %v2106, 0.0
  %v2133 = vadd.f32 %v2131, %v2132
  %v2134 = vsel %vm101, %v2107, 0.0
  %v2135 = vadd.f32 %v2133, %v2134
  %v2136 = vsel %vm101, %v2108, 0.0
  %v2137 = vadd.f32 %v2135, %v2136
  %v2138 = vsel %vm101, %v2109, 0.0
  %v2139 = vadd.f32 %v2137, %v2138
  %v2140 = vsel %vm101, %v2110, 0.0
  %v2141 = vadd.f32 %v2139, %v2140
  %v2142 = vrot.slane %v2141, 4
  %v2143 = vadd.f32 %v2141, %v2142
  %v2144 = vrot.slane %v2143, 2
  %v2145 = vadd.f32 %v2143, %v2144
  %v2146 = vrot.slane %v2145, 1
  %v2147 = vadd.f32 %v2145, %v2146
  %v2148 = vmul.f32 %v2147, %v2093
  %v2149 = vmul.f32 %v2094, %v2094
  %v2150 = vsub.f32 %v2148, %v2149
  %v2151 = vmax.f32 %v2150, 0.0
  %v2152 = vsub.f32 %v2040, %v2094
  %v2153 = vsub.f32 %v2041, %v2094
  %v2154 = vsub.f32 %v2042, %v2094
  %v2155 = vsub.f32 %v2043, %v2094
  %v2156 = vsub.f32 %v2044, %v2094
  %v2157 = vsub.f32 %v2045, %v2094
  %v2158 = vsub.f32 %v2046, %v2094
  %v2159 = vsub.f32 %v2047, %v2094
  %v2160 = vsub.f32 %v2048, %v2094
  %v2161 = vsub.f32 %v2049, %v2094
  %v2162 = vsub.f32 %v2050, %v2094
  %v2163 = vsub.f32 %v2051, %v2094
  %v2164 = vsub.f32 %v2052, %v2094
  %v2165 = vsub.f32 %v2053, %v2094
  %v2166 = vsub.f32 %v2054, %v2094
  %v2167 = vsub.f32 %v2055, %v2094
  %v2168 = vadd.f32 %v2151, 1e-05
  %v2169 = vrsqrt.pop %v2168
  %v2170 = vmul.f32 %v2152, %v2169
  %v2171 = vmul.f32 %v2153, %v2169
  %v2172 = vmul.f32 %v2154, %v2169
  %v2173 = vmul.f32 %v2155, %v2169
  %v2174 = vmul.f32 %v2156, %v2169
  %v2175 = vmul.f32 %v2157, %v2169
  %v2176 = vmul.f32 %v2158, %v2169
  %v2177 = vmul.f32 %v2159, %v2169
  %v2178 = vmul.f32 %v2160, %v2169
  %v2179 = vmul.f32 %v2161, %v2169
  %v2180 = vmul.f32 %v2162, %v2169
  %v2181 = vmul.f32 %v2163, %v2169
  %v2182 = vmul.f32 %v2164, %v2169
  %v2183 = vmul.f32 %v2165, %v2169
  %v2184 = vmul.f32 %v2166, %v2169
  %v2185 = vmul.f32 %v2167, %v2169
  %v2186 = vld [vmem:[%s5] sm:$0x1]
  %v2188 = vlaneseq
  %v2189 = vshrl.u32 %v2188, 7
  %v2190 = vsub.s32 0, %v2189
  %v2191 = vrot.slane %v2186, %v2190
  %v2193 = vmul.f32 %v2170, %v2191
  %v2194 = vmul.f32 %v2171, %v2191
  %v2195 = vmul.f32 %v2172, %v2191
  %v2196 = vmul.f32 %v2173, %v2191
  %v2197 = vmul.f32 %v2174, %v2191
  %v2198 = vmul.f32 %v2175, %v2191
  %v2199 = vmul.f32 %v2176, %v2191
  %v2200 = vmul.f32 %v2177, %v2191
  %v2201 = vmul.f32 %v2178, %v2191
  %v2202 = vmul.f32 %v2179, %v2191
  %v2203 = vmul.f32 %v2180, %v2191
  %v2204 = vmul.f32 %v2181, %v2191
  %v2205 = vmul.f32 %v2182, %v2191
  %v2206 = vmul.f32 %v2183, %v2191
  %v2207 = vmul.f32 %v2184, %v2191
  %v2208 = vmul.f32 %v2185, %v2191
  %v2209 = vld [vmem:[%s6] sm:$0x1]
  %v2211 = vlaneseq
  %v2212 = vshrl.u32 %v2211, 7
  %v2213 = vsub.s32 0, %v2212
  %v2214 = vrot.slane %v2209, %v2213
  %v2216 = vadd.f32 %v2193, %v2214
  %v2217 = vadd.f32 %v2194, %v2214
  %v2218 = vadd.f32 %v2195, %v2214
  %v2219 = vadd.f32 %v2196, %v2214
  %v2220 = vadd.f32 %v2197, %v2214
  %v2221 = vadd.f32 %v2198, %v2214
  %v2222 = vadd.f32 %v2199, %v2214
  %v2223 = vadd.f32 %v2200, %v2214
  %v2224 = vadd.f32 %v2201, %v2214
  %v2225 = vadd.f32 %v2202, %v2214
  %v2226 = vadd.f32 %v2203, %v2214
  %v2227 = vadd.f32 %v2204, %v2214
  %v2228 = vadd.f32 %v2205, %v2214
  %v2229 = vadd.f32 %v2206, %v2214
  %v2230 = vadd.f32 %v2207, %v2214
  %v2231 = vadd.f32 %v2208, %v2214
  %v2232 = vmul.f32 %v2216, 0.01
  %v2233 = vmul.f32 %v2217, 0.01
  %v2234 = vmul.f32 %v2218, 0.01
  %v2235 = vmul.f32 %v2219, 0.01
  %v2236 = vmul.f32 %v2220, 0.01
  %v2237 = vmul.f32 %v2221, 0.01
  %v2238 = vmul.f32 %v2222, 0.01
  %v2239 = vmul.f32 %v2223, 0.01
  %v2240 = vmul.f32 %v2224, 0.01
  %v2241 = vmul.f32 %v2225, 0.01
  %v2242 = vmul.f32 %v2226, 0.01
  %v2243 = vmul.f32 %v2227, 0.01
  %v2244 = vmul.f32 %v2228, 0.01
  %v2245 = vmul.f32 %v2229, 0.01
  %v2246 = vmul.f32 %v2230, 0.01
  %v2247 = vmul.f32 %v2231, 0.01
  %v2248 = vmax.f32 %v2216, %v2232
  %v2249 = vmax.f32 %v2217, %v2233
  %v2250 = vmax.f32 %v2218, %v2234
  %v2251 = vmax.f32 %v2219, %v2235
  %v2252 = vmax.f32 %v2220, %v2236
  %v2253 = vmax.f32 %v2221, %v2237
  %v2254 = vmax.f32 %v2222, %v2238
  %v2255 = vmax.f32 %v2223, %v2239
  %v2256 = vmax.f32 %v2224, %v2240
  %v2257 = vmax.f32 %v2225, %v2241
  %v2258 = vmax.f32 %v2226, %v2242
  %v2259 = vmax.f32 %v2227, %v2243
  %v2260 = vmax.f32 %v2228, %v2244
  %v2261 = vmax.f32 %v2229, %v2245
  %v2262 = vmax.f32 %v2230, %v2246
  %v2263 = vmax.f32 %v2231, %v2247
  %s2264 = scalar_lea.vmem [#allocation3], 16
  %2265 = vst.msk [vmem:[%s2264 + $0x1] sm:$0xff] %vm101, %v2248
  %2266 = vst.msk [vmem:[%s2264 + $0x11] sm:$0xff] %vm101, %v2249
  %2267 = vst.msk [vmem:[%s2264 + $0x21] sm:$0xff] %vm101, %v2250
  %2268 = vst.msk [vmem:[%s2264 + $0x31] sm:$0xff] %vm101, %v2251
  %2269 = vst.msk [vmem:[%s2264 + $0x41] sm:$0xff] %vm101, %v2252
  %2270 = vst.msk [vmem:[%s2264 + $0x51] sm:$0xff] %vm101, %v2253
  %2271 = vst.msk [vmem:[%s2264 + $0x61] sm:$0xff] %vm101, %v2254
  %2272 = vst.msk [vmem:[%s2264 + $0x71] sm:$0xff] %vm101, %v2255
  %2273 = vst.msk [vmem:[%s2264 + $0xa1] sm:$0xff] %vm101, %v2256
  %2274 = vst.msk [vmem:[%s2264 + $0xb1] sm:$0xff] %vm101, %v2257
  %2275 = vst.msk [vmem:[%s2264 + $0xc1] sm:$0xff] %vm101, %v2258
  %2276 = vst.msk [vmem:[%s2264 + $0xd1] sm:$0xff] %vm101, %v2259
  %2277 = vst.msk [vmem:[%s2264 + $0xe1] sm:$0xff] %vm101, %v2260
  %2278 = vst.msk [vmem:[%s2264 + $0xf1] sm:$0xff] %vm101, %v2261
  %2279 = vst.msk [vmem:[%s2264 + $0x101] sm:$0xff] %vm101, %v2262
  %2280 = vst.msk [vmem:[%s2264 + $0x111] sm:$0xff] %vm101, %v2263
  %v2281 = vld [vmem:[#allocation3] sm:$0xff]
  %v2282 = vld [vmem:[#allocation3 + $0x8] sm:$0x3]
  %v2283 = vld [vmem:[#allocation3 + $0x10] sm:$0xff]
  %v2284 = vld [vmem:[#allocation3 + $0x18] sm:$0x3]
  %v2285 = vld [vmem:[#allocation3 + $0x20] sm:$0xff]
  %v2286 = vld [vmem:[#allocation3 + $0x28] sm:$0x3]
  %v2287 = vld [vmem:[#allocation3 + $0x30] sm:$0xff]
  %v2288 = vld [vmem:[#allocation3 + $0x38] sm:$0x3]
  %v2289 = vld [vmem:[#allocation3 + $0x40] sm:$0xff]
  %v2290 = vld [vmem:[#allocation3 + $0x48] sm:$0x3]
  %v2291 = vld [vmem:[#allocation3 + $0x50] sm:$0xff]
  %v2292 = vld [vmem:[#allocation3 + $0x58] sm:$0x3]
  %v2293 = vld [vmem:[#allocation3 + $0x60] sm:$0xff]
  %v2294 = vld [vmem:[#allocation3 + $0x68] sm:$0x3]
  %v2295 = vld [vmem:[#allocation3 + $0x70] sm:$0xff]
  %v2296 = vld [vmem:[#allocation3 + $0x78] sm:$0x3]
  %v2297 = vld [vmem:[#allocation3 + $0x80] sm:$0xff]
  %v2298 = vld [vmem:[#allocation3 + $0x88] sm:$0x3]
  %v2299 = vld [vmem:[#allocation3 + $0x90] sm:$0xff]
  %v2300 = vld [vmem:[#allocation3 + $0x98] sm:$0x3]
  %v2301 = vld [vmem:[#allocation3 + $0xa0] sm:$0xff]
  %v2302 = vld [vmem:[#allocation3 + $0xa8] sm:$0x3]
  %v2303 = vld [vmem:[#allocation3 + $0xb0] sm:$0xff]
  %v2304 = vld [vmem:[#allocation3 + $0xb8] sm:$0x3]
  %v2305 = vld [vmem:[#allocation3 + $0xc0] sm:$0xff]
  %v2306 = vld [vmem:[#allocation3 + $0xc8] sm:$0x3]
  %v2307 = vld [vmem:[#allocation3 + $0xd0] sm:$0xff]
  %v2308 = vld [vmem:[#allocation3 + $0xd8] sm:$0x3]
  %v2309 = vld [vmem:[#allocation3 + $0xe0] sm:$0xff]
  %v2310 = vld [vmem:[#allocation3 + $0xe8] sm:$0x3]
  %v2311 = vld [vmem:[#allocation3 + $0xf0] sm:$0xff]
  %v2312 = vld [vmem:[#allocation3 + $0xf8] sm:$0x3]
  %v2313 = vld [vmem:[#allocation3 + $0x100] sm:$0xff]
  %v2314 = vld [vmem:[#allocation3 + $0x108] sm:$0x3]
  %v2315 = vld [vmem:[#allocation3 + $0x110] sm:$0xff]
  %v2316 = vld [vmem:[#allocation3 + $0x118] sm:$0x3]
  %v2317 = vld [vmem:[#allocation3 + $0x120] sm:$0xff]
  %v2318 = vld [vmem:[#allocation3 + $0x128] sm:$0x3]
  %v2319 = vld [vmem:[#allocation3 + $0x130] sm:$0xff]
  %v2320 = vld [vmem:[#allocation3 + $0x138] sm:$0x3]
  %v2321 = vld [vmem:[%s7] sm:$0xff]
  %v2354 = vrot.slane %v2281, 1
  %v2355 = vrot.slane %v2282, 1
  %v2356 = vsel %vm345, %v2354, %v2355
  %v2357 = vrot.slane %v2283, 1
  %v2358 = vrot.slane %v2284, 1
  %v2359 = vsel %vm345, %v2357, %v2358
  %v2360 = vrot.slane %v2285, 1
  %v2361 = vrot.slane %v2286, 1
  %v2362 = vsel %vm345, %v2360, %v2361
  %v2363 = vrot.slane %v2287, 1
  %v2364 = vrot.slane %v2288, 1
  %v2365 = vsel %vm345, %v2363, %v2364
  %v2366 = vrot.slane %v2289, 1
  %v2367 = vrot.slane %v2290, 1
  %v2368 = vsel %vm345, %v2366, %v2367
  %v2369 = vrot.slane %v2291, 1
  %v2370 = vrot.slane %v2292, 1
  %v2371 = vsel %vm345, %v2369, %v2370
  %v2372 = vrot.slane %v2293, 1
  %v2373 = vrot.slane %v2294, 1
  %v2374 = vsel %vm345, %v2372, %v2373
  %v2375 = vrot.slane %v2295, 1
  %v2376 = vrot.slane %v2296, 1
  %v2377 = vsel %vm345, %v2375, %v2376
  %v2378 = vrot.slane %v2301, 1
  %v2379 = vrot.slane %v2302, 1
  %v2380 = vsel %vm345, %v2378, %v2379
  %v2381 = vrot.slane %v2303, 1
  %v2382 = vrot.slane %v2304, 1
  %v2383 = vsel %vm345, %v2381, %v2382
  %v2384 = vrot.slane %v2305, 1
  %v2385 = vrot.slane %v2306, 1
  %v2386 = vsel %vm345, %v2384, %v2385
  %v2387 = vrot.slane %v2307, 1
  %v2388 = vrot.slane %v2308, 1
  %v2389 = vsel %vm345, %v2387, %v2388
  %v2390 = vrot.slane %v2309, 1
  %v2391 = vrot.slane %v2310, 1
  %v2392 = vsel %vm345, %v2390, %v2391
  %v2393 = vrot.slane %v2311, 1
  %v2394 = vrot.slane %v2312, 1
  %v2395 = vsel %vm345, %v2393, %v2394
  %v2396 = vrot.slane %v2313, 1
  %v2397 = vrot.slane %v2314, 1
  %v2398 = vsel %vm345, %v2396, %v2397
  %v2399 = vrot.slane %v2315, 1
  %v2400 = vrot.slane %v2316, 1
  %v2401 = vsel %vm345, %v2399, %v2400
  %s2402 = scalar_lea.vmem %s7, 8
  %v2403 = vld [vmem:[%s2402] sm:$0xff]
  %v2404 = vsel %vm101, %v2356, 0
  %v2406 = vsel %vm101, %v2359, 0
  %v2408 = vsel %vm101, %v2362, 0
  %v2410 = vsel %vm101, %v2365, 0
  %v2412 = vsel %vm101, %v2368, 0
  %v2414 = vsel %vm101, %v2371, 0
  %v2416 = vsel %vm101, %v2374, 0
  %v2418 = vsel %vm101, %v2377, 0
  %v2420 = vsel %vm101, %v2380, 0
  %v2422 = vsel %vm101, %v2383, 0
  %v2424 = vsel %vm101, %v2386, 0
  %v2426 = vsel %vm101, %v2389, 0
  %v2428 = vsel %vm101, %v2392, 0
  %v2430 = vsel %vm101, %v2395, 0
  %v2432 = vsel %vm101, %v2398, 0
  %v2434 = vsel %vm101, %v2401, 0
  %2436 = vmatprep.subr.mxu0 0.0
  %2437 = vmatpush1.msra.mxu0 0.0
  %2438 = vmatprep.subr.mxu0 0.0
  %2439 = vmatpush1.msra.mxu0 0.0
  %2440 = vmatprep.subr.mxu0 0.0
  %2441 = vmatpush1.msra.mxu0 0.0
  %2442 = vmatprep.subr.mxu0 0.0
  %2443 = vmatpush1.msra.mxu0 0.0
  %2444 = vmatprep.subr.mxu0 0.0
  %2445 = vmatpush1.msra.mxu0 0.0
  %2446 = vmatprep.subr.mxu0 0.0
  %2447 = vmatpush1.msra.mxu0 0.0
  %2448 = vmatprep.subr.mxu0 0.0
  %2449 = vmatpush1.msra.mxu0 0.0
  %2450 = vmatprep.subr.mxu0 0.0
  %2451 = vmatpush1.msra.mxu0 0.0
  %2452 = vmatprep.subr.mxu0 0.0
  %2453 = vmatpush1.msra.mxu0 0.0
  %2454 = vmatprep.subr.mxu0 0.0
  %2455 = vmatpush1.msra.mxu0 0.0
  %2456 = vmatprep.subr.mxu0 0.0
  %2457 = vmatpush1.msra.mxu0 0.0
  %2458 = vmatprep.subr.mxu0 0.0
  %2459 = vmatpush1.msra.mxu0 0.0
  %2460 = vmatprep.subr.mxu0 0.0
  %2461 = vmatpush1.msra.mxu0 0.0
  %2462 = vmatprep.subr.mxu0 0.0
  %2463 = vmatpush1.msra.mxu0 0.0
  %2464 = vmatprep.subr.mxu0 0.0
  %2465 = vmatpush1.msra.mxu0 0.0
  %2466 = vmatprep.subr.mxu0 0.0
  %2467 = vmatpush1.msra.mxu0 %v2403
  %2468 = vmatprep.subr.mxu0 0.0
  %2469 = vmatpush2.msra.mxu0 0.0
  %2470 = vmatprep.subr.mxu0 0.0
  %2471 = vmatpush2.msra.mxu0 0.0
  %2472 = vmatprep.subr.mxu0 0.0
  %2473 = vmatpush2.msra.mxu0 0.0
  %2474 = vmatprep.subr.mxu0 0.0
  %2475 = vmatpush2.msra.mxu0 0.0
  %2476 = vmatprep.subr.mxu0 0.0
  %2477 = vmatpush2.msra.mxu0 0.0
  %2478 = vmatprep.subr.mxu0 0.0
  %2479 = vmatpush2.msra.mxu0 0.0
  %2480 = vmatprep.subr.mxu0 0.0
  %2481 = vmatpush2.msra.mxu0 0.0
  %2482 = vmatprep.subr.mxu0 0.0
  %2483 = vmatpush2.msra.mxu0 0.0
  %2484 = vmatprep.subr.mxu0 0.0
  %2485 = vmatpush2.msra.mxu0 0.0
  %2486 = vmatprep.subr.mxu0 0.0
  %2487 = vmatpush2.msra.mxu0 0.0
  %2488 = vmatprep.subr.mxu0 0.0
  %2489 = vmatpush2.msra.mxu0 0.0
  %2490 = vmatprep.subr.mxu0 0.0
  %2491 = vmatpush2.msra.mxu0 0.0
  %2492 = vmatprep.subr.mxu0 0.0
  %2493 = vmatpush2.msra.mxu0 0.0
  %2494 = vmatprep.subr.mxu0 0.0
  %2495 = vmatpush2.msra.mxu0 0.0
  %2496 = vmatprep.subr.mxu0 0.0
  %2497 = vmatpush2.msra.mxu0 0.0
  %2498 = vmatprep.subr.mxu0 0.0
  %2499 = vmatpush2.msra.mxu0 0.0
  %2500 = vmatprep.mubr.f32.mxu0 0.0
  %2501 = vmatmul.mubr.f32.gmra.mxu0 %v2404
  %v2502 = vpop.f32.mrf.mxu0
  %v2503 = vadd.f32 0.0, %v2502
  %v2504 = vpop.f32.mrf.mxu0
  %2505 = vmatprep.mubr.f32.mxu0 0.0
  %2506 = vmatmul.mubr.f32.gmra.mxu0 %v2406
  %v2507 = vpop.f32.mrf.mxu0
  %v2508 = vadd.f32 0.0, %v2507
  %v2509 = vpop.f32.mrf.mxu0
  %2510 = vmatprep.mubr.f32.mxu0 0.0
  %2511 = vmatmul.mubr.f32.gmra.mxu0 %v2408
  %v2512 = vpop.f32.mrf.mxu0
  %v2513 = vadd.f32 0.0, %v2512
  %v2514 = vpop.f32.mrf.mxu0
  %2515 = vmatprep.mubr.f32.mxu0 0.0
  %2516 = vmatmul.mubr.f32.gmra.mxu0 %v2410
  %v2517 = vpop.f32.mrf.mxu0
  %v2518 = vadd.f32 0.0, %v2517
  %v2519 = vpop.f32.mrf.mxu0
  %2520 = vmatprep.mubr.f32.mxu0 0.0
  %2521 = vmatmul.mubr.f32.gmra.mxu0 %v2412
  %v2522 = vpop.f32.mrf.mxu0
  %v2523 = vadd.f32 0.0, %v2522
  %v2524 = vpop.f32.mrf.mxu0
  %2525 = vmatprep.mubr.f32.mxu0 0.0
  %2526 = vmatmul.mubr.f32.gmra.mxu0 %v2414
  %v2527 = vpop.f32.mrf.mxu0
  %v2528 = vadd.f32 0.0, %v2527
  %v2529 = vpop.f32.mrf.mxu0
  %2530 = vmatprep.mubr.f32.mxu0 0.0
  %2531 = vmatmul.mubr.f32.gmra.mxu0 %v2416
  %v2532 = vpop.f32.mrf.mxu0
  %v2533 = vadd.f32 0.0, %v2532
  %v2534 = vpop.f32.mrf.mxu0
  %2535 = vmatprep.mubr.f32.mxu0 0.0
  %2536 = vmatmul.mubr.f32.gmra.mxu0 %v2418
  %v2537 = vpop.f32.mrf.mxu0
  %v2538 = vadd.f32 0.0, %v2537
  %v2539 = vpop.f32.mrf.mxu0
  %2540 = vmatprep.mubr.f32.mxu0 0.0
  %2541 = vmatmul.mubr.f32.gmra.mxu0 %v2420
  %v2542 = vpop.f32.mrf.mxu0
  %v2543 = vadd.f32 0.0, %v2542
  %v2544 = vpop.f32.mrf.mxu0
  %2545 = vmatprep.mubr.f32.mxu0 0.0
  %2546 = vmatmul.mubr.f32.gmra.mxu0 %v2422
  %v2547 = vpop.f32.mrf.mxu0
  %v2548 = vadd.f32 0.0, %v2547
  %v2549 = vpop.f32.mrf.mxu0
  %2550 = vmatprep.mubr.f32.mxu0 0.0
  %2551 = vmatmul.mubr.f32.gmra.mxu0 %v2424
  %v2552 = vpop.f32.mrf.mxu0
  %v2553 = vadd.f32 0.0, %v2552
  %v2554 = vpop.f32.mrf.mxu0
  %2555 = vmatprep.mubr.f32.mxu0 0.0
  %2556 = vmatmul.mubr.f32.gmra.mxu0 %v2426
  %v2557 = vpop.f32.mrf.mxu0
  %v2558 = vadd.f32 0.0, %v2557
  %v2559 = vpop.f32.mrf.mxu0
  %2560 = vmatprep.mubr.f32.mxu0 0.0
  %2561 = vmatmul.mubr.f32.gmra.mxu0 %v2428
  %v2562 = vpop.f32.mrf.mxu0
  %v2563 = vadd.f32 0.0, %v2562
  %v2564 = vpop.f32.mrf.mxu0
  %2565 = vmatprep.mubr.f32.mxu0 0.0
  %2566 = vmatmul.mubr.f32.gmra.mxu0 %v2430
  %v2567 = vpop.f32.mrf.mxu0
  %v2568 = vadd.f32 0.0, %v2567
  %v2569 = vpop.f32.mrf.mxu0
  %2570 = vmatprep.mubr.f32.mxu0 0.0
  %2571 = vmatmul.mubr.f32.gmra.mxu0 %v2432
  %v2572 = vpop.f32.mrf.mxu0
  %v2573 = vadd.f32 0.0, %v2572
  %v2574 = vpop.f32.mrf.mxu0
  %2575 = vmatprep.mubr.f32.mxu0 0.0
  %2576 = vmatmul.mubr.f32.gmra.mxu0 %v2434
  %v2577 = vpop.f32.mrf.mxu0
  %v2578 = vadd.f32 0.0, %v2577
  %v2579 = vpop.f32.mrf.mxu0
  %2580 = vdwg.mxu0
  %v2581 = vsel %vm101, %v2281, 0
  %v2583 = vsel %vm101, %v2283, 0
  %v2585 = vsel %vm101, %v2285, 0
  %v2587 = vsel %vm101, %v2287, 0
  %v2589 = vsel %vm101, %v2289, 0
  %v2591 = vsel %vm101, %v2291, 0
  %v2593 = vsel %vm101, %v2293, 0
  %v2595 = vsel %vm101, %v2295, 0
  %v2597 = vsel %vm101, %v2301, 0
  %v2599 = vsel %vm101, %v2303, 0
  %v2601 = vsel %vm101, %v2305, 0
  %v2603 = vsel %vm101, %v2307, 0
  %v2605 = vsel %vm101, %v2309, 0
  %v2607 = vsel %vm101, %v2311, 0
  %v2609 = vsel %vm101, %v2313, 0
  %v2611 = vsel %vm101, %v2315, 0
  %2613 = vmatprep.subr.mxu0 0.0
  %2614 = vmatpush1.msra.mxu0 0.0
  %2615 = vmatprep.subr.mxu0 0.0
  %2616 = vmatpush1.msra.mxu0 0.0
  %2617 = vmatprep.subr.mxu0 0.0
  %2618 = vmatpush1.msra.mxu0 0.0
  %2619 = vmatprep.subr.mxu0 0.0
  %2620 = vmatpush1.msra.mxu0 0.0
  %2621 = vmatprep.subr.mxu0 0.0
  %2622 = vmatpush1.msra.mxu0 0.0
  %2623 = vmatprep.subr.mxu0 0.0
  %2624 = vmatpush1.msra.mxu0 0.0
  %2625 = vmatprep.subr.mxu0 0.0
  %2626 = vmatpush1.msra.mxu0 0.0
  %2627 = vmatprep.subr.mxu0 0.0
  %2628 = vmatpush1.msra.mxu0 0.0
  %2629 = vmatprep.subr.mxu0 0.0
  %2630 = vmatpush1.msra.mxu0 0.0
  %2631 = vmatprep.subr.mxu0 0.0
  %2632 = vmatpush1.msra.mxu0 0.0
  %2633 = vmatprep.subr.mxu0 0.0
  %2634 = vmatpush1.msra.mxu0 0.0
  %2635 = vmatprep.subr.mxu0 0.0
  %2636 = vmatpush1.msra.mxu0 0.0
  %2637 = vmatprep.subr.mxu0 0.0
  %2638 = vmatpush1.msra.mxu0 0.0
  %2639 = vmatprep.subr.mxu0 0.0
  %2640 = vmatpush1.msra.mxu0 0.0
  %2641 = vmatprep.subr.mxu0 0.0
  %2642 = vmatpush1.msra.mxu0 0.0
  %2643 = vmatprep.subr.mxu0 0.0
  %2644 = vmatpush1.msra.mxu0 %v2321
  %2645 = vmatprep.subr.mxu0 0.0
  %2646 = vmatpush2.msra.mxu0 0.0
  %2647 = vmatprep.subr.mxu0 0.0
  %2648 = vmatpush2.msra.mxu0 0.0
  %2649 = vmatprep.subr.mxu0 0.0
  %2650 = vmatpush2.msra.mxu0 0.0
  %2651 = vmatprep.subr.mxu0 0.0
  %2652 = vmatpush2.msra.mxu0 0.0
  %2653 = vmatprep.subr.mxu0 0.0
  %2654 = vmatpush2.msra.mxu0 0.0
  %2655 = vmatprep.subr.mxu0 0.0
  %2656 = vmatpush2.msra.mxu0 0.0
  %2657 = vmatprep.subr.mxu0 0.0
  %2658 = vmatpush2.msra.mxu0 0.0
  %2659 = vmatprep.subr.mxu0 0.0
  %2660 = vmatpush2.msra.mxu0 0.0
  %2661 = vmatprep.subr.mxu0 0.0
  %2662 = vmatpush2.msra.mxu0 0.0
  %2663 = vmatprep.subr.mxu0 0.0
  %2664 = vmatpush2.msra.mxu0 0.0
  %2665 = vmatprep.subr.mxu0 0.0
  %2666 = vmatpush2.msra.mxu0 0.0
  %2667 = vmatprep.subr.mxu0 0.0
  %2668 = vmatpush2.msra.mxu0 0.0
  %2669 = vmatprep.subr.mxu0 0.0
  %2670 = vmatpush2.msra.mxu0 0.0
  %2671 = vmatprep.subr.mxu0 0.0
  %2672 = vmatpush2.msra.mxu0 0.0
  %2673 = vmatprep.subr.mxu0 0.0
  %2674 = vmatpush2.msra.mxu0 0.0
  %2675 = vmatprep.subr.mxu0 0.0
  %2676 = vmatpush2.msra.mxu0 0.0
  %2677 = vmatprep.mubr.f32.mxu0 0.0
  %2678 = vmatmul.mubr.f32.gmra.mxu0 %v2581
  %v2679 = vpop.f32.mrf.mxu0
  %v2680 = vadd.f32 %v2503, %v2679
  %v2681 = vpop.f32.mrf.mxu0
  %2682 = vmatprep.mubr.f32.mxu0 0.0
  %2683 = vmatmul.mubr.f32.gmra.mxu0 %v2583
  %v2684 = vpop.f32.mrf.mxu0
  %v2685 = vadd.f32 %v2508, %v2684
  %v2686 = vpop.f32.mrf.mxu0
  %2687 = vmatprep.mubr.f32.mxu0 0.0
  %2688 = vmatmul.mubr.f32.gmra.mxu0 %v2585
  %v2689 = vpop.f32.mrf.mxu0
  %v2690 = vadd.f32 %v2513, %v2689
  %v2691 = vpop.f32.mrf.mxu0
  %2692 = vmatprep.mubr.f32.mxu0 0.0
  %2693 = vmatmul.mubr.f32.gmra.mxu0 %v2587
  %v2694 = vpop.f32.mrf.mxu0
  %v2695 = vadd.f32 %v2518, %v2694
  %v2696 = vpop.f32.mrf.mxu0
  %2697 = vmatprep.mubr.f32.mxu0 0.0
  %2698 = vmatmul.mubr.f32.gmra.mxu0 %v2589
  %v2699 = vpop.f32.mrf.mxu0
  %v2700 = vadd.f32 %v2523, %v2699
  %v2701 = vpop.f32.mrf.mxu0
  %2702 = vmatprep.mubr.f32.mxu0 0.0
  %2703 = vmatmul.mubr.f32.gmra.mxu0 %v2591
  %v2704 = vpop.f32.mrf.mxu0
  %v2705 = vadd.f32 %v2528, %v2704
  %v2706 = vpop.f32.mrf.mxu0
  %2707 = vmatprep.mubr.f32.mxu0 0.0
  %2708 = vmatmul.mubr.f32.gmra.mxu0 %v2593
  %v2709 = vpop.f32.mrf.mxu0
  %v2710 = vadd.f32 %v2533, %v2709
  %v2711 = vpop.f32.mrf.mxu0
  %2712 = vmatprep.mubr.f32.mxu0 0.0
  %2713 = vmatmul.mubr.f32.gmra.mxu0 %v2595
  %v2714 = vpop.f32.mrf.mxu0
  %v2715 = vadd.f32 %v2538, %v2714
  %v2716 = vpop.f32.mrf.mxu0
  %2717 = vmatprep.mubr.f32.mxu0 0.0
  %2718 = vmatmul.mubr.f32.gmra.mxu0 %v2597
  %v2719 = vpop.f32.mrf.mxu0
  %v2720 = vadd.f32 %v2543, %v2719
  %v2721 = vpop.f32.mrf.mxu0
  %2722 = vmatprep.mubr.f32.mxu0 0.0
  %2723 = vmatmul.mubr.f32.gmra.mxu0 %v2599
  %v2724 = vpop.f32.mrf.mxu0
  %v2725 = vadd.f32 %v2548, %v2724
  %v2726 = vpop.f32.mrf.mxu0
  %2727 = vmatprep.mubr.f32.mxu0 0.0
  %2728 = vmatmul.mubr.f32.gmra.mxu0 %v2601
  %v2729 = vpop.f32.mrf.mxu0
  %v2730 = vadd.f32 %v2553, %v2729
  %v2731 = vpop.f32.mrf.mxu0
  %2732 = vmatprep.mubr.f32.mxu0 0.0
  %2733 = vmatmul.mubr.f32.gmra.mxu0 %v2603
  %v2734 = vpop.f32.mrf.mxu0
  %v2735 = vadd.f32 %v2558, %v2734
  %v2736 = vpop.f32.mrf.mxu0
  %2737 = vmatprep.mubr.f32.mxu0 0.0
  %2738 = vmatmul.mubr.f32.gmra.mxu0 %v2605
  %v2739 = vpop.f32.mrf.mxu0
  %v2740 = vadd.f32 %v2563, %v2739
  %v2741 = vpop.f32.mrf.mxu0
  %2742 = vmatprep.mubr.f32.mxu0 0.0
  %2743 = vmatmul.mubr.f32.gmra.mxu0 %v2607
  %v2744 = vpop.f32.mrf.mxu0
  %v2745 = vadd.f32 %v2568, %v2744
  %v2746 = vpop.f32.mrf.mxu0
  %2747 = vmatprep.mubr.f32.mxu0 0.0
  %2748 = vmatmul.mubr.f32.gmra.mxu0 %v2609
  %v2749 = vpop.f32.mrf.mxu0
  %v2750 = vadd.f32 %v2573, %v2749
  %v2751 = vpop.f32.mrf.mxu0
  %2752 = vmatprep.mubr.f32.mxu0 0.0
  %2753 = vmatmul.mubr.f32.gmra.mxu0 %v2611
  %v2754 = vpop.f32.mrf.mxu0
  %v2755 = vadd.f32 %v2578, %v2754
  %v2756 = vpop.f32.mrf.mxu0
  %2757 = vdwg.mxu0
  %v2758 = vrot.slane %v2281, 2
  %v2759 = vrot.slane %v2282, 2
  %v2760 = vsel %vm757, %v2758, %v2759
  %v2761 = vrot.slane %v2283, 2
  %v2762 = vrot.slane %v2284, 2
  %v2763 = vsel %vm757, %v2761, %v2762
  %v2764 = vrot.slane %v2285, 2
  %v2765 = vrot.slane %v2286, 2
  %v2766 = vsel %vm757, %v2764, %v2765
  %v2767 = vrot.slane %v2287, 2
  %v2768 = vrot.slane %v2288, 2
  %v2769 = vsel %vm757, %v2767, %v2768
  %v2770 = vrot.slane %v2289, 2
  %v2771 = vrot.slane %v2290, 2
  %v2772 = vsel %vm757, %v2770, %v2771
  %v2773 = vrot.slane %v2291, 2
  %v2774 = vrot.slane %v2292, 2
  %v2775 = vsel %vm757, %v2773, %v2774
  %v2776 = vrot.slane %v2293, 2
  %v2777 = vrot.slane %v2294, 2
  %v2778 = vsel %vm757, %v2776, %v2777
  %v2779 = vrot.slane %v2295, 2
  %v2780 = vrot.slane %v2296, 2
  %v2781 = vsel %vm757, %v2779, %v2780
  %v2782 = vrot.slane %v2301, 2
  %v2783 = vrot.slane %v2302, 2
  %v2784 = vsel %vm757, %v2782, %v2783
  %v2785 = vrot.slane %v2303, 2
  %v2786 = vrot.slane %v2304, 2
  %v2787 = vsel %vm757, %v2785, %v2786
  %v2788 = vrot.slane %v2305, 2
  %v2789 = vrot.slane %v2306, 2
  %v2790 = vsel %vm757, %v2788, %v2789
  %v2791 = vrot.slane %v2307, 2
  %v2792 = vrot.slane %v2308, 2
  %v2793 = vsel %vm757, %v2791, %v2792
  %v2794 = vrot.slane %v2309, 2
  %v2795 = vrot.slane %v2310, 2
  %v2796 = vsel %vm757, %v2794, %v2795
  %v2797 = vrot.slane %v2311, 2
  %v2798 = vrot.slane %v2312, 2
  %v2799 = vsel %vm757, %v2797, %v2798
  %v2800 = vrot.slane %v2313, 2
  %v2801 = vrot.slane %v2314, 2
  %v2802 = vsel %vm757, %v2800, %v2801
  %v2803 = vrot.slane %v2315, 2
  %v2804 = vrot.slane %v2316, 2
  %v2805 = vsel %vm757, %v2803, %v2804
  %s2806 = scalar_lea.vmem %s7, 16
  %v2807 = vld [vmem:[%s2806] sm:$0xff]
  %v2808 = vsel %vm101, %v2760, 0
  %v2810 = vsel %vm101, %v2763, 0
  %v2812 = vsel %vm101, %v2766, 0
  %v2814 = vsel %vm101, %v2769, 0
  %v2816 = vsel %vm101, %v2772, 0
  %v2818 = vsel %vm101, %v2775, 0
  %v2820 = vsel %vm101, %v2778, 0
  %v2822 = vsel %vm101, %v2781, 0
  %v2824 = vsel %vm101, %v2784, 0
  %v2826 = vsel %vm101, %v2787, 0
  %v2828 = vsel %vm101, %v2790, 0
  %v2830 = vsel %vm101, %v2793, 0
  %v2832 = vsel %vm101, %v2796, 0
  %v2834 = vsel %vm101, %v2799, 0
  %v2836 = vsel %vm101, %v2802, 0
  %v2838 = vsel %vm101, %v2805, 0
  %2840 = vmatprep.subr.mxu0 0.0
  %2841 = vmatpush1.msra.mxu0 0.0
  %2842 = vmatprep.subr.mxu0 0.0
  %2843 = vmatpush1.msra.mxu0 0.0
  %2844 = vmatprep.subr.mxu0 0.0
  %2845 = vmatpush1.msra.mxu0 0.0
  %2846 = vmatprep.subr.mxu0 0.0
  %2847 = vmatpush1.msra.mxu0 0.0
  %2848 = vmatprep.subr.mxu0 0.0
  %2849 = vmatpush1.msra.mxu0 0.0
  %2850 = vmatprep.subr.mxu0 0.0
  %2851 = vmatpush1.msra.mxu0 0.0
  %2852 = vmatprep.subr.mxu0 0.0
  %2853 = vmatpush1.msra.mxu0 0.0
  %2854 = vmatprep.subr.mxu0 0.0
  %2855 = vmatpush1.msra.mxu0 0.0
  %2856 = vmatprep.subr.mxu0 0.0
  %2857 = vmatpush1.msra.mxu0 0.0
  %2858 = vmatprep.subr.mxu0 0.0
  %2859 = vmatpush1.msra.mxu0 0.0
  %2860 = vmatprep.subr.mxu0 0.0
  %2861 = vmatpush1.msra.mxu0 0.0
  %2862 = vmatprep.subr.mxu0 0.0
  %2863 = vmatpush1.msra.mxu0 0.0
  %2864 = vmatprep.subr.mxu0 0.0
  %2865 = vmatpush1.msra.mxu0 0.0
  %2866 = vmatprep.subr.mxu0 0.0
  %2867 = vmatpush1.msra.mxu0 0.0
  %2868 = vmatprep.subr.mxu0 0.0
  %2869 = vmatpush1.msra.mxu0 0.0
  %2870 = vmatprep.subr.mxu0 0.0
  %2871 = vmatpush1.msra.mxu0 %v2807
  %2872 = vmatprep.subr.mxu0 0.0
  %2873 = vmatpush2.msra.mxu0 0.0
  %2874 = vmatprep.subr.mxu0 0.0
  %2875 = vmatpush2.msra.mxu0 0.0
  %2876 = vmatprep.subr.mxu0 0.0
  %2877 = vmatpush2.msra.mxu0 0.0
  %2878 = vmatprep.subr.mxu0 0.0
  %2879 = vmatpush2.msra.mxu0 0.0
  %2880 = vmatprep.subr.mxu0 0.0
  %2881 = vmatpush2.msra.mxu0 0.0
  %2882 = vmatprep.subr.mxu0 0.0
  %2883 = vmatpush2.msra.mxu0 0.0
  %2884 = vmatprep.subr.mxu0 0.0
  %2885 = vmatpush2.msra.mxu0 0.0
  %2886 = vmatprep.subr.mxu0 0.0
  %2887 = vmatpush2.msra.mxu0 0.0
  %2888 = vmatprep.subr.mxu0 0.0
  %2889 = vmatpush2.msra.mxu0 0.0
  %2890 = vmatprep.subr.mxu0 0.0
  %2891 = vmatpush2.msra.mxu0 0.0
  %2892 = vmatprep.subr.mxu0 0.0
  %2893 = vmatpush2.msra.mxu0 0.0
  %2894 = vmatprep.subr.mxu0 0.0
  %2895 = vmatpush2.msra.mxu0 0.0
  %2896 = vmatprep.subr.mxu0 0.0
  %2897 = vmatpush2.msra.mxu0 0.0
  %2898 = vmatprep.subr.mxu0 0.0
  %2899 = vmatpush2.msra.mxu0 0.0
  %2900 = vmatprep.subr.mxu0 0.0
  %2901 = vmatpush2.msra.mxu0 0.0
  %2902 = vmatprep.subr.mxu0 0.0
  %2903 = vmatpush2.msra.mxu0 0.0
  %2904 = vmatprep.mubr.f32.mxu0 0.0
  %2905 = vmatmul.mubr.f32.gmra.mxu0 %v2808
  %v2906 = vpop.f32.mrf.mxu0
  %v2907 = vadd.f32 0.0, %v2906
  %v2908 = vpop.f32.mrf.mxu0
  %2909 = vmatprep.mubr.f32.mxu0 0.0
  %2910 = vmatmul.mubr.f32.gmra.mxu0 %v2810
  %v2911 = vpop.f32.mrf.mxu0
  %v2912 = vadd.f32 0.0, %v2911
  %v2913 = vpop.f32.mrf.mxu0
  %2914 = vmatprep.mubr.f32.mxu0 0.0
  %2915 = vmatmul.mubr.f32.gmra.mxu0 %v2812
  %v2916 = vpop.f32.mrf.mxu0
  %v2917 = vadd.f32 0.0, %v2916
  %v2918 = vpop.f32.mrf.mxu0
  %2919 = vmatprep.mubr.f32.mxu0 0.0
  %2920 = vmatmul.mubr.f32.gmra.mxu0 %v2814
  %v2921 = vpop.f32.mrf.mxu0
  %v2922 = vadd.f32 0.0, %v2921
  %v2923 = vpop.f32.mrf.mxu0
  %2924 = vmatprep.mubr.f32.mxu0 0.0
  %2925 = vmatmul.mubr.f32.gmra.mxu0 %v2816
  %v2926 = vpop.f32.mrf.mxu0
  %v2927 = vadd.f32 0.0, %v2926
  %v2928 = vpop.f32.mrf.mxu0
  %2929 = vmatprep.mubr.f32.mxu0 0.0
  %2930 = vmatmul.mubr.f32.gmra.mxu0 %v2818
  %v2931 = vpop.f32.mrf.mxu0
  %v2932 = vadd.f32 0.0, %v2931
  %v2933 = vpop.f32.mrf.mxu0
  %2934 = vmatprep.mubr.f32.mxu0 0.0
  %2935 = vmatmul.mubr.f32.gmra.mxu0 %v2820
  %v2936 = vpop.f32.mrf.mxu0
  %v2937 = vadd.f32 0.0, %v2936
  %v2938 = vpop.f32.mrf.mxu0
  %2939 = vmatprep.mubr.f32.mxu0 0.0
  %2940 = vmatmul.mubr.f32.gmra.mxu0 %v2822
  %v2941 = vpop.f32.mrf.mxu0
  %v2942 = vadd.f32 0.0, %v2941
  %v2943 = vpop.f32.mrf.mxu0
  %2944 = vmatprep.mubr.f32.mxu0 0.0
  %2945 = vmatmul.mubr.f32.gmra.mxu0 %v2824
  %v2946 = vpop.f32.mrf.mxu0
  %v2947 = vadd.f32 0.0, %v2946
  %v2948 = vpop.f32.mrf.mxu0
  %2949 = vmatprep.mubr.f32.mxu0 0.0
  %2950 = vmatmul.mubr.f32.gmra.mxu0 %v2826
  %v2951 = vpop.f32.mrf.mxu0
  %v2952 = vadd.f32 0.0, %v2951
  %v2953 = vpop.f32.mrf.mxu0
  %2954 = vmatprep.mubr.f32.mxu0 0.0
  %2955 = vmatmul.mubr.f32.gmra.mxu0 %v2828
  %v2956 = vpop.f32.mrf.mxu0
  %v2957 = vadd.f32 0.0, %v2956
  %v2958 = vpop.f32.mrf.mxu0
  %2959 = vmatprep.mubr.f32.mxu0 0.0
  %2960 = vmatmul.mubr.f32.gmra.mxu0 %v2830
  %v2961 = vpop.f32.mrf.mxu0
  %v2962 = vadd.f32 0.0, %v2961
  %v2963 = vpop.f32.mrf.mxu0
  %2964 = vmatprep.mubr.f32.mxu0 0.0
  %2965 = vmatmul.mubr.f32.gmra.mxu0 %v2832
  %v2966 = vpop.f32.mrf.mxu0
  %v2967 = vadd.f32 0.0, %v2966
  %v2968 = vpop.f32.mrf.mxu0
  %2969 = vmatprep.mubr.f32.mxu0 0.0
  %2970 = vmatmul.mubr.f32.gmra.mxu0 %v2834
  %v2971 = vpop.f32.mrf.mxu0
  %v2972 = vadd.f32 0.0, %v2971
  %v2973 = vpop.f32.mrf.mxu0
  %2974 = vmatprep.mubr.f32.mxu0 0.0
  %2975 = vmatmul.mubr.f32.gmra.mxu0 %v2836
  %v2976 = vpop.f32.mrf.mxu0
  %v2977 = vadd.f32 0.0, %v2976
  %v2978 = vpop.f32.mrf.mxu0
  %2979 = vmatprep.mubr.f32.mxu0 0.0
  %2980 = vmatmul.mubr.f32.gmra.mxu0 %v2838
  %v2981 = vpop.f32.mrf.mxu0
  %v2982 = vadd.f32 0.0, %v2981
  %v2983 = vpop.f32.mrf.mxu0
  %2984 = vdwg.mxu0
  %v2985 = vadd.f32 %v2680, %v2907
  %v2986 = vadd.f32 %v2685, %v2912
  %v2987 = vadd.f32 %v2690, %v2917
  %v2988 = vadd.f32 %v2695, %v2922
  %v2989 = vadd.f32 %v2700, %v2927
  %v2990 = vadd.f32 %v2705, %v2932
  %v2991 = vadd.f32 %v2710, %v2937
  %v2992 = vadd.f32 %v2715, %v2942
  %v2993 = vadd.f32 %v2720, %v2947
  %v2994 = vadd.f32 %v2725, %v2952
  %v2995 = vadd.f32 %v2730, %v2957
  %v2996 = vadd.f32 %v2735, %v2962
  %v2997 = vadd.f32 %v2740, %v2967
  %v2998 = vadd.f32 %v2745, %v2972
  %v2999 = vadd.f32 %v2750, %v2977
  %v3000 = vadd.f32 %v2755, %v2982
  %s3001 = scalar_lea.vmem %s7, 24
  %v3002 = vld [vmem:[%s3001] sm:$0xff]
  %v3004 = vsel %vm101, %v2297, 0
  %v3007 = vsel %vm101, %v2317, 0
  %3009 = vmatprep.subr.mxu0 0.0
  %3010 = vmatpush1.msra.mxu0 0.0
  %3011 = vmatprep.subr.mxu0 0.0
  %3012 = vmatpush1.msra.mxu0 0.0
  %3013 = vmatprep.subr.mxu0 0.0
  %3014 = vmatpush1.msra.mxu0 0.0
  %3015 = vmatprep.subr.mxu0 0.0
  %3016 = vmatpush1.msra.mxu0 0.0
  %3017 = vmatprep.subr.mxu0 0.0
  %3018 = vmatpush1.msra.mxu0 0.0
  %3019 = vmatprep.subr.mxu0 0.0
  %3020 = vmatpush1.msra.mxu0 0.0
  %3021 = vmatprep.subr.mxu0 0.0
  %3022 = vmatpush1.msra.mxu0 0.0
  %3023 = vmatprep.subr.mxu0 0.0
  %3024 = vmatpush1.msra.mxu0 0.0
  %3025 = vmatprep.subr.mxu0 0.0
  %3026 = vmatpush1.msra.mxu0 0.0
  %3027 = vmatprep.subr.mxu0 0.0
  %3028 = vmatpush1.msra.mxu0 0.0
  %3029 = vmatprep.subr.mxu0 0.0
  %3030 = vmatpush1.msra.mxu0 0.0
  %3031 = vmatprep.subr.mxu0 0.0
  %3032 = vmatpush1.msra.mxu0 0.0
  %3033 = vmatprep.subr.mxu0 0.0
  %3034 = vmatpush1.msra.mxu0 0.0
  %3035 = vmatprep.subr.mxu0 0.0
  %3036 = vmatpush1.msra.mxu0 0.0
  %3037 = vmatprep.subr.mxu0 0.0
  %3038 = vmatpush1.msra.mxu0 0.0
  %3039 = vmatprep.subr.mxu0 0.0
  %3040 = vmatpush1.msra.mxu0 %v3002
  %3041 = vmatprep.subr.mxu0 0.0
  %3042 = vmatpush2.msra.mxu0 0.0
  %3043 = vmatprep.subr.mxu0 0.0
  %3044 = vmatpush2.msra.mxu0 0.0
  %3045 = vmatprep.subr.mxu0 0.0
  %3046 = vmatpush2.msra.mxu0 0.0
  %3047 = vmatprep.subr.mxu0 0.0
  %3048 = vmatpush2.msra.mxu0 0.0
  %3049 = vmatprep.subr.mxu0 0.0
  %3050 = vmatpush2.msra.mxu0 0.0
  %3051 = vmatprep.subr.mxu0 0.0
  %3052 = vmatpush2.msra.mxu0 0.0
  %3053 = vmatprep.subr.mxu0 0.0
  %3054 = vmatpush2.msra.mxu0 0.0
  %3055 = vmatprep.subr.mxu0 0.0
  %3056 = vmatpush2.msra.mxu0 0.0
  %3057 = vmatprep.subr.mxu0 0.0
  %3058 = vmatpush2.msra.mxu0 0.0
  %3059 = vmatprep.subr.mxu0 0.0
  %3060 = vmatpush2.msra.mxu0 0.0
  %3061 = vmatprep.subr.mxu0 0.0
  %3062 = vmatpush2.msra.mxu0 0.0
  %3063 = vmatprep.subr.mxu0 0.0
  %3064 = vmatpush2.msra.mxu0 0.0
  %3065 = vmatprep.subr.mxu0 0.0
  %3066 = vmatpush2.msra.mxu0 0.0
  %3067 = vmatprep.subr.mxu0 0.0
  %3068 = vmatpush2.msra.mxu0 0.0
  %3069 = vmatprep.subr.mxu0 0.0
  %3070 = vmatpush2.msra.mxu0 0.0
  %3071 = vmatprep.subr.mxu0 0.0
  %3072 = vmatpush2.msra.mxu0 0.0
  %3073 = vmatprep.mubr.f32.mxu0 0.0
  %3074 = vmatmul.mubr.f32.gmra.mxu0 %v2583
  %v3075 = vpop.f32.mrf.mxu0
  %v3076 = vadd.f32 0.0, %v3075
  %v3077 = vpop.f32.mrf.mxu0
  %3078 = vmatprep.mubr.f32.mxu0 0.0
  %3079 = vmatmul.mubr.f32.gmra.mxu0 %v2585
  %v3080 = vpop.f32.mrf.mxu0
  %v3081 = vadd.f32 0.0, %v3080
  %v3082 = vpop.f32.mrf.mxu0
  %3083 = vmatprep.mubr.f32.mxu0 0.0
  %3084 = vmatmul.mubr.f32.gmra.mxu0 %v2587
  %v3085 = vpop.f32.mrf.mxu0
  %v3086 = vadd.f32 0.0, %v3085
  %v3087 = vpop.f32.mrf.mxu0
  %3088 = vmatprep.mubr.f32.mxu0 0.0
  %3089 = vmatmul.mubr.f32.gmra.mxu0 %v2589
  %v3090 = vpop.f32.mrf.mxu0
  %v3091 = vadd.f32 0.0, %v3090
  %v3092 = vpop.f32.mrf.mxu0
  %3093 = vmatprep.mubr.f32.mxu0 0.0
  %3094 = vmatmul.mubr.f32.gmra.mxu0 %v2591
  %v3095 = vpop.f32.mrf.mxu0
  %v3096 = vadd.f32 0.0, %v3095
  %v3097 = vpop.f32.mrf.mxu0
  %3098 = vmatprep.mubr.f32.mxu0 0.0
  %3099 = vmatmul.mubr.f32.gmra.mxu0 %v2593
  %v3100 = vpop.f32.mrf.mxu0
  %v3101 = vadd.f32 0.0, %v3100
  %v3102 = vpop.f32.mrf.mxu0
  %3103 = vmatprep.mubr.f32.mxu0 0.0
  %3104 = vmatmul.mubr.f32.gmra.mxu0 %v2595
  %v3105 = vpop.f32.mrf.mxu0
  %v3106 = vadd.f32 0.0, %v3105
  %v3107 = vpop.f32.mrf.mxu0
  %3108 = vmatprep.mubr.f32.mxu0 0.0
  %3109 = vmatmul.mubr.f32.gmra.mxu0 %v3004
  %v3110 = vpop.f32.mrf.mxu0
  %v3111 = vadd.f32 0.0, %v3110
  %v3112 = vpop.f32.mrf.mxu0
  %3113 = vmatprep.mubr.f32.mxu0 0.0
  %3114 = vmatmul.mubr.f32.gmra.mxu0 %v2599
  %v3115 = vpop.f32.mrf.mxu0
  %v3116 = vadd.f32 0.0, %v3115
  %v3117 = vpop.f32.mrf.mxu0
  %3118 = vmatprep.mubr.f32.mxu0 0.0
  %3119 = vmatmul.mubr.f32.gmra.mxu0 %v2601
  %v3120 = vpop.f32.mrf.mxu0
  %v3121 = vadd.f32 0.0, %v3120
  %v3122 = vpop.f32.mrf.mxu0
  %3123 = vmatprep.mubr.f32.mxu0 0.0
  %3124 = vmatmul.mubr.f32.gmra.mxu0 %v2603
  %v3125 = vpop.f32.mrf.mxu0
  %v3126 = vadd.f32 0.0, %v3125
  %v3127 = vpop.f32.mrf.mxu0
  %3128 = vmatprep.mubr.f32.mxu0 0.0
  %3129 = vmatmul.mubr.f32.gmra.mxu0 %v2605
  %v3130 = vpop.f32.mrf.mxu0
  %v3131 = vadd.f32 0.0, %v3130
  %v3132 = vpop.f32.mrf.mxu0
  %3133 = vmatprep.mubr.f32.mxu0 0.0
  %3134 = vmatmul.mubr.f32.gmra.mxu0 %v2607
  %v3135 = vpop.f32.mrf.mxu0
  %v3136 = vadd.f32 0.0, %v3135
  %v3137 = vpop.f32.mrf.mxu0
  %3138 = vmatprep.mubr.f32.mxu0 0.0
  %3139 = vmatmul.mubr.f32.gmra.mxu0 %v2609
  %v3140 = vpop.f32.mrf.mxu0
  %v3141 = vadd.f32 0.0, %v3140
  %v3142 = vpop.f32.mrf.mxu0
  %3143 = vmatprep.mubr.f32.mxu0 0.0
  %3144 = vmatmul.mubr.f32.gmra.mxu0 %v2611
  %v3145 = vpop.f32.mrf.mxu0
  %v3146 = vadd.f32 0.0, %v3145
  %v3147 = vpop.f32.mrf.mxu0
  %3148 = vmatprep.mubr.f32.mxu0 0.0
  %3149 = vmatmul.mubr.f32.gmra.mxu0 %v3007
  %v3150 = vpop.f32.mrf.mxu0
  %v3151 = vadd.f32 0.0, %v3150
  %v3152 = vpop.f32.mrf.mxu0
  %3153 = vdwg.mxu0
  %v3154 = vadd.f32 %v2985, %v3076
  %v3155 = vadd.f32 %v2986, %v3081
  %v3156 = vadd.f32 %v2987, %v3086
  %v3157 = vadd.f32 %v2988, %v3091
  %v3158 = vadd.f32 %v2989, %v3096
  %v3159 = vadd.f32 %v2990, %v3101
  %v3160 = vadd.f32 %v2991, %v3106
  %v3161 = vadd.f32 %v2992, %v3111
  %v3162 = vadd.f32 %v2993, %v3116
  %v3163 = vadd.f32 %v2994, %v3121
  %v3164 = vadd.f32 %v2995, %v3126
  %v3165 = vadd.f32 %v2996, %v3131
  %v3166 = vadd.f32 %v2997, %v3136
  %v3167 = vadd.f32 %v2998, %v3141
  %v3168 = vadd.f32 %v2999, %v3146
  %v3169 = vadd.f32 %v3000, %v3151
  %v3172 = vrot.slane %v2297, 1
  %v3173 = vrot.slane %v2298, 1
  %v3174 = vsel %vm345, %v3172, %v3173
  %v3175 = vrot.slane %v2317, 1
  %v3176 = vrot.slane %v2318, 1
  %v3177 = vsel %vm345, %v3175, %v3176
  %s3178 = scalar_lea.vmem %s7, 32
  %v3179 = vld [vmem:[%s3178] sm:$0xff]
  %v3180 = vsel %vm101, %v3174, 0
  %v3182 = vsel %vm101, %v3177, 0
  %3184 = vmatprep.subr.mxu0 0.0
  %3185 = vmatpush1.msra.mxu0 0.0
  %3186 = vmatprep.subr.mxu0 0.0
  %3187 = vmatpush1.msra.mxu0 0.0
  %3188 = vmatprep.subr.mxu0 0.0
  %3189 = vmatpush1.msra.mxu0 0.0
  %3190 = vmatprep.subr.mxu0 0.0
  %3191 = vmatpush1.msra.mxu0 0.0
  %3192 = vmatprep.subr.mxu0 0.0
  %3193 = vmatpush1.msra.mxu0 0.0
  %3194 = vmatprep.subr.mxu0 0.0
  %3195 = vmatpush1.msra.mxu0 0.0
  %3196 = vmatprep.subr.mxu0 0.0
  %3197 = vmatpush1.msra.mxu0 0.0
  %3198 = vmatprep.subr.mxu0 0.0
  %3199 = vmatpush1.msra.mxu0 0.0
  %3200 = vmatprep.subr.mxu0 0.0
  %3201 = vmatpush1.msra.mxu0 0.0
  %3202 = vmatprep.subr.mxu0 0.0
  %3203 = vmatpush1.msra.mxu0 0.0
  %3204 = vmatprep.subr.mxu0 0.0
  %3205 = vmatpush1.msra.mxu0 0.0
  %3206 = vmatprep.subr.mxu0 0.0
  %3207 = vmatpush1.msra.mxu0 0.0
  %3208 = vmatprep.subr.mxu0 0.0
  %3209 = vmatpush1.msra.mxu0 0.0
  %3210 = vmatprep.subr.mxu0 0.0
  %3211 = vmatpush1.msra.mxu0 0.0
  %3212 = vmatprep.subr.mxu0 0.0
  %3213 = vmatpush1.msra.mxu0 0.0
  %3214 = vmatprep.subr.mxu0 0.0
  %3215 = vmatpush1.msra.mxu0 %v3179
  %3216 = vmatprep.subr.mxu0 0.0
  %3217 = vmatpush2.msra.mxu0 0.0
  %3218 = vmatprep.subr.mxu0 0.0
  %3219 = vmatpush2.msra.mxu0 0.0
  %3220 = vmatprep.subr.mxu0 0.0
  %3221 = vmatpush2.msra.mxu0 0.0
  %3222 = vmatprep.subr.mxu0 0.0
  %3223 = vmatpush2.msra.mxu0 0.0
  %3224 = vmatprep.subr.mxu0 0.0
  %3225 = vmatpush2.msra.mxu0 0.0
  %3226 = vmatprep.subr.mxu0 0.0
  %3227 = vmatpush2.msra.mxu0 0.0
  %3228 = vmatprep.subr.mxu0 0.0
  %3229 = vmatpush2.msra.mxu0 0.0
  %3230 = vmatprep.subr.mxu0 0.0
  %3231 = vmatpush2.msra.mxu0 0.0
  %3232 = vmatprep.subr.mxu0 0.0
  %3233 = vmatpush2.msra.mxu0 0.0
  %3234 = vmatprep.subr.mxu0 0.0
  %3235 = vmatpush2.msra.mxu0 0.0
  %3236 = vmatprep.subr.mxu0 0.0
  %3237 = vmatpush2.msra.mxu0 0.0
  %3238 = vmatprep.subr.mxu0 0.0
  %3239 = vmatpush2.msra.mxu0 0.0
  %3240 = vmatprep.subr.mxu0 0.0
  %3241 = vmatpush2.msra.mxu0 0.0
  %3242 = vmatprep.subr.mxu0 0.0
  %3243 = vmatpush2.msra.mxu0 0.0
  %3244 = vmatprep.subr.mxu0 0.0
  %3245 = vmatpush2.msra.mxu0 0.0
  %3246 = vmatprep.subr.mxu0 0.0
  %3247 = vmatpush2.msra.mxu0 0.0
  %3248 = vmatprep.mubr.f32.mxu0 0.0
  %3249 = vmatmul.mubr.f32.gmra.mxu0 %v2406
  %v3250 = vpop.f32.mrf.mxu0
  %v3251 = vadd.f32 0.0, %v3250
  %v3252 = vpop.f32.mrf.mxu0
  %3253 = vmatprep.mubr.f32.mxu0 0.0
  %3254 = vmatmul.mubr.f32.gmra.mxu0 %v2408
  %v3255 = vpop.f32.mrf.mxu0
  %v3256 = vadd.f32 0.0, %v3255
  %v3257 = vpop.f32.mrf.mxu0
  %3258 = vmatprep.mubr.f32.mxu0 0.0
  %3259 = vmatmul.mubr.f32.gmra.mxu0 %v2410
  %v3260 = vpop.f32.mrf.mxu0
  %v3261 = vadd.f32 0.0, %v3260
  %v3262 = vpop.f32.mrf.mxu0
  %3263 = vmatprep.mubr.f32.mxu0 0.0
  %3264 = vmatmul.mubr.f32.gmra.mxu0 %v2412
  %v3265 = vpop.f32.mrf.mxu0
  %v3266 = vadd.f32 0.0, %v3265
  %v3267 = vpop.f32.mrf.mxu0
  %3268 = vmatprep.mubr.f32.mxu0 0.0
  %3269 = vmatmul.mubr.f32.gmra.mxu0 %v2414
  %v3270 = vpop.f32.mrf.mxu0
  %v3271 = vadd.f32 0.0, %v3270
  %v3272 = vpop.f32.mrf.mxu0
  %3273 = vmatprep.mubr.f32.mxu0 0.0
  %3274 = vmatmul.mubr.f32.gmra.mxu0 %v2416
  %v3275 = vpop.f32.mrf.mxu0
  %v3276 = vadd.f32 0.0, %v3275
  %v3277 = vpop.f32.mrf.mxu0
  %3278 = vmatprep.mubr.f32.mxu0 0.0
  %3279 = vmatmul.mubr.f32.gmra.mxu0 %v2418
  %v3280 = vpop.f32.mrf.mxu0
  %v3281 = vadd.f32 0.0, %v3280
  %v3282 = vpop.f32.mrf.mxu0
  %3283 = vmatprep.mubr.f32.mxu0 0.0
  %3284 = vmatmul.mubr.f32.gmra.mxu0 %v3180
  %v3285 = vpop.f32.mrf.mxu0
  %v3286 = vadd.f32 0.0, %v3285
  %v3287 = vpop.f32.mrf.mxu0
  %3288 = vmatprep.mubr.f32.mxu0 0.0
  %3289 = vmatmul.mubr.f32.gmra.mxu0 %v2422
  %v3290 = vpop.f32.mrf.mxu0
  %v3291 = vadd.f32 0.0, %v3290
  %v3292 = vpop.f32.mrf.mxu0
  %3293 = vmatprep.mubr.f32.mxu0 0.0
  %3294 = vmatmul.mubr.f32.gmra.mxu0 %v2424
  %v3295 = vpop.f32.mrf.mxu0
  %v3296 = vadd.f32 0.0, %v3295
  %v3297 = vpop.f32.mrf.mxu0
  %3298 = vmatprep.mubr.f32.mxu0 0.0
  %3299 = vmatmul.mubr.f32.gmra.mxu0 %v2426
  %v3300 = vpop.f32.mrf.mxu0
  %v3301 = vadd.f32 0.0, %v3300
  %v3302 = vpop.f32.mrf.mxu0
  %3303 = vmatprep.mubr.f32.mxu0 0.0
  %3304 = vmatmul.mubr.f32.gmra.mxu0 %v2428
  %v3305 = vpop.f32.mrf.mxu0
  %v3306 = vadd.f32 0.0, %v3305
  %v3307 = vpop.f32.mrf.mxu0
  %3308 = vmatprep.mubr.f32.mxu0 0.0
  %3309 = vmatmul.mubr.f32.gmra.mxu0 %v2430
  %v3310 = vpop.f32.mrf.mxu0
  %v3311 = vadd.f32 0.0, %v3310
  %v3312 = vpop.f32.mrf.mxu0
  %3313 = vmatprep.mubr.f32.mxu0 0.0
  %3314 = vmatmul.mubr.f32.gmra.mxu0 %v2432
  %v3315 = vpop.f32.mrf.mxu0
  %v3316 = vadd.f32 0.0, %v3315
  %v3317 = vpop.f32.mrf.mxu0
  %3318 = vmatprep.mubr.f32.mxu0 0.0
  %3319 = vmatmul.mubr.f32.gmra.mxu0 %v2434
  %v3320 = vpop.f32.mrf.mxu0
  %v3321 = vadd.f32 0.0, %v3320
  %v3322 = vpop.f32.mrf.mxu0
  %3323 = vmatprep.mubr.f32.mxu0 0.0
  %3324 = vmatmul.mubr.f32.gmra.mxu0 %v3182
  %v3325 = vpop.f32.mrf.mxu0
  %v3326 = vadd.f32 0.0, %v3325
  %v3327 = vpop.f32.mrf.mxu0
  %3328 = vdwg.mxu0
  %v3329 = vadd.f32 %v3154, %v3251
  %v3330 = vadd.f32 %v3155, %v3256
  %v3331 = vadd.f32 %v3156, %v3261
  %v3332 = vadd.f32 %v3157, %v3266
  %v3333 = vadd.f32 %v3158, %v3271
  %v3334 = vadd.f32 %v3159, %v3276
  %v3335 = vadd.f32 %v3160, %v3281
  %v3336 = vadd.f32 %v3161, %v3286
  %v3337 = vadd.f32 %v3162, %v3291
  %v3338 = vadd.f32 %v3163, %v3296
  %v3339 = vadd.f32 %v3164, %v3301
  %v3340 = vadd.f32 %v3165, %v3306
  %v3341 = vadd.f32 %v3166, %v3311
  %v3342 = vadd.f32 %v3167, %v3316
  %v3343 = vadd.f32 %v3168, %v3321
  %v3344 = vadd.f32 %v3169, %v3326
  %v3345 = vrot.slane %v2297, 2
  %v3346 = vrot.slane %v2298, 2
  %v3347 = vsel %vm757, %v3345, %v3346
  %v3348 = vrot.slane %v2317, 2
  %v3349 = vrot.slane %v2318, 2
  %v3350 = vsel %vm757, %v3348, %v3349
  %s3351 = scalar_lea.vmem %s7, 40
  %v3352 = vld [vmem:[%s3351] sm:$0xff]
  %v3353 = vsel %vm101, %v3347, 0
  %v3355 = vsel %vm101, %v3350, 0
  %3357 = vmatprep.subr.mxu0 0.0
  %3358 = vmatpush1.msra.mxu0 0.0
  %3359 = vmatprep.subr.mxu0 0.0
  %3360 = vmatpush1.msra.mxu0 0.0
  %3361 = vmatprep.subr.mxu0 0.0
  %3362 = vmatpush1.msra.mxu0 0.0
  %3363 = vmatprep.subr.mxu0 0.0
  %3364 = vmatpush1.msra.mxu0 0.0
  %3365 = vmatprep.subr.mxu0 0.0
  %3366 = vmatpush1.msra.mxu0 0.0
  %3367 = vmatprep.subr.mxu0 0.0
  %3368 = vmatpush1.msra.mxu0 0.0
  %3369 = vmatprep.subr.mxu0 0.0
  %3370 = vmatpush1.msra.mxu0 0.0
  %3371 = vmatprep.subr.mxu0 0.0
  %3372 = vmatpush1.msra.mxu0 0.0
  %3373 = vmatprep.subr.mxu0 0.0
  %3374 = vmatpush1.msra.mxu0 0.0
  %3375 = vmatprep.subr.mxu0 0.0
  %3376 = vmatpush1.msra.mxu0 0.0
  %3377 = vmatprep.subr.mxu0 0.0
  %3378 = vmatpush1.msra.mxu0 0.0
  %3379 = vmatprep.subr.mxu0 0.0
  %3380 = vmatpush1.msra.mxu0 0.0
  %3381 = vmatprep.subr.mxu0 0.0
  %3382 = vmatpush1.msra.mxu0 0.0
  %3383 = vmatprep.subr.mxu0 0.0
  %3384 = vmatpush1.msra.mxu0 0.0
  %3385 = vmatprep.subr.mxu0 0.0
  %3386 = vmatpush1.msra.mxu0 0.0
  %3387 = vmatprep.subr.mxu0 0.0
  %3388 = vmatpush1.msra.mxu0 %v3352
  %3389 = vmatprep.subr.mxu0 0.0
  %3390 = vmatpush2.msra.mxu0 0.0
  %3391 = vmatprep.subr.mxu0 0.0
  %3392 = vmatpush2.msra.mxu0 0.0
  %3393 = vmatprep.subr.mxu0 0.0
  %3394 = vmatpush2.msra.mxu0 0.0
  %3395 = vmatprep.subr.mxu0 0.0
  %3396 = vmatpush2.msra.mxu0 0.0
  %3397 = vmatprep.subr.mxu0 0.0
  %3398 = vmatpush2.msra.mxu0 0.0
  %3399 = vmatprep.subr.mxu0 0.0
  %3400 = vmatpush2.msra.mxu0 0.0
  %3401 = vmatprep.subr.mxu0 0.0
  %3402 = vmatpush2.msra.mxu0 0.0
  %3403 = vmatprep.subr.mxu0 0.0
  %3404 = vmatpush2.msra.mxu0 0.0
  %3405 = vmatprep.subr.mxu0 0.0
  %3406 = vmatpush2.msra.mxu0 0.0
  %3407 = vmatprep.subr.mxu0 0.0
  %3408 = vmatpush2.msra.mxu0 0.0
  %3409 = vmatprep.subr.mxu0 0.0
  %3410 = vmatpush2.msra.mxu0 0.0
  %3411 = vmatprep.subr.mxu0 0.0
  %3412 = vmatpush2.msra.mxu0 0.0
  %3413 = vmatprep.subr.mxu0 0.0
  %3414 = vmatpush2.msra.mxu0 0.0
  %3415 = vmatprep.subr.mxu0 0.0
  %3416 = vmatpush2.msra.mxu0 0.0
  %3417 = vmatprep.subr.mxu0 0.0
  %3418 = vmatpush2.msra.mxu0 0.0
  %3419 = vmatprep.subr.mxu0 0.0
  %3420 = vmatpush2.msra.mxu0 0.0
  %3421 = vmatprep.mubr.f32.mxu0 0.0
  %3422 = vmatmul.mubr.f32.gmra.mxu0 %v2810
  %v3423 = vpop.f32.mrf.mxu0
  %v3424 = vadd.f32 0.0, %v3423
  %v3425 = vpop.f32.mrf.mxu0
  %3426 = vmatprep.mubr.f32.mxu0 0.0
  %3427 = vmatmul.mubr.f32.gmra.mxu0 %v2812
  %v3428 = vpop.f32.mrf.mxu0
  %v3429 = vadd.f32 0.0, %v3428
  %v3430 = vpop.f32.mrf.mxu0
  %3431 = vmatprep.mubr.f32.mxu0 0.0
  %3432 = vmatmul.mubr.f32.gmra.mxu0 %v2814
  %v3433 = vpop.f32.mrf.mxu0
  %v3434 = vadd.f32 0.0, %v3433
  %v3435 = vpop.f32.mrf.mxu0
  %3436 = vmatprep.mubr.f32.mxu0 0.0
  %3437 = vmatmul.mubr.f32.gmra.mxu0 %v2816
  %v3438 = vpop.f32.mrf.mxu0
  %v3439 = vadd.f32 0.0, %v3438
  %v3440 = vpop.f32.mrf.mxu0
  %3441 = vmatprep.mubr.f32.mxu0 0.0
  %3442 = vmatmul.mubr.f32.gmra.mxu0 %v2818
  %v3443 = vpop.f32.mrf.mxu0
  %v3444 = vadd.f32 0.0, %v3443
  %v3445 = vpop.f32.mrf.mxu0
  %3446 = vmatprep.mubr.f32.mxu0 0.0
  %3447 = vmatmul.mubr.f32.gmra.mxu0 %v2820
  %v3448 = vpop.f32.mrf.mxu0
  %v3449 = vadd.f32 0.0, %v3448
  %v3450 = vpop.f32.mrf.mxu0
  %3451 = vmatprep.mubr.f32.mxu0 0.0
  %3452 = vmatmul.mubr.f32.gmra.mxu0 %v2822
  %v3453 = vpop.f32.mrf.mxu0
  %v3454 = vadd.f32 0.0, %v3453
  %v3455 = vpop.f32.mrf.mxu0
  %3456 = vmatprep.mubr.f32.mxu0 0.0
  %3457 = vmatmul.mubr.f32.gmra.mxu0 %v3353
  %v3458 = vpop.f32.mrf.mxu0
  %v3459 = vadd.f32 0.0, %v3458
  %v3460 = vpop.f32.mrf.mxu0
  %3461 = vmatprep.mubr.f32.mxu0 0.0
  %3462 = vmatmul.mubr.f32.gmra.mxu0 %v2826
  %v3463 = vpop.f32.mrf.mxu0
  %v3464 = vadd.f32 0.0, %v3463
  %v3465 = vpop.f32.mrf.mxu0
  %3466 = vmatprep.mubr.f32.mxu0 0.0
  %3467 = vmatmul.mubr.f32.gmra.mxu0 %v2828
  %v3468 = vpop.f32.mrf.mxu0
  %v3469 = vadd.f32 0.0, %v3468
  %v3470 = vpop.f32.mrf.mxu0
  %3471 = vmatprep.mubr.f32.mxu0 0.0
  %3472 = vmatmul.mubr.f32.gmra.mxu0 %v2830
  %v3473 = vpop.f32.mrf.mxu0
  %v3474 = vadd.f32 0.0, %v3473
  %v3475 = vpop.f32.mrf.mxu0
  %3476 = vmatprep.mubr.f32.mxu0 0.0
  %3477 = vmatmul.mubr.f32.gmra.mxu0 %v2832
  %v3478 = vpop.f32.mrf.mxu0
  %v3479 = vadd.f32 0.0, %v3478
  %v3480 = vpop.f32.mrf.mxu0
  %3481 = vmatprep.mubr.f32.mxu0 0.0
  %3482 = vmatmul.mubr.f32.gmra.mxu0 %v2834
  %v3483 = vpop.f32.mrf.mxu0
  %v3484 = vadd.f32 0.0, %v3483
  %v3485 = vpop.f32.mrf.mxu0
  %3486 = vmatprep.mubr.f32.mxu0 0.0
  %3487 = vmatmul.mubr.f32.gmra.mxu0 %v2836
  %v3488 = vpop.f32.mrf.mxu0
  %v3489 = vadd.f32 0.0, %v3488
  %v3490 = vpop.f32.mrf.mxu0
  %3491 = vmatprep.mubr.f32.mxu0 0.0
  %3492 = vmatmul.mubr.f32.gmra.mxu0 %v2838
  %v3493 = vpop.f32.mrf.mxu0
  %v3494 = vadd.f32 0.0, %v3493
  %v3495 = vpop.f32.mrf.mxu0
  %3496 = vmatprep.mubr.f32.mxu0 0.0
  %3497 = vmatmul.mubr.f32.gmra.mxu0 %v3355
  %v3498 = vpop.f32.mrf.mxu0
  %v3499 = vadd.f32 0.0, %v3498
  %v3500 = vpop.f32.mrf.mxu0
  %3501 = vdwg.mxu0
  %v3502 = vadd.f32 %v3329, %v3424
  %v3503 = vadd.f32 %v3330, %v3429
  %v3504 = vadd.f32 %v3331, %v3434
  %v3505 = vadd.f32 %v3332, %v3439
  %v3506 = vadd.f32 %v3333, %v3444
  %v3507 = vadd.f32 %v3334, %v3449
  %v3508 = vadd.f32 %v3335, %v3454
  %v3509 = vadd.f32 %v3336, %v3459
  %v3510 = vadd.f32 %v3337, %v3464
  %v3511 = vadd.f32 %v3338, %v3469
  %v3512 = vadd.f32 %v3339, %v3474
  %v3513 = vadd.f32 %v3340, %v3479
  %v3514 = vadd.f32 %v3341, %v3484
  %v3515 = vadd.f32 %v3342, %v3489
  %v3516 = vadd.f32 %v3343, %v3494
  %v3517 = vadd.f32 %v3344, %v3499
  %s3518 = scalar_lea.vmem %s7, 48
  %v3519 = vld [vmem:[%s3518] sm:$0xff]
  %v3521 = vsel %vm101, %v2299, 0
  %v3524 = vsel %vm101, %v2319, 0
  %3526 = vmatprep.subr.mxu0 0.0
  %3527 = vmatpush1.msra.mxu0 0.0
  %3528 = vmatprep.subr.mxu0 0.0
  %3529 = vmatpush1.msra.mxu0 0.0
  %3530 = vmatprep.subr.mxu0 0.0
  %3531 = vmatpush1.msra.mxu0 0.0
  %3532 = vmatprep.subr.mxu0 0.0
  %3533 = vmatpush1.msra.mxu0 0.0
  %3534 = vmatprep.subr.mxu0 0.0
  %3535 = vmatpush1.msra.mxu0 0.0
  %3536 = vmatprep.subr.mxu0 0.0
  %3537 = vmatpush1.msra.mxu0 0.0
  %3538 = vmatprep.subr.mxu0 0.0
  %3539 = vmatpush1.msra.mxu0 0.0
  %3540 = vmatprep.subr.mxu0 0.0
  %3541 = vmatpush1.msra.mxu0 0.0
  %3542 = vmatprep.subr.mxu0 0.0
  %3543 = vmatpush1.msra.mxu0 0.0
  %3544 = vmatprep.subr.mxu0 0.0
  %3545 = vmatpush1.msra.mxu0 0.0
  %3546 = vmatprep.subr.mxu0 0.0
  %3547 = vmatpush1.msra.mxu0 0.0
  %3548 = vmatprep.subr.mxu0 0.0
  %3549 = vmatpush1.msra.mxu0 0.0
  %3550 = vmatprep.subr.mxu0 0.0
  %3551 = vmatpush1.msra.mxu0 0.0
  %3552 = vmatprep.subr.mxu0 0.0
  %3553 = vmatpush1.msra.mxu0 0.0
  %3554 = vmatprep.subr.mxu0 0.0
  %3555 = vmatpush1.msra.mxu0 0.0
  %3556 = vmatprep.subr.mxu0 0.0
  %3557 = vmatpush1.msra.mxu0 %v3519
  %3558 = vmatprep.subr.mxu0 0.0
  %3559 = vmatpush2.msra.mxu0 0.0
  %3560 = vmatprep.subr.mxu0 0.0
  %3561 = vmatpush2.msra.mxu0 0.0
  %3562 = vmatprep.subr.mxu0 0.0
  %3563 = vmatpush2.msra.mxu0 0.0
  %3564 = vmatprep.subr.mxu0 0.0
  %3565 = vmatpush2.msra.mxu0 0.0
  %3566 = vmatprep.subr.mxu0 0.0
  %3567 = vmatpush2.msra.mxu0 0.0
  %3568 = vmatprep.subr.mxu0 0.0
  %3569 = vmatpush2.msra.mxu0 0.0
  %3570 = vmatprep.subr.mxu0 0.0
  %3571 = vmatpush2.msra.mxu0 0.0
  %3572 = vmatprep.subr.mxu0 0.0
  %3573 = vmatpush2.msra.mxu0 0.0
  %3574 = vmatprep.subr.mxu0 0.0
  %3575 = vmatpush2.msra.mxu0 0.0
  %3576 = vmatprep.subr.mxu0 0.0
  %3577 = vmatpush2.msra.mxu0 0.0
  %3578 = vmatprep.subr.mxu0 0.0
  %3579 = vmatpush2.msra.mxu0 0.0
  %3580 = vmatprep.subr.mxu0 0.0
  %3581 = vmatpush2.msra.mxu0 0.0
  %3582 = vmatprep.subr.mxu0 0.0
  %3583 = vmatpush2.msra.mxu0 0.0
  %3584 = vmatprep.subr.mxu0 0.0
  %3585 = vmatpush2.msra.mxu0 0.0
  %3586 = vmatprep.subr.mxu0 0.0
  %3587 = vmatpush2.msra.mxu0 0.0
  %3588 = vmatprep.subr.mxu0 0.0
  %3589 = vmatpush2.msra.mxu0 0.0
  %3590 = vmatprep.mubr.f32.mxu0 0.0
  %3591 = vmatmul.mubr.f32.gmra.mxu0 %v2585
  %v3592 = vpop.f32.mrf.mxu0
  %v3593 = vadd.f32 0.0, %v3592
  %v3594 = vpop.f32.mrf.mxu0
  %3595 = vmatprep.mubr.f32.mxu0 0.0
  %3596 = vmatmul.mubr.f32.gmra.mxu0 %v2587
  %v3597 = vpop.f32.mrf.mxu0
  %v3598 = vadd.f32 0.0, %v3597
  %v3599 = vpop.f32.mrf.mxu0
  %3600 = vmatprep.mubr.f32.mxu0 0.0
  %3601 = vmatmul.mubr.f32.gmra.mxu0 %v2589
  %v3602 = vpop.f32.mrf.mxu0
  %v3603 = vadd.f32 0.0, %v3602
  %v3604 = vpop.f32.mrf.mxu0
  %3605 = vmatprep.mubr.f32.mxu0 0.0
  %3606 = vmatmul.mubr.f32.gmra.mxu0 %v2591
  %v3607 = vpop.f32.mrf.mxu0
  %v3608 = vadd.f32 0.0, %v3607
  %v3609 = vpop.f32.mrf.mxu0
  %3610 = vmatprep.mubr.f32.mxu0 0.0
  %3611 = vmatmul.mubr.f32.gmra.mxu0 %v2593
  %v3612 = vpop.f32.mrf.mxu0
  %v3613 = vadd.f32 0.0, %v3612
  %v3614 = vpop.f32.mrf.mxu0
  %3615 = vmatprep.mubr.f32.mxu0 0.0
  %3616 = vmatmul.mubr.f32.gmra.mxu0 %v2595
  %v3617 = vpop.f32.mrf.mxu0
  %v3618 = vadd.f32 0.0, %v3617
  %v3619 = vpop.f32.mrf.mxu0
  %3620 = vmatprep.mubr.f32.mxu0 0.0
  %3621 = vmatmul.mubr.f32.gmra.mxu0 %v3004
  %v3622 = vpop.f32.mrf.mxu0
  %v3623 = vadd.f32 0.0, %v3622
  %v3624 = vpop.f32.mrf.mxu0
  %3625 = vmatprep.mubr.f32.mxu0 0.0
  %3626 = vmatmul.mubr.f32.gmra.mxu0 %v3521
  %v3627 = vpop.f32.mrf.mxu0
  %v3628 = vadd.f32 0.0, %v3627
  %v3629 = vpop.f32.mrf.mxu0
  %3630 = vmatprep.mubr.f32.mxu0 0.0
  %3631 = vmatmul.mubr.f32.gmra.mxu0 %v2601
  %v3632 = vpop.f32.mrf.mxu0
  %v3633 = vadd.f32 0.0, %v3632
  %v3634 = vpop.f32.mrf.mxu0
  %3635 = vmatprep.mubr.f32.mxu0 0.0
  %3636 = vmatmul.mubr.f32.gmra.mxu0 %v2603
  %v3637 = vpop.f32.mrf.mxu0
  %v3638 = vadd.f32 0.0, %v3637
  %v3639 = vpop.f32.mrf.mxu0
  %3640 = vmatprep.mubr.f32.mxu0 0.0
  %3641 = vmatmul.mubr.f32.gmra.mxu0 %v2605
  %v3642 = vpop.f32.mrf.mxu0
  %v3643 = vadd.f32 0.0, %v3642
  %v3644 = vpop.f32.mrf.mxu0
  %3645 = vmatprep.mubr.f32.mxu0 0.0
  %3646 = vmatmul.mubr.f32.gmra.mxu0 %v2607
  %v3647 = vpop.f32.mrf.mxu0
  %v3648 = vadd.f32 0.0, %v3647
  %v3649 = vpop.f32.mrf.mxu0
  %3650 = vmatprep.mubr.f32.mxu0 0.0
  %3651 = vmatmul.mubr.f32.gmra.mxu0 %v2609
  %v3652 = vpop.f32.mrf.mxu0
  %v3653 = vadd.f32 0.0, %v3652
  %v3654 = vpop.f32.mrf.mxu0
  %3655 = vmatprep.mubr.f32.mxu0 0.0
  %3656 = vmatmul.mubr.f32.gmra.mxu0 %v2611
  %v3657 = vpop.f32.mrf.mxu0
  %v3658 = vadd.f32 0.0, %v3657
  %v3659 = vpop.f32.mrf.mxu0
  %3660 = vmatprep.mubr.f32.mxu0 0.0
  %3661 = vmatmul.mubr.f32.gmra.mxu0 %v3007
  %v3662 = vpop.f32.mrf.mxu0
  %v3663 = vadd.f32 0.0, %v3662
  %v3664 = vpop.f32.mrf.mxu0
  %3665 = vmatprep.mubr.f32.mxu0 0.0
  %3666 = vmatmul.mubr.f32.gmra.mxu0 %v3524
  %v3667 = vpop.f32.mrf.mxu0
  %v3668 = vadd.f32 0.0, %v3667
  %v3669 = vpop.f32.mrf.mxu0
  %3670 = vdwg.mxu0
  %v3671 = vadd.f32 %v3502, %v3593
  %v3672 = vadd.f32 %v3503, %v3598
  %v3673 = vadd.f32 %v3504, %v3603
  %v3674 = vadd.f32 %v3505, %v3608
  %v3675 = vadd.f32 %v3506, %v3613
  %v3676 = vadd.f32 %v3507, %v3618
  %v3677 = vadd.f32 %v3508, %v3623
  %v3678 = vadd.f32 %v3509, %v3628
  %v3679 = vadd.f32 %v3510, %v3633
  %v3680 = vadd.f32 %v3511, %v3638
  %v3681 = vadd.f32 %v3512, %v3643
  %v3682 = vadd.f32 %v3513, %v3648
  %v3683 = vadd.f32 %v3514, %v3653
  %v3684 = vadd.f32 %v3515, %v3658
  %v3685 = vadd.f32 %v3516, %v3663
  %v3686 = vadd.f32 %v3517, %v3668
  %v3689 = vrot.slane %v2299, 1
  %v3690 = vrot.slane %v2300, 1
  %v3691 = vsel %vm345, %v3689, %v3690
  %v3692 = vrot.slane %v2319, 1
  %v3693 = vrot.slane %v2320, 1
  %v3694 = vsel %vm345, %v3692, %v3693
  %s3695 = scalar_lea.vmem %s7, 56
  %v3696 = vld [vmem:[%s3695] sm:$0xff]
  %v3697 = vsel %vm101, %v3691, 0
  %v3699 = vsel %vm101, %v3694, 0
  %3701 = vmatprep.subr.mxu0 0.0
  %3702 = vmatpush1.msra.mxu0 0.0
  %3703 = vmatprep.subr.mxu0 0.0
  %3704 = vmatpush1.msra.mxu0 0.0
  %3705 = vmatprep.subr.mxu0 0.0
  %3706 = vmatpush1.msra.mxu0 0.0
  %3707 = vmatprep.subr.mxu0 0.0
  %3708 = vmatpush1.msra.mxu0 0.0
  %3709 = vmatprep.subr.mxu0 0.0
  %3710 = vmatpush1.msra.mxu0 0.0
  %3711 = vmatprep.subr.mxu0 0.0
  %3712 = vmatpush1.msra.mxu0 0.0
  %3713 = vmatprep.subr.mxu0 0.0
  %3714 = vmatpush1.msra.mxu0 0.0
  %3715 = vmatprep.subr.mxu0 0.0
  %3716 = vmatpush1.msra.mxu0 0.0
  %3717 = vmatprep.subr.mxu0 0.0
  %3718 = vmatpush1.msra.mxu0 0.0
  %3719 = vmatprep.subr.mxu0 0.0
  %3720 = vmatpush1.msra.mxu0 0.0
  %3721 = vmatprep.subr.mxu0 0.0
  %3722 = vmatpush1.msra.mxu0 0.0
  %3723 = vmatprep.subr.mxu0 0.0
  %3724 = vmatpush1.msra.mxu0 0.0
  %3725 = vmatprep.subr.mxu0 0.0
  %3726 = vmatpush1.msra.mxu0 0.0
  %3727 = vmatprep.subr.mxu0 0.0
  %3728 = vmatpush1.msra.mxu0 0.0
  %3729 = vmatprep.subr.mxu0 0.0
  %3730 = vmatpush1.msra.mxu0 0.0
  %3731 = vmatprep.subr.mxu0 0.0
  %3732 = vmatpush1.msra.mxu0 %v3696
  %3733 = vmatprep.subr.mxu0 0.0
  %3734 = vmatpush2.msra.mxu0 0.0
  %3735 = vmatprep.subr.mxu0 0.0
  %3736 = vmatpush2.msra.mxu0 0.0
  %3737 = vmatprep.subr.mxu0 0.0
  %3738 = vmatpush2.msra.mxu0 0.0
  %3739 = vmatprep.subr.mxu0 0.0
  %3740 = vmatpush2.msra.mxu0 0.0
  %3741 = vmatprep.subr.mxu0 0.0
  %3742 = vmatpush2.msra.mxu0 0.0
  %3743 = vmatprep.subr.mxu0 0.0
  %3744 = vmatpush2.msra.mxu0 0.0
  %3745 = vmatprep.subr.mxu0 0.0
  %3746 = vmatpush2.msra.mxu0 0.0
  %3747 = vmatprep.subr.mxu0 0.0
  %3748 = vmatpush2.msra.mxu0 0.0
  %3749 = vmatprep.subr.mxu0 0.0
  %3750 = vmatpush2.msra.mxu0 0.0
  %3751 = vmatprep.subr.mxu0 0.0
  %3752 = vmatpush2.msra.mxu0 0.0
  %3753 = vmatprep.subr.mxu0 0.0
  %3754 = vmatpush2.msra.mxu0 0.0
  %3755 = vmatprep.subr.mxu0 0.0
  %3756 = vmatpush2.msra.mxu0 0.0
  %3757 = vmatprep.subr.mxu0 0.0
  %3758 = vmatpush2.msra.mxu0 0.0
  %3759 = vmatprep.subr.mxu0 0.0
  %3760 = vmatpush2.msra.mxu0 0.0
  %3761 = vmatprep.subr.mxu0 0.0
  %3762 = vmatpush2.msra.mxu0 0.0
  %3763 = vmatprep.subr.mxu0 0.0
  %3764 = vmatpush2.msra.mxu0 0.0
  %3765 = vmatprep.mubr.f32.mxu0 0.0
  %3766 = vmatmul.mubr.f32.gmra.mxu0 %v2408
  %v3767 = vpop.f32.mrf.mxu0
  %v3768 = vadd.f32 0.0, %v3767
  %v3769 = vpop.f32.mrf.mxu0
  %3770 = vmatprep.mubr.f32.mxu0 0.0
  %3771 = vmatmul.mubr.f32.gmra.mxu0 %v2410
  %v3772 = vpop.f32.mrf.mxu0
  %v3773 = vadd.f32 0.0, %v3772
  %v3774 = vpop.f32.mrf.mxu0
  %3775 = vmatprep.mubr.f32.mxu0 0.0
  %3776 = vmatmul.mubr.f32.gmra.mxu0 %v2412
  %v3777 = vpop.f32.mrf.mxu0
  %v3778 = vadd.f32 0.0, %v3777
  %v3779 = vpop.f32.mrf.mxu0
  %3780 = vmatprep.mubr.f32.mxu0 0.0
  %3781 = vmatmul.mubr.f32.gmra.mxu0 %v2414
  %v3782 = vpop.f32.mrf.mxu0
  %v3783 = vadd.f32 0.0, %v3782
  %v3784 = vpop.f32.mrf.mxu0
  %3785 = vmatprep.mubr.f32.mxu0 0.0
  %3786 = vmatmul.mubr.f32.gmra.mxu0 %v2416
  %v3787 = vpop.f32.mrf.mxu0
  %v3788 = vadd.f32 0.0, %v3787
  %v3789 = vpop.f32.mrf.mxu0
  %3790 = vmatprep.mubr.f32.mxu0 0.0
  %3791 = vmatmul.mubr.f32.gmra.mxu0 %v2418
  %v3792 = vpop.f32.mrf.mxu0
  %v3793 = vadd.f32 0.0, %v3792
  %v3794 = vpop.f32.mrf.mxu0
  %3795 = vmatprep.mubr.f32.mxu0 0.0
  %3796 = vmatmul.mubr.f32.gmra.mxu0 %v3180
  %v3797 = vpop.f32.mrf.mxu0
  %v3798 = vadd.f32 0.0, %v3797
  %v3799 = vpop.f32.mrf.mxu0
  %3800 = vmatprep.mubr.f32.mxu0 0.0
  %3801 = vmatmul.mubr.f32.gmra.mxu0 %v3697
  %v3802 = vpop.f32.mrf.mxu0
  %v3803 = vadd.f32 0.0, %v3802
  %v3804 = vpop.f32.mrf.mxu0
  %3805 = vmatprep.mubr.f32.mxu0 0.0
  %3806 = vmatmul.mubr.f32.gmra.mxu0 %v2424
  %v3807 = vpop.f32.mrf.mxu0
  %v3808 = vadd.f32 0.0, %v3807
  %v3809 = vpop.f32.mrf.mxu0
  %3810 = vmatprep.mubr.f32.mxu0 0.0
  %3811 = vmatmul.mubr.f32.gmra.mxu0 %v2426
  %v3812 = vpop.f32.mrf.mxu0
  %v3813 = vadd.f32 0.0, %v3812
  %v3814 = vpop.f32.mrf.mxu0
  %3815 = vmatprep.mubr.f32.mxu0 0.0
  %3816 = vmatmul.mubr.f32.gmra.mxu0 %v2428
  %v3817 = vpop.f32.mrf.mxu0
  %v3818 = vadd.f32 0.0, %v3817
  %v3819 = vpop.f32.mrf.mxu0
  %3820 = vmatprep.mubr.f32.mxu0 0.0
  %3821 = vmatmul.mubr.f32.gmra.mxu0 %v2430
  %v3822 = vpop.f32.mrf.mxu0
  %v3823 = vadd.f32 0.0, %v3822
  %v3824 = vpop.f32.mrf.mxu0
  %3825 = vmatprep.mubr.f32.mxu0 0.0
  %3826 = vmatmul.mubr.f32.gmra.mxu0 %v2432
  %v3827 = vpop.f32.mrf.mxu0
  %v3828 = vadd.f32 0.0, %v3827
  %v3829 = vpop.f32.mrf.mxu0
  %3830 = vmatprep.mubr.f32.mxu0 0.0
  %3831 = vmatmul.mubr.f32.gmra.mxu0 %v2434
  %v3832 = vpop.f32.mrf.mxu0
  %v3833 = vadd.f32 0.0, %v3832
  %v3834 = vpop.f32.mrf.mxu0
  %3835 = vmatprep.mubr.f32.mxu0 0.0
  %3836 = vmatmul.mubr.f32.gmra.mxu0 %v3182
  %v3837 = vpop.f32.mrf.mxu0
  %v3838 = vadd.f32 0.0, %v3837
  %v3839 = vpop.f32.mrf.mxu0
  %3840 = vmatprep.mubr.f32.mxu0 0.0
  %3841 = vmatmul.mubr.f32.gmra.mxu0 %v3699
  %v3842 = vpop.f32.mrf.mxu0
  %v3843 = vadd.f32 0.0, %v3842
  %v3844 = vpop.f32.mrf.mxu0
  %3845 = vdwg.mxu0
  %v3846 = vadd.f32 %v3671, %v3768
  %v3847 = vadd.f32 %v3672, %v3773
  %v3848 = vadd.f32 %v3673, %v3778
  %v3849 = vadd.f32 %v3674, %v3783
  %v3850 = vadd.f32 %v3675, %v3788
  %v3851 = vadd.f32 %v3676, %v3793
  %v3852 = vadd.f32 %v3677, %v3798
  %v3853 = vadd.f32 %v3678, %v3803
  %v3854 = vadd.f32 %v3679, %v3808
  %v3855 = vadd.f32 %v3680, %v3813
  %v3856 = vadd.f32 %v3681, %v3818
  %v3857 = vadd.f32 %v3682, %v3823
  %v3858 = vadd.f32 %v3683, %v3828
  %v3859 = vadd.f32 %v3684, %v3833
  %v3860 = vadd.f32 %v3685, %v3838
  %v3861 = vadd.f32 %v3686, %v3843
  %v3862 = vrot.slane %v2299, 2
  %v3863 = vrot.slane %v2300, 2
  %v3864 = vsel %vm757, %v3862, %v3863
  %v3865 = vrot.slane %v2319, 2
  %v3866 = vrot.slane %v2320, 2
  %v3867 = vsel %vm757, %v3865, %v3866
  %s3868 = scalar_lea.vmem %s7, 64
  %v3869 = vld [vmem:[%s3868] sm:$0xff]
  %v3870 = vsel %vm101, %v3864, 0
  %v3872 = vsel %vm101, %v3867, 0
  %3874 = vmatprep.subr.mxu0 0.0
  %3875 = vmatpush1.msra.mxu0 0.0
  %3876 = vmatprep.subr.mxu0 0.0
  %3877 = vmatpush1.msra.mxu0 0.0
  %3878 = vmatprep.subr.mxu0 0.0
  %3879 = vmatpush1.msra.mxu0 0.0
  %3880 = vmatprep.subr.mxu0 0.0
  %3881 = vmatpush1.msra.mxu0 0.0
  %3882 = vmatprep.subr.mxu0 0.0
  %3883 = vmatpush1.msra.mxu0 0.0
  %3884 = vmatprep.subr.mxu0 0.0
  %3885 = vmatpush1.msra.mxu0 0.0
  %3886 = vmatprep.subr.mxu0 0.0
  %3887 = vmatpush1.msra.mxu0 0.0
  %3888 = vmatprep.subr.mxu0 0.0
  %3889 = vmatpush1.msra.mxu0 0.0
  %3890 = vmatprep.subr.mxu0 0.0
  %3891 = vmatpush1.msra.mxu0 0.0
  %3892 = vmatprep.subr.mxu0 0.0
  %3893 = vmatpush1.msra.mxu0 0.0
  %3894 = vmatprep.subr.mxu0 0.0
  %3895 = vmatpush1.msra.mxu0 0.0
  %3896 = vmatprep.subr.mxu0 0.0
  %3897 = vmatpush1.msra.mxu0 0.0
  %3898 = vmatprep.subr.mxu0 0.0
  %3899 = vmatpush1.msra.mxu0 0.0
  %3900 = vmatprep.subr.mxu0 0.0
  %3901 = vmatpush1.msra.mxu0 0.0
  %3902 = vmatprep.subr.mxu0 0.0
  %3903 = vmatpush1.msra.mxu0 0.0
  %3904 = vmatprep.subr.mxu0 0.0
  %3905 = vmatpush1.msra.mxu0 %v3869
  %3906 = vmatprep.subr.mxu0 0.0
  %3907 = vmatpush2.msra.mxu0 0.0
  %3908 = vmatprep.subr.mxu0 0.0
  %3909 = vmatpush2.msra.mxu0 0.0
  %3910 = vmatprep.subr.mxu0 0.0
  %3911 = vmatpush2.msra.mxu0 0.0
  %3912 = vmatprep.subr.mxu0 0.0
  %3913 = vmatpush2.msra.mxu0 0.0
  %3914 = vmatprep.subr.mxu0 0.0
  %3915 = vmatpush2.msra.mxu0 0.0
  %3916 = vmatprep.subr.mxu0 0.0
  %3917 = vmatpush2.msra.mxu0 0.0
  %3918 = vmatprep.subr.mxu0 0.0
  %3919 = vmatpush2.msra.mxu0 0.0
  %3920 = vmatprep.subr.mxu0 0.0
  %3921 = vmatpush2.msra.mxu0 0.0
  %3922 = vmatprep.subr.mxu0 0.0
  %3923 = vmatpush2.msra.mxu0 0.0
  %3924 = vmatprep.subr.mxu0 0.0
  %3925 = vmatpush2.msra.mxu0 0.0
  %3926 = vmatprep.subr.mxu0 0.0
  %3927 = vmatpush2.msra.mxu0 0.0
  %3928 = vmatprep.subr.mxu0 0.0
  %3929 = vmatpush2.msra.mxu0 0.0
  %3930 = vmatprep.subr.mxu0 0.0
  %3931 = vmatpush2.msra.mxu0 0.0
  %3932 = vmatprep.subr.mxu0 0.0
  %3933 = vmatpush2.msra.mxu0 0.0
  %3934 = vmatprep.subr.mxu0 0.0
  %3935 = vmatpush2.msra.mxu0 0.0
  %3936 = vmatprep.subr.mxu0 0.0
  %3937 = vmatpush2.msra.mxu0 0.0
  %3938 = vmatprep.mubr.f32.mxu0 0.0
  %3939 = vmatmul.mubr.f32.gmra.mxu0 %v2812
  %v3940 = vpop.f32.mrf.mxu0
  %v3941 = vadd.f32 0.0, %v3940
  %v3942 = vpop.f32.mrf.mxu0
  %3943 = vmatprep.mubr.f32.mxu0 0.0
  %3944 = vmatmul.mubr.f32.gmra.mxu0 %v2814
  %v3945 = vpop.f32.mrf.mxu0
  %v3946 = vadd.f32 0.0, %v3945
  %v3947 = vpop.f32.mrf.mxu0
  %3948 = vmatprep.mubr.f32.mxu0 0.0
  %3949 = vmatmul.mubr.f32.gmra.mxu0 %v2816
  %v3950 = vpop.f32.mrf.mxu0
  %v3951 = vadd.f32 0.0, %v3950
  %v3952 = vpop.f32.mrf.mxu0
  %3953 = vmatprep.mubr.f32.mxu0 0.0
  %3954 = vmatmul.mubr.f32.gmra.mxu0 %v2818
  %v3955 = vpop.f32.mrf.mxu0
  %v3956 = vadd.f32 0.0, %v3955
  %v3957 = vpop.f32.mrf.mxu0
  %3958 = vmatprep.mubr.f32.mxu0 0.0
  %3959 = vmatmul.mubr.f32.gmra.mxu0 %v2820
  %v3960 = vpop.f32.mrf.mxu0
  %v3961 = vadd.f32 0.0, %v3960
  %v3962 = vpop.f32.mrf.mxu0
  %3963 = vmatprep.mubr.f32.mxu0 0.0
  %3964 = vmatmul.mubr.f32.gmra.mxu0 %v2822
  %v3965 = vpop.f32.mrf.mxu0
  %v3966 = vadd.f32 0.0, %v3965
  %v3967 = vpop.f32.mrf.mxu0
  %3968 = vmatprep.mubr.f32.mxu0 0.0
  %3969 = vmatmul.mubr.f32.gmra.mxu0 %v3353
  %v3970 = vpop.f32.mrf.mxu0
  %v3971 = vadd.f32 0.0, %v3970
  %v3972 = vpop.f32.mrf.mxu0
  %3973 = vmatprep.mubr.f32.mxu0 0.0
  %3974 = vmatmul.mubr.f32.gmra.mxu0 %v3870
  %v3975 = vpop.f32.mrf.mxu0
  %v3976 = vadd.f32 0.0, %v3975
  %v3977 = vpop.f32.mrf.mxu0
  %3978 = vmatprep.mubr.f32.mxu0 0.0
  %3979 = vmatmul.mubr.f32.gmra.mxu0 %v2828
  %v3980 = vpop.f32.mrf.mxu0
  %v3981 = vadd.f32 0.0, %v3980
  %v3982 = vpop.f32.mrf.mxu0
  %3983 = vmatprep.mubr.f32.mxu0 0.0
  %3984 = vmatmul.mubr.f32.gmra.mxu0 %v2830
  %v3985 = vpop.f32.mrf.mxu0
  %v3986 = vadd.f32 0.0, %v3985
  %v3987 = vpop.f32.mrf.mxu0
  %3988 = vmatprep.mubr.f32.mxu0 0.0
  %3989 = vmatmul.mubr.f32.gmra.mxu0 %v2832
  %v3990 = vpop.f32.mrf.mxu0
  %v3991 = vadd.f32 0.0, %v3990
  %v3992 = vpop.f32.mrf.mxu0
  %3993 = vmatprep.mubr.f32.mxu0 0.0
  %3994 = vmatmul.mubr.f32.gmra.mxu0 %v2834
  %v3995 = vpop.f32.mrf.mxu0
  %v3996 = vadd.f32 0.0, %v3995
  %v3997 = vpop.f32.mrf.mxu0
  %3998 = vmatprep.mubr.f32.mxu0 0.0
  %3999 = vmatmul.mubr.f32.gmra.mxu0 %v2836
  %v4000 = vpop.f32.mrf.mxu0
  %v4001 = vadd.f32 0.0, %v4000
  %v4002 = vpop.f32.mrf.mxu0
  %4003 = vmatprep.mubr.f32.mxu0 0.0
  %4004 = vmatmul.mubr.f32.gmra.mxu0 %v2838
  %v4005 = vpop.f32.mrf.mxu0
  %v4006 = vadd.f32 0.0, %v4005
  %v4007 = vpop.f32.mrf.mxu0
  %4008 = vmatprep.mubr.f32.mxu0 0.0
  %4009 = vmatmul.mubr.f32.gmra.mxu0 %v3355
  %v4010 = vpop.f32.mrf.mxu0
  %v4011 = vadd.f32 0.0, %v4010
  %v4012 = vpop.f32.mrf.mxu0
  %4013 = vmatprep.mubr.f32.mxu0 0.0
  %4014 = vmatmul.mubr.f32.gmra.mxu0 %v3872
  %v4015 = vpop.f32.mrf.mxu0
  %v4016 = vadd.f32 0.0, %v4015
  %v4017 = vpop.f32.mrf.mxu0
  %4018 = vdwg.mxu0
  %v4019 = vadd.f32 %v3846, %v3941
  %v4020 = vadd.f32 %v3847, %v3946
  %v4021 = vadd.f32 %v3848, %v3951
  %v4022 = vadd.f32 %v3849, %v3956
  %v4023 = vadd.f32 %v3850, %v3961
  %v4024 = vadd.f32 %v3851, %v3966
  %v4025 = vadd.f32 %v3852, %v3971
  %v4026 = vadd.f32 %v3853, %v3976
  %v4027 = vadd.f32 %v3854, %v3981
  %v4028 = vadd.f32 %v3855, %v3986
  %v4029 = vadd.f32 %v3856, %v3991
  %v4030 = vadd.f32 %v3857, %v3996
  %v4031 = vadd.f32 %v3858, %v4001
  %v4032 = vadd.f32 %v3859, %v4006
  %v4033 = vadd.f32 %v3860, %v4011
  %v4034 = vadd.f32 %v3861, %v4016
  %v4035 = vsel %vm101, %v4019, 0.0
  %v4036 = vsel %vm101, %v4020, 0.0
  %v4037 = vadd.f32 %v4035, %v4036
  %v4038 = vsel %vm101, %v4021, 0.0
  %v4039 = vadd.f32 %v4037, %v4038
  %v4040 = vsel %vm101, %v4022, 0.0
  %v4041 = vadd.f32 %v4039, %v4040
  %v4042 = vsel %vm101, %v4023, 0.0
  %v4043 = vadd.f32 %v4041, %v4042
  %v4044 = vsel %vm101, %v4024, 0.0
  %v4045 = vadd.f32 %v4043, %v4044
  %v4046 = vsel %vm101, %v4025, 0.0
  %v4047 = vadd.f32 %v4045, %v4046
  %v4048 = vsel %vm101, %v4026, 0.0
  %v4049 = vadd.f32 %v4047, %v4048
  %v4050 = vsel %vm101, %v4027, 0.0
  %v4051 = vadd.f32 %v4049, %v4050
  %v4052 = vsel %vm101, %v4028, 0.0
  %v4053 = vadd.f32 %v4051, %v4052
  %v4054 = vsel %vm101, %v4029, 0.0
  %v4055 = vadd.f32 %v4053, %v4054
  %v4056 = vsel %vm101, %v4030, 0.0
  %v4057 = vadd.f32 %v4055, %v4056
  %v4058 = vsel %vm101, %v4031, 0.0
  %v4059 = vadd.f32 %v4057, %v4058
  %v4060 = vsel %vm101, %v4032, 0.0
  %v4061 = vadd.f32 %v4059, %v4060
  %v4062 = vsel %vm101, %v4033, 0.0
  %v4063 = vadd.f32 %v4061, %v4062
  %v4064 = vsel %vm101, %v4034, 0.0
  %v4065 = vadd.f32 %v4063, %v4064
  %v4066 = vrot.slane %v4065, 4
  %v4067 = vadd.f32 %v4065, %v4066
  %v4068 = vrot.slane %v4067, 2
  %v4069 = vadd.f32 %v4067, %v4068
  %v4070 = vrot.slane %v4069, 1
  %v4071 = vadd.f32 %v4069, %v4070
  %v4072 = vmul.f32 %v4071, %v2093
  %v4073 = vmul.f32 %v4019, %v4019
  %v4074 = vmul.f32 %v4020, %v4020
  %v4075 = vmul.f32 %v4021, %v4021
  %v4076 = vmul.f32 %v4022, %v4022
  %v4077 = vmul.f32 %v4023, %v4023
  %v4078 = vmul.f32 %v4024, %v4024
  %v4079 = vmul.f32 %v4025, %v4025
  %v4080 = vmul.f32 %v4026, %v4026
  %v4081 = vmul.f32 %v4027, %v4027
  %v4082 = vmul.f32 %v4028, %v4028
  %v4083 = vmul.f32 %v4029, %v4029
  %v4084 = vmul.f32 %v4030, %v4030
  %v4085 = vmul.f32 %v4031, %v4031
  %v4086 = vmul.f32 %v4032, %v4032
  %v4087 = vmul.f32 %v4033, %v4033
  %v4088 = vmul.f32 %v4034, %v4034
  %v4089 = vsel %vm101, %v4073, 0.0
  %v4090 = vsel %vm101, %v4074, 0.0
  %v4091 = vadd.f32 %v4089, %v4090
  %v4092 = vsel %vm101, %v4075, 0.0
  %v4093 = vadd.f32 %v4091, %v4092
  %v4094 = vsel %vm101, %v4076, 0.0
  %v4095 = vadd.f32 %v4093, %v4094
  %v4096 = vsel %vm101, %v4077, 0.0
  %v4097 = vadd.f32 %v4095, %v4096
  %v4098 = vsel %vm101, %v4078, 0.0
  %v4099 = vadd.f32 %v4097, %v4098
  %v4100 = vsel %vm101, %v4079, 0.0
  %v4101 = vadd.f32 %v4099, %v4100
  %v4102 = vsel %vm101, %v4080, 0.0
  %v4103 = vadd.f32 %v4101, %v4102
  %v4104 = vsel %vm101, %v4081, 0.0
  %v4105 = vadd.f32 %v4103, %v4104
  %v4106 = vsel %vm101, %v4082, 0.0
  %v4107 = vadd.f32 %v4105, %v4106
  %v4108 = vsel %vm101, %v4083, 0.0
  %v4109 = vadd.f32 %v4107, %v4108
  %v4110 = vsel %vm101, %v4084, 0.0
  %v4111 = vadd.f32 %v4109, %v4110
  %v4112 = vsel %vm101, %v4085, 0.0
  %v4113 = vadd.f32 %v4111, %v4112
  %v4114 = vsel %vm101, %v4086, 0.0
  %v4115 = vadd.f32 %v4113, %v4114
  %v4116 = vsel %vm101, %v4087, 0.0
  %v4117 = vadd.f32 %v4115, %v4116
  %v4118 = vsel %vm101, %v4088, 0.0
  %v4119 = vadd.f32 %v4117, %v4118
  %v4120 = vrot.slane %v4119, 4
  %v4121 = vadd.f32 %v4119, %v4120
  %v4122 = vrot.slane %v4121, 2
  %v4123 = vadd.f32 %v4121, %v4122
  %v4124 = vrot.slane %v4123, 1
  %v4125 = vadd.f32 %v4123, %v4124
  %v4126 = vmul.f32 %v4125, %v2093
  %v4127 = vmul.f32 %v4072, %v4072
  %v4128 = vsub.f32 %v4126, %v4127
  %v4129 = vmax.f32 %v4128, 0.0
  %v4130 = vsub.f32 %v4019, %v4072
  %v4131 = vsub.f32 %v4020, %v4072
  %v4132 = vsub.f32 %v4021, %v4072
  %v4133 = vsub.f32 %v4022, %v4072
  %v4134 = vsub.f32 %v4023, %v4072
  %v4135 = vsub.f32 %v4024, %v4072
  %v4136 = vsub.f32 %v4025, %v4072
  %v4137 = vsub.f32 %v4026, %v4072
  %v4138 = vsub.f32 %v4027, %v4072
  %v4139 = vsub.f32 %v4028, %v4072
  %v4140 = vsub.f32 %v4029, %v4072
  %v4141 = vsub.f32 %v4030, %v4072
  %v4142 = vsub.f32 %v4031, %v4072
  %v4143 = vsub.f32 %v4032, %v4072
  %v4144 = vsub.f32 %v4033, %v4072
  %v4145 = vsub.f32 %v4034, %v4072
  %v4146 = vadd.f32 %v4129, 1e-05
  %v4147 = vrsqrt.pop %v4146
  %v4148 = vmul.f32 %v4130, %v4147
  %v4149 = vmul.f32 %v4131, %v4147
  %v4150 = vmul.f32 %v4132, %v4147
  %v4151 = vmul.f32 %v4133, %v4147
  %v4152 = vmul.f32 %v4134, %v4147
  %v4153 = vmul.f32 %v4135, %v4147
  %v4154 = vmul.f32 %v4136, %v4147
  %v4155 = vmul.f32 %v4137, %v4147
  %v4156 = vmul.f32 %v4138, %v4147
  %v4157 = vmul.f32 %v4139, %v4147
  %v4158 = vmul.f32 %v4140, %v4147
  %v4159 = vmul.f32 %v4141, %v4147
  %v4160 = vmul.f32 %v4142, %v4147
  %v4161 = vmul.f32 %v4143, %v4147
  %v4162 = vmul.f32 %v4144, %v4147
  %v4163 = vmul.f32 %v4145, %v4147
  %v4164 = vld [vmem:[%s8] sm:$0x1]
  %v4166 = vlaneseq
  %v4167 = vshrl.u32 %v4166, 7
  %v4168 = vsub.s32 0, %v4167
  %v4169 = vrot.slane %v4164, %v4168
  %v4171 = vmul.f32 %v4148, %v4169
  %v4172 = vmul.f32 %v4149, %v4169
  %v4173 = vmul.f32 %v4150, %v4169
  %v4174 = vmul.f32 %v4151, %v4169
  %v4175 = vmul.f32 %v4152, %v4169
  %v4176 = vmul.f32 %v4153, %v4169
  %v4177 = vmul.f32 %v4154, %v4169
  %v4178 = vmul.f32 %v4155, %v4169
  %v4179 = vmul.f32 %v4156, %v4169
  %v4180 = vmul.f32 %v4157, %v4169
  %v4181 = vmul.f32 %v4158, %v4169
  %v4182 = vmul.f32 %v4159, %v4169
  %v4183 = vmul.f32 %v4160, %v4169
  %v4184 = vmul.f32 %v4161, %v4169
  %v4185 = vmul.f32 %v4162, %v4169
  %v4186 = vmul.f32 %v4163, %v4169
  %v4187 = vld [vmem:[%s9] sm:$0x1]
  %v4189 = vlaneseq
  %v4190 = vshrl.u32 %v4189, 7
  %v4191 = vsub.s32 0, %v4190
  %v4192 = vrot.slane %v4187, %v4191
  %v4194 = vadd.f32 %v4171, %v4192
  %v4195 = vadd.f32 %v4172, %v4192
  %v4196 = vadd.f32 %v4173, %v4192
  %v4197 = vadd.f32 %v4174, %v4192
  %v4198 = vadd.f32 %v4175, %v4192
  %v4199 = vadd.f32 %v4176, %v4192
  %v4200 = vadd.f32 %v4177, %v4192
  %v4201 = vadd.f32 %v4178, %v4192
  %v4202 = vadd.f32 %v4179, %v4192
  %v4203 = vadd.f32 %v4180, %v4192
  %v4204 = vadd.f32 %v4181, %v4192
  %v4205 = vadd.f32 %v4182, %v4192
  %v4206 = vadd.f32 %v4183, %v4192
  %v4207 = vadd.f32 %v4184, %v4192
  %v4208 = vadd.f32 %v4185, %v4192
  %v4209 = vadd.f32 %v4186, %v4192
  %v4210 = vmul.f32 %v4194, 0.01
  %v4211 = vmul.f32 %v4195, 0.01
  %v4212 = vmul.f32 %v4196, 0.01
  %v4213 = vmul.f32 %v4197, 0.01
  %v4214 = vmul.f32 %v4198, 0.01
  %v4215 = vmul.f32 %v4199, 0.01
  %v4216 = vmul.f32 %v4200, 0.01
  %v4217 = vmul.f32 %v4201, 0.01
  %v4218 = vmul.f32 %v4202, 0.01
  %v4219 = vmul.f32 %v4203, 0.01
  %v4220 = vmul.f32 %v4204, 0.01
  %v4221 = vmul.f32 %v4205, 0.01
  %v4222 = vmul.f32 %v4206, 0.01
  %v4223 = vmul.f32 %v4207, 0.01
  %v4224 = vmul.f32 %v4208, 0.01
  %v4225 = vmul.f32 %v4209, 0.01
  %v4226 = vmax.f32 %v4194, %v4210
  %v4227 = vmax.f32 %v4195, %v4211
  %v4228 = vmax.f32 %v4196, %v4212
  %v4229 = vmax.f32 %v4197, %v4213
  %v4230 = vmax.f32 %v4198, %v4214
  %v4231 = vmax.f32 %v4199, %v4215
  %v4232 = vmax.f32 %v4200, %v4216
  %v4233 = vmax.f32 %v4201, %v4217
  %v4234 = vmax.f32 %v4202, %v4218
  %v4235 = vmax.f32 %v4203, %v4219
  %v4236 = vmax.f32 %v4204, %v4220
  %v4237 = vmax.f32 %v4205, %v4221
  %v4238 = vmax.f32 %v4206, %v4222
  %v4239 = vmax.f32 %v4207, %v4223
  %v4240 = vmax.f32 %v4208, %v4224
  %v4241 = vmax.f32 %v4209, %v4225
  %v4242 = vld [vmem:[%s10] sm:$0xf]
  %v4243 = vld [vmem:[%s11] sm:$0x1]
  %v4245 = vlaneseq
  %v4246 = vshrl.u32 %v4245, 7
  %v4247 = vsub.s32 0, %v4246
  %v4248 = vrot.slane %v4243, %v4247
  %v4251 = vsel %vm59, %v239, 0
  %v4254 = vsel %vm59, %v240, 0
  %v4257 = vsel %vm59, %v241, 0
  %v4260 = vsel %vm59, %v242, 0
  %v4263 = vsel %vm59, %v243, 0
  %v4266 = vsel %vm59, %v244, 0
  %v4269 = vsel %vm59, %v245, 0
  %v4272 = vsel %vm59, %v246, 0
  %v4275 = vsel %vm59, %v247, 0
  %v4278 = vsel %vm59, %v248, 0
  %v4281 = vsel %vm59, %v249, 0
  %v4284 = vsel %vm59, %v250, 0
  %v4287 = vsel %vm59, %v251, 0
  %v4290 = vsel %vm59, %v252, 0
  %v4293 = vsel %vm59, %v253, 0
  %v4296 = vsel %vm59, %v254, 0
  %v4299 = vsel %vm428, %v4242, 0
  %4301 = vmatprep.subr.mxu0 0.0
  %4302 = vmatpush1.msra.mxu0 0.0
  %4303 = vmatprep.subr.mxu0 0.0
  %4304 = vmatpush1.msra.mxu0 0.0
  %4305 = vmatprep.subr.mxu0 0.0
  %4306 = vmatpush1.msra.mxu0 0.0
  %4307 = vmatprep.subr.mxu0 0.0
  %4308 = vmatpush1.msra.mxu0 0.0
  %4309 = vmatprep.subr.mxu0 0.0
  %4310 = vmatpush1.msra.mxu0 0.0
  %4311 = vmatprep.subr.mxu0 0.0
  %4312 = vmatpush1.msra.mxu0 0.0
  %4313 = vmatprep.subr.mxu0 0.0
  %4314 = vmatpush1.msra.mxu0 0.0
  %4315 = vmatprep.subr.mxu0 0.0
  %4316 = vmatpush1.msra.mxu0 0.0
  %4317 = vmatprep.subr.mxu0 0.0
  %4318 = vmatpush1.msra.mxu0 0.0
  %4319 = vmatprep.subr.mxu0 0.0
  %4320 = vmatpush1.msra.mxu0 0.0
  %4321 = vmatprep.subr.mxu0 0.0
  %4322 = vmatpush1.msra.mxu0 0.0
  %4323 = vmatprep.subr.mxu0 0.0
  %4324 = vmatpush1.msra.mxu0 0.0
  %4325 = vmatprep.subr.mxu0 0.0
  %4326 = vmatpush1.msra.mxu0 0.0
  %4327 = vmatprep.subr.mxu0 0.0
  %4328 = vmatpush1.msra.mxu0 0.0
  %4329 = vmatprep.subr.mxu0 0.0
  %4330 = vmatpush1.msra.mxu0 0.0
  %4331 = vmatprep.subr.mxu0 0.0
  %4332 = vmatpush1.msra.mxu0 %v4299
  %4333 = vmatprep.subr.mxu0 0.0
  %4334 = vmatpush2.msra.mxu0 0.0
  %4335 = vmatprep.subr.mxu0 0.0
  %4336 = vmatpush2.msra.mxu0 0.0
  %4337 = vmatprep.subr.mxu0 0.0
  %4338 = vmatpush2.msra.mxu0 0.0
  %4339 = vmatprep.subr.mxu0 0.0
  %4340 = vmatpush2.msra.mxu0 0.0
  %4341 = vmatprep.subr.mxu0 0.0
  %4342 = vmatpush2.msra.mxu0 0.0
  %4343 = vmatprep.subr.mxu0 0.0
  %4344 = vmatpush2.msra.mxu0 0.0
  %4345 = vmatprep.subr.mxu0 0.0
  %4346 = vmatpush2.msra.mxu0 0.0
  %4347 = vmatprep.subr.mxu0 0.0
  %4348 = vmatpush2.msra.mxu0 0.0
  %4349 = vmatprep.subr.mxu0 0.0
  %4350 = vmatpush2.msra.mxu0 0.0
  %4351 = vmatprep.subr.mxu0 0.0
  %4352 = vmatpush2.msra.mxu0 0.0
  %4353 = vmatprep.subr.mxu0 0.0
  %4354 = vmatpush2.msra.mxu0 0.0
  %4355 = vmatprep.subr.mxu0 0.0
  %4356 = vmatpush2.msra.mxu0 0.0
  %4357 = vmatprep.subr.mxu0 0.0
  %4358 = vmatpush2.msra.mxu0 0.0
  %4359 = vmatprep.subr.mxu0 0.0
  %4360 = vmatpush2.msra.mxu0 0.0
  %4361 = vmatprep.subr.mxu0 0.0
  %4362 = vmatpush2.msra.mxu0 0.0
  %4363 = vmatprep.subr.mxu0 0.0
  %4364 = vmatpush2.msra.mxu0 0.0
  %4365 = vmatprep.mubr.f32.mxu0 0.0
  %4366 = vmatmul.mubr.f32.gmra.mxu0 %v4251
  %v4367 = vpop.f32.mrf.mxu0
  %v4368 = vadd.f32 %v4248, %v4367
  %v4369 = vpop.f32.mrf.mxu0
  %4370 = vmatprep.mubr.f32.mxu0 0.0
  %4371 = vmatmul.mubr.f32.gmra.mxu0 %v4254
  %v4372 = vpop.f32.mrf.mxu0
  %v4373 = vadd.f32 %v4248, %v4372
  %v4374 = vpop.f32.mrf.mxu0
  %4375 = vmatprep.mubr.f32.mxu0 0.0
  %4376 = vmatmul.mubr.f32.gmra.mxu0 %v4257
  %v4377 = vpop.f32.mrf.mxu0
  %v4378 = vadd.f32 %v4248, %v4377
  %v4379 = vpop.f32.mrf.mxu0
  %4380 = vmatprep.mubr.f32.mxu0 0.0
  %4381 = vmatmul.mubr.f32.gmra.mxu0 %v4260
  %v4382 = vpop.f32.mrf.mxu0
  %v4383 = vadd.f32 %v4248, %v4382
  %v4384 = vpop.f32.mrf.mxu0
  %4385 = vmatprep.mubr.f32.mxu0 0.0
  %4386 = vmatmul.mubr.f32.gmra.mxu0 %v4263
  %v4387 = vpop.f32.mrf.mxu0
  %v4388 = vadd.f32 %v4248, %v4387
  %v4389 = vpop.f32.mrf.mxu0
  %4390 = vmatprep.mubr.f32.mxu0 0.0
  %4391 = vmatmul.mubr.f32.gmra.mxu0 %v4266
  %v4392 = vpop.f32.mrf.mxu0
  %v4393 = vadd.f32 %v4248, %v4392
  %v4394 = vpop.f32.mrf.mxu0
  %4395 = vmatprep.mubr.f32.mxu0 0.0
  %4396 = vmatmul.mubr.f32.gmra.mxu0 %v4269
  %v4397 = vpop.f32.mrf.mxu0
  %v4398 = vadd.f32 %v4248, %v4397
  %v4399 = vpop.f32.mrf.mxu0
  %4400 = vmatprep.mubr.f32.mxu0 0.0
  %4401 = vmatmul.mubr.f32.gmra.mxu0 %v4272
  %v4402 = vpop.f32.mrf.mxu0
  %v4403 = vadd.f32 %v4248, %v4402
  %v4404 = vpop.f32.mrf.mxu0
  %4405 = vmatprep.mubr.f32.mxu0 0.0
  %4406 = vmatmul.mubr.f32.gmra.mxu0 %v4275
  %v4407 = vpop.f32.mrf.mxu0
  %v4408 = vadd.f32 %v4248, %v4407
  %v4409 = vpop.f32.mrf.mxu0
  %4410 = vmatprep.mubr.f32.mxu0 0.0
  %4411 = vmatmul.mubr.f32.gmra.mxu0 %v4278
  %v4412 = vpop.f32.mrf.mxu0
  %v4413 = vadd.f32 %v4248, %v4412
  %v4414 = vpop.f32.mrf.mxu0
  %4415 = vmatprep.mubr.f32.mxu0 0.0
  %4416 = vmatmul.mubr.f32.gmra.mxu0 %v4281
  %v4417 = vpop.f32.mrf.mxu0
  %v4418 = vadd.f32 %v4248, %v4417
  %v4419 = vpop.f32.mrf.mxu0
  %4420 = vmatprep.mubr.f32.mxu0 0.0
  %4421 = vmatmul.mubr.f32.gmra.mxu0 %v4284
  %v4422 = vpop.f32.mrf.mxu0
  %v4423 = vadd.f32 %v4248, %v4422
  %v4424 = vpop.f32.mrf.mxu0
  %4425 = vmatprep.mubr.f32.mxu0 0.0
  %4426 = vmatmul.mubr.f32.gmra.mxu0 %v4287
  %v4427 = vpop.f32.mrf.mxu0
  %v4428 = vadd.f32 %v4248, %v4427
  %v4429 = vpop.f32.mrf.mxu0
  %4430 = vmatprep.mubr.f32.mxu0 0.0
  %4431 = vmatmul.mubr.f32.gmra.mxu0 %v4290
  %v4432 = vpop.f32.mrf.mxu0
  %v4433 = vadd.f32 %v4248, %v4432
  %v4434 = vpop.f32.mrf.mxu0
  %4435 = vmatprep.mubr.f32.mxu0 0.0
  %4436 = vmatmul.mubr.f32.gmra.mxu0 %v4293
  %v4437 = vpop.f32.mrf.mxu0
  %v4438 = vadd.f32 %v4248, %v4437
  %v4439 = vpop.f32.mrf.mxu0
  %4440 = vmatprep.mubr.f32.mxu0 0.0
  %4441 = vmatmul.mubr.f32.gmra.mxu0 %v4296
  %v4442 = vpop.f32.mrf.mxu0
  %v4443 = vadd.f32 %v4248, %v4442
  %v4444 = vpop.f32.mrf.mxu0
  %4445 = vdwg.mxu0
  %v4446 = vadd.f32 %v4368, %v4226
  %v4447 = vadd.f32 %v4373, %v4227
  %v4448 = vadd.f32 %v4378, %v4228
  %v4449 = vadd.f32 %v4383, %v4229
  %v4450 = vadd.f32 %v4388, %v4230
  %v4451 = vadd.f32 %v4393, %v4231
  %v4452 = vadd.f32 %v4398, %v4232
  %v4453 = vadd.f32 %v4403, %v4233
  %v4454 = vadd.f32 %v4408, %v4234
  %v4455 = vadd.f32 %v4413, %v4235
  %v4456 = vadd.f32 %v4418, %v4236
  %v4457 = vadd.f32 %v4423, %v4237
  %v4458 = vadd.f32 %v4428, %v4238
  %v4459 = vadd.f32 %v4433, %v4239
  %v4460 = vadd.f32 %v4438, %v4240
  %v4461 = vadd.f32 %v4443, %v4241
  %v4462 = vmul.f32 %v4446, 0.01
  %v4463 = vmul.f32 %v4447, 0.01
  %v4464 = vmul.f32 %v4448, 0.01
  %v4465 = vmul.f32 %v4449, 0.01
  %v4466 = vmul.f32 %v4450, 0.01
  %v4467 = vmul.f32 %v4451, 0.01
  %v4468 = vmul.f32 %v4452, 0.01
  %v4469 = vmul.f32 %v4453, 0.01
  %v4470 = vmul.f32 %v4454, 0.01
  %v4471 = vmul.f32 %v4455, 0.01
  %v4472 = vmul.f32 %v4456, 0.01
  %v4473 = vmul.f32 %v4457, 0.01
  %v4474 = vmul.f32 %v4458, 0.01
  %v4475 = vmul.f32 %v4459, 0.01
  %v4476 = vmul.f32 %v4460, 0.01
  %v4477 = vmul.f32 %v4461, 0.01
  %v4478 = vmax.f32 %v4446, %v4462
  %v4479 = vmax.f32 %v4447, %v4463
  %v4480 = vmax.f32 %v4448, %v4464
  %v4481 = vmax.f32 %v4449, %v4465
  %v4482 = vmax.f32 %v4450, %v4466
  %v4483 = vmax.f32 %v4451, %v4467
  %v4484 = vmax.f32 %v4452, %v4468
  %v4485 = vmax.f32 %v4453, %v4469
  %v4486 = vmax.f32 %v4454, %v4470
  %v4487 = vmax.f32 %v4455, %v4471
  %v4488 = vmax.f32 %v4456, %v4472
  %v4489 = vmax.f32 %v4457, %v4473
  %v4490 = vmax.f32 %v4458, %v4474
  %v4491 = vmax.f32 %v4459, %v4475
  %v4492 = vmax.f32 %v4460, %v4476
  %v4493 = vmax.f32 %v4461, %v4477
  %4494 = vst.msk [vmem:[%s2264 + $0x1] sm:$0xff] %vm101, %v4478
  %4495 = vst.msk [vmem:[%s2264 + $0x11] sm:$0xff] %vm101, %v4479
  %4496 = vst.msk [vmem:[%s2264 + $0x21] sm:$0xff] %vm101, %v4480
  %4497 = vst.msk [vmem:[%s2264 + $0x31] sm:$0xff] %vm101, %v4481
  %4498 = vst.msk [vmem:[%s2264 + $0x41] sm:$0xff] %vm101, %v4482
  %4499 = vst.msk [vmem:[%s2264 + $0x51] sm:$0xff] %vm101, %v4483
  %4500 = vst.msk [vmem:[%s2264 + $0x61] sm:$0xff] %vm101, %v4484
  %4501 = vst.msk [vmem:[%s2264 + $0x71] sm:$0xff] %vm101, %v4485
  %4502 = vst.msk [vmem:[%s2264 + $0xa1] sm:$0xff] %vm101, %v4486
  %4503 = vst.msk [vmem:[%s2264 + $0xb1] sm:$0xff] %vm101, %v4487
  %4504 = vst.msk [vmem:[%s2264 + $0xc1] sm:$0xff] %vm101, %v4488
  %4505 = vst.msk [vmem:[%s2264 + $0xd1] sm:$0xff] %vm101, %v4489
  %4506 = vst.msk [vmem:[%s2264 + $0xe1] sm:$0xff] %vm101, %v4490
  %4507 = vst.msk [vmem:[%s2264 + $0xf1] sm:$0xff] %vm101, %v4491
  %4508 = vst.msk [vmem:[%s2264 + $0x101] sm:$0xff] %vm101, %v4492
  %4509 = vst.msk [vmem:[%s2264 + $0x111] sm:$0xff] %vm101, %v4493
  %v4510 = vld [vmem:[#allocation3] sm:$0xff]
  %v4511 = vld [vmem:[#allocation3 + $0x8] sm:$0x3]
  %v4512 = vld [vmem:[#allocation3 + $0x10] sm:$0xff]
  %v4513 = vld [vmem:[#allocation3 + $0x18] sm:$0x3]
  %v4514 = vld [vmem:[#allocation3 + $0x20] sm:$0xff]
  %v4515 = vld [vmem:[#allocation3 + $0x28] sm:$0x3]
  %v4516 = vld [vmem:[#allocation3 + $0x30] sm:$0xff]
  %v4517 = vld [vmem:[#allocation3 + $0x38] sm:$0x3]
  %v4518 = vld [vmem:[#allocation3 + $0x40] sm:$0xff]
  %v4519 = vld [vmem:[#allocation3 + $0x48] sm:$0x3]
  %v4520 = vld [vmem:[#allocation3 + $0x50] sm:$0xff]
  %v4521 = vld [vmem:[#allocation3 + $0x58] sm:$0x3]
  %v4522 = vld [vmem:[#allocation3 + $0x60] sm:$0xff]
  %v4523 = vld [vmem:[#allocation3 + $0x68] sm:$0x3]
  %v4524 = vld [vmem:[#allocation3 + $0x70] sm:$0xff]
  %v4525 = vld [vmem:[#allocation3 + $0x78] sm:$0x3]
  %v4526 = vld [vmem:[#allocation3 + $0x80] sm:$0xff]
  %v4527 = vld [vmem:[#allocation3 + $0x88] sm:$0x3]
  %v4528 = vld [vmem:[#allocation3 + $0x90] sm:$0xff]
  %v4529 = vld [vmem:[#allocation3 + $0x98] sm:$0x3]
  %v4530 = vld [vmem:[#allocation3 + $0xa0] sm:$0xff]
  %v4531 = vld [vmem:[#allocation3 + $0xa8] sm:$0x3]
  %v4532 = vld [vmem:[#allocation3 + $0xb0] sm:$0xff]
  %v4533 = vld [vmem:[#allocation3 + $0xb8] sm:$0x3]
  %v4534 = vld [vmem:[#allocation3 + $0xc0] sm:$0xff]
  %v4535 = vld [vmem:[#allocation3 + $0xc8] sm:$0x3]
  %v4536 = vld [vmem:[#allocation3 + $0xd0] sm:$0xff]
  %v4537 = vld [vmem:[#allocation3 + $0xd8] sm:$0x3]
  %v4538 = vld [vmem:[#allocation3 + $0xe0] sm:$0xff]
  %v4539 = vld [vmem:[#allocation3 + $0xe8] sm:$0x3]
  %v4540 = vld [vmem:[#allocation3 + $0xf0] sm:$0xff]
  %v4541 = vld [vmem:[#allocation3 + $0xf8] sm:$0x3]
  %v4542 = vld [vmem:[#allocation3 + $0x100] sm:$0xff]
  %v4543 = vld [vmem:[#allocation3 + $0x108] sm:$0x3]
  %v4544 = vld [vmem:[#allocation3 + $0x110] sm:$0xff]
  %v4545 = vld [vmem:[#allocation3 + $0x118] sm:$0x3]
  %v4546 = vld [vmem:[#allocation3 + $0x120] sm:$0xff]
  %v4547 = vld [vmem:[#allocation3 + $0x128] sm:$0x3]
  %v4548 = vld [vmem:[#allocation3 + $0x130] sm:$0xff]
  %v4549 = vld [vmem:[#allocation3 + $0x138] sm:$0x3]
  %v4550 = vld [vmem:[%s12] sm:$0xff]
  %v4583 = vrot.slane %v4510, 1
  %v4584 = vrot.slane %v4511, 1
  %v4585 = vsel %vm345, %v4583, %v4584
  %v4586 = vrot.slane %v4512, 1
  %v4587 = vrot.slane %v4513, 1
  %v4588 = vsel %vm345, %v4586, %v4587
  %v4589 = vrot.slane %v4514, 1
  %v4590 = vrot.slane %v4515, 1
  %v4591 = vsel %vm345, %v4589, %v4590
  %v4592 = vrot.slane %v4516, 1
  %v4593 = vrot.slane %v4517, 1
  %v4594 = vsel %vm345, %v4592, %v4593
  %v4595 = vrot.slane %v4518, 1
  %v4596 = vrot.slane %v4519, 1
  %v4597 = vsel %vm345, %v4595, %v4596
  %v4598 = vrot.slane %v4520, 1
  %v4599 = vrot.slane %v4521, 1
  %v4600 = vsel %vm345, %v4598, %v4599
  %v4601 = vrot.slane %v4522, 1
  %v4602 = vrot.slane %v4523, 1
  %v4603 = vsel %vm345, %v4601, %v4602
  %v4604 = vrot.slane %v4524, 1
  %v4605 = vrot.slane %v4525, 1
  %v4606 = vsel %vm345, %v4604, %v4605
  %v4607 = vrot.slane %v4530, 1
  %v4608 = vrot.slane %v4531, 1
  %v4609 = vsel %vm345, %v4607, %v4608
  %v4610 = vrot.slane %v4532, 1
  %v4611 = vrot.slane %v4533, 1
  %v4612 = vsel %vm345, %v4610, %v4611
  %v4613 = vrot.slane %v4534, 1
  %v4614 = vrot.slane %v4535, 1
  %v4615 = vsel %vm345, %v4613, %v4614
  %v4616 = vrot.slane %v4536, 1
  %v4617 = vrot.slane %v4537, 1
  %v4618 = vsel %vm345, %v4616, %v4617
  %v4619 = vrot.slane %v4538, 1
  %v4620 = vrot.slane %v4539, 1
  %v4621 = vsel %vm345, %v4619, %v4620
  %v4622 = vrot.slane %v4540, 1
  %v4623 = vrot.slane %v4541, 1
  %v4624 = vsel %vm345, %v4622, %v4623
  %v4625 = vrot.slane %v4542, 1
  %v4626 = vrot.slane %v4543, 1
  %v4627 = vsel %vm345, %v4625, %v4626
  %v4628 = vrot.slane %v4544, 1
  %v4629 = vrot.slane %v4545, 1
  %v4630 = vsel %vm345, %v4628, %v4629
  %s4631 = scalar_lea.vmem %s12, 8
  %v4632 = vld [vmem:[%s4631] sm:$0xff]
  %v4633 = vsel %vm101, %v4585, 0
  %v4635 = vsel %vm101, %v4588, 0
  %v4637 = vsel %vm101, %v4591, 0
  %v4639 = vsel %vm101, %v4594, 0
  %v4641 = vsel %vm101, %v4597, 0
  %v4643 = vsel %vm101, %v4600, 0
  %v4645 = vsel %vm101, %v4603, 0
  %v4647 = vsel %vm101, %v4606, 0
  %v4649 = vsel %vm101, %v4609, 0
  %v4651 = vsel %vm101, %v4612, 0
  %v4653 = vsel %vm101, %v4615, 0
  %v4655 = vsel %vm101, %v4618, 0
  %v4657 = vsel %vm101, %v4621, 0
  %v4659 = vsel %vm101, %v4624, 0
  %v4661 = vsel %vm101, %v4627, 0
  %v4663 = vsel %vm101, %v4630, 0
  %4665 = vmatprep.subr.mxu0 0.0
  %4666 = vmatpush1.msra.mxu0 0.0
  %4667 = vmatprep.subr.mxu0 0.0
  %4668 = vmatpush1.msra.mxu0 0.0
  %4669 = vmatprep.subr.mxu0 0.0
  %4670 = vmatpush1.msra.mxu0 0.0
  %4671 = vmatprep.subr.mxu0 0.0
  %4672 = vmatpush1.msra.mxu0 0.0
  %4673 = vmatprep.subr.mxu0 0.0
  %4674 = vmatpush1.msra.mxu0 0.0
  %4675 = vmatprep.subr.mxu0 0.0
  %4676 = vmatpush1.msra.mxu0 0.0
  %4677 = vmatprep.subr.mxu0 0.0
  %4678 = vmatpush1.msra.mxu0 0.0
  %4679 = vmatprep.subr.mxu0 0.0
  %4680 = vmatpush1.msra.mxu0 0.0
  %4681 = vmatprep.subr.mxu0 0.0
  %4682 = vmatpush1.msra.mxu0 0.0
  %4683 = vmatprep.subr.mxu0 0.0
  %4684 = vmatpush1.msra.mxu0 0.0
  %4685 = vmatprep.subr.mxu0 0.0
  %4686 = vmatpush1.msra.mxu0 0.0
  %4687 = vmatprep.subr.mxu0 0.0
  %4688 = vmatpush1.msra.mxu0 0.0
  %4689 = vmatprep.subr.mxu0 0.0
  %4690 = vmatpush1.msra.mxu0 0.0
  %4691 = vmatprep.subr.mxu0 0.0
  %4692 = vmatpush1.msra.mxu0 0.0
  %4693 = vmatprep.subr.mxu0 0.0
  %4694 = vmatpush1.msra.mxu0 0.0
  %4695 = vmatprep.subr.mxu0 0.0
  %4696 = vmatpush1.msra.mxu0 %v4632
  %4697 = vmatprep.subr.mxu0 0.0
  %4698 = vmatpush2.msra.mxu0 0.0
  %4699 = vmatprep.subr.mxu0 0.0
  %4700 = vmatpush2.msra.mxu0 0.0
  %4701 = vmatprep.subr.mxu0 0.0
  %4702 = vmatpush2.msra.mxu0 0.0
  %4703 = vmatprep.subr.mxu0 0.0
  %4704 = vmatpush2.msra.mxu0 0.0
  %4705 = vmatprep.subr.mxu0 0.0
  %4706 = vmatpush2.msra.mxu0 0.0
  %4707 = vmatprep.subr.mxu0 0.0
  %4708 = vmatpush2.msra.mxu0 0.0
  %4709 = vmatprep.subr.mxu0 0.0
  %4710 = vmatpush2.msra.mxu0 0.0
  %4711 = vmatprep.subr.mxu0 0.0
  %4712 = vmatpush2.msra.mxu0 0.0
  %4713 = vmatprep.subr.mxu0 0.0
  %4714 = vmatpush2.msra.mxu0 0.0
  %4715 = vmatprep.subr.mxu0 0.0
  %4716 = vmatpush2.msra.mxu0 0.0
  %4717 = vmatprep.subr.mxu0 0.0
  %4718 = vmatpush2.msra.mxu0 0.0
  %4719 = vmatprep.subr.mxu0 0.0
  %4720 = vmatpush2.msra.mxu0 0.0
  %4721 = vmatprep.subr.mxu0 0.0
  %4722 = vmatpush2.msra.mxu0 0.0
  %4723 = vmatprep.subr.mxu0 0.0
  %4724 = vmatpush2.msra.mxu0 0.0
  %4725 = vmatprep.subr.mxu0 0.0
  %4726 = vmatpush2.msra.mxu0 0.0
  %4727 = vmatprep.subr.mxu0 0.0
  %4728 = vmatpush2.msra.mxu0 0.0
  %4729 = vmatprep.mubr.f32.mxu0 0.0
  %4730 = vmatmul.mubr.f32.gmra.mxu0 %v4633
  %v4731 = vpop.f32.mrf.mxu0
  %v4732 = vadd.f32 0.0, %v4731
  %v4733 = vpop.f32.mrf.mxu0
  %4734 = vmatprep.mubr.f32.mxu0 0.0
  %4735 = vmatmul.mubr.f32.gmra.mxu0 %v4635
  %v4736 = vpop.f32.mrf.mxu0
  %v4737 = vadd.f32 0.0, %v4736
  %v4738 = vpop.f32.mrf.mxu0
  %4739 = vmatprep.mubr.f32.mxu0 0.0
  %4740 = vmatmul.mubr.f32.gmra.mxu0 %v4637
  %v4741 = vpop.f32.mrf.mxu0
  %v4742 = vadd.f32 0.0, %v4741
  %v4743 = vpop.f32.mrf.mxu0
  %4744 = vmatprep.mubr.f32.mxu0 0.0
  %4745 = vmatmul.mubr.f32.gmra.mxu0 %v4639
  %v4746 = vpop.f32.mrf.mxu0
  %v4747 = vadd.f32 0.0, %v4746
  %v4748 = vpop.f32.mrf.mxu0
  %4749 = vmatprep.mubr.f32.mxu0 0.0
  %4750 = vmatmul.mubr.f32.gmra.mxu0 %v4641
  %v4751 = vpop.f32.mrf.mxu0
  %v4752 = vadd.f32 0.0, %v4751
  %v4753 = vpop.f32.mrf.mxu0
  %4754 = vmatprep.mubr.f32.mxu0 0.0
  %4755 = vmatmul.mubr.f32.gmra.mxu0 %v4643
  %v4756 = vpop.f32.mrf.mxu0
  %v4757 = vadd.f32 0.0, %v4756
  %v4758 = vpop.f32.mrf.mxu0
  %4759 = vmatprep.mubr.f32.mxu0 0.0
  %4760 = vmatmul.mubr.f32.gmra.mxu0 %v4645
  %v4761 = vpop.f32.mrf.mxu0
  %v4762 = vadd.f32 0.0, %v4761
  %v4763 = vpop.f32.mrf.mxu0
  %4764 = vmatprep.mubr.f32.mxu0 0.0
  %4765 = vmatmul.mubr.f32.gmra.mxu0 %v4647
  %v4766 = vpop.f32.mrf.mxu0
  %v4767 = vadd.f32 0.0, %v4766
  %v4768 = vpop.f32.mrf.mxu0
  %4769 = vmatprep.mubr.f32.mxu0 0.0
  %4770 = vmatmul.mubr.f32.gmra.mxu0 %v4649
  %v4771 = vpop.f32.mrf.mxu0
  %v4772 = vadd.f32 0.0, %v4771
  %v4773 = vpop.f32.mrf.mxu0
  %4774 = vmatprep.mubr.f32.mxu0 0.0
  %4775 = vmatmul.mubr.f32.gmra.mxu0 %v4651
  %v4776 = vpop.f32.mrf.mxu0
  %v4777 = vadd.f32 0.0, %v4776
  %v4778 = vpop.f32.mrf.mxu0
  %4779 = vmatprep.mubr.f32.mxu0 0.0
  %4780 = vmatmul.mubr.f32.gmra.mxu0 %v4653
  %v4781 = vpop.f32.mrf.mxu0
  %v4782 = vadd.f32 0.0, %v4781
  %v4783 = vpop.f32.mrf.mxu0
  %4784 = vmatprep.mubr.f32.mxu0 0.0
  %4785 = vmatmul.mubr.f32.gmra.mxu0 %v4655
  %v4786 = vpop.f32.mrf.mxu0
  %v4787 = vadd.f32 0.0, %v4786
  %v4788 = vpop.f32.mrf.mxu0
  %4789 = vmatprep.mubr.f32.mxu0 0.0
  %4790 = vmatmul.mubr.f32.gmra.mxu0 %v4657
  %v4791 = vpop.f32.mrf.mxu0
  %v4792 = vadd.f32 0.0, %v4791
  %v4793 = vpop.f32.mrf.mxu0
  %4794 = vmatprep.mubr.f32.mxu0 0.0
  %4795 = vmatmul.mubr.f32.gmra.mxu0 %v4659
  %v4796 = vpop.f32.mrf.mxu0
  %v4797 = vadd.f32 0.0, %v4796
  %v4798 = vpop.f32.mrf.mxu0
  %4799 = vmatprep.mubr.f32.mxu0 0.0
  %4800 = vmatmul.mubr.f32.gmra.mxu0 %v4661
  %v4801 = vpop.f32.mrf.mxu0
  %v4802 = vadd.f32 0.0, %v4801
  %v4803 = vpop.f32.mrf.mxu0
  %4804 = vmatprep.mubr.f32.mxu0 0.0
  %4805 = vmatmul.mubr.f32.gmra.mxu0 %v4663
  %v4806 = vpop.f32.mrf.mxu0
  %v4807 = vadd.f32 0.0, %v4806
  %v4808 = vpop.f32.mrf.mxu0
  %4809 = vdwg.mxu0
  %v4810 = vsel %vm101, %v4510, 0
  %v4812 = vsel %vm101, %v4512, 0
  %v4814 = vsel %vm101, %v4514, 0
  %v4816 = vsel %vm101, %v4516, 0
  %v4818 = vsel %vm101, %v4518, 0
  %v4820 = vsel %vm101, %v4520, 0
  %v4822 = vsel %vm101, %v4522, 0
  %v4824 = vsel %vm101, %v4524, 0
  %v4826 = vsel %vm101, %v4530, 0
  %v4828 = vsel %vm101, %v4532, 0
  %v4830 = vsel %vm101, %v4534, 0
  %v4832 = vsel %vm101, %v4536, 0
  %v4834 = vsel %vm101, %v4538, 0
  %v4836 = vsel %vm101, %v4540, 0
  %v4838 = vsel %vm101, %v4542, 0
  %v4840 = vsel %vm101, %v4544, 0
  %4842 = vmatprep.subr.mxu0 0.0
  %4843 = vmatpush1.msra.mxu0 0.0
  %4844 = vmatprep.subr.mxu0 0.0
  %4845 = vmatpush1.msra.mxu0 0.0
  %4846 = vmatprep.subr.mxu0 0.0
  %4847 = vmatpush1.msra.mxu0 0.0
  %4848 = vmatprep.subr.mxu0 0.0
  %4849 = vmatpush1.msra.mxu0 0.0
  %4850 = vmatprep.subr.mxu0 0.0
  %4851 = vmatpush1.msra.mxu0 0.0
  %4852 = vmatprep.subr.mxu0 0.0
  %4853 = vmatpush1.msra.mxu0 0.0
  %4854 = vmatprep.subr.mxu0 0.0
  %4855 = vmatpush1.msra.mxu0 0.0
  %4856 = vmatprep.subr.mxu0 0.0
  %4857 = vmatpush1.msra.mxu0 0.0
  %4858 = vmatprep.subr.mxu0 0.0
  %4859 = vmatpush1.msra.mxu0 0.0
  %4860 = vmatprep.subr.mxu0 0.0
  %4861 = vmatpush1.msra.mxu0 0.0
  %4862 = vmatprep.subr.mxu0 0.0
  %4863 = vmatpush1.msra.mxu0 0.0
  %4864 = vmatprep.subr.mxu0 0.0
  %4865 = vmatpush1.msra.mxu0 0.0
  %4866 = vmatprep.subr.mxu0 0.0
  %4867 = vmatpush1.msra.mxu0 0.0
  %4868 = vmatprep.subr.mxu0 0.0
  %4869 = vmatpush1.msra.mxu0 0.0
  %4870 = vmatprep.subr.mxu0 0.0
  %4871 = vmatpush1.msra.mxu0 0.0
  %4872 = vmatprep.subr.mxu0 0.0
  %4873 = vmatpush1.msra.mxu0 %v4550
  %4874 = vmatprep.subr.mxu0 0.0
  %4875 = vmatpush2.msra.mxu0 0.0
  %4876 = vmatprep.subr.mxu0 0.0
  %4877 = vmatpush2.msra.mxu0 0.0
  %4878 = vmatprep.subr.mxu0 0.0
  %4879 = vmatpush2.msra.mxu0 0.0
  %4880 = vmatprep.subr.mxu0 0.0
  %4881 = vmatpush2.msra.mxu0 0.0
  %4882 = vmatprep.subr.mxu0 0.0
  %4883 = vmatpush2.msra.mxu0 0.0
  %4884 = vmatprep.subr.mxu0 0.0
  %4885 = vmatpush2.msra.mxu0 0.0
  %4886 = vmatprep.subr.mxu0 0.0
  %4887 = vmatpush2.msra.mxu0 0.0
  %4888 = vmatprep.subr.mxu0 0.0
  %4889 = vmatpush2.msra.mxu0 0.0
  %4890 = vmatprep.subr.mxu0 0.0
  %4891 = vmatpush2.msra.mxu0 0.0
  %4892 = vmatprep.subr.mxu0 0.0
  %4893 = vmatpush2.msra.mxu0 0.0
  %4894 = vmatprep.subr.mxu0 0.0
  %4895 = vmatpush2.msra.mxu0 0.0
  %4896 = vmatprep.subr.mxu0 0.0
  %4897 = vmatpush2.msra.mxu0 0.0
  %4898 = vmatprep.subr.mxu0 0.0
  %4899 = vmatpush2.msra.mxu0 0.0
  %4900 = vmatprep.subr.mxu0 0.0
  %4901 = vmatpush2.msra.mxu0 0.0
  %4902 = vmatprep.subr.mxu0 0.0
  %4903 = vmatpush2.msra.mxu0 0.0
  %4904 = vmatprep.subr.mxu0 0.0
  %4905 = vmatpush2.msra.mxu0 0.0
  %4906 = vmatprep.mubr.f32.mxu0 0.0
  %4907 = vmatmul.mubr.f32.gmra.mxu0 %v4810
  %v4908 = vpop.f32.mrf.mxu0
  %v4909 = vadd.f32 %v4732, %v4908
  %v4910 = vpop.f32.mrf.mxu0
  %4911 = vmatprep.mubr.f32.mxu0 0.0
  %4912 = vmatmul.mubr.f32.gmra.mxu0 %v4812
  %v4913 = vpop.f32.mrf.mxu0
  %v4914 = vadd.f32 %v4737, %v4913
  %v4915 = vpop.f32.mrf.mxu0
  %4916 = vmatprep.mubr.f32.mxu0 0.0
  %4917 = vmatmul.mubr.f32.gmra.mxu0 %v4814
  %v4918 = vpop.f32.mrf.mxu0
  %v4919 = vadd.f32 %v4742, %v4918
  %v4920 = vpop.f32.mrf.mxu0
  %4921 = vmatprep.mubr.f32.mxu0 0.0
  %4922 = vmatmul.mubr.f32.gmra.mxu0 %v4816
  %v4923 = vpop.f32.mrf.mxu0
  %v4924 = vadd.f32 %v4747, %v4923
  %v4925 = vpop.f32.mrf.mxu0
  %4926 = vmatprep.mubr.f32.mxu0 0.0
  %4927 = vmatmul.mubr.f32.gmra.mxu0 %v4818
  %v4928 = vpop.f32.mrf.mxu0
  %v4929 = vadd.f32 %v4752, %v4928
  %v4930 = vpop.f32.mrf.mxu0
  %4931 = vmatprep.mubr.f32.mxu0 0.0
  %4932 = vmatmul.mubr.f32.gmra.mxu0 %v4820
  %v4933 = vpop.f32.mrf.mxu0
  %v4934 = vadd.f32 %v4757, %v4933
  %v4935 = vpop.f32.mrf.mxu0
  %4936 = vmatprep.mubr.f32.mxu0 0.0
  %4937 = vmatmul.mubr.f32.gmra.mxu0 %v4822
  %v4938 = vpop.f32.mrf.mxu0
  %v4939 = vadd.f32 %v4762, %v4938
  %v4940 = vpop.f32.mrf.mxu0
  %4941 = vmatprep.mubr.f32.mxu0 0.0
  %4942 = vmatmul.mubr.f32.gmra.mxu0 %v4824
  %v4943 = vpop.f32.mrf.mxu0
  %v4944 = vadd.f32 %v4767, %v4943
  %v4945 = vpop.f32.mrf.mxu0
  %4946 = vmatprep.mubr.f32.mxu0 0.0
  %4947 = vmatmul.mubr.f32.gmra.mxu0 %v4826
  %v4948 = vpop.f32.mrf.mxu0
  %v4949 = vadd.f32 %v4772, %v4948
  %v4950 = vpop.f32.mrf.mxu0
  %4951 = vmatprep.mubr.f32.mxu0 0.0
  %4952 = vmatmul.mubr.f32.gmra.mxu0 %v4828
  %v4953 = vpop.f32.mrf.mxu0
  %v4954 = vadd.f32 %v4777, %v4953
  %v4955 = vpop.f32.mrf.mxu0
  %4956 = vmatprep.mubr.f32.mxu0 0.0
  %4957 = vmatmul.mubr.f32.gmra.mxu0 %v4830
  %v4958 = vpop.f32.mrf.mxu0
  %v4959 = vadd.f32 %v4782, %v4958
  %v4960 = vpop.f32.mrf.mxu0
  %4961 = vmatprep.mubr.f32.mxu0 0.0
  %4962 = vmatmul.mubr.f32.gmra.mxu0 %v4832
  %v4963 = vpop.f32.mrf.mxu0
  %v4964 = vadd.f32 %v4787, %v4963
  %v4965 = vpop.f32.mrf.mxu0
  %4966 = vmatprep.mubr.f32.mxu0 0.0
  %4967 = vmatmul.mubr.f32.gmra.mxu0 %v4834
  %v4968 = vpop.f32.mrf.mxu0
  %v4969 = vadd.f32 %v4792, %v4968
  %v4970 = vpop.f32.mrf.mxu0
  %4971 = vmatprep.mubr.f32.mxu0 0.0
  %4972 = vmatmul.mubr.f32.gmra.mxu0 %v4836
  %v4973 = vpop.f32.mrf.mxu0
  %v4974 = vadd.f32 %v4797, %v4973
  %v4975 = vpop.f32.mrf.mxu0
  %4976 = vmatprep.mubr.f32.mxu0 0.0
  %4977 = vmatmul.mubr.f32.gmra.mxu0 %v4838
  %v4978 = vpop.f32.mrf.mxu0
  %v4979 = vadd.f32 %v4802, %v4978
  %v4980 = vpop.f32.mrf.mxu0
  %4981 = vmatprep.mubr.f32.mxu0 0.0
  %4982 = vmatmul.mubr.f32.gmra.mxu0 %v4840
  %v4983 = vpop.f32.mrf.mxu0
  %v4984 = vadd.f32 %v4807, %v4983
  %v4985 = vpop.f32.mrf.mxu0
  %4986 = vdwg.mxu0
  %v4987 = vrot.slane %v4510, 2
  %v4988 = vrot.slane %v4511, 2
  %v4989 = vsel %vm757, %v4987, %v4988
  %v4990 = vrot.slane %v4512, 2
  %v4991 = vrot.slane %v4513, 2
  %v4992 = vsel %vm757, %v4990, %v4991
  %v4993 = vrot.slane %v4514, 2
  %v4994 = vrot.slane %v4515, 2
  %v4995 = vsel %vm757, %v4993, %v4994
  %v4996 = vrot.slane %v4516, 2
  %v4997 = vrot.slane %v4517, 2
  %v4998 = vsel %vm757, %v4996, %v4997
  %v4999 = vrot.slane %v4518, 2
  %v5000 = vrot.slane %v4519, 2
  %v5001 = vsel %vm757, %v4999, %v5000
  %v5002 = vrot.slane %v4520, 2
  %v5003 = vrot.slane %v4521, 2
  %v5004 = vsel %vm757, %v5002, %v5003
  %v5005 = vrot.slane %v4522, 2
  %v5006 = vrot.slane %v4523, 2
  %v5007 = vsel %vm757, %v5005, %v5006
  %v5008 = vrot.slane %v4524, 2
  %v5009 = vrot.slane %v4525, 2
  %v5010 = vsel %vm757, %v5008, %v5009
  %v5011 = vrot.slane %v4530, 2
  %v5012 = vrot.slane %v4531, 2
  %v5013 = vsel %vm757, %v5011, %v5012
  %v5014 = vrot.slane %v4532, 2
  %v5015 = vrot.slane %v4533, 2
  %v5016 = vsel %vm757, %v5014, %v5015
  %v5017 = vrot.slane %v4534, 2
  %v5018 = vrot.slane %v4535, 2
  %v5019 = vsel %vm757, %v5017, %v5018
  %v5020 = vrot.slane %v4536, 2
  %v5021 = vrot.slane %v4537, 2
  %v5022 = vsel %vm757, %v5020, %v5021
  %v5023 = vrot.slane %v4538, 2
  %v5024 = vrot.slane %v4539, 2
  %v5025 = vsel %vm757, %v5023, %v5024
  %v5026 = vrot.slane %v4540, 2
  %v5027 = vrot.slane %v4541, 2
  %v5028 = vsel %vm757, %v5026, %v5027
  %v5029 = vrot.slane %v4542, 2
  %v5030 = vrot.slane %v4543, 2
  %v5031 = vsel %vm757, %v5029, %v5030
  %v5032 = vrot.slane %v4544, 2
  %v5033 = vrot.slane %v4545, 2
  %v5034 = vsel %vm757, %v5032, %v5033
  %s5035 = scalar_lea.vmem %s12, 16
  %v5036 = vld [vmem:[%s5035] sm:$0xff]
  %v5037 = vsel %vm101, %v4989, 0
  %v5039 = vsel %vm101, %v4992, 0
  %v5041 = vsel %vm101, %v4995, 0
  %v5043 = vsel %vm101, %v4998, 0
  %v5045 = vsel %vm101, %v5001, 0
  %v5047 = vsel %vm101, %v5004, 0
  %v5049 = vsel %vm101, %v5007, 0
  %v5051 = vsel %vm101, %v5010, 0
  %v5053 = vsel %vm101, %v5013, 0
  %v5055 = vsel %vm101, %v5016, 0
  %v5057 = vsel %vm101, %v5019, 0
  %v5059 = vsel %vm101, %v5022, 0
  %v5061 = vsel %vm101, %v5025, 0
  %v5063 = vsel %vm101, %v5028, 0
  %v5065 = vsel %vm101, %v5031, 0
  %v5067 = vsel %vm101, %v5034, 0
  %5069 = vmatprep.subr.mxu0 0.0
  %5070 = vmatpush1.msra.mxu0 0.0
  %5071 = vmatprep.subr.mxu0 0.0
  %5072 = vmatpush1.msra.mxu0 0.0
  %5073 = vmatprep.subr.mxu0 0.0
  %5074 = vmatpush1.msra.mxu0 0.0
  %5075 = vmatprep.subr.mxu0 0.0
  %5076 = vmatpush1.msra.mxu0 0.0
  %5077 = vmatprep.subr.mxu0 0.0
  %5078 = vmatpush1.msra.mxu0 0.0
  %5079 = vmatprep.subr.mxu0 0.0
  %5080 = vmatpush1.msra.mxu0 0.0
  %5081 = vmatprep.subr.mxu0 0.0
  %5082 = vmatpush1.msra.mxu0 0.0
  %5083 = vmatprep.subr.mxu0 0.0
  %5084 = vmatpush1.msra.mxu0 0.0
  %5085 = vmatprep.subr.mxu0 0.0
  %5086 = vmatpush1.msra.mxu0 0.0
  %5087 = vmatprep.subr.mxu0 0.0
  %5088 = vmatpush1.msra.mxu0 0.0
  %5089 = vmatprep.subr.mxu0 0.0
  %5090 = vmatpush1.msra.mxu0 0.0
  %5091 = vmatprep.subr.mxu0 0.0
  %5092 = vmatpush1.msra.mxu0 0.0
  %5093 = vmatprep.subr.mxu0 0.0
  %5094 = vmatpush1.msra.mxu0 0.0
  %5095 = vmatprep.subr.mxu0 0.0
  %5096 = vmatpush1.msra.mxu0 0.0
  %5097 = vmatprep.subr.mxu0 0.0
  %5098 = vmatpush1.msra.mxu0 0.0
  %5099 = vmatprep.subr.mxu0 0.0
  %5100 = vmatpush1.msra.mxu0 %v5036
  %5101 = vmatprep.subr.mxu0 0.0
  %5102 = vmatpush2.msra.mxu0 0.0
  %5103 = vmatprep.subr.mxu0 0.0
  %5104 = vmatpush2.msra.mxu0 0.0
  %5105 = vmatprep.subr.mxu0 0.0
  %5106 = vmatpush2.msra.mxu0 0.0
  %5107 = vmatprep.subr.mxu0 0.0
  %5108 = vmatpush2.msra.mxu0 0.0
  %5109 = vmatprep.subr.mxu0 0.0
  %5110 = vmatpush2.msra.mxu0 0.0
  %5111 = vmatprep.subr.mxu0 0.0
  %5112 = vmatpush2.msra.mxu0 0.0
  %5113 = vmatprep.subr.mxu0 0.0
  %5114 = vmatpush2.msra.mxu0 0.0
  %5115 = vmatprep.subr.mxu0 0.0
  %5116 = vmatpush2.msra.mxu0 0.0
  %5117 = vmatprep.subr.mxu0 0.0
  %5118 = vmatpush2.msra.mxu0 0.0
  %5119 = vmatprep.subr.mxu0 0.0
  %5120 = vmatpush2.msra.mxu0 0.0
  %5121 = vmatprep.subr.mxu0 0.0
  %5122 = vmatpush2.msra.mxu0 0.0
  %5123 = vmatprep.subr.mxu0 0.0
  %5124 = vmatpush2.msra.mxu0 0.0
  %5125 = vmatprep.subr.mxu0 0.0
  %5126 = vmatpush2.msra.mxu0 0.0
  %5127 = vmatprep.subr.mxu0 0.0
  %5128 = vmatpush2.msra.mxu0 0.0
  %5129 = vmatprep.subr.mxu0 0.0
  %5130 = vmatpush2.msra.mxu0 0.0
  %5131 = vmatprep.subr.mxu0 0.0
  %5132 = vmatpush2.msra.mxu0 0.0
  %5133 = vmatprep.mubr.f32.mxu0 0.0
  %5134 = vmatmul.mubr.f32.gmra.mxu0 %v5037
  %v5135 = vpop.f32.mrf.mxu0
  %v5136 = vadd.f32 0.0, %v5135
  %v5137 = vpop.f32.mrf.mxu0
  %5138 = vmatprep.mubr.f32.mxu0 0.0
  %5139 = vmatmul.mubr.f32.gmra.mxu0 %v5039
  %v5140 = vpop.f32.mrf.mxu0
  %v5141 = vadd.f32 0.0, %v5140
  %v5142 = vpop.f32.mrf.mxu0
  %5143 = vmatprep.mubr.f32.mxu0 0.0
  %5144 = vmatmul.mubr.f32.gmra.mxu0 %v5041
  %v5145 = vpop.f32.mrf.mxu0
  %v5146 = vadd.f32 0.0, %v5145
  %v5147 = vpop.f32.mrf.mxu0
  %5148 = vmatprep.mubr.f32.mxu0 0.0
  %5149 = vmatmul.mubr.f32.gmra.mxu0 %v5043
  %v5150 = vpop.f32.mrf.mxu0
  %v5151 = vadd.f32 0.0, %v5150
  %v5152 = vpop.f32.mrf.mxu0
  %5153 = vmatprep.mubr.f32.mxu0 0.0
  %5154 = vmatmul.mubr.f32.gmra.mxu0 %v5045
  %v5155 = vpop.f32.mrf.mxu0
  %v5156 = vadd.f32 0.0, %v5155
  %v5157 = vpop.f32.mrf.mxu0
  %5158 = vmatprep.mubr.f32.mxu0 0.0
  %5159 = vmatmul.mubr.f32.gmra.mxu0 %v5047
  %v5160 = vpop.f32.mrf.mxu0
  %v5161 = vadd.f32 0.0, %v5160
  %v5162 = vpop.f32.mrf.mxu0
  %5163 = vmatprep.mubr.f32.mxu0 0.0
  %5164 = vmatmul.mubr.f32.gmra.mxu0 %v5049
  %v5165 = vpop.f32.mrf.mxu0
  %v5166 = vadd.f32 0.0, %v5165
  %v5167 = vpop.f32.mrf.mxu0
  %5168 = vmatprep.mubr.f32.mxu0 0.0
  %5169 = vmatmul.mubr.f32.gmra.mxu0 %v5051
  %v5170 = vpop.f32.mrf.mxu0
  %v5171 = vadd.f32 0.0, %v5170
  %v5172 = vpop.f32.mrf.mxu0
  %5173 = vmatprep.mubr.f32.mxu0 0.0
  %5174 = vmatmul.mubr.f32.gmra.mxu0 %v5053
  %v5175 = vpop.f32.mrf.mxu0
  %v5176 = vadd.f32 0.0, %v5175
  %v5177 = vpop.f32.mrf.mxu0
  %5178 = vmatprep.mubr.f32.mxu0 0.0
  %5179 = vmatmul.mubr.f32.gmra.mxu0 %v5055
  %v5180 = vpop.f32.mrf.mxu0
  %v5181 = vadd.f32 0.0, %v5180
  %v5182 = vpop.f32.mrf.mxu0
  %5183 = vmatprep.mubr.f32.mxu0 0.0
  %5184 = vmatmul.mubr.f32.gmra.mxu0 %v5057
  %v5185 = vpop.f32.mrf.mxu0
  %v5186 = vadd.f32 0.0, %v5185
  %v5187 = vpop.f32.mrf.mxu0
  %5188 = vmatprep.mubr.f32.mxu0 0.0
  %5189 = vmatmul.mubr.f32.gmra.mxu0 %v5059
  %v5190 = vpop.f32.mrf.mxu0
  %v5191 = vadd.f32 0.0, %v5190
  %v5192 = vpop.f32.mrf.mxu0
  %5193 = vmatprep.mubr.f32.mxu0 0.0
  %5194 = vmatmul.mubr.f32.gmra.mxu0 %v5061
  %v5195 = vpop.f32.mrf.mxu0
  %v5196 = vadd.f32 0.0, %v5195
  %v5197 = vpop.f32.mrf.mxu0
  %5198 = vmatprep.mubr.f32.mxu0 0.0
  %5199 = vmatmul.mubr.f32.gmra.mxu0 %v5063
  %v5200 = vpop.f32.mrf.mxu0
  %v5201 = vadd.f32 0.0, %v5200
  %v5202 = vpop.f32.mrf.mxu0
  %5203 = vmatprep.mubr.f32.mxu0 0.0
  %5204 = vmatmul.mubr.f32.gmra.mxu0 %v5065
  %v5205 = vpop.f32.mrf.mxu0
  %v5206 = vadd.f32 0.0, %v5205
  %v5207 = vpop.f32.mrf.mxu0
  %5208 = vmatprep.mubr.f32.mxu0 0.0
  %5209 = vmatmul.mubr.f32.gmra.mxu0 %v5067
  %v5210 = vpop.f32.mrf.mxu0
  %v5211 = vadd.f32 0.0, %v5210
  %v5212 = vpop.f32.mrf.mxu0
  %5213 = vdwg.mxu0
  %v5214 = vadd.f32 %v4909, %v5136
  %v5215 = vadd.f32 %v4914, %v5141
  %v5216 = vadd.f32 %v4919, %v5146
  %v5217 = vadd.f32 %v4924, %v5151
  %v5218 = vadd.f32 %v4929, %v5156
  %v5219 = vadd.f32 %v4934, %v5161
  %v5220 = vadd.f32 %v4939, %v5166
  %v5221 = vadd.f32 %v4944, %v5171
  %v5222 = vadd.f32 %v4949, %v5176
  %v5223 = vadd.f32 %v4954, %v5181
  %v5224 = vadd.f32 %v4959, %v5186
  %v5225 = vadd.f32 %v4964, %v5191
  %v5226 = vadd.f32 %v4969, %v5196
  %v5227 = vadd.f32 %v4974, %v5201
  %v5228 = vadd.f32 %v4979, %v5206
  %v5229 = vadd.f32 %v4984, %v5211
  %s5230 = scalar_lea.vmem %s12, 24
  %v5231 = vld [vmem:[%s5230] sm:$0xff]
  %v5233 = vsel %vm101, %v4526, 0
  %v5236 = vsel %vm101, %v4546, 0
  %5238 = vmatprep.subr.mxu0 0.0
  %5239 = vmatpush1.msra.mxu0 0.0
  %5240 = vmatprep.subr.mxu0 0.0
  %5241 = vmatpush1.msra.mxu0 0.0
  %5242 = vmatprep.subr.mxu0 0.0
  %5243 = vmatpush1.msra.mxu0 0.0
  %5244 = vmatprep.subr.mxu0 0.0
  %5245 = vmatpush1.msra.mxu0 0.0
  %5246 = vmatprep.subr.mxu0 0.0
  %5247 = vmatpush1.msra.mxu0 0.0
  %5248 = vmatprep.subr.mxu0 0.0
  %5249 = vmatpush1.msra.mxu0 0.0
  %5250 = vmatprep.subr.mxu0 0.0
  %5251 = vmatpush1.msra.mxu0 0.0
  %5252 = vmatprep.subr.mxu0 0.0
  %5253 = vmatpush1.msra.mxu0 0.0
  %5254 = vmatprep.subr.mxu0 0.0
  %5255 = vmatpush1.msra.mxu0 0.0
  %5256 = vmatprep.subr.mxu0 0.0
  %5257 = vmatpush1.msra.mxu0 0.0
  %5258 = vmatprep.subr.mxu0 0.0
  %5259 = vmatpush1.msra.mxu0 0.0
  %5260 = vmatprep.subr.mxu0 0.0
  %5261 = vmatpush1.msra.mxu0 0.0
  %5262 = vmatprep.subr.mxu0 0.0
  %5263 = vmatpush1.msra.mxu0 0.0
  %5264 = vmatprep.subr.mxu0 0.0
  %5265 = vmatpush1.msra.mxu0 0.0
  %5266 = vmatprep.subr.mxu0 0.0
  %5267 = vmatpush1.msra.mxu0 0.0
  %5268 = vmatprep.subr.mxu0 0.0
  %5269 = vmatpush1.msra.mxu0 %v5231
  %5270 = vmatprep.subr.mxu0 0.0
  %5271 = vmatpush2.msra.mxu0 0.0
  %5272 = vmatprep.subr.mxu0 0.0
  %5273 = vmatpush2.msra.mxu0 0.0
  %5274 = vmatprep.subr.mxu0 0.0
  %5275 = vmatpush2.msra.mxu0 0.0
  %5276 = vmatprep.subr.mxu0 0.0
  %5277 = vmatpush2.msra.mxu0 0.0
  %5278 = vmatprep.subr.mxu0 0.0
  %5279 = vmatpush2.msra.mxu0 0.0
  %5280 = vmatprep.subr.mxu0 0.0
  %5281 = vmatpush2.msra.mxu0 0.0
  %5282 = vmatprep.subr.mxu0 0.0
  %5283 = vmatpush2.msra.mxu0 0.0
  %5284 = vmatprep.subr.mxu0 0.0
  %5285 = vmatpush2.msra.mxu0 0.0
  %5286 = vmatprep.subr.mxu0 0.0
  %5287 = vmatpush2.msra.mxu0 0.0
  %5288 = vmatprep.subr.mxu0 0.0
  %5289 = vmatpush2.msra.mxu0 0.0
  %5290 = vmatprep.subr.mxu0 0.0
  %5291 = vmatpush2.msra.mxu0 0.0
  %5292 = vmatprep.subr.mxu0 0.0
  %5293 = vmatpush2.msra.mxu0 0.0
  %5294 = vmatprep.subr.mxu0 0.0
  %5295 = vmatpush2.msra.mxu0 0.0
  %5296 = vmatprep.subr.mxu0 0.0
  %5297 = vmatpush2.msra.mxu0 0.0
  %5298 = vmatprep.subr.mxu0 0.0
  %5299 = vmatpush2.msra.mxu0 0.0
  %5300 = vmatprep.subr.mxu0 0.0
  %5301 = vmatpush2.msra.mxu0 0.0
  %5302 = vmatprep.mubr.f32.mxu0 0.0
  %5303 = vmatmul.mubr.f32.gmra.mxu0 %v4812
  %v5304 = vpop.f32.mrf.mxu0
  %v5305 = vadd.f32 0.0, %v5304
  %v5306 = vpop.f32.mrf.mxu0
  %5307 = vmatprep.mubr.f32.mxu0 0.0
  %5308 = vmatmul.mubr.f32.gmra.mxu0 %v4814
  %v5309 = vpop.f32.mrf.mxu0
  %v5310 = vadd.f32 0.0, %v5309
  %v5311 = vpop.f32.mrf.mxu0
  %5312 = vmatprep.mubr.f32.mxu0 0.0
  %5313 = vmatmul.mubr.f32.gmra.mxu0 %v4816
  %v5314 = vpop.f32.mrf.mxu0
  %v5315 = vadd.f32 0.0, %v5314
  %v5316 = vpop.f32.mrf.mxu0
  %5317 = vmatprep.mubr.f32.mxu0 0.0
  %5318 = vmatmul.mubr.f32.gmra.mxu0 %v4818
  %v5319 = vpop.f32.mrf.mxu0
  %v5320 = vadd.f32 0.0, %v5319
  %v5321 = vpop.f32.mrf.mxu0
  %5322 = vmatprep.mubr.f32.mxu0 0.0
  %5323 = vmatmul.mubr.f32.gmra.mxu0 %v4820
  %v5324 = vpop.f32.mrf.mxu0
  %v5325 = vadd.f32 0.0, %v5324
  %v5326 = vpop.f32.mrf.mxu0
  %5327 = vmatprep.mubr.f32.mxu0 0.0
  %5328 = vmatmul.mubr.f32.gmra.mxu0 %v4822
  %v5329 = vpop.f32.mrf.mxu0
  %v5330 = vadd.f32 0.0, %v5329
  %v5331 = vpop.f32.mrf.mxu0
  %5332 = vmatprep.mubr.f32.mxu0 0.0
  %5333 = vmatmul.mubr.f32.gmra.mxu0 %v4824
  %v5334 = vpop.f32.mrf.mxu0
  %v5335 = vadd.f32 0.0, %v5334
  %v5336 = vpop.f32.mrf.mxu0
  %5337 = vmatprep.mubr.f32.mxu0 0.0
  %5338 = vmatmul.mubr.f32.gmra.mxu0 %v5233
  %v5339 = vpop.f32.mrf.mxu0
  %v5340 = vadd.f32 0.0, %v5339
  %v5341 = vpop.f32.mrf.mxu0
  %5342 = vmatprep.mubr.f32.mxu0 0.0
  %5343 = vmatmul.mubr.f32.gmra.mxu0 %v4828
  %v5344 = vpop.f32.mrf.mxu0
  %v5345 = vadd.f32 0.0, %v5344
  %v5346 = vpop.f32.mrf.mxu0
  %5347 = vmatprep.mubr.f32.mxu0 0.0
  %5348 = vmatmul.mubr.f32.gmra.mxu0 %v4830
  %v5349 = vpop.f32.mrf.mxu0
  %v5350 = vadd.f32 0.0, %v5349
  %v5351 = vpop.f32.mrf.mxu0
  %5352 = vmatprep.mubr.f32.mxu0 0.0
  %5353 = vmatmul.mubr.f32.gmra.mxu0 %v4832
  %v5354 = vpop.f32.mrf.mxu0
  %v5355 = vadd.f32 0.0, %v5354
  %v5356 = vpop.f32.mrf.mxu0
  %5357 = vmatprep.mubr.f32.mxu0 0.0
  %5358 = vmatmul.mubr.f32.gmra.mxu0 %v4834
  %v5359 = vpop.f32.mrf.mxu0
  %v5360 = vadd.f32 0.0, %v5359
  %v5361 = vpop.f32.mrf.mxu0
  %5362 = vmatprep.mubr.f32.mxu0 0.0
  %5363 = vmatmul.mubr.f32.gmra.mxu0 %v4836
  %v5364 = vpop.f32.mrf.mxu0
  %v5365 = vadd.f32 0.0, %v5364
  %v5366 = vpop.f32.mrf.mxu0
  %5367 = vmatprep.mubr.f32.mxu0 0.0
  %5368 = vmatmul.mubr.f32.gmra.mxu0 %v4838
  %v5369 = vpop.f32.mrf.mxu0
  %v5370 = vadd.f32 0.0, %v5369
  %v5371 = vpop.f32.mrf.mxu0
  %5372 = vmatprep.mubr.f32.mxu0 0.0
  %5373 = vmatmul.mubr.f32.gmra.mxu0 %v4840
  %v5374 = vpop.f32.mrf.mxu0
  %v5375 = vadd.f32 0.0, %v5374
  %v5376 = vpop.f32.mrf.mxu0
  %5377 = vmatprep.mubr.f32.mxu0 0.0
  %5378 = vmatmul.mubr.f32.gmra.mxu0 %v5236
  %v5379 = vpop.f32.mrf.mxu0
  %v5380 = vadd.f32 0.0, %v5379
  %v5381 = vpop.f32.mrf.mxu0
  %5382 = vdwg.mxu0
  %v5383 = vadd.f32 %v5214, %v5305
  %v5384 = vadd.f32 %v5215, %v5310
  %v5385 = vadd.f32 %v5216, %v5315
  %v5386 = vadd.f32 %v5217, %v5320
  %v5387 = vadd.f32 %v5218, %v5325
  %v5388 = vadd.f32 %v5219, %v5330
  %v5389 = vadd.f32 %v5220, %v5335
  %v5390 = vadd.f32 %v5221, %v5340
  %v5391 = vadd.f32 %v5222, %v5345
  %v5392 = vadd.f32 %v5223, %v5350
  %v5393 = vadd.f32 %v5224, %v5355
  %v5394 = vadd.f32 %v5225, %v5360
  %v5395 = vadd.f32 %v5226, %v5365
  %v5396 = vadd.f32 %v5227, %v5370
  %v5397 = vadd.f32 %v5228, %v5375
  %v5398 = vadd.f32 %v5229, %v5380
  %v5401 = vrot.slane %v4526, 1
  %v5402 = vrot.slane %v4527, 1
  %v5403 = vsel %vm345, %v5401, %v5402
  %v5404 = vrot.slane %v4546, 1
  %v5405 = vrot.slane %v4547, 1
  %v5406 = vsel %vm345, %v5404, %v5405
  %s5407 = scalar_lea.vmem %s12, 32
  %v5408 = vld [vmem:[%s5407] sm:$0xff]
  %v5409 = vsel %vm101, %v5403, 0
  %v5411 = vsel %vm101, %v5406, 0
  %5413 = vmatprep.subr.mxu0 0.0
  %5414 = vmatpush1.msra.mxu0 0.0
  %5415 = vmatprep.subr.mxu0 0.0
  %5416 = vmatpush1.msra.mxu0 0.0
  %5417 = vmatprep.subr.mxu0 0.0
  %5418 = vmatpush1.msra.mxu0 0.0
  %5419 = vmatprep.subr.mxu0 0.0
  %5420 = vmatpush1.msra.mxu0 0.0
  %5421 = vmatprep.subr.mxu0 0.0
  %5422 = vmatpush1.msra.mxu0 0.0
  %5423 = vmatprep.subr.mxu0 0.0
  %5424 = vmatpush1.msra.mxu0 0.0
  %5425 = vmatprep.subr.mxu0 0.0
  %5426 = vmatpush1.msra.mxu0 0.0
  %5427 = vmatprep.subr.mxu0 0.0
  %5428 = vmatpush1.msra.mxu0 0.0
  %5429 = vmatprep.subr.mxu0 0.0
  %5430 = vmatpush1.msra.mxu0 0.0
  %5431 = vmatprep.subr.mxu0 0.0
  %5432 = vmatpush1.msra.mxu0 0.0
  %5433 = vmatprep.subr.mxu0 0.0
  %5434 = vmatpush1.msra.mxu0 0.0
  %5435 = vmatprep.subr.mxu0 0.0
  %5436 = vmatpush1.msra.mxu0 0.0
  %5437 = vmatprep.subr.mxu0 0.0
  %5438 = vmatpush1.msra.mxu0 0.0
  %5439 = vmatprep.subr.mxu0 0.0
  %5440 = vmatpush1.msra.mxu0 0.0
  %5441 = vmatprep.subr.mxu0 0.0
  %5442 = vmatpush1.msra.mxu0 0.0
  %5443 = vmatprep.subr.mxu0 0.0
  %5444 = vmatpush1.msra.mxu0 %v5408
  %5445 = vmatprep.subr.mxu0 0.0
  %5446 = vmatpush2.msra.mxu0 0.0
  %5447 = vmatprep.subr.mxu0 0.0
  %5448 = vmatpush2.msra.mxu0 0.0
  %5449 = vmatprep.subr.mxu0 0.0
  %5450 = vmatpush2.msra.mxu0 0.0
  %5451 = vmatprep.subr.mxu0 0.0
  %5452 = vmatpush2.msra.mxu0 0.0
  %5453 = vmatprep.subr.mxu0 0.0
  %5454 = vmatpush2.msra.mxu0 0.0
  %5455 = vmatprep.subr.mxu0 0.0
  %5456 = vmatpush2.msra.mxu0 0.0
  %5457 = vmatprep.subr.mxu0 0.0
  %5458 = vmatpush2.msra.mxu0 0.0
  %5459 = vmatprep.subr.mxu0 0.0
  %5460 = vmatpush2.msra.mxu0 0.0
  %5461 = vmatprep.subr.mxu0 0.0
  %5462 = vmatpush2.msra.mxu0 0.0
  %5463 = vmatprep.subr.mxu0 0.0
  %5464 = vmatpush2.msra.mxu0 0.0
  %5465 = vmatprep.subr.mxu0 0.0
  %5466 = vmatpush2.msra.mxu0 0.0
  %5467 = vmatprep.subr.mxu0 0.0
  %5468 = vmatpush2.msra.mxu0 0.0
  %5469 = vmatprep.subr.mxu0 0.0
  %5470 = vmatpush2.msra.mxu0 0.0
  %5471 = vmatprep.subr.mxu0 0.0
  %5472 = vmatpush2.msra.mxu0 0.0
  %5473 = vmatprep.subr.mxu0 0.0
  %5474 = vmatpush2.msra.mxu0 0.0
  %5475 = vmatprep.subr.mxu0 0.0
  %5476 = vmatpush2.msra.mxu0 0.0
  %5477 = vmatprep.mubr.f32.mxu0 0.0
  %5478 = vmatmul.mubr.f32.gmra.mxu0 %v4635
  %v5479 = vpop.f32.mrf.mxu0
  %v5480 = vadd.f32 0.0, %v5479
  %v5481 = vpop.f32.mrf.mxu0
  %5482 = vmatprep.mubr.f32.mxu0 0.0
  %5483 = vmatmul.mubr.f32.gmra.mxu0 %v4637
  %v5484 = vpop.f32.mrf.mxu0
  %v5485 = vadd.f32 0.0, %v5484
  %v5486 = vpop.f32.mrf.mxu0
  %5487 = vmatprep.mubr.f32.mxu0 0.0
  %5488 = vmatmul.mubr.f32.gmra.mxu0 %v4639
  %v5489 = vpop.f32.mrf.mxu0
  %v5490 = vadd.f32 0.0, %v5489
  %v5491 = vpop.f32.mrf.mxu0
  %5492 = vmatprep.mubr.f32.mxu0 0.0
  %5493 = vmatmul.mubr.f32.gmra.mxu0 %v4641
  %v5494 = vpop.f32.mrf.mxu0
  %v5495 = vadd.f32 0.0, %v5494
  %v5496 = vpop.f32.mrf.mxu0
  %5497 = vmatprep.mubr.f32.mxu0 0.0
  %5498 = vmatmul.mubr.f32.gmra.mxu0 %v4643
  %v5499 = vpop.f32.mrf.mxu0
  %v5500 = vadd.f32 0.0, %v5499
  %v5501 = vpop.f32.mrf.mxu0
  %5502 = vmatprep.mubr.f32.mxu0 0.0
  %5503 = vmatmul.mubr.f32.gmra.mxu0 %v4645
  %v5504 = vpop.f32.mrf.mxu0
  %v5505 = vadd.f32 0.0, %v5504
  %v5506 = vpop.f32.mrf.mxu0
  %5507 = vmatprep.mubr.f32.mxu0 0.0
  %5508 = vmatmul.mubr.f32.gmra.mxu0 %v4647
  %v5509 = vpop.f32.mrf.mxu0
  %v5510 = vadd.f32 0.0, %v5509
  %v5511 = vpop.f32.mrf.mxu0
  %5512 = vmatprep.mubr.f32.mxu0 0.0
  %5513 = vmatmul.mubr.f32.gmra.mxu0 %v5409
  %v5514 = vpop.f32.mrf.mxu0
  %v5515 = vadd.f32 0.0, %v5514
  %v5516 = vpop.f32.mrf.mxu0
  %5517 = vmatprep.mubr.f32.mxu0 0.0
  %5518 = vmatmul.mubr.f32.gmra.mxu0 %v4651
  %v5519 = vpop.f32.mrf.mxu0
  %v5520 = vadd.f32 0.0, %v5519
  %v5521 = vpop.f32.mrf.mxu0
  %5522 = vmatprep.mubr.f32.mxu0 0.0
  %5523 = vmatmul.mubr.f32.gmra.mxu0 %v4653
  %v5524 = vpop.f32.mrf.mxu0
  %v5525 = vadd.f32 0.0, %v5524
  %v5526 = vpop.f32.mrf.mxu0
  %5527 = vmatprep.mubr.f32.mxu0 0.0
  %5528 = vmatmul.mubr.f32.gmra.mxu0 %v4655
  %v5529 = vpop.f32.mrf.mxu0
  %v5530 = vadd.f32 0.0, %v5529
  %v5531 = vpop.f32.mrf.mxu0
  %5532 = vmatprep.mubr.f32.mxu0 0.0
  %5533 = vmatmul.mubr.f32.gmra.mxu0 %v4657
  %v5534 = vpop.f32.mrf.mxu0
  %v5535 = vadd.f32 0.0, %v5534
  %v5536 = vpop.f32.mrf.mxu0
  %5537 = vmatprep.mubr.f32.mxu0 0.0
  %5538 = vmatmul.mubr.f32.gmra.mxu0 %v4659
  %v5539 = vpop.f32.mrf.mxu0
  %v5540 = vadd.f32 0.0, %v5539
  %v5541 = vpop.f32.mrf.mxu0
  %5542 = vmatprep.mubr.f32.mxu0 0.0
  %5543 = vmatmul.mubr.f32.gmra.mxu0 %v4661
  %v5544 = vpop.f32.mrf.mxu0
  %v5545 = vadd.f32 0.0, %v5544
  %v5546 = vpop.f32.mrf.mxu0
  %5547 = vmatprep.mubr.f32.mxu0 0.0
  %5548 = vmatmul.mubr.f32.gmra.mxu0 %v4663
  %v5549 = vpop.f32.mrf.mxu0
  %v5550 = vadd.f32 0.0, %v5549
  %v5551 = vpop.f32.mrf.mxu0
  %5552 = vmatprep.mubr.f32.mxu0 0.0
  %5553 = vmatmul.mubr.f32.gmra.mxu0 %v5411
  %v5554 = vpop.f32.mrf.mxu0
  %v5555 = vadd.f32 0.0, %v5554
  %v5556 = vpop.f32.mrf.mxu0
  %5557 = vdwg.mxu0
  %v5558 = vadd.f32 %v5383, %v5480
  %v5559 = vadd.f32 %v5384, %v5485
  %v5560 = vadd.f32 %v5385, %v5490
  %v5561 = vadd.f32 %v5386, %v5495
  %v5562 = vadd.f32 %v5387, %v5500
  %v5563 = vadd.f32 %v5388, %v5505
  %v5564 = vadd.f32 %v5389, %v5510
  %v5565 = vadd.f32 %v5390, %v5515
  %v5566 = vadd.f32 %v5391, %v5520
  %v5567 = vadd.f32 %v5392, %v5525
  %v5568 = vadd.f32 %v5393, %v5530
  %v5569 = vadd.f32 %v5394, %v5535
  %v5570 = vadd.f32 %v5395, %v5540
  %v5571 = vadd.f32 %v5396, %v5545
  %v5572 = vadd.f32 %v5397, %v5550
  %v5573 = vadd.f32 %v5398, %v5555
  %v5574 = vrot.slane %v4526, 2
  %v5575 = vrot.slane %v4527, 2
  %v5576 = vsel %vm757, %v5574, %v5575
  %v5577 = vrot.slane %v4546, 2
  %v5578 = vrot.slane %v4547, 2
  %v5579 = vsel %vm757, %v5577, %v5578
  %s5580 = scalar_lea.vmem %s12, 40
  %v5581 = vld [vmem:[%s5580] sm:$0xff]
  %v5582 = vsel %vm101, %v5576, 0
  %v5584 = vsel %vm101, %v5579, 0
  %5586 = vmatprep.subr.mxu0 0.0
  %5587 = vmatpush1.msra.mxu0 0.0
  %5588 = vmatprep.subr.mxu0 0.0
  %5589 = vmatpush1.msra.mxu0 0.0
  %5590 = vmatprep.subr.mxu0 0.0
  %5591 = vmatpush1.msra.mxu0 0.0
  %5592 = vmatprep.subr.mxu0 0.0
  %5593 = vmatpush1.msra.mxu0 0.0
  %5594 = vmatprep.subr.mxu0 0.0
  %5595 = vmatpush1.msra.mxu0 0.0
  %5596 = vmatprep.subr.mxu0 0.0
  %5597 = vmatpush1.msra.mxu0 0.0
  %5598 = vmatprep.subr.mxu0 0.0
  %5599 = vmatpush1.msra.mxu0 0.0
  %5600 = vmatprep.subr.mxu0 0.0
  %5601 = vmatpush1.msra.mxu0 0.0
  %5602 = vmatprep.subr.mxu0 0.0
  %5603 = vmatpush1.msra.mxu0 0.0
  %5604 = vmatprep.subr.mxu0 0.0
  %5605 = vmatpush1.msra.mxu0 0.0
  %5606 = vmatprep.subr.mxu0 0.0
  %5607 = vmatpush1.msra.mxu0 0.0
  %5608 = vmatprep.subr.mxu0 0.0
  %5609 = vmatpush1.msra.mxu0 0.0
  %5610 = vmatprep.subr.mxu0 0.0
  %5611 = vmatpush1.msra.mxu0 0.0
  %5612 = vmatprep.subr.mxu0 0.0
  %5613 = vmatpush1.msra.mxu0 0.0
  %5614 = vmatprep.subr.mxu0 0.0
  %5615 = vmatpush1.msra.mxu0 0.0
  %5616 = vmatprep.subr.mxu0 0.0
  %5617 = vmatpush1.msra.mxu0 %v5581
  %5618 = vmatprep.subr.mxu0 0.0
  %5619 = vmatpush2.msra.mxu0 0.0
  %5620 = vmatprep.subr.mxu0 0.0
  %5621 = vmatpush2.msra.mxu0 0.0
  %5622 = vmatprep.subr.mxu0 0.0
  %5623 = vmatpush2.msra.mxu0 0.0
  %5624 = vmatprep.subr.mxu0 0.0
  %5625 = vmatpush2.msra.mxu0 0.0
  %5626 = vmatprep.subr.mxu0 0.0
  %5627 = vmatpush2.msra.mxu0 0.0
  %5628 = vmatprep.subr.mxu0 0.0
  %5629 = vmatpush2.msra.mxu0 0.0
  %5630 = vmatprep.subr.mxu0 0.0
  %5631 = vmatpush2.msra.mxu0 0.0
  %5632 = vmatprep.subr.mxu0 0.0
  %5633 = vmatpush2.msra.mxu0 0.0
  %5634 = vmatprep.subr.mxu0 0.0
  %5635 = vmatpush2.msra.mxu0 0.0
  %5636 = vmatprep.subr.mxu0 0.0
  %5637 = vmatpush2.msra.mxu0 0.0
  %5638 = vmatprep.subr.mxu0 0.0
  %5639 = vmatpush2.msra.mxu0 0.0
  %5640 = vmatprep.subr.mxu0 0.0
  %5641 = vmatpush2.msra.mxu0 0.0
  %5642 = vmatprep.subr.mxu0 0.0
  %5643 = vmatpush2.msra.mxu0 0.0
  %5644 = vmatprep.subr.mxu0 0.0
  %5645 = vmatpush2.msra.mxu0 0.0
  %5646 = vmatprep.subr.mxu0 0.0
  %5647 = vmatpush2.msra.mxu0 0.0
  %5648 = vmatprep.subr.mxu0 0.0
  %5649 = vmatpush2.msra.mxu0 0.0
  %5650 = vmatprep.mubr.f32.mxu0 0.0
  %5651 = vmatmul.mubr.f32.gmra.mxu0 %v5039
  %v5652 = vpop.f32.mrf.mxu0
  %v5653 = vadd.f32 0.0, %v5652
  %v5654 = vpop.f32.mrf.mxu0
  %5655 = vmatprep.mubr.f32.mxu0 0.0
  %5656 = vmatmul.mubr.f32.gmra.mxu0 %v5041
  %v5657 = vpop.f32.mrf.mxu0
  %v5658 = vadd.f32 0.0, %v5657
  %v5659 = vpop.f32.mrf.mxu0
  %5660 = vmatprep.mubr.f32.mxu0 0.0
  %5661 = vmatmul.mubr.f32.gmra.mxu0 %v5043
  %v5662 = vpop.f32.mrf.mxu0
  %v5663 = vadd.f32 0.0, %v5662
  %v5664 = vpop.f32.mrf.mxu0
  %5665 = vmatprep.mubr.f32.mxu0 0.0
  %5666 = vmatmul.mubr.f32.gmra.mxu0 %v5045
  %v5667 = vpop.f32.mrf.mxu0
  %v5668 = vadd.f32 0.0, %v5667
  %v5669 = vpop.f32.mrf.mxu0
  %5670 = vmatprep.mubr.f32.mxu0 0.0
  %5671 = vmatmul.mubr.f32.gmra.mxu0 %v5047
  %v5672 = vpop.f32.mrf.mxu0
  %v5673 = vadd.f32 0.0, %v5672
  %v5674 = vpop.f32.mrf.mxu0
  %5675 = vmatprep.mubr.f32.mxu0 0.0
  %5676 = vmatmul.mubr.f32.gmra.mxu0 %v5049
  %v5677 = vpop.f32.mrf.mxu0
  %v5678 = vadd.f32 0.0, %v5677
  %v5679 = vpop.f32.mrf.mxu0
  %5680 = vmatprep.mubr.f32.mxu0 0.0
  %5681 = vmatmul.mubr.f32.gmra.mxu0 %v5051
  %v5682 = vpop.f32.mrf.mxu0
  %v5683 = vadd.f32 0.0, %v5682
  %v5684 = vpop.f32.mrf.mxu0
  %5685 = vmatprep.mubr.f32.mxu0 0.0
  %5686 = vmatmul.mubr.f32.gmra.mxu0 %v5582
  %v5687 = vpop.f32.mrf.mxu0
  %v5688 = vadd.f32 0.0, %v5687
  %v5689 = vpop.f32.mrf.mxu0
  %5690 = vmatprep.mubr.f32.mxu0 0.0
  %5691 = vmatmul.mubr.f32.gmra.mxu0 %v5055
  %v5692 = vpop.f32.mrf.mxu0
  %v5693 = vadd.f32 0.0, %v5692
  %v5694 = vpop.f32.mrf.mxu0
  %5695 = vmatprep.mubr.f32.mxu0 0.0
  %5696 = vmatmul.mubr.f32.gmra.mxu0 %v5057
  %v5697 = vpop.f32.mrf.mxu0
  %v5698 = vadd.f32 0.0, %v5697
  %v5699 = vpop.f32.mrf.mxu0
  %5700 = vmatprep.mubr.f32.mxu0 0.0
  %5701 = vmatmul.mubr.f32.gmra.mxu0 %v5059
  %v5702 = vpop.f32.mrf.mxu0
  %v5703 = vadd.f32 0.0, %v5702
  %v5704 = vpop.f32.mrf.mxu0
  %5705 = vmatprep.mubr.f32.mxu0 0.0
  %5706 = vmatmul.mubr.f32.gmra.mxu0 %v5061
  %v5707 = vpop.f32.mrf.mxu0
  %v5708 = vadd.f32 0.0, %v5707
  %v5709 = vpop.f32.mrf.mxu0
  %5710 = vmatprep.mubr.f32.mxu0 0.0
  %5711 = vmatmul.mubr.f32.gmra.mxu0 %v5063
  %v5712 = vpop.f32.mrf.mxu0
  %v5713 = vadd.f32 0.0, %v5712
  %v5714 = vpop.f32.mrf.mxu0
  %5715 = vmatprep.mubr.f32.mxu0 0.0
  %5716 = vmatmul.mubr.f32.gmra.mxu0 %v5065
  %v5717 = vpop.f32.mrf.mxu0
  %v5718 = vadd.f32 0.0, %v5717
  %v5719 = vpop.f32.mrf.mxu0
  %5720 = vmatprep.mubr.f32.mxu0 0.0
  %5721 = vmatmul.mubr.f32.gmra.mxu0 %v5067
  %v5722 = vpop.f32.mrf.mxu0
  %v5723 = vadd.f32 0.0, %v5722
  %v5724 = vpop.f32.mrf.mxu0
  %5725 = vmatprep.mubr.f32.mxu0 0.0
  %5726 = vmatmul.mubr.f32.gmra.mxu0 %v5584
  %v5727 = vpop.f32.mrf.mxu0
  %v5728 = vadd.f32 0.0, %v5727
  %v5729 = vpop.f32.mrf.mxu0
  %5730 = vdwg.mxu0
  %v5731 = vadd.f32 %v5558, %v5653
  %v5732 = vadd.f32 %v5559, %v5658
  %v5733 = vadd.f32 %v5560, %v5663
  %v5734 = vadd.f32 %v5561, %v5668
  %v5735 = vadd.f32 %v5562, %v5673
  %v5736 = vadd.f32 %v5563, %v5678
  %v5737 = vadd.f32 %v5564, %v5683
  %v5738 = vadd.f32 %v5565, %v5688
  %v5739 = vadd.f32 %v5566, %v5693
  %v5740 = vadd.f32 %v5567, %v5698
  %v5741 = vadd.f32 %v5568, %v5703
  %v5742 = vadd.f32 %v5569, %v5708
  %v5743 = vadd.f32 %v5570, %v5713
  %v5744 = vadd.f32 %v5571, %v5718
  %v5745 = vadd.f32 %v5572, %v5723
  %v5746 = vadd.f32 %v5573, %v5728
  %s5747 = scalar_lea.vmem %s12, 48
  %v5748 = vld [vmem:[%s5747] sm:$0xff]
  %v5750 = vsel %vm101, %v4528, 0
  %v5753 = vsel %vm101, %v4548, 0
  %5755 = vmatprep.subr.mxu0 0.0
  %5756 = vmatpush1.msra.mxu0 0.0
  %5757 = vmatprep.subr.mxu0 0.0
  %5758 = vmatpush1.msra.mxu0 0.0
  %5759 = vmatprep.subr.mxu0 0.0
  %5760 = vmatpush1.msra.mxu0 0.0
  %5761 = vmatprep.subr.mxu0 0.0
  %5762 = vmatpush1.msra.mxu0 0.0
  %5763 = vmatprep.subr.mxu0 0.0
  %5764 = vmatpush1.msra.mxu0 0.0
  %5765 = vmatprep.subr.mxu0 0.0
  %5766 = vmatpush1.msra.mxu0 0.0
  %5767 = vmatprep.subr.mxu0 0.0
  %5768 = vmatpush1.msra.mxu0 0.0
  %5769 = vmatprep.subr.mxu0 0.0
  %5770 = vmatpush1.msra.mxu0 0.0
  %5771 = vmatprep.subr.mxu0 0.0
  %5772 = vmatpush1.msra.mxu0 0.0
  %5773 = vmatprep.subr.mxu0 0.0
  %5774 = vmatpush1.msra.mxu0 0.0
  %5775 = vmatprep.subr.mxu0 0.0
  %5776 = vmatpush1.msra.mxu0 0.0
  %5777 = vmatprep.subr.mxu0 0.0
  %5778 = vmatpush1.msra.mxu0 0.0
  %5779 = vmatprep.subr.mxu0 0.0
  %5780 = vmatpush1.msra.mxu0 0.0
  %5781 = vmatprep.subr.mxu0 0.0
  %5782 = vmatpush1.msra.mxu0 0.0
  %5783 = vmatprep.subr.mxu0 0.0
  %5784 = vmatpush1.msra.mxu0 0.0
  %5785 = vmatprep.subr.mxu0 0.0
  %5786 = vmatpush1.msra.mxu0 %v5748
  %5787 = vmatprep.subr.mxu0 0.0
  %5788 = vmatpush2.msra.mxu0 0.0
  %5789 = vmatprep.subr.mxu0 0.0
  %5790 = vmatpush2.msra.mxu0 0.0
  %5791 = vmatprep.subr.mxu0 0.0
  %5792 = vmatpush2.msra.mxu0 0.0
  %5793 = vmatprep.subr.mxu0 0.0
  %5794 = vmatpush2.msra.mxu0 0.0
  %5795 = vmatprep.subr.mxu0 0.0
  %5796 = vmatpush2.msra.mxu0 0.0
  %5797 = vmatprep.subr.mxu0 0.0
  %5798 = vmatpush2.msra.mxu0 0.0
  %5799 = vmatprep.subr.mxu0 0.0
  %5800 = vmatpush2.msra.mxu0 0.0
  %5801 = vmatprep.subr.mxu0 0.0
  %5802 = vmatpush2.msra.mxu0 0.0
  %5803 = vmatprep.subr.mxu0 0.0
  %5804 = vmatpush2.msra.mxu0 0.0
  %5805 = vmatprep.subr.mxu0 0.0
  %5806 = vmatpush2.msra.mxu0 0.0
  %5807 = vmatprep.subr.mxu0 0.0
  %5808 = vmatpush2.msra.mxu0 0.0
  %5809 = vmatprep.subr.mxu0 0.0
  %5810 = vmatpush2.msra.mxu0 0.0
  %5811 = vmatprep.subr.mxu0 0.0
  %5812 = vmatpush2.msra.mxu0 0.0
  %5813 = vmatprep.subr.mxu0 0.0
  %5814 = vmatpush2.msra.mxu0 0.0
  %5815 = vmatprep.subr.mxu0 0.0
  %5816 = vmatpush2.msra.mxu0 0.0
  %5817 = vmatprep.subr.mxu0 0.0
  %5818 = vmatpush2.msra.mxu0 0.0
  %5819 = vmatprep.mubr.f32.mxu0 0.0
  %5820 = vmatmul.mubr.f32.gmra.mxu0 %v4814
  %v5821 = vpop.f32.mrf.mxu0
  %v5822 = vadd.f32 0.0, %v5821
  %v5823 = vpop.f32.mrf.mxu0
  %5824 = vmatprep.mubr.f32.mxu0 0.0
  %5825 = vmatmul.mubr.f32.gmra.mxu0 %v4816
  %v5826 = vpop.f32.mrf.mxu0
  %v5827 = vadd.f32 0.0, %v5826
  %v5828 = vpop.f32.mrf.mxu0
  %5829 = vmatprep.mubr.f32.mxu0 0.0
  %5830 = vmatmul.mubr.f32.gmra.mxu0 %v4818
  %v5831 = vpop.f32.mrf.mxu0
  %v5832 = vadd.f32 0.0, %v5831
  %v5833 = vpop.f32.mrf.mxu0
  %5834 = vmatprep.mubr.f32.mxu0 0.0
  %5835 = vmatmul.mubr.f32.gmra.mxu0 %v4820
  %v5836 = vpop.f32.mrf.mxu0
  %v5837 = vadd.f32 0.0, %v5836
  %v5838 = vpop.f32.mrf.mxu0
  %5839 = vmatprep.mubr.f32.mxu0 0.0
  %5840 = vmatmul.mubr.f32.gmra.mxu0 %v4822
  %v5841 = vpop.f32.mrf.mxu0
  %v5842 = vadd.f32 0.0, %v5841
  %v5843 = vpop.f32.mrf.mxu0
  %5844 = vmatprep.mubr.f32.mxu0 0.0
  %5845 = vmatmul.mubr.f32.gmra.mxu0 %v4824
  %v5846 = vpop.f32.mrf.mxu0
  %v5847 = vadd.f32 0.0, %v5846
  %v5848 = vpop.f32.mrf.mxu0
  %5849 = vmatprep.mubr.f32.mxu0 0.0
  %5850 = vmatmul.mubr.f32.gmra.mxu0 %v5233
  %v5851 = vpop.f32.mrf.mxu0
  %v5852 = vadd.f32 0.0, %v5851
  %v5853 = vpop.f32.mrf.mxu0
  %5854 = vmatprep.mubr.f32.mxu0 0.0
  %5855 = vmatmul.mubr.f32.gmra.mxu0 %v5750
  %v5856 = vpop.f32.mrf.mxu0
  %v5857 = vadd.f32 0.0, %v5856
  %v5858 = vpop.f32.mrf.mxu0
  %5859 = vmatprep.mubr.f32.mxu0 0.0
  %5860 = vmatmul.mubr.f32.gmra.mxu0 %v4830
  %v5861 = vpop.f32.mrf.mxu0
  %v5862 = vadd.f32 0.0, %v5861
  %v5863 = vpop.f32.mrf.mxu0
  %5864 = vmatprep.mubr.f32.mxu0 0.0
  %5865 = vmatmul.mubr.f32.gmra.mxu0 %v4832
  %v5866 = vpop.f32.mrf.mxu0
  %v5867 = vadd.f32 0.0, %v5866
  %v5868 = vpop.f32.mrf.mxu0
  %5869 = vmatprep.mubr.f32.mxu0 0.0
  %5870 = vmatmul.mubr.f32.gmra.mxu0 %v4834
  %v5871 = vpop.f32.mrf.mxu0
  %v5872 = vadd.f32 0.0, %v5871
  %v5873 = vpop.f32.mrf.mxu0
  %5874 = vmatprep.mubr.f32.mxu0 0.0
  %5875 = vmatmul.mubr.f32.gmra.mxu0 %v4836
  %v5876 = vpop.f32.mrf.mxu0
  %v5877 = vadd.f32 0.0, %v5876
  %v5878 = vpop.f32.mrf.mxu0
  %5879 = vmatprep.mubr.f32.mxu0 0.0
  %5880 = vmatmul.mubr.f32.gmra.mxu0 %v4838
  %v5881 = vpop.f32.mrf.mxu0
  %v5882 = vadd.f32 0.0, %v5881
  %v5883 = vpop.f32.mrf.mxu0
  %5884 = vmatprep.mubr.f32.mxu0 0.0
  %5885 = vmatmul.mubr.f32.gmra.mxu0 %v4840
  %v5886 = vpop.f32.mrf.mxu0
  %v5887 = vadd.f32 0.0, %v5886
  %v5888 = vpop.f32.mrf.mxu0
  %5889 = vmatprep.mubr.f32.mxu0 0.0
  %5890 = vmatmul.mubr.f32.gmra.mxu0 %v5236
  %v5891 = vpop.f32.mrf.mxu0
  %v5892 = vadd.f32 0.0, %v5891
  %v5893 = vpop.f32.mrf.mxu0
  %5894 = vmatprep.mubr.f32.mxu0 0.0
  %5895 = vmatmul.mubr.f32.gmra.mxu0 %v5753
  %v5896 = vpop.f32.mrf.mxu0
  %v5897 = vadd.f32 0.0, %v5896
  %v5898 = vpop.f32.mrf.mxu0
  %5899 = vdwg.mxu0
  %v5900 = vadd.f32 %v5731, %v5822
  %v5901 = vadd.f32 %v5732, %v5827
  %v5902 = vadd.f32 %v5733, %v5832
  %v5903 = vadd.f32 %v5734, %v5837
  %v5904 = vadd.f32 %v5735, %v5842
  %v5905 = vadd.f32 %v5736, %v5847
  %v5906 = vadd.f32 %v5737, %v5852
  %v5907 = vadd.f32 %v5738, %v5857
  %v5908 = vadd.f32 %v5739, %v5862
  %v5909 = vadd.f32 %v5740, %v5867
  %v5910 = vadd.f32 %v5741, %v5872
  %v5911 = vadd.f32 %v5742, %v5877
  %v5912 = vadd.f32 %v5743, %v5882
  %v5913 = vadd.f32 %v5744, %v5887
  %v5914 = vadd.f32 %v5745, %v5892
  %v5915 = vadd.f32 %v5746, %v5897
  %v5918 = vrot.slane %v4528, 1
  %v5919 = vrot.slane %v4529, 1
  %v5920 = vsel %vm345, %v5918, %v5919
  %v5921 = vrot.slane %v4548, 1
  %v5922 = vrot.slane %v4549, 1
  %v5923 = vsel %vm345, %v5921, %v5922
  %s5924 = scalar_lea.vmem %s12, 56
  %v5925 = vld [vmem:[%s5924] sm:$0xff]
  %v5926 = vsel %vm101, %v5920, 0
  %v5928 = vsel %vm101, %v5923, 0
  %5930 = vmatprep.subr.mxu0 0.0
  %5931 = vmatpush1.msra.mxu0 0.0
  %5932 = vmatprep.subr.mxu0 0.0
  %5933 = vmatpush1.msra.mxu0 0.0
  %5934 = vmatprep.subr.mxu0 0.0
  %5935 = vmatpush1.msra.mxu0 0.0
  %5936 = vmatprep.subr.mxu0 0.0
  %5937 = vmatpush1.msra.mxu0 0.0
  %5938 = vmatprep.subr.mxu0 0.0
  %5939 = vmatpush1.msra.mxu0 0.0
  %5940 = vmatprep.subr.mxu0 0.0
  %5941 = vmatpush1.msra.mxu0 0.0
  %5942 = vmatprep.subr.mxu0 0.0
  %5943 = vmatpush1.msra.mxu0 0.0
  %5944 = vmatprep.subr.mxu0 0.0
  %5945 = vmatpush1.msra.mxu0 0.0
  %5946 = vmatprep.subr.mxu0 0.0
  %5947 = vmatpush1.msra.mxu0 0.0
  %5948 = vmatprep.subr.mxu0 0.0
  %5949 = vmatpush1.msra.mxu0 0.0
  %5950 = vmatprep.subr.mxu0 0.0
  %5951 = vmatpush1.msra.mxu0 0.0
  %5952 = vmatprep.subr.mxu0 0.0
  %5953 = vmatpush1.msra.mxu0 0.0
  %5954 = vmatprep.subr.mxu0 0.0
  %5955 = vmatpush1.msra.mxu0 0.0
  %5956 = vmatprep.subr.mxu0 0.0
  %5957 = vmatpush1.msra.mxu0 0.0
  %5958 = vmatprep.subr.mxu0 0.0
  %5959 = vmatpush1.msra.mxu0 0.0
  %5960 = vmatprep.subr.mxu0 0.0
  %5961 = vmatpush1.msra.mxu0 %v5925
  %5962 = vmatprep.subr.mxu0 0.0
  %5963 = vmatpush2.msra.mxu0 0.0
  %5964 = vmatprep.subr.mxu0 0.0
  %5965 = vmatpush2.msra.mxu0 0.0
  %5966 = vmatprep.subr.mxu0 0.0
  %5967 = vmatpush2.msra.mxu0 0.0
  %5968 = vmatprep.subr.mxu0 0.0
  %5969 = vmatpush2.msra.mxu0 0.0
  %5970 = vmatprep.subr.mxu0 0.0
  %5971 = vmatpush2.msra.mxu0 0.0
  %5972 = vmatprep.subr.mxu0 0.0
  %5973 = vmatpush2.msra.mxu0 0.0
  %5974 = vmatprep.subr.mxu0 0.0
  %5975 = vmatpush2.msra.mxu0 0.0
  %5976 = vmatprep.subr.mxu0 0.0
  %5977 = vmatpush2.msra.mxu0 0.0
  %5978 = vmatprep.subr.mxu0 0.0
  %5979 = vmatpush2.msra.mxu0 0.0
  %5980 = vmatprep.subr.mxu0 0.0
  %5981 = vmatpush2.msra.mxu0 0.0
  %5982 = vmatprep.subr.mxu0 0.0
  %5983 = vmatpush2.msra.mxu0 0.0
  %5984 = vmatprep.subr.mxu0 0.0
  %5985 = vmatpush2.msra.mxu0 0.0
  %5986 = vmatprep.subr.mxu0 0.0
  %5987 = vmatpush2.msra.mxu0 0.0
  %5988 = vmatprep.subr.mxu0 0.0
  %5989 = vmatpush2.msra.mxu0 0.0
  %5990 = vmatprep.subr.mxu0 0.0
  %5991 = vmatpush2.msra.mxu0 0.0
  %5992 = vmatprep.subr.mxu0 0.0
  %5993 = vmatpush2.msra.mxu0 0.0
  %5994 = vmatprep.mubr.f32.mxu0 0.0
  %5995 = vmatmul.mubr.f32.gmra.mxu0 %v4637
  %v5996 = vpop.f32.mrf.mxu0
  %v5997 = vadd.f32 0.0, %v5996
  %v5998 = vpop.f32.mrf.mxu0
  %5999 = vmatprep.mubr.f32.mxu0 0.0
  %6000 = vmatmul.mubr.f32.gmra.mxu0 %v4639
  %v6001 = vpop.f32.mrf.mxu0
  %v6002 = vadd.f32 0.0, %v6001
  %v6003 = vpop.f32.mrf.mxu0
  %6004 = vmatprep.mubr.f32.mxu0 0.0
  %6005 = vmatmul.mubr.f32.gmra.mxu0 %v4641
  %v6006 = vpop.f32.mrf.mxu0
  %v6007 = vadd.f32 0.0, %v6006
  %v6008 = vpop.f32.mrf.mxu0
  %6009 = vmatprep.mubr.f32.mxu0 0.0
  %6010 = vmatmul.mubr.f32.gmra.mxu0 %v4643
  %v6011 = vpop.f32.mrf.mxu0
  %v6012 = vadd.f32 0.0, %v6011
  %v6013 = vpop.f32.mrf.mxu0
  %6014 = vmatprep.mubr.f32.mxu0 0.0
  %6015 = vmatmul.mubr.f32.gmra.mxu0 %v4645
  %v6016 = vpop.f32.mrf.mxu0
  %v6017 = vadd.f32 0.0, %v6016
  %v6018 = vpop.f32.mrf.mxu0
  %6019 = vmatprep.mubr.f32.mxu0 0.0
  %6020 = vmatmul.mubr.f32.gmra.mxu0 %v4647
  %v6021 = vpop.f32.mrf.mxu0
  %v6022 = vadd.f32 0.0, %v6021
  %v6023 = vpop.f32.mrf.mxu0
  %6024 = vmatprep.mubr.f32.mxu0 0.0
  %6025 = vmatmul.mubr.f32.gmra.mxu0 %v5409
  %v6026 = vpop.f32.mrf.mxu0
  %v6027 = vadd.f32 0.0, %v6026
  %v6028 = vpop.f32.mrf.mxu0
  %6029 = vmatprep.mubr.f32.mxu0 0.0
  %6030 = vmatmul.mubr.f32.gmra.mxu0 %v5926
  %v6031 = vpop.f32.mrf.mxu0
  %v6032 = vadd.f32 0.0, %v6031
  %v6033 = vpop.f32.mrf.mxu0
  %6034 = vmatprep.mubr.f32.mxu0 0.0
  %6035 = vmatmul.mubr.f32.gmra.mxu0 %v4653
  %v6036 = vpop.f32.mrf.mxu0
  %v6037 = vadd.f32 0.0, %v6036
  %v6038 = vpop.f32.mrf.mxu0
  %6039 = vmatprep.mubr.f32.mxu0 0.0
  %6040 = vmatmul.mubr.f32.gmra.mxu0 %v4655
  %v6041 = vpop.f32.mrf.mxu0
  %v6042 = vadd.f32 0.0, %v6041
  %v6043 = vpop.f32.mrf.mxu0
  %6044 = vmatprep.mubr.f32.mxu0 0.0
  %6045 = vmatmul.mubr.f32.gmra.mxu0 %v4657
  %v6046 = vpop.f32.mrf.mxu0
  %v6047 = vadd.f32 0.0, %v6046
  %v6048 = vpop.f32.mrf.mxu0
  %6049 = vmatprep.mubr.f32.mxu0 0.0
  %6050 = vmatmul.mubr.f32.gmra.mxu0 %v4659
  %v6051 = vpop.f32.mrf.mxu0
  %v6052 = vadd.f32 0.0, %v6051
  %v6053 = vpop.f32.mrf.mxu0
  %6054 = vmatprep.mubr.f32.mxu0 0.0
  %6055 = vmatmul.mubr.f32.gmra.mxu0 %v4661
  %v6056 = vpop.f32.mrf.mxu0
  %v6057 = vadd.f32 0.0, %v6056
  %v6058 = vpop.f32.mrf.mxu0
  %6059 = vmatprep.mubr.f32.mxu0 0.0
  %6060 = vmatmul.mubr.f32.gmra.mxu0 %v4663
  %v6061 = vpop.f32.mrf.mxu0
  %v6062 = vadd.f32 0.0, %v6061
  %v6063 = vpop.f32.mrf.mxu0
  %6064 = vmatprep.mubr.f32.mxu0 0.0
  %6065 = vmatmul.mubr.f32.gmra.mxu0 %v5411
  %v6066 = vpop.f32.mrf.mxu0
  %v6067 = vadd.f32 0.0, %v6066
  %v6068 = vpop.f32.mrf.mxu0
  %6069 = vmatprep.mubr.f32.mxu0 0.0
  %6070 = vmatmul.mubr.f32.gmra.mxu0 %v5928
  %v6071 = vpop.f32.mrf.mxu0
  %v6072 = vadd.f32 0.0, %v6071
  %v6073 = vpop.f32.mrf.mxu0
  %6074 = vdwg.mxu0
  %v6075 = vadd.f32 %v5900, %v5997
  %v6076 = vadd.f32 %v5901, %v6002
  %v6077 = vadd.f32 %v5902, %v6007
  %v6078 = vadd.f32 %v5903, %v6012
  %v6079 = vadd.f32 %v5904, %v6017
  %v6080 = vadd.f32 %v5905, %v6022
  %v6081 = vadd.f32 %v5906, %v6027
  %v6082 = vadd.f32 %v5907, %v6032
  %v6083 = vadd.f32 %v5908, %v6037
  %v6084 = vadd.f32 %v5909, %v6042
  %v6085 = vadd.f32 %v5910, %v6047
  %v6086 = vadd.f32 %v5911, %v6052
  %v6087 = vadd.f32 %v5912, %v6057
  %v6088 = vadd.f32 %v5913, %v6062
  %v6089 = vadd.f32 %v5914, %v6067
  %v6090 = vadd.f32 %v5915, %v6072
  %v6091 = vrot.slane %v4528, 2
  %v6092 = vrot.slane %v4529, 2
  %v6093 = vsel %vm757, %v6091, %v6092
  %v6094 = vrot.slane %v4548, 2
  %v6095 = vrot.slane %v4549, 2
  %v6096 = vsel %vm757, %v6094, %v6095
  %s6097 = scalar_lea.vmem %s12, 64
  %v6098 = vld [vmem:[%s6097] sm:$0xff]
  %v6099 = vsel %vm101, %v6093, 0
  %v6101 = vsel %vm101, %v6096, 0
  %6103 = vmatprep.subr.mxu0 0.0
  %6104 = vmatpush1.msra.mxu0 0.0
  %6105 = vmatprep.subr.mxu0 0.0
  %6106 = vmatpush1.msra.mxu0 0.0
  %6107 = vmatprep.subr.mxu0 0.0
  %6108 = vmatpush1.msra.mxu0 0.0
  %6109 = vmatprep.subr.mxu0 0.0
  %6110 = vmatpush1.msra.mxu0 0.0
  %6111 = vmatprep.subr.mxu0 0.0
  %6112 = vmatpush1.msra.mxu0 0.0
  %6113 = vmatprep.subr.mxu0 0.0
  %6114 = vmatpush1.msra.mxu0 0.0
  %6115 = vmatprep.subr.mxu0 0.0
  %6116 = vmatpush1.msra.mxu0 0.0
  %6117 = vmatprep.subr.mxu0 0.0
  %6118 = vmatpush1.msra.mxu0 0.0
  %6119 = vmatprep.subr.mxu0 0.0
  %6120 = vmatpush1.msra.mxu0 0.0
  %6121 = vmatprep.subr.mxu0 0.0
  %6122 = vmatpush1.msra.mxu0 0.0
  %6123 = vmatprep.subr.mxu0 0.0
  %6124 = vmatpush1.msra.mxu0 0.0
  %6125 = vmatprep.subr.mxu0 0.0
  %6126 = vmatpush1.msra.mxu0 0.0
  %6127 = vmatprep.subr.mxu0 0.0
  %6128 = vmatpush1.msra.mxu0 0.0
  %6129 = vmatprep.subr.mxu0 0.0
  %6130 = vmatpush1.msra.mxu0 0.0
  %6131 = vmatprep.subr.mxu0 0.0
  %6132 = vmatpush1.msra.mxu0 0.0
  %6133 = vmatprep.subr.mxu0 0.0
  %6134 = vmatpush1.msra.mxu0 %v6098
  %6135 = vmatprep.subr.mxu0 0.0
  %6136 = vmatpush2.msra.mxu0 0.0
  %6137 = vmatprep.subr.mxu0 0.0
  %6138 = vmatpush2.msra.mxu0 0.0
  %6139 = vmatprep.subr.mxu0 0.0
  %6140 = vmatpush2.msra.mxu0 0.0
  %6141 = vmatprep.subr.mxu0 0.0
  %6142 = vmatpush2.msra.mxu0 0.0
  %6143 = vmatprep.subr.mxu0 0.0
  %6144 = vmatpush2.msra.mxu0 0.0
  %6145 = vmatprep.subr.mxu0 0.0
  %6146 = vmatpush2.msra.mxu0 0.0
  %6147 = vmatprep.subr.mxu0 0.0
  %6148 = vmatpush2.msra.mxu0 0.0
  %6149 = vmatprep.subr.mxu0 0.0
  %6150 = vmatpush2.msra.mxu0 0.0
  %6151 = vmatprep.subr.mxu0 0.0
  %6152 = vmatpush2.msra.mxu0 0.0
  %6153 = vmatprep.subr.mxu0 0.0
  %6154 = vmatpush2.msra.mxu0 0.0
  %6155 = vmatprep.subr.mxu0 0.0
  %6156 = vmatpush2.msra.mxu0 0.0
  %6157 = vmatprep.subr.mxu0 0.0
  %6158 = vmatpush2.msra.mxu0 0.0
  %6159 = vmatprep.subr.mxu0 0.0
  %6160 = vmatpush2.msra.mxu0 0.0
  %6161 = vmatprep.subr.mxu0 0.0
  %6162 = vmatpush2.msra.mxu0 0.0
  %6163 = vmatprep.subr.mxu0 0.0
  %6164 = vmatpush2.msra.mxu0 0.0
  %6165 = vmatprep.subr.mxu0 0.0
  %6166 = vmatpush2.msra.mxu0 0.0
  %6167 = vmatprep.mubr.f32.mxu0 0.0
  %6168 = vmatmul.mubr.f32.gmra.mxu0 %v5041
  %v6169 = vpop.f32.mrf.mxu0
  %v6170 = vadd.f32 0.0, %v6169
  %v6171 = vpop.f32.mrf.mxu0
  %6172 = vmatprep.mubr.f32.mxu0 0.0
  %6173 = vmatmul.mubr.f32.gmra.mxu0 %v5043
  %v6174 = vpop.f32.mrf.mxu0
  %v6175 = vadd.f32 0.0, %v6174
  %v6176 = vpop.f32.mrf.mxu0
  %6177 = vmatprep.mubr.f32.mxu0 0.0
  %6178 = vmatmul.mubr.f32.gmra.mxu0 %v5045
  %v6179 = vpop.f32.mrf.mxu0
  %v6180 = vadd.f32 0.0, %v6179
  %v6181 = vpop.f32.mrf.mxu0
  %6182 = vmatprep.mubr.f32.mxu0 0.0
  %6183 = vmatmul.mubr.f32.gmra.mxu0 %v5047
  %v6184 = vpop.f32.mrf.mxu0
  %v6185 = vadd.f32 0.0, %v6184
  %v6186 = vpop.f32.mrf.mxu0
  %6187 = vmatprep.mubr.f32.mxu0 0.0
  %6188 = vmatmul.mubr.f32.gmra.mxu0 %v5049
  %v6189 = vpop.f32.mrf.mxu0
  %v6190 = vadd.f32 0.0, %v6189
  %v6191 = vpop.f32.mrf.mxu0
  %6192 = vmatprep.mubr.f32.mxu0 0.0
  %6193 = vmatmul.mubr.f32.gmra.mxu0 %v5051
  %v6194 = vpop.f32.mrf.mxu0
  %v6195 = vadd.f32 0.0, %v6194
  %v6196 = vpop.f32.mrf.mxu0
  %6197 = vmatprep.mubr.f32.mxu0 0.0
  %6198 = vmatmul.mubr.f32.gmra.mxu0 %v5582
  %v6199 = vpop.f32.mrf.mxu0
  %v6200 = vadd.f32 0.0, %v6199
  %v6201 = vpop.f32.mrf.mxu0
  %6202 = vmatprep.mubr.f32.mxu0 0.0
  %6203 = vmatmul.mubr.f32.gmra.mxu0 %v6099
  %v6204 = vpop.f32.mrf.mxu0
  %v6205 = vadd.f32 0.0, %v6204
  %v6206 = vpop.f32.mrf.mxu0
  %6207 = vmatprep.mubr.f32.mxu0 0.0
  %6208 = vmatmul.mubr.f32.gmra.mxu0 %v5057
  %v6209 = vpop.f32.mrf.mxu0
  %v6210 = vadd.f32 0.0, %v6209
  %v6211 = vpop.f32.mrf.mxu0
  %6212 = vmatprep.mubr.f32.mxu0 0.0
  %6213 = vmatmul.mubr.f32.gmra.mxu0 %v5059
  %v6214 = vpop.f32.mrf.mxu0
  %v6215 = vadd.f32 0.0, %v6214
  %v6216 = vpop.f32.mrf.mxu0
  %6217 = vmatprep.mubr.f32.mxu0 0.0
  %6218 = vmatmul.mubr.f32.gmra.mxu0 %v5061
  %v6219 = vpop.f32.mrf.mxu0
  %v6220 = vadd.f32 0.0, %v6219
  %v6221 = vpop.f32.mrf.mxu0
  %6222 = vmatprep.mubr.f32.mxu0 0.0
  %6223 = vmatmul.mubr.f32.gmra.mxu0 %v5063
  %v6224 = vpop.f32.mrf.mxu0
  %v6225 = vadd.f32 0.0, %v6224
  %v6226 = vpop.f32.mrf.mxu0
  %6227 = vmatprep.mubr.f32.mxu0 0.0
  %6228 = vmatmul.mubr.f32.gmra.mxu0 %v5065
  %v6229 = vpop.f32.mrf.mxu0
  %v6230 = vadd.f32 0.0, %v6229
  %v6231 = vpop.f32.mrf.mxu0
  %6232 = vmatprep.mubr.f32.mxu0 0.0
  %6233 = vmatmul.mubr.f32.gmra.mxu0 %v5067
  %v6234 = vpop.f32.mrf.mxu0
  %v6235 = vadd.f32 0.0, %v6234
  %v6236 = vpop.f32.mrf.mxu0
  %6237 = vmatprep.mubr.f32.mxu0 0.0
  %6238 = vmatmul.mubr.f32.gmra.mxu0 %v5584
  %v6239 = vpop.f32.mrf.mxu0
  %v6240 = vadd.f32 0.0, %v6239
  %v6241 = vpop.f32.mrf.mxu0
  %6242 = vmatprep.mubr.f32.mxu0 0.0
  %6243 = vmatmul.mubr.f32.gmra.mxu0 %v6101
  %v6244 = vpop.f32.mrf.mxu0
  %v6245 = vadd.f32 0.0, %v6244
  %v6246 = vpop.f32.mrf.mxu0
  %6247 = vdwg.mxu0
  %v6248 = vadd.f32 %v6075, %v6170
  %v6249 = vadd.f32 %v6076, %v6175
  %v6250 = vadd.f32 %v6077, %v6180
  %v6251 = vadd.f32 %v6078, %v6185
  %v6252 = vadd.f32 %v6079, %v6190
  %v6253 = vadd.f32 %v6080, %v6195
  %v6254 = vadd.f32 %v6081, %v6200
  %v6255 = vadd.f32 %v6082, %v6205
  %v6256 = vadd.f32 %v6083, %v6210
  %v6257 = vadd.f32 %v6084, %v6215
  %v6258 = vadd.f32 %v6085, %v6220
  %v6259 = vadd.f32 %v6086, %v6225
  %v6260 = vadd.f32 %v6087, %v6230
  %v6261 = vadd.f32 %v6088, %v6235
  %v6262 = vadd.f32 %v6089, %v6240
  %v6263 = vadd.f32 %v6090, %v6245
  %v6264 = vsel %vm101, %v6248, 0.0
  %v6265 = vsel %vm101, %v6249, 0.0
  %v6266 = vadd.f32 %v6264, %v6265
  %v6267 = vsel %vm101, %v6250, 0.0
  %v6268 = vadd.f32 %v6266, %v6267
  %v6269 = vsel %vm101, %v6251, 0.0
  %v6270 = vadd.f32 %v6268, %v6269
  %v6271 = vsel %vm101, %v6252, 0.0
  %v6272 = vadd.f32 %v6270, %v6271
  %v6273 = vsel %vm101, %v6253, 0.0
  %v6274 = vadd.f32 %v6272, %v6273
  %v6275 = vsel %vm101, %v6254, 0.0
  %v6276 = vadd.f32 %v6274, %v6275
  %v6277 = vsel %vm101, %v6255, 0.0
  %v6278 = vadd.f32 %v6276, %v6277
  %v6279 = vsel %vm101, %v6256, 0.0
  %v6280 = vadd.f32 %v6278, %v6279
  %v6281 = vsel %vm101, %v6257, 0.0
  %v6282 = vadd.f32 %v6280, %v6281
  %v6283 = vsel %vm101, %v6258, 0.0
  %v6284 = vadd.f32 %v6282, %v6283
  %v6285 = vsel %vm101, %v6259, 0.0
  %v6286 = vadd.f32 %v6284, %v6285
  %v6287 = vsel %vm101, %v6260, 0.0
  %v6288 = vadd.f32 %v6286, %v6287
  %v6289 = vsel %vm101, %v6261, 0.0
  %v6290 = vadd.f32 %v6288, %v6289
  %v6291 = vsel %vm101, %v6262, 0.0
  %v6292 = vadd.f32 %v6290, %v6291
  %v6293 = vsel %vm101, %v6263, 0.0
  %v6294 = vadd.f32 %v6292, %v6293
  %v6295 = vrot.slane %v6294, 4
  %v6296 = vadd.f32 %v6294, %v6295
  %v6297 = vrot.slane %v6296, 2
  %v6298 = vadd.f32 %v6296, %v6297
  %v6299 = vrot.slane %v6298, 1
  %v6300 = vadd.f32 %v6298, %v6299
  %v6301 = vmul.f32 %v6300, %v2093
  %v6302 = vmul.f32 %v6248, %v6248
  %v6303 = vmul.f32 %v6249, %v6249
  %v6304 = vmul.f32 %v6250, %v6250
  %v6305 = vmul.f32 %v6251, %v6251
  %v6306 = vmul.f32 %v6252, %v6252
  %v6307 = vmul.f32 %v6253, %v6253
  %v6308 = vmul.f32 %v6254, %v6254
  %v6309 = vmul.f32 %v6255, %v6255
  %v6310 = vmul.f32 %v6256, %v6256
  %v6311 = vmul.f32 %v6257, %v6257
  %v6312 = vmul.f32 %v6258, %v6258
  %v6313 = vmul.f32 %v6259, %v6259
  %v6314 = vmul.f32 %v6260, %v6260
  %v6315 = vmul.f32 %v6261, %v6261
  %v6316 = vmul.f32 %v6262, %v6262
  %v6317 = vmul.f32 %v6263, %v6263
  %v6318 = vsel %vm101, %v6302, 0.0
  %v6319 = vsel %vm101, %v6303, 0.0
  %v6320 = vadd.f32 %v6318, %v6319
  %v6321 = vsel %vm101, %v6304, 0.0
  %v6322 = vadd.f32 %v6320, %v6321
  %v6323 = vsel %vm101, %v6305, 0.0
  %v6324 = vadd.f32 %v6322, %v6323
  %v6325 = vsel %vm101, %v6306, 0.0
  %v6326 = vadd.f32 %v6324, %v6325
  %v6327 = vsel %vm101, %v6307, 0.0
  %v6328 = vadd.f32 %v6326, %v6327
  %v6329 = vsel %vm101, %v6308, 0.0
  %v6330 = vadd.f32 %v6328, %v6329
  %v6331 = vsel %vm101, %v6309, 0.0
  %v6332 = vadd.f32 %v6330, %v6331
  %v6333 = vsel %vm101, %v6310, 0.0
  %v6334 = vadd.f32 %v6332, %v6333
  %v6335 = vsel %vm101, %v6311, 0.0
  %v6336 = vadd.f32 %v6334, %v6335
  %v6337 = vsel %vm101, %v6312, 0.0
  %v6338 = vadd.f32 %v6336, %v6337
  %v6339 = vsel %vm101, %v6313, 0.0
  %v6340 = vadd.f32 %v6338, %v6339
  %v6341 = vsel %vm101, %v6314, 0.0
  %v6342 = vadd.f32 %v6340, %v6341
  %v6343 = vsel %vm101, %v6315, 0.0
  %v6344 = vadd.f32 %v6342, %v6343
  %v6345 = vsel %vm101, %v6316, 0.0
  %v6346 = vadd.f32 %v6344, %v6345
  %v6347 = vsel %vm101, %v6317, 0.0
  %v6348 = vadd.f32 %v6346, %v6347
  %v6349 = vrot.slane %v6348, 4
  %v6350 = vadd.f32 %v6348, %v6349
  %v6351 = vrot.slane %v6350, 2
  %v6352 = vadd.f32 %v6350, %v6351
  %v6353 = vrot.slane %v6352, 1
  %v6354 = vadd.f32 %v6352, %v6353
  %v6355 = vmul.f32 %v6354, %v2093
  %v6356 = vmul.f32 %v6301, %v6301
  %v6357 = vsub.f32 %v6355, %v6356
  %v6358 = vmax.f32 %v6357, 0.0
  %v6359 = vsub.f32 %v6248, %v6301
  %v6360 = vsub.f32 %v6249, %v6301
  %v6361 = vsub.f32 %v6250, %v6301
  %v6362 = vsub.f32 %v6251, %v6301
  %v6363 = vsub.f32 %v6252, %v6301
  %v6364 = vsub.f32 %v6253, %v6301
  %v6365 = vsub.f32 %v6254, %v6301
  %v6366 = vsub.f32 %v6255, %v6301
  %v6367 = vsub.f32 %v6256, %v6301
  %v6368 = vsub.f32 %v6257, %v6301
  %v6369 = vsub.f32 %v6258, %v6301
  %v6370 = vsub.f32 %v6259, %v6301
  %v6371 = vsub.f32 %v6260, %v6301
  %v6372 = vsub.f32 %v6261, %v6301
  %v6373 = vsub.f32 %v6262, %v6301
  %v6374 = vsub.f32 %v6263, %v6301
  %v6375 = vadd.f32 %v6358, 1e-05
  %v6376 = vrsqrt.pop %v6375
  %v6377 = vmul.f32 %v6359, %v6376
  %v6378 = vmul.f32 %v6360, %v6376
  %v6379 = vmul.f32 %v6361, %v6376
  %v6380 = vmul.f32 %v6362, %v6376
  %v6381 = vmul.f32 %v6363, %v6376
  %v6382 = vmul.f32 %v6364, %v6376
  %v6383 = vmul.f32 %v6365, %v6376
  %v6384 = vmul.f32 %v6366, %v6376
  %v6385 = vmul.f32 %v6367, %v6376
  %v6386 = vmul.f32 %v6368, %v6376
  %v6387 = vmul.f32 %v6369, %v6376
  %v6388 = vmul.f32 %v6370, %v6376
  %v6389 = vmul.f32 %v6371, %v6376
  %v6390 = vmul.f32 %v6372, %v6376
  %v6391 = vmul.f32 %v6373, %v6376
  %v6392 = vmul.f32 %v6374, %v6376
  %v6393 = vld [vmem:[%s13] sm:$0x1]
  %v6395 = vlaneseq
  %v6396 = vshrl.u32 %v6395, 7
  %v6397 = vsub.s32 0, %v6396
  %v6398 = vrot.slane %v6393, %v6397
  %v6400 = vmul.f32 %v6377, %v6398
  %v6401 = vmul.f32 %v6378, %v6398
  %v6402 = vmul.f32 %v6379, %v6398
  %v6403 = vmul.f32 %v6380, %v6398
  %v6404 = vmul.f32 %v6381, %v6398
  %v6405 = vmul.f32 %v6382, %v6398
  %v6406 = vmul.f32 %v6383, %v6398
  %v6407 = vmul.f32 %v6384, %v6398
  %v6408 = vmul.f32 %v6385, %v6398
  %v6409 = vmul.f32 %v6386, %v6398
  %v6410 = vmul.f32 %v6387, %v6398
  %v6411 = vmul.f32 %v6388, %v6398
  %v6412 = vmul.f32 %v6389, %v6398
  %v6413 = vmul.f32 %v6390, %v6398
  %v6414 = vmul.f32 %v6391, %v6398
  %v6415 = vmul.f32 %v6392, %v6398
  %v6416 = vld [vmem:[%s14] sm:$0x1]
  %v6418 = vlaneseq
  %v6419 = vshrl.u32 %v6418, 7
  %v6420 = vsub.s32 0, %v6419
  %v6421 = vrot.slane %v6416, %v6420
  %v6423 = vadd.f32 %v6400, %v6421
  %v6424 = vadd.f32 %v6401, %v6421
  %v6425 = vadd.f32 %v6402, %v6421
  %v6426 = vadd.f32 %v6403, %v6421
  %v6427 = vadd.f32 %v6404, %v6421
  %v6428 = vadd.f32 %v6405, %v6421
  %v6429 = vadd.f32 %v6406, %v6421
  %v6430 = vadd.f32 %v6407, %v6421
  %v6431 = vadd.f32 %v6408, %v6421
  %v6432 = vadd.f32 %v6409, %v6421
  %v6433 = vadd.f32 %v6410, %v6421
  %v6434 = vadd.f32 %v6411, %v6421
  %v6435 = vadd.f32 %v6412, %v6421
  %v6436 = vadd.f32 %v6413, %v6421
  %v6437 = vadd.f32 %v6414, %v6421
  %v6438 = vadd.f32 %v6415, %v6421
  %v6439 = vmul.f32 %v6423, 0.01
  %v6440 = vmul.f32 %v6424, 0.01
  %v6441 = vmul.f32 %v6425, 0.01
  %v6442 = vmul.f32 %v6426, 0.01
  %v6443 = vmul.f32 %v6427, 0.01
  %v6444 = vmul.f32 %v6428, 0.01
  %v6445 = vmul.f32 %v6429, 0.01
  %v6446 = vmul.f32 %v6430, 0.01
  %v6447 = vmul.f32 %v6431, 0.01
  %v6448 = vmul.f32 %v6432, 0.01
  %v6449 = vmul.f32 %v6433, 0.01
  %v6450 = vmul.f32 %v6434, 0.01
  %v6451 = vmul.f32 %v6435, 0.01
  %v6452 = vmul.f32 %v6436, 0.01
  %v6453 = vmul.f32 %v6437, 0.01
  %v6454 = vmul.f32 %v6438, 0.01
  %v6455 = vmax.f32 %v6423, %v6439
  %v6456 = vmax.f32 %v6424, %v6440
  %v6457 = vmax.f32 %v6425, %v6441
  %v6458 = vmax.f32 %v6426, %v6442
  %v6459 = vmax.f32 %v6427, %v6443
  %v6460 = vmax.f32 %v6428, %v6444
  %v6461 = vmax.f32 %v6429, %v6445
  %v6462 = vmax.f32 %v6430, %v6446
  %v6463 = vmax.f32 %v6431, %v6447
  %v6464 = vmax.f32 %v6432, %v6448
  %v6465 = vmax.f32 %v6433, %v6449
  %v6466 = vmax.f32 %v6434, %v6450
  %v6467 = vmax.f32 %v6435, %v6451
  %v6468 = vmax.f32 %v6436, %v6452
  %v6469 = vmax.f32 %v6437, %v6453
  %v6470 = vmax.f32 %v6438, %v6454
  %6471 = vst.msk [vmem:[%s2264 + $0x1] sm:$0xff] %vm101, %v6455
  %6472 = vst.msk [vmem:[%s2264 + $0x11] sm:$0xff] %vm101, %v6456
  %6473 = vst.msk [vmem:[%s2264 + $0x21] sm:$0xff] %vm101, %v6457
  %6474 = vst.msk [vmem:[%s2264 + $0x31] sm:$0xff] %vm101, %v6458
  %6475 = vst.msk [vmem:[%s2264 + $0x41] sm:$0xff] %vm101, %v6459
  %6476 = vst.msk [vmem:[%s2264 + $0x51] sm:$0xff] %vm101, %v6460
  %6477 = vst.msk [vmem:[%s2264 + $0x61] sm:$0xff] %vm101, %v6461
  %6478 = vst.msk [vmem:[%s2264 + $0x71] sm:$0xff] %vm101, %v6462
  %6479 = vst.msk [vmem:[%s2264 + $0xa1] sm:$0xff] %vm101, %v6463
  %6480 = vst.msk [vmem:[%s2264 + $0xb1] sm:$0xff] %vm101, %v6464
  %6481 = vst.msk [vmem:[%s2264 + $0xc1] sm:$0xff] %vm101, %v6465
  %6482 = vst.msk [vmem:[%s2264 + $0xd1] sm:$0xff] %vm101, %v6466
  %6483 = vst.msk [vmem:[%s2264 + $0xe1] sm:$0xff] %vm101, %v6467
  %6484 = vst.msk [vmem:[%s2264 + $0xf1] sm:$0xff] %vm101, %v6468
  %6485 = vst.msk [vmem:[%s2264 + $0x101] sm:$0xff] %vm101, %v6469
  %6486 = vst.msk [vmem:[%s2264 + $0x111] sm:$0xff] %vm101, %v6470
  %v6487 = vld [vmem:[#allocation3] sm:$0xff]
  %v6488 = vld [vmem:[#allocation3 + $0x8] sm:$0x3]
  %v6489 = vld [vmem:[#allocation3 + $0x10] sm:$0xff]
  %v6490 = vld [vmem:[#allocation3 + $0x18] sm:$0x3]
  %v6491 = vld [vmem:[#allocation3 + $0x20] sm:$0xff]
  %v6492 = vld [vmem:[#allocation3 + $0x28] sm:$0x3]
  %v6493 = vld [vmem:[#allocation3 + $0x30] sm:$0xff]
  %v6494 = vld [vmem:[#allocation3 + $0x38] sm:$0x3]
  %v6495 = vld [vmem:[#allocation3 + $0x40] sm:$0xff]
  %v6496 = vld [vmem:[#allocation3 + $0x48] sm:$0x3]
  %v6497 = vld [vmem:[#allocation3 + $0x50] sm:$0xff]
  %v6498 = vld [vmem:[#allocation3 + $0x58] sm:$0x3]
  %v6499 = vld [vmem:[#allocation3 + $0x60] sm:$0xff]
  %v6500 = vld [vmem:[#allocation3 + $0x68] sm:$0x3]
  %v6501 = vld [vmem:[#allocation3 + $0x70] sm:$0xff]
  %v6502 = vld [vmem:[#allocation3 + $0x78] sm:$0x3]
  %v6503 = vld [vmem:[#allocation3 + $0x80] sm:$0xff]
  %v6504 = vld [vmem:[#allocation3 + $0x88] sm:$0x3]
  %v6505 = vld [vmem:[#allocation3 + $0x90] sm:$0xff]
  %v6506 = vld [vmem:[#allocation3 + $0x98] sm:$0x3]
  %v6507 = vld [vmem:[#allocation3 + $0xa0] sm:$0xff]
  %v6508 = vld [vmem:[#allocation3 + $0xa8] sm:$0x3]
  %v6509 = vld [vmem:[#allocation3 + $0xb0] sm:$0xff]
  %v6510 = vld [vmem:[#allocation3 + $0xb8] sm:$0x3]
  %v6511 = vld [vmem:[#allocation3 + $0xc0] sm:$0xff]
  %v6512 = vld [vmem:[#allocation3 + $0xc8] sm:$0x3]
  %v6513 = vld [vmem:[#allocation3 + $0xd0] sm:$0xff]
  %v6514 = vld [vmem:[#allocation3 + $0xd8] sm:$0x3]
  %v6515 = vld [vmem:[#allocation3 + $0xe0] sm:$0xff]
  %v6516 = vld [vmem:[#allocation3 + $0xe8] sm:$0x3]
  %v6517 = vld [vmem:[#allocation3 + $0xf0] sm:$0xff]
  %v6518 = vld [vmem:[#allocation3 + $0xf8] sm:$0x3]
  %v6519 = vld [vmem:[#allocation3 + $0x100] sm:$0xff]
  %v6520 = vld [vmem:[#allocation3 + $0x108] sm:$0x3]
  %v6521 = vld [vmem:[#allocation3 + $0x110] sm:$0xff]
  %v6522 = vld [vmem:[#allocation3 + $0x118] sm:$0x3]
  %v6523 = vld [vmem:[#allocation3 + $0x120] sm:$0xff]
  %v6524 = vld [vmem:[#allocation3 + $0x128] sm:$0x3]
  %v6525 = vld [vmem:[#allocation3 + $0x130] sm:$0xff]
  %v6526 = vld [vmem:[#allocation3 + $0x138] sm:$0x3]
  %v6527 = vld [vmem:[%s15] sm:$0xff]
  %v6560 = vrot.slane %v6487, 1
  %v6561 = vrot.slane %v6488, 1
  %v6562 = vsel %vm345, %v6560, %v6561
  %v6563 = vrot.slane %v6489, 1
  %v6564 = vrot.slane %v6490, 1
  %v6565 = vsel %vm345, %v6563, %v6564
  %v6566 = vrot.slane %v6491, 1
  %v6567 = vrot.slane %v6492, 1
  %v6568 = vsel %vm345, %v6566, %v6567
  %v6569 = vrot.slane %v6493, 1
  %v6570 = vrot.slane %v6494, 1
  %v6571 = vsel %vm345, %v6569, %v6570
  %v6572 = vrot.slane %v6495, 1
  %v6573 = vrot.slane %v6496, 1
  %v6574 = vsel %vm345, %v6572, %v6573
  %v6575 = vrot.slane %v6497, 1
  %v6576 = vrot.slane %v6498, 1
  %v6577 = vsel %vm345, %v6575, %v6576
  %v6578 = vrot.slane %v6499, 1
  %v6579 = vrot.slane %v6500, 1
  %v6580 = vsel %vm345, %v6578, %v6579
  %v6581 = vrot.slane %v6501, 1
  %v6582 = vrot.slane %v6502, 1
  %v6583 = vsel %vm345, %v6581, %v6582
  %v6584 = vrot.slane %v6507, 1
  %v6585 = vrot.slane %v6508, 1
  %v6586 = vsel %vm345, %v6584, %v6585
  %v6587 = vrot.slane %v6509, 1
  %v6588 = vrot.slane %v6510, 1
  %v6589 = vsel %vm345, %v6587, %v6588
  %v6590 = vrot.slane %v6511, 1
  %v6591 = vrot.slane %v6512, 1
  %v6592 = vsel %vm345, %v6590, %v6591
  %v6593 = vrot.slane %v6513, 1
  %v6594 = vrot.slane %v6514, 1
  %v6595 = vsel %vm345, %v6593, %v6594
  %v6596 = vrot.slane %v6515, 1
  %v6597 = vrot.slane %v6516, 1
  %v6598 = vsel %vm345, %v6596, %v6597
  %v6599 = vrot.slane %v6517, 1
  %v6600 = vrot.slane %v6518, 1
  %v6601 = vsel %vm345, %v6599, %v6600
  %v6602 = vrot.slane %v6519, 1
  %v6603 = vrot.slane %v6520, 1
  %v6604 = vsel %vm345, %v6602, %v6603
  %v6605 = vrot.slane %v6521, 1
  %v6606 = vrot.slane %v6522, 1
  %v6607 = vsel %vm345, %v6605, %v6606
  %s6608 = scalar_lea.vmem %s15, 8
  %v6609 = vld [vmem:[%s6608] sm:$0xff]
  %v6610 = vsel %vm101, %v6562, 0
  %v6612 = vsel %vm101, %v6565, 0
  %v6614 = vsel %vm101, %v6568, 0
  %v6616 = vsel %vm101, %v6571, 0
  %v6618 = vsel %vm101, %v6574, 0
  %v6620 = vsel %vm101, %v6577, 0
  %v6622 = vsel %vm101, %v6580, 0
  %v6624 = vsel %vm101, %v6583, 0
  %v6626 = vsel %vm101, %v6586, 0
  %v6628 = vsel %vm101, %v6589, 0
  %v6630 = vsel %vm101, %v6592, 0
  %v6632 = vsel %vm101, %v6595, 0
  %v6634 = vsel %vm101, %v6598, 0
  %v6636 = vsel %vm101, %v6601, 0
  %v6638 = vsel %vm101, %v6604, 0
  %v6640 = vsel %vm101, %v6607, 0
  %6642 = vmatprep.subr.mxu0 0.0
  %6643 = vmatpush1.msra.mxu0 0.0
  %6644 = vmatprep.subr.mxu0 0.0
  %6645 = vmatpush1.msra.mxu0 0.0
  %6646 = vmatprep.subr.mxu0 0.0
  %6647 = vmatpush1.msra.mxu0 0.0
  %6648 = vmatprep.subr.mxu0 0.0
  %6649 = vmatpush1.msra.mxu0 0.0
  %6650 = vmatprep.subr.mxu0 0.0
  %6651 = vmatpush1.msra.mxu0 0.0
  %6652 = vmatprep.subr.mxu0 0.0
  %6653 = vmatpush1.msra.mxu0 0.0
  %6654 = vmatprep.subr.mxu0 0.0
  %6655 = vmatpush1.msra.mxu0 0.0
  %6656 = vmatprep.subr.mxu0 0.0
  %6657 = vmatpush1.msra.mxu0 0.0
  %6658 = vmatprep.subr.mxu0 0.0
  %6659 = vmatpush1.msra.mxu0 0.0
  %6660 = vmatprep.subr.mxu0 0.0
  %6661 = vmatpush1.msra.mxu0 0.0
  %6662 = vmatprep.subr.mxu0 0.0
  %6663 = vmatpush1.msra.mxu0 0.0
  %6664 = vmatprep.subr.mxu0 0.0
  %6665 = vmatpush1.msra.mxu0 0.0
  %6666 = vmatprep.subr.mxu0 0.0
  %6667 = vmatpush1.msra.mxu0 0.0
  %6668 = vmatprep.subr.mxu0 0.0
  %6669 = vmatpush1.msra.mxu0 0.0
  %6670 = vmatprep.subr.mxu0 0.0
  %6671 = vmatpush1.msra.mxu0 0.0
  %6672 = vmatprep.subr.mxu0 0.0
  %6673 = vmatpush1.msra.mxu0 %v6609
  %6674 = vmatprep.subr.mxu0 0.0
  %6675 = vmatpush2.msra.mxu0 0.0
  %6676 = vmatprep.subr.mxu0 0.0
  %6677 = vmatpush2.msra.mxu0 0.0
  %6678 = vmatprep.subr.mxu0 0.0
  %6679 = vmatpush2.msra.mxu0 0.0
  %6680 = vmatprep.subr.mxu0 0.0
  %6681 = vmatpush2.msra.mxu0 0.0
  %6682 = vmatprep.subr.mxu0 0.0
  %6683 = vmatpush2.msra.mxu0 0.0
  %6684 = vmatprep.subr.mxu0 0.0
  %6685 = vmatpush2.msra.mxu0 0.0
  %6686 = vmatprep.subr.mxu0 0.0
  %6687 = vmatpush2.msra.mxu0 0.0
  %6688 = vmatprep.subr.mxu0 0.0
  %6689 = vmatpush2.msra.mxu0 0.0
  %6690 = vmatprep.subr.mxu0 0.0
  %6691 = vmatpush2.msra.mxu0 0.0
  %6692 = vmatprep.subr.mxu0 0.0
  %6693 = vmatpush2.msra.mxu0 0.0
  %6694 = vmatprep.subr.mxu0 0.0
  %6695 = vmatpush2.msra.mxu0 0.0
  %6696 = vmatprep.subr.mxu0 0.0
  %6697 = vmatpush2.msra.mxu0 0.0
  %6698 = vmatprep.subr.mxu0 0.0
  %6699 = vmatpush2.msra.mxu0 0.0
  %6700 = vmatprep.subr.mxu0 0.0
  %6701 = vmatpush2.msra.mxu0 0.0
  %6702 = vmatprep.subr.mxu0 0.0
  %6703 = vmatpush2.msra.mxu0 0.0
  %6704 = vmatprep.subr.mxu0 0.0
  %6705 = vmatpush2.msra.mxu0 0.0
  %6706 = vmatprep.mubr.f32.mxu0 0.0
  %6707 = vmatmul.mubr.f32.gmra.mxu0 %v6610
  %v6708 = vpop.f32.mrf.mxu0
  %v6709 = vadd.f32 0.0, %v6708
  %v6710 = vpop.f32.mrf.mxu0
  %6711 = vmatprep.mubr.f32.mxu0 0.0
  %6712 = vmatmul.mubr.f32.gmra.mxu0 %v6612
  %v6713 = vpop.f32.mrf.mxu0
  %v6714 = vadd.f32 0.0, %v6713
  %v6715 = vpop.f32.mrf.mxu0
  %6716 = vmatprep.mubr.f32.mxu0 0.0
  %6717 = vmatmul.mubr.f32.gmra.mxu0 %v6614
  %v6718 = vpop.f32.mrf.mxu0
  %v6719 = vadd.f32 0.0, %v6718
  %v6720 = vpop.f32.mrf.mxu0
  %6721 = vmatprep.mubr.f32.mxu0 0.0
  %6722 = vmatmul.mubr.f32.gmra.mxu0 %v6616
  %v6723 = vpop.f32.mrf.mxu0
  %v6724 = vadd.f32 0.0, %v6723
  %v6725 = vpop.f32.mrf.mxu0
  %6726 = vmatprep.mubr.f32.mxu0 0.0
  %6727 = vmatmul.mubr.f32.gmra.mxu0 %v6618
  %v6728 = vpop.f32.mrf.mxu0
  %v6729 = vadd.f32 0.0, %v6728
  %v6730 = vpop.f32.mrf.mxu0
  %6731 = vmatprep.mubr.f32.mxu0 0.0
  %6732 = vmatmul.mubr.f32.gmra.mxu0 %v6620
  %v6733 = vpop.f32.mrf.mxu0
  %v6734 = vadd.f32 0.0, %v6733
  %v6735 = vpop.f32.mrf.mxu0
  %6736 = vmatprep.mubr.f32.mxu0 0.0
  %6737 = vmatmul.mubr.f32.gmra.mxu0 %v6622
  %v6738 = vpop.f32.mrf.mxu0
  %v6739 = vadd.f32 0.0, %v6738
  %v6740 = vpop.f32.mrf.mxu0
  %6741 = vmatprep.mubr.f32.mxu0 0.0
  %6742 = vmatmul.mubr.f32.gmra.mxu0 %v6624
  %v6743 = vpop.f32.mrf.mxu0
  %v6744 = vadd.f32 0.0, %v6743
  %v6745 = vpop.f32.mrf.mxu0
  %6746 = vmatprep.mubr.f32.mxu0 0.0
  %6747 = vmatmul.mubr.f32.gmra.mxu0 %v6626
  %v6748 = vpop.f32.mrf.mxu0
  %v6749 = vadd.f32 0.0, %v6748
  %v6750 = vpop.f32.mrf.mxu0
  %6751 = vmatprep.mubr.f32.mxu0 0.0
  %6752 = vmatmul.mubr.f32.gmra.mxu0 %v6628
  %v6753 = vpop.f32.mrf.mxu0
  %v6754 = vadd.f32 0.0, %v6753
  %v6755 = vpop.f32.mrf.mxu0
  %6756 = vmatprep.mubr.f32.mxu0 0.0
  %6757 = vmatmul.mubr.f32.gmra.mxu0 %v6630
  %v6758 = vpop.f32.mrf.mxu0
  %v6759 = vadd.f32 0.0, %v6758
  %v6760 = vpop.f32.mrf.mxu0
  %6761 = vmatprep.mubr.f32.mxu0 0.0
  %6762 = vmatmul.mubr.f32.gmra.mxu0 %v6632
  %v6763 = vpop.f32.mrf.mxu0
  %v6764 = vadd.f32 0.0, %v6763
  %v6765 = vpop.f32.mrf.mxu0
  %6766 = vmatprep.mubr.f32.mxu0 0.0
  %6767 = vmatmul.mubr.f32.gmra.mxu0 %v6634
  %v6768 = vpop.f32.mrf.mxu0
  %v6769 = vadd.f32 0.0, %v6768
  %v6770 = vpop.f32.mrf.mxu0
  %6771 = vmatprep.mubr.f32.mxu0 0.0
  %6772 = vmatmul.mubr.f32.gmra.mxu0 %v6636
  %v6773 = vpop.f32.mrf.mxu0
  %v6774 = vadd.f32 0.0, %v6773
  %v6775 = vpop.f32.mrf.mxu0
  %6776 = vmatprep.mubr.f32.mxu0 0.0
  %6777 = vmatmul.mubr.f32.gmra.mxu0 %v6638
  %v6778 = vpop.f32.mrf.mxu0
  %v6779 = vadd.f32 0.0, %v6778
  %v6780 = vpop.f32.mrf.mxu0
  %6781 = vmatprep.mubr.f32.mxu0 0.0
  %6782 = vmatmul.mubr.f32.gmra.mxu0 %v6640
  %v6783 = vpop.f32.mrf.mxu0
  %v6784 = vadd.f32 0.0, %v6783
  %v6785 = vpop.f32.mrf.mxu0
  %6786 = vdwg.mxu0
  %v6787 = vsel %vm101, %v6487, 0
  %v6789 = vsel %vm101, %v6489, 0
  %v6791 = vsel %vm101, %v6491, 0
  %v6793 = vsel %vm101, %v6493, 0
  %v6795 = vsel %vm101, %v6495, 0
  %v6797 = vsel %vm101, %v6497, 0
  %v6799 = vsel %vm101, %v6499, 0
  %v6801 = vsel %vm101, %v6501, 0
  %v6803 = vsel %vm101, %v6507, 0
  %v6805 = vsel %vm101, %v6509, 0
  %v6807 = vsel %vm101, %v6511, 0
  %v6809 = vsel %vm101, %v6513, 0
  %v6811 = vsel %vm101, %v6515, 0
  %v6813 = vsel %vm101, %v6517, 0
  %v6815 = vsel %vm101, %v6519, 0
  %v6817 = vsel %vm101, %v6521, 0
  %6819 = vmatprep.subr.mxu0 0.0
  %6820 = vmatpush1.msra.mxu0 0.0
  %6821 = vmatprep.subr.mxu0 0.0
  %6822 = vmatpush1.msra.mxu0 0.0
  %6823 = vmatprep.subr.mxu0 0.0
  %6824 = vmatpush1.msra.mxu0 0.0
  %6825 = vmatprep.subr.mxu0 0.0
  %6826 = vmatpush1.msra.mxu0 0.0
  %6827 = vmatprep.subr.mxu0 0.0
  %6828 = vmatpush1.msra.mxu0 0.0
  %6829 = vmatprep.subr.mxu0 0.0
  %6830 = vmatpush1.msra.mxu0 0.0
  %6831 = vmatprep.subr.mxu0 0.0
  %6832 = vmatpush1.msra.mxu0 0.0
  %6833 = vmatprep.subr.mxu0 0.0
  %6834 = vmatpush1.msra.mxu0 0.0
  %6835 = vmatprep.subr.mxu0 0.0
  %6836 = vmatpush1.msra.mxu0 0.0
  %6837 = vmatprep.subr.mxu0 0.0
  %6838 = vmatpush1.msra.mxu0 0.0
  %6839 = vmatprep.subr.mxu0 0.0
  %6840 = vmatpush1.msra.mxu0 0.0
  %6841 = vmatprep.subr.mxu0 0.0
  %6842 = vmatpush1.msra.mxu0 0.0
  %6843 = vmatprep.subr.mxu0 0.0
  %6844 = vmatpush1.msra.mxu0 0.0
  %6845 = vmatprep.subr.mxu0 0.0
  %6846 = vmatpush1.msra.mxu0 0.0
  %6847 = vmatprep.subr.mxu0 0.0
  %6848 = vmatpush1.msra.mxu0 0.0
  %6849 = vmatprep.subr.mxu0 0.0
  %6850 = vmatpush1.msra.mxu0 %v6527
  %6851 = vmatprep.subr.mxu0 0.0
  %6852 = vmatpush2.msra.mxu0 0.0
  %6853 = vmatprep.subr.mxu0 0.0
  %6854 = vmatpush2.msra.mxu0 0.0
  %6855 = vmatprep.subr.mxu0 0.0
  %6856 = vmatpush2.msra.mxu0 0.0
  %6857 = vmatprep.subr.mxu0 0.0
  %6858 = vmatpush2.msra.mxu0 0.0
  %6859 = vmatprep.subr.mxu0 0.0
  %6860 = vmatpush2.msra.mxu0 0.0
  %6861 = vmatprep.subr.mxu0 0.0
  %6862 = vmatpush2.msra.mxu0 0.0
  %6863 = vmatprep.subr.mxu0 0.0
  %6864 = vmatpush2.msra.mxu0 0.0
  %6865 = vmatprep.subr.mxu0 0.0
  %6866 = vmatpush2.msra.mxu0 0.0
  %6867 = vmatprep.subr.mxu0 0.0
  %6868 = vmatpush2.msra.mxu0 0.0
  %6869 = vmatprep.subr.mxu0 0.0
  %6870 = vmatpush2.msra.mxu0 0.0
  %6871 = vmatprep.subr.mxu0 0.0
  %6872 = vmatpush2.msra.mxu0 0.0
  %6873 = vmatprep.subr.mxu0 0.0
  %6874 = vmatpush2.msra.mxu0 0.0
  %6875 = vmatprep.subr.mxu0 0.0
  %6876 = vmatpush2.msra.mxu0 0.0
  %6877 = vmatprep.subr.mxu0 0.0
  %6878 = vmatpush2.msra.mxu0 0.0
  %6879 = vmatprep.subr.mxu0 0.0
  %6880 = vmatpush2.msra.mxu0 0.0
  %6881 = vmatprep.subr.mxu0 0.0
  %6882 = vmatpush2.msra.mxu0 0.0
  %6883 = vmatprep.mubr.f32.mxu0 0.0
  %6884 = vmatmul.mubr.f32.gmra.mxu0 %v6787
  %v6885 = vpop.f32.mrf.mxu0
  %v6886 = vadd.f32 %v6709, %v6885
  %v6887 = vpop.f32.mrf.mxu0
  %6888 = vmatprep.mubr.f32.mxu0 0.0
  %6889 = vmatmul.mubr.f32.gmra.mxu0 %v6789
  %v6890 = vpop.f32.mrf.mxu0
  %v6891 = vadd.f32 %v6714, %v6890
  %v6892 = vpop.f32.mrf.mxu0
  %6893 = vmatprep.mubr.f32.mxu0 0.0
  %6894 = vmatmul.mubr.f32.gmra.mxu0 %v6791
  %v6895 = vpop.f32.mrf.mxu0
  %v6896 = vadd.f32 %v6719, %v6895
  %v6897 = vpop.f32.mrf.mxu0
  %6898 = vmatprep.mubr.f32.mxu0 0.0
  %6899 = vmatmul.mubr.f32.gmra.mxu0 %v6793
  %v6900 = vpop.f32.mrf.mxu0
  %v6901 = vadd.f32 %v6724, %v6900
  %v6902 = vpop.f32.mrf.mxu0
  %6903 = vmatprep.mubr.f32.mxu0 0.0
  %6904 = vmatmul.mubr.f32.gmra.mxu0 %v6795
  %v6905 = vpop.f32.mrf.mxu0
  %v6906 = vadd.f32 %v6729, %v6905
  %v6907 = vpop.f32.mrf.mxu0
  %6908 = vmatprep.mubr.f32.mxu0 0.0
  %6909 = vmatmul.mubr.f32.gmra.mxu0 %v6797
  %v6910 = vpop.f32.mrf.mxu0
  %v6911 = vadd.f32 %v6734, %v6910
  %v6912 = vpop.f32.mrf.mxu0
  %6913 = vmatprep.mubr.f32.mxu0 0.0
  %6914 = vmatmul.mubr.f32.gmra.mxu0 %v6799
  %v6915 = vpop.f32.mrf.mxu0
  %v6916 = vadd.f32 %v6739, %v6915
  %v6917 = vpop.f32.mrf.mxu0
  %6918 = vmatprep.mubr.f32.mxu0 0.0
  %6919 = vmatmul.mubr.f32.gmra.mxu0 %v6801
  %v6920 = vpop.f32.mrf.mxu0
  %v6921 = vadd.f32 %v6744, %v6920
  %v6922 = vpop.f32.mrf.mxu0
  %6923 = vmatprep.mubr.f32.mxu0 0.0
  %6924 = vmatmul.mubr.f32.gmra.mxu0 %v6803
  %v6925 = vpop.f32.mrf.mxu0
  %v6926 = vadd.f32 %v6749, %v6925
  %v6927 = vpop.f32.mrf.mxu0
  %6928 = vmatprep.mubr.f32.mxu0 0.0
  %6929 = vmatmul.mubr.f32.gmra.mxu0 %v6805
  %v6930 = vpop.f32.mrf.mxu0
  %v6931 = vadd.f32 %v6754, %v6930
  %v6932 = vpop.f32.mrf.mxu0
  %6933 = vmatprep.mubr.f32.mxu0 0.0
  %6934 = vmatmul.mubr.f32.gmra.mxu0 %v6807
  %v6935 = vpop.f32.mrf.mxu0
  %v6936 = vadd.f32 %v6759, %v6935
  %v6937 = vpop.f32.mrf.mxu0
  %6938 = vmatprep.mubr.f32.mxu0 0.0
  %6939 = vmatmul.mubr.f32.gmra.mxu0 %v6809
  %v6940 = vpop.f32.mrf.mxu0
  %v6941 = vadd.f32 %v6764, %v6940
  %v6942 = vpop.f32.mrf.mxu0
  %6943 = vmatprep.mubr.f32.mxu0 0.0
  %6944 = vmatmul.mubr.f32.gmra.mxu0 %v6811
  %v6945 = vpop.f32.mrf.mxu0
  %v6946 = vadd.f32 %v6769, %v6945
  %v6947 = vpop.f32.mrf.mxu0
  %6948 = vmatprep.mubr.f32.mxu0 0.0
  %6949 = vmatmul.mubr.f32.gmra.mxu0 %v6813
  %v6950 = vpop.f32.mrf.mxu0
  %v6951 = vadd.f32 %v6774, %v6950
  %v6952 = vpop.f32.mrf.mxu0
  %6953 = vmatprep.mubr.f32.mxu0 0.0
  %6954 = vmatmul.mubr.f32.gmra.mxu0 %v6815
  %v6955 = vpop.f32.mrf.mxu0
  %v6956 = vadd.f32 %v6779, %v6955
  %v6957 = vpop.f32.mrf.mxu0
  %6958 = vmatprep.mubr.f32.mxu0 0.0
  %6959 = vmatmul.mubr.f32.gmra.mxu0 %v6817
  %v6960 = vpop.f32.mrf.mxu0
  %v6961 = vadd.f32 %v6784, %v6960
  %v6962 = vpop.f32.mrf.mxu0
  %6963 = vdwg.mxu0
  %v6964 = vrot.slane %v6487, 2
  %v6965 = vrot.slane %v6488, 2
  %v6966 = vsel %vm757, %v6964, %v6965
  %v6967 = vrot.slane %v6489, 2
  %v6968 = vrot.slane %v6490, 2
  %v6969 = vsel %vm757, %v6967, %v6968
  %v6970 = vrot.slane %v6491, 2
  %v6971 = vrot.slane %v6492, 2
  %v6972 = vsel %vm757, %v6970, %v6971
  %v6973 = vrot.slane %v6493, 2
  %v6974 = vrot.slane %v6494, 2
  %v6975 = vsel %vm757, %v6973, %v6974
  %v6976 = vrot.slane %v6495, 2
  %v6977 = vrot.slane %v6496, 2
  %v6978 = vsel %vm757, %v6976, %v6977
  %v6979 = vrot.slane %v6497, 2
  %v6980 = vrot.slane %v6498, 2
  %v6981 = vsel %vm757, %v6979, %v6980
  %v6982 = vrot.slane %v6499, 2
  %v6983 = vrot.slane %v6500, 2
  %v6984 = vsel %vm757, %v6982, %v6983
  %v6985 = vrot.slane %v6501, 2
  %v6986 = vrot.slane %v6502, 2
  %v6987 = vsel %vm757, %v6985, %v6986
  %v6988 = vrot.slane %v6507, 2
  %v6989 = vrot.slane %v6508, 2
  %v6990 = vsel %vm757, %v6988, %v6989
  %v6991 = vrot.slane %v6509, 2
  %v6992 = vrot.slane %v6510, 2
  %v6993 = vsel %vm757, %v6991, %v6992
  %v6994 = vrot.slane %v6511, 2
  %v6995 = vrot.slane %v6512, 2
  %v6996 = vsel %vm757, %v6994, %v6995
  %v6997 = vrot.slane %v6513, 2
  %v6998 = vrot.slane %v6514, 2
  %v6999 = vsel %vm757, %v6997, %v6998
  %v7000 = vrot.slane %v6515, 2
  %v7001 = vrot.slane %v6516, 2
  %v7002 = vsel %vm757, %v7000, %v7001
  %v7003 = vrot.slane %v6517, 2
  %v7004 = vrot.slane %v6518, 2
  %v7005 = vsel %vm757, %v7003, %v7004
  %v7006 = vrot.slane %v6519, 2
  %v7007 = vrot.slane %v6520, 2
  %v7008 = vsel %vm757, %v7006, %v7007
  %v7009 = vrot.slane %v6521, 2
  %v7010 = vrot.slane %v6522, 2
  %v7011 = vsel %vm757, %v7009, %v7010
  %s7012 = scalar_lea.vmem %s15, 16
  %v7013 = vld [vmem:[%s7012] sm:$0xff]
  %v7014 = vsel %vm101, %v6966, 0
  %v7016 = vsel %vm101, %v6969, 0
  %v7018 = vsel %vm101, %v6972, 0
  %v7020 = vsel %vm101, %v6975, 0
  %v7022 = vsel %vm101, %v6978, 0
  %v7024 = vsel %vm101, %v6981, 0
  %v7026 = vsel %vm101, %v6984, 0
  %v7028 = vsel %vm101, %v6987, 0
  %v7030 = vsel %vm101, %v6990, 0
  %v7032 = vsel %vm101, %v6993, 0
  %v7034 = vsel %vm101, %v6996, 0
  %v7036 = vsel %vm101, %v6999, 0
  %v7038 = vsel %vm101, %v7002, 0
  %v7040 = vsel %vm101, %v7005, 0
  %v7042 = vsel %vm101, %v7008, 0
  %v7044 = vsel %vm101, %v7011, 0
  %7046 = vmatprep.subr.mxu0 0.0
  %7047 = vmatpush1.msra.mxu0 0.0
  %7048 = vmatprep.subr.mxu0 0.0
  %7049 = vmatpush1.msra.mxu0 0.0
  %7050 = vmatprep.subr.mxu0 0.0
  %7051 = vmatpush1.msra.mxu0 0.0
  %7052 = vmatprep.subr.mxu0 0.0
  %7053 = vmatpush1.msra.mxu0 0.0
  %7054 = vmatprep.subr.mxu0 0.0
  %7055 = vmatpush1.msra.mxu0 0.0
  %7056 = vmatprep.subr.mxu0 0.0
  %7057 = vmatpush1.msra.mxu0 0.0
  %7058 = vmatprep.subr.mxu0 0.0
  %7059 = vmatpush1.msra.mxu0 0.0
  %7060 = vmatprep.subr.mxu0 0.0
  %7061 = vmatpush1.msra.mxu0 0.0
  %7062 = vmatprep.subr.mxu0 0.0
  %7063 = vmatpush1.msra.mxu0 0.0
  %7064 = vmatprep.subr.mxu0 0.0
  %7065 = vmatpush1.msra.mxu0 0.0
  %7066 = vmatprep.subr.mxu0 0.0
  %7067 = vmatpush1.msra.mxu0 0.0
  %7068 = vmatprep.subr.mxu0 0.0
  %7069 = vmatpush1.msra.mxu0 0.0
  %7070 = vmatprep.subr.mxu0 0.0
  %7071 = vmatpush1.msra.mxu0 0.0
  %7072 = vmatprep.subr.mxu0 0.0
  %7073 = vmatpush1.msra.mxu0 0.0
  %7074 = vmatprep.subr.mxu0 0.0
  %7075 = vmatpush1.msra.mxu0 0.0
  %7076 = vmatprep.subr.mxu0 0.0
  %7077 = vmatpush1.msra.mxu0 %v7013
  %7078 = vmatprep.subr.mxu0 0.0
  %7079 = vmatpush2.msra.mxu0 0.0
  %7080 = vmatprep.subr.mxu0 0.0
  %7081 = vmatpush2.msra.mxu0 0.0
  %7082 = vmatprep.subr.mxu0 0.0
  %7083 = vmatpush2.msra.mxu0 0.0
  %7084 = vmatprep.subr.mxu0 0.0
  %7085 = vmatpush2.msra.mxu0 0.0
  %7086 = vmatprep.subr.mxu0 0.0
  %7087 = vmatpush2.msra.mxu0 0.0
  %7088 = vmatprep.subr.mxu0 0.0
  %7089 = vmatpush2.msra.mxu0 0.0
  %7090 = vmatprep.subr.mxu0 0.0
  %7091 = vmatpush2.msra.mxu0 0.0
  %7092 = vmatprep.subr.mxu0 0.0
  %7093 = vmatpush2.msra.mxu0 0.0
  %7094 = vmatprep.subr.mxu0 0.0
  %7095 = vmatpush2.msra.mxu0 0.0
  %7096 = vmatprep.subr.mxu0 0.0
  %7097 = vmatpush2.msra.mxu0 0.0
  %7098 = vmatprep.subr.mxu0 0.0
  %7099 = vmatpush2.msra.mxu0 0.0
  %7100 = vmatprep.subr.mxu0 0.0
  %7101 = vmatpush2.msra.mxu0 0.0
  %7102 = vmatprep.subr.mxu0 0.0
  %7103 = vmatpush2.msra.mxu0 0.0
  %7104 = vmatprep.subr.mxu0 0.0
  %7105 = vmatpush2.msra.mxu0 0.0
  %7106 = vmatprep.subr.mxu0 0.0
  %7107 = vmatpush2.msra.mxu0 0.0
  %7108 = vmatprep.subr.mxu0 0.0
  %7109 = vmatpush2.msra.mxu0 0.0
  %7110 = vmatprep.mubr.f32.mxu0 0.0
  %7111 = vmatmul.mubr.f32.gmra.mxu0 %v7014
  %v7112 = vpop.f32.mrf.mxu0
  %v7113 = vadd.f32 0.0, %v7112
  %v7114 = vpop.f32.mrf.mxu0
  %7115 = vmatprep.mubr.f32.mxu0 0.0
  %7116 = vmatmul.mubr.f32.gmra.mxu0 %v7016
  %v7117 = vpop.f32.mrf.mxu0
  %v7118 = vadd.f32 0.0, %v7117
  %v7119 = vpop.f32.mrf.mxu0
  %7120 = vmatprep.mubr.f32.mxu0 0.0
  %7121 = vmatmul.mubr.f32.gmra.mxu0 %v7018
  %v7122 = vpop.f32.mrf.mxu0
  %v7123 = vadd.f32 0.0, %v7122
  %v7124 = vpop.f32.mrf.mxu0
  %7125 = vmatprep.mubr.f32.mxu0 0.0
  %7126 = vmatmul.mubr.f32.gmra.mxu0 %v7020
  %v7127 = vpop.f32.mrf.mxu0
  %v7128 = vadd.f32 0.0, %v7127
  %v7129 = vpop.f32.mrf.mxu0
  %7130 = vmatprep.mubr.f32.mxu0 0.0
  %7131 = vmatmul.mubr.f32.gmra.mxu0 %v7022
  %v7132 = vpop.f32.mrf.mxu0
  %v7133 = vadd.f32 0.0, %v7132
  %v7134 = vpop.f32.mrf.mxu0
  %7135 = vmatprep.mubr.f32.mxu0 0.0
  %7136 = vmatmul.mubr.f32.gmra.mxu0 %v7024
  %v7137 = vpop.f32.mrf.mxu0
  %v7138 = vadd.f32 0.0, %v7137
  %v7139 = vpop.f32.mrf.mxu0
  %7140 = vmatprep.mubr.f32.mxu0 0.0
  %7141 = vmatmul.mubr.f32.gmra.mxu0 %v7026
  %v7142 = vpop.f32.mrf.mxu0
  %v7143 = vadd.f32 0.0, %v7142
  %v7144 = vpop.f32.mrf.mxu0
  %7145 = vmatprep.mubr.f32.mxu0 0.0
  %7146 = vmatmul.mubr.f32.gmra.mxu0 %v7028
  %v7147 = vpop.f32.mrf.mxu0
  %v7148 = vadd.f32 0.0, %v7147
  %v7149 = vpop.f32.mrf.mxu0
  %7150 = vmatprep.mubr.f32.mxu0 0.0
  %7151 = vmatmul.mubr.f32.gmra.mxu0 %v7030
  %v7152 = vpop.f32.mrf.mxu0
  %v7153 = vadd.f32 0.0, %v7152
  %v7154 = vpop.f32.mrf.mxu0
  %7155 = vmatprep.mubr.f32.mxu0 0.0
  %7156 = vmatmul.mubr.f32.gmra.mxu0 %v7032
  %v7157 = vpop.f32.mrf.mxu0
  %v7158 = vadd.f32 0.0, %v7157
  %v7159 = vpop.f32.mrf.mxu0
  %7160 = vmatprep.mubr.f32.mxu0 0.0
  %7161 = vmatmul.mubr.f32.gmra.mxu0 %v7034
  %v7162 = vpop.f32.mrf.mxu0
  %v7163 = vadd.f32 0.0, %v7162
  %v7164 = vpop.f32.mrf.mxu0
  %7165 = vmatprep.mubr.f32.mxu0 0.0
  %7166 = vmatmul.mubr.f32.gmra.mxu0 %v7036
  %v7167 = vpop.f32.mrf.mxu0
  %v7168 = vadd.f32 0.0, %v7167
  %v7169 = vpop.f32.mrf.mxu0
  %7170 = vmatprep.mubr.f32.mxu0 0.0
  %7171 = vmatmul.mubr.f32.gmra.mxu0 %v7038
  %v7172 = vpop.f32.mrf.mxu0
  %v7173 = vadd.f32 0.0, %v7172
  %v7174 = vpop.f32.mrf.mxu0
  %7175 = vmatprep.mubr.f32.mxu0 0.0
  %7176 = vmatmul.mubr.f32.gmra.mxu0 %v7040
  %v7177 = vpop.f32.mrf.mxu0
  %v7178 = vadd.f32 0.0, %v7177
  %v7179 = vpop.f32.mrf.mxu0
  %7180 = vmatprep.mubr.f32.mxu0 0.0
  %7181 = vmatmul.mubr.f32.gmra.mxu0 %v7042
  %v7182 = vpop.f32.mrf.mxu0
  %v7183 = vadd.f32 0.0, %v7182
  %v7184 = vpop.f32.mrf.mxu0
  %7185 = vmatprep.mubr.f32.mxu0 0.0
  %7186 = vmatmul.mubr.f32.gmra.mxu0 %v7044
  %v7187 = vpop.f32.mrf.mxu0
  %v7188 = vadd.f32 0.0, %v7187
  %v7189 = vpop.f32.mrf.mxu0
  %7190 = vdwg.mxu0
  %v7191 = vadd.f32 %v6886, %v7113
  %v7192 = vadd.f32 %v6891, %v7118
  %v7193 = vadd.f32 %v6896, %v7123
  %v7194 = vadd.f32 %v6901, %v7128
  %v7195 = vadd.f32 %v6906, %v7133
  %v7196 = vadd.f32 %v6911, %v7138
  %v7197 = vadd.f32 %v6916, %v7143
  %v7198 = vadd.f32 %v6921, %v7148
  %v7199 = vadd.f32 %v6926, %v7153
  %v7200 = vadd.f32 %v6931, %v7158
  %v7201 = vadd.f32 %v6936, %v7163
  %v7202 = vadd.f32 %v6941, %v7168
  %v7203 = vadd.f32 %v6946, %v7173
  %v7204 = vadd.f32 %v6951, %v7178
  %v7205 = vadd.f32 %v6956, %v7183
  %v7206 = vadd.f32 %v6961, %v7188
  %s7207 = scalar_lea.vmem %s15, 24
  %v7208 = vld [vmem:[%s7207] sm:$0xff]
  %v7210 = vsel %vm101, %v6503, 0
  %v7213 = vsel %vm101, %v6523, 0
  %7215 = vmatprep.subr.mxu0 0.0
  %7216 = vmatpush1.msra.mxu0 0.0
  %7217 = vmatprep.subr.mxu0 0.0
  %7218 = vmatpush1.msra.mxu0 0.0
  %7219 = vmatprep.subr.mxu0 0.0
  %7220 = vmatpush1.msra.mxu0 0.0
  %7221 = vmatprep.subr.mxu0 0.0
  %7222 = vmatpush1.msra.mxu0 0.0
  %7223 = vmatprep.subr.mxu0 0.0
  %7224 = vmatpush1.msra.mxu0 0.0
  %7225 = vmatprep.subr.mxu0 0.0
  %7226 = vmatpush1.msra.mxu0 0.0
  %7227 = vmatprep.subr.mxu0 0.0
  %7228 = vmatpush1.msra.mxu0 0.0
  %7229 = vmatprep.subr.mxu0 0.0
  %7230 = vmatpush1.msra.mxu0 0.0
  %7231 = vmatprep.subr.mxu0 0.0
  %7232 = vmatpush1.msra.mxu0 0.0
  %7233 = vmatprep.subr.mxu0 0.0
  %7234 = vmatpush1.msra.mxu0 0.0
  %7235 = vmatprep.subr.mxu0 0.0
  %7236 = vmatpush1.msra.mxu0 0.0
  %7237 = vmatprep.subr.mxu0 0.0
  %7238 = vmatpush1.msra.mxu0 0.0
  %7239 = vmatprep.subr.mxu0 0.0
  %7240 = vmatpush1.msra.mxu0 0.0
  %7241 = vmatprep.subr.mxu0 0.0
  %7242 = vmatpush1.msra.mxu0 0.0
  %7243 = vmatprep.subr.mxu0 0.0
  %7244 = vmatpush1.msra.mxu0 0.0
  %7245 = vmatprep.subr.mxu0 0.0
  %7246 = vmatpush1.msra.mxu0 %v7208
  %7247 = vmatprep.subr.mxu0 0.0
  %7248 = vmatpush2.msra.mxu0 0.0
  %7249 = vmatprep.subr.mxu0 0.0
  %7250 = vmatpush2.msra.mxu0 0.0
  %7251 = vmatprep.subr.mxu0 0.0
  %7252 = vmatpush2.msra.mxu0 0.0
  %7253 = vmatprep.subr.mxu0 0.0
  %7254 = vmatpush2.msra.mxu0 0.0
  %7255 = vmatprep.subr.mxu0 0.0
  %7256 = vmatpush2.msra.mxu0 0.0
  %7257 = vmatprep.subr.mxu0 0.0
  %7258 = vmatpush2.msra.mxu0 0.0
  %7259 = vmatprep.subr.mxu0 0.0
  %7260 = vmatpush2.msra.mxu0 0.0
  %7261 = vmatprep.subr.mxu0 0.0
  %7262 = vmatpush2.msra.mxu0 0.0
  %7263 = vmatprep.subr.mxu0 0.0
  %7264 = vmatpush2.msra.mxu0 0.0
  %7265 = vmatprep.subr.mxu0 0.0
  %7266 = vmatpush2.msra.mxu0 0.0
  %7267 = vmatprep.subr.mxu0 0.0
  %7268 = vmatpush2.msra.mxu0 0.0
  %7269 = vmatprep.subr.mxu0 0.0
  %7270 = vmatpush2.msra.mxu0 0.0
  %7271 = vmatprep.subr.mxu0 0.0
  %7272 = vmatpush2.msra.mxu0 0.0
  %7273 = vmatprep.subr.mxu0 0.0
  %7274 = vmatpush2.msra.mxu0 0.0
  %7275 = vmatprep.subr.mxu0 0.0
  %7276 = vmatpush2.msra.mxu0 0.0
  %7277 = vmatprep.subr.mxu0 0.0
  %7278 = vmatpush2.msra.mxu0 0.0
  %7279 = vmatprep.mubr.f32.mxu0 0.0
  %7280 = vmatmul.mubr.f32.gmra.mxu0 %v6789
  %v7281 = vpop.f32.mrf.mxu0
  %v7282 = vadd.f32 0.0, %v7281
  %v7283 = vpop.f32.mrf.mxu0
  %7284 = vmatprep.mubr.f32.mxu0 0.0
  %7285 = vmatmul.mubr.f32.gmra.mxu0 %v6791
  %v7286 = vpop.f32.mrf.mxu0
  %v7287 = vadd.f32 0.0, %v7286
  %v7288 = vpop.f32.mrf.mxu0
  %7289 = vmatprep.mubr.f32.mxu0 0.0
  %7290 = vmatmul.mubr.f32.gmra.mxu0 %v6793
  %v7291 = vpop.f32.mrf.mxu0
  %v7292 = vadd.f32 0.0, %v7291
  %v7293 = vpop.f32.mrf.mxu0
  %7294 = vmatprep.mubr.f32.mxu0 0.0
  %7295 = vmatmul.mubr.f32.gmra.mxu0 %v6795
  %v7296 = vpop.f32.mrf.mxu0
  %v7297 = vadd.f32 0.0, %v7296
  %v7298 = vpop.f32.mrf.mxu0
  %7299 = vmatprep.mubr.f32.mxu0 0.0
  %7300 = vmatmul.mubr.f32.gmra.mxu0 %v6797
  %v7301 = vpop.f32.mrf.mxu0
  %v7302 = vadd.f32 0.0, %v7301
  %v7303 = vpop.f32.mrf.mxu0
  %7304 = vmatprep.mubr.f32.mxu0 0.0
  %7305 = vmatmul.mubr.f32.gmra.mxu0 %v6799
  %v7306 = vpop.f32.mrf.mxu0
  %v7307 = vadd.f32 0.0, %v7306
  %v7308 = vpop.f32.mrf.mxu0
  %7309 = vmatprep.mubr.f32.mxu0 0.0
  %7310 = vmatmul.mubr.f32.gmra.mxu0 %v6801
  %v7311 = vpop.f32.mrf.mxu0
  %v7312 = vadd.f32 0.0, %v7311
  %v7313 = vpop.f32.mrf.mxu0
  %7314 = vmatprep.mubr.f32.mxu0 0.0
  %7315 = vmatmul.mubr.f32.gmra.mxu0 %v7210
  %v7316 = vpop.f32.mrf.mxu0
  %v7317 = vadd.f32 0.0, %v7316
  %v7318 = vpop.f32.mrf.mxu0
  %7319 = vmatprep.mubr.f32.mxu0 0.0
  %7320 = vmatmul.mubr.f32.gmra.mxu0 %v6805
  %v7321 = vpop.f32.mrf.mxu0
  %v7322 = vadd.f32 0.0, %v7321
  %v7323 = vpop.f32.mrf.mxu0
  %7324 = vmatprep.mubr.f32.mxu0 0.0
  %7325 = vmatmul.mubr.f32.gmra.mxu0 %v6807
  %v7326 = vpop.f32.mrf.mxu0
  %v7327 = vadd.f32 0.0, %v7326
  %v7328 = vpop.f32.mrf.mxu0
  %7329 = vmatprep.mubr.f32.mxu0 0.0
  %7330 = vmatmul.mubr.f32.gmra.mxu0 %v6809
  %v7331 = vpop.f32.mrf.mxu0
  %v7332 = vadd.f32 0.0, %v7331
  %v7333 = vpop.f32.mrf.mxu0
  %7334 = vmatprep.mubr.f32.mxu0 0.0
  %7335 = vmatmul.mubr.f32.gmra.mxu0 %v6811
  %v7336 = vpop.f32.mrf.mxu0
  %v7337 = vadd.f32 0.0, %v7336
  %v7338 = vpop.f32.mrf.mxu0
  %7339 = vmatprep.mubr.f32.mxu0 0.0
  %7340 = vmatmul.mubr.f32.gmra.mxu0 %v6813
  %v7341 = vpop.f32.mrf.mxu0
  %v7342 = vadd.f32 0.0, %v7341
  %v7343 = vpop.f32.mrf.mxu0
  %7344 = vmatprep.mubr.f32.mxu0 0.0
  %7345 = vmatmul.mubr.f32.gmra.mxu0 %v6815
  %v7346 = vpop.f32.mrf.mxu0
  %v7347 = vadd.f32 0.0, %v7346
  %v7348 = vpop.f32.mrf.mxu0
  %7349 = vmatprep.mubr.f32.mxu0 0.0
  %7350 = vmatmul.mubr.f32.gmra.mxu0 %v6817
  %v7351 = vpop.f32.mrf.mxu0
  %v7352 = vadd.f32 0.0, %v7351
  %v7353 = vpop.f32.mrf.mxu0
  %7354 = vmatprep.mubr.f32.mxu0 0.0
  %7355 = vmatmul.mubr.f32.gmra.mxu0 %v7213
  %v7356 = vpop.f32.mrf.mxu0
  %v7357 = vadd.f32 0.0, %v7356
  %v7358 = vpop.f32.mrf.mxu0
  %7359 = vdwg.mxu0
  %v7360 = vadd.f32 %v7191, %v7282
  %v7361 = vadd.f32 %v7192, %v7287
  %v7362 = vadd.f32 %v7193, %v7292
  %v7363 = vadd.f32 %v7194, %v7297
  %v7364 = vadd.f32 %v7195, %v7302
  %v7365 = vadd.f32 %v7196, %v7307
  %v7366 = vadd.f32 %v7197, %v7312
  %v7367 = vadd.f32 %v7198, %v7317
  %v7368 = vadd.f32 %v7199, %v7322
  %v7369 = vadd.f32 %v7200, %v7327
  %v7370 = vadd.f32 %v7201, %v7332
  %v7371 = vadd.f32 %v7202, %v7337
  %v7372 = vadd.f32 %v7203, %v7342
  %v7373 = vadd.f32 %v7204, %v7347
  %v7374 = vadd.f32 %v7205, %v7352
  %v7375 = vadd.f32 %v7206, %v7357
  %v7378 = vrot.slane %v6503, 1
  %v7379 = vrot.slane %v6504, 1
  %v7380 = vsel %vm345, %v7378, %v7379
  %v7381 = vrot.slane %v6523, 1
  %v7382 = vrot.slane %v6524, 1
  %v7383 = vsel %vm345, %v7381, %v7382
  %s7384 = scalar_lea.vmem %s15, 32
  %v7385 = vld [vmem:[%s7384] sm:$0xff]
  %v7386 = vsel %vm101, %v7380, 0
  %v7388 = vsel %vm101, %v7383, 0
  %7390 = vmatprep.subr.mxu0 0.0
  %7391 = vmatpush1.msra.mxu0 0.0
  %7392 = vmatprep.subr.mxu0 0.0
  %7393 = vmatpush1.msra.mxu0 0.0
  %7394 = vmatprep.subr.mxu0 0.0
  %7395 = vmatpush1.msra.mxu0 0.0
  %7396 = vmatprep.subr.mxu0 0.0
  %7397 = vmatpush1.msra.mxu0 0.0
  %7398 = vmatprep.subr.mxu0 0.0
  %7399 = vmatpush1.msra.mxu0 0.0
  %7400 = vmatprep.subr.mxu0 0.0
  %7401 = vmatpush1.msra.mxu0 0.0
  %7402 = vmatprep.subr.mxu0 0.0
  %7403 = vmatpush1.msra.mxu0 0.0
  %7404 = vmatprep.subr.mxu0 0.0
  %7405 = vmatpush1.msra.mxu0 0.0
  %7406 = vmatprep.subr.mxu0 0.0
  %7407 = vmatpush1.msra.mxu0 0.0
  %7408 = vmatprep.subr.mxu0 0.0
  %7409 = vmatpush1.msra.mxu0 0.0
  %7410 = vmatprep.subr.mxu0 0.0
  %7411 = vmatpush1.msra.mxu0 0.0
  %7412 = vmatprep.subr.mxu0 0.0
  %7413 = vmatpush1.msra.mxu0 0.0
  %7414 = vmatprep.subr.mxu0 0.0
  %7415 = vmatpush1.msra.mxu0 0.0
  %7416 = vmatprep.subr.mxu0 0.0
  %7417 = vmatpush1.msra.mxu0 0.0
  %7418 = vmatprep.subr.mxu0 0.0
  %7419 = vmatpush1.msra.mxu0 0.0
  %7420 = vmatprep.subr.mxu0 0.0
  %7421 = vmatpush1.msra.mxu0 %v7385
  %7422 = vmatprep.subr.mxu0 0.0
  %7423 = vmatpush2.msra.mxu0 0.0
  %7424 = vmatprep.subr.mxu0 0.0
  %7425 = vmatpush2.msra.mxu0 0.0
  %7426 = vmatprep.subr.mxu0 0.0
  %7427 = vmatpush2.msra.mxu0 0.0
  %7428 = vmatprep.subr.mxu0 0.0
  %7429 = vmatpush2.msra.mxu0 0.0
  %7430 = vmatprep.subr.mxu0 0.0
  %7431 = vmatpush2.msra.mxu0 0.0
  %7432 = vmatprep.subr.mxu0 0.0
  %7433 = vmatpush2.msra.mxu0 0.0
  %7434 = vmatprep.subr.mxu0 0.0
  %7435 = vmatpush2.msra.mxu0 0.0
  %7436 = vmatprep.subr.mxu0 0.0
  %7437 = vmatpush2.msra.mxu0 0.0
  %7438 = vmatprep.subr.mxu0 0.0
  %7439 = vmatpush2.msra.mxu0 0.0
  %7440 = vmatprep.subr.mxu0 0.0
  %7441 = vmatpush2.msra.mxu0 0.0
  %7442 = vmatprep.subr.mxu0 0.0
  %7443 = vmatpush2.msra.mxu0 0.0
  %7444 = vmatprep.subr.mxu0 0.0
  %7445 = vmatpush2.msra.mxu0 0.0
  %7446 = vmatprep.subr.mxu0 0.0
  %7447 = vmatpush2.msra.mxu0 0.0
  %7448 = vmatprep.subr.mxu0 0.0
  %7449 = vmatpush2.msra.mxu0 0.0
  %7450 = vmatprep.subr.mxu0 0.0
  %7451 = vmatpush2.msra.mxu0 0.0
  %7452 = vmatprep.subr.mxu0 0.0
  %7453 = vmatpush2.msra.mxu0 0.0
  %7454 = vmatprep.mubr.f32.mxu0 0.0
  %7455 = vmatmul.mubr.f32.gmra.mxu0 %v6612
  %v7456 = vpop.f32.mrf.mxu0
  %v7457 = vadd.f32 0.0, %v7456
  %v7458 = vpop.f32.mrf.mxu0
  %7459 = vmatprep.mubr.f32.mxu0 0.0
  %7460 = vmatmul.mubr.f32.gmra.mxu0 %v6614
  %v7461 = vpop.f32.mrf.mxu0
  %v7462 = vadd.f32 0.0, %v7461
  %v7463 = vpop.f32.mrf.mxu0
  %7464 = vmatprep.mubr.f32.mxu0 0.0
  %7465 = vmatmul.mubr.f32.gmra.mxu0 %v6616
  %v7466 = vpop.f32.mrf.mxu0
  %v7467 = vadd.f32 0.0, %v7466
  %v7468 = vpop.f32.mrf.mxu0
  %7469 = vmatprep.mubr.f32.mxu0 0.0
  %7470 = vmatmul.mubr.f32.gmra.mxu0 %v6618
  %v7471 = vpop.f32.mrf.mxu0
  %v7472 = vadd.f32 0.0, %v7471
  %v7473 = vpop.f32.mrf.mxu0
  %7474 = vmatprep.mubr.f32.mxu0 0.0
  %7475 = vmatmul.mubr.f32.gmra.mxu0 %v6620
  %v7476 = vpop.f32.mrf.mxu0
  %v7477 = vadd.f32 0.0, %v7476
  %v7478 = vpop.f32.mrf.mxu0
  %7479 = vmatprep.mubr.f32.mxu0 0.0
  %7480 = vmatmul.mubr.f32.gmra.mxu0 %v6622
  %v7481 = vpop.f32.mrf.mxu0
  %v7482 = vadd.f32 0.0, %v7481
  %v7483 = vpop.f32.mrf.mxu0
  %7484 = vmatprep.mubr.f32.mxu0 0.0
  %7485 = vmatmul.mubr.f32.gmra.mxu0 %v6624
  %v7486 = vpop.f32.mrf.mxu0
  %v7487 = vadd.f32 0.0, %v7486
  %v7488 = vpop.f32.mrf.mxu0
  %7489 = vmatprep.mubr.f32.mxu0 0.0
  %7490 = vmatmul.mubr.f32.gmra.mxu0 %v7386
  %v7491 = vpop.f32.mrf.mxu0
  %v7492 = vadd.f32 0.0, %v7491
  %v7493 = vpop.f32.mrf.mxu0
  %7494 = vmatprep.mubr.f32.mxu0 0.0
  %7495 = vmatmul.mubr.f32.gmra.mxu0 %v6628
  %v7496 = vpop.f32.mrf.mxu0
  %v7497 = vadd.f32 0.0, %v7496
  %v7498 = vpop.f32.mrf.mxu0
  %7499 = vmatprep.mubr.f32.mxu0 0.0
  %7500 = vmatmul.mubr.f32.gmra.mxu0 %v6630
  %v7501 = vpop.f32.mrf.mxu0
  %v7502 = vadd.f32 0.0, %v7501
  %v7503 = vpop.f32.mrf.mxu0
  %7504 = vmatprep.mubr.f32.mxu0 0.0
  %7505 = vmatmul.mubr.f32.gmra.mxu0 %v6632
  %v7506 = vpop.f32.mrf.mxu0
  %v7507 = vadd.f32 0.0, %v7506
  %v7508 = vpop.f32.mrf.mxu0
  %7509 = vmatprep.mubr.f32.mxu0 0.0
  %7510 = vmatmul.mubr.f32.gmra.mxu0 %v6634
  %v7511 = vpop.f32.mrf.mxu0
  %v7512 = vadd.f32 0.0, %v7511
  %v7513 = vpop.f32.mrf.mxu0
  %7514 = vmatprep.mubr.f32.mxu0 0.0
  %7515 = vmatmul.mubr.f32.gmra.mxu0 %v6636
  %v7516 = vpop.f32.mrf.mxu0
  %v7517 = vadd.f32 0.0, %v7516
  %v7518 = vpop.f32.mrf.mxu0
  %7519 = vmatprep.mubr.f32.mxu0 0.0
  %7520 = vmatmul.mubr.f32.gmra.mxu0 %v6638
  %v7521 = vpop.f32.mrf.mxu0
  %v7522 = vadd.f32 0.0, %v7521
  %v7523 = vpop.f32.mrf.mxu0
  %7524 = vmatprep.mubr.f32.mxu0 0.0
  %7525 = vmatmul.mubr.f32.gmra.mxu0 %v6640
  %v7526 = vpop.f32.mrf.mxu0
  %v7527 = vadd.f32 0.0, %v7526
  %v7528 = vpop.f32.mrf.mxu0
  %7529 = vmatprep.mubr.f32.mxu0 0.0
  %7530 = vmatmul.mubr.f32.gmra.mxu0 %v7388
  %v7531 = vpop.f32.mrf.mxu0
  %v7532 = vadd.f32 0.0, %v7531
  %v7533 = vpop.f32.mrf.mxu0
  %7534 = vdwg.mxu0
  %v7535 = vadd.f32 %v7360, %v7457
  %v7536 = vadd.f32 %v7361, %v7462
  %v7537 = vadd.f32 %v7362, %v7467
  %v7538 = vadd.f32 %v7363, %v7472
  %v7539 = vadd.f32 %v7364, %v7477
  %v7540 = vadd.f32 %v7365, %v7482
  %v7541 = vadd.f32 %v7366, %v7487
  %v7542 = vadd.f32 %v7367, %v7492
  %v7543 = vadd.f32 %v7368, %v7497
  %v7544 = vadd.f32 %v7369, %v7502
  %v7545 = vadd.f32 %v7370, %v7507
  %v7546 = vadd.f32 %v7371, %v7512
  %v7547 = vadd.f32 %v7372, %v7517
  %v7548 = vadd.f32 %v7373, %v7522
  %v7549 = vadd.f32 %v7374, %v7527
  %v7550 = vadd.f32 %v7375, %v7532
  %v7551 = vrot.slane %v6503, 2
  %v7552 = vrot.slane %v6504, 2
  %v7553 = vsel %vm757, %v7551, %v7552
  %v7554 = vrot.slane %v6523, 2
  %v7555 = vrot.slane %v6524, 2
  %v7556 = vsel %vm757, %v7554, %v7555
  %s7557 = scalar_lea.vmem %s15, 40
  %v7558 = vld [vmem:[%s7557] sm:$0xff]
  %v7559 = vsel %vm101, %v7553, 0
  %v7561 = vsel %vm101, %v7556, 0
  %7563 = vmatprep.subr.mxu0 0.0
  %7564 = vmatpush1.msra.mxu0 0.0
  %7565 = vmatprep.subr.mxu0 0.0
  %7566 = vmatpush1.msra.mxu0 0.0
  %7567 = vmatprep.subr.mxu0 0.0
  %7568 = vmatpush1.msra.mxu0 0.0
  %7569 = vmatprep.subr.mxu0 0.0
  %7570 = vmatpush1.msra.mxu0 0.0
  %7571 = vmatprep.subr.mxu0 0.0
  %7572 = vmatpush1.msra.mxu0 0.0
  %7573 = vmatprep.subr.mxu0 0.0
  %7574 = vmatpush1.msra.mxu0 0.0
  %7575 = vmatprep.subr.mxu0 0.0
  %7576 = vmatpush1.msra.mxu0 0.0
  %7577 = vmatprep.subr.mxu0 0.0
  %7578 = vmatpush1.msra.mxu0 0.0
  %7579 = vmatprep.subr.mxu0 0.0
  %7580 = vmatpush1.msra.mxu0 0.0
  %7581 = vmatprep.subr.mxu0 0.0
  %7582 = vmatpush1.msra.mxu0 0.0
  %7583 = vmatprep.subr.mxu0 0.0
  %7584 = vmatpush1.msra.mxu0 0.0
  %7585 = vmatprep.subr.mxu0 0.0
  %7586 = vmatpush1.msra.mxu0 0.0
  %7587 = vmatprep.subr.mxu0 0.0
  %7588 = vmatpush1.msra.mxu0 0.0
  %7589 = vmatprep.subr.mxu0 0.0
  %7590 = vmatpush1.msra.mxu0 0.0
  %7591 = vmatprep.subr.mxu0 0.0
  %7592 = vmatpush1.msra.mxu0 0.0
  %7593 = vmatprep.subr.mxu0 0.0
  %7594 = vmatpush1.msra.mxu0 %v7558
  %7595 = vmatprep.subr.mxu0 0.0
  %7596 = vmatpush2.msra.mxu0 0.0
  %7597 = vmatprep.subr.mxu0 0.0
  %7598 = vmatpush2.msra.mxu0 0.0
  %7599 = vmatprep.subr.mxu0 0.0
  %7600 = vmatpush2.msra.mxu0 0.0
  %7601 = vmatprep.subr.mxu0 0.0
  %7602 = vmatpush2.msra.mxu0 0.0
  %7603 = vmatprep.subr.mxu0 0.0
  %7604 = vmatpush2.msra.mxu0 0.0
  %7605 = vmatprep.subr.mxu0 0.0
  %7606 = vmatpush2.msra.mxu0 0.0
  %7607 = vmatprep.subr.mxu0 0.0
  %7608 = vmatpush2.msra.mxu0 0.0
  %7609 = vmatprep.subr.mxu0 0.0
  %7610 = vmatpush2.msra.mxu0 0.0
  %7611 = vmatprep.subr.mxu0 0.0
  %7612 = vmatpush2.msra.mxu0 0.0
  %7613 = vmatprep.subr.mxu0 0.0
  %7614 = vmatpush2.msra.mxu0 0.0
  %7615 = vmatprep.subr.mxu0 0.0
  %7616 = vmatpush2.msra.mxu0 0.0
  %7617 = vmatprep.subr.mxu0 0.0
  %7618 = vmatpush2.msra.mxu0 0.0
  %7619 = vmatprep.subr.mxu0 0.0
  %7620 = vmatpush2.msra.mxu0 0.0
  %7621 = vmatprep.subr.mxu0 0.0
  %7622 = vmatpush2.msra.mxu0 0.0
  %7623 = vmatprep.subr.mxu0 0.0
  %7624 = vmatpush2.msra.mxu0 0.0
  %7625 = vmatprep.subr.mxu0 0.0
  %7626 = vmatpush2.msra.mxu0 0.0
  %7627 = vmatprep.mubr.f32.mxu0 0.0
  %7628 = vmatmul.mubr.f32.gmra.mxu0 %v7016
  %v7629 = vpop.f32.mrf.mxu0
  %v7630 = vadd.f32 0.0, %v7629
  %v7631 = vpop.f32.mrf.mxu0
  %7632 = vmatprep.mubr.f32.mxu0 0.0
  %7633 = vmatmul.mubr.f32.gmra.mxu0 %v7018
  %v7634 = vpop.f32.mrf.mxu0
  %v7635 = vadd.f32 0.0, %v7634
  %v7636 = vpop.f32.mrf.mxu0
  %7637 = vmatprep.mubr.f32.mxu0 0.0
  %7638 = vmatmul.mubr.f32.gmra.mxu0 %v7020
  %v7639 = vpop.f32.mrf.mxu0
  %v7640 = vadd.f32 0.0, %v7639
  %v7641 = vpop.f32.mrf.mxu0
  %7642 = vmatprep.mubr.f32.mxu0 0.0
  %7643 = vmatmul.mubr.f32.gmra.mxu0 %v7022
  %v7644 = vpop.f32.mrf.mxu0
  %v7645 = vadd.f32 0.0, %v7644
  %v7646 = vpop.f32.mrf.mxu0
  %7647 = vmatprep.mubr.f32.mxu0 0.0
  %7648 = vmatmul.mubr.f32.gmra.mxu0 %v7024
  %v7649 = vpop.f32.mrf.mxu0
  %v7650 = vadd.f32 0.0, %v7649
  %v7651 = vpop.f32.mrf.mxu0
  %7652 = vmatprep.mubr.f32.mxu0 0.0
  %7653 = vmatmul.mubr.f32.gmra.mxu0 %v7026
  %v7654 = vpop.f32.mrf.mxu0
  %v7655 = vadd.f32 0.0, %v7654
  %v7656 = vpop.f32.mrf.mxu0
  %7657 = vmatprep.mubr.f32.mxu0 0.0
  %7658 = vmatmul.mubr.f32.gmra.mxu0 %v7028
  %v7659 = vpop.f32.mrf.mxu0
  %v7660 = vadd.f32 0.0, %v7659
  %v7661 = vpop.f32.mrf.mxu0
  %7662 = vmatprep.mubr.f32.mxu0 0.0
  %7663 = vmatmul.mubr.f32.gmra.mxu0 %v7559
  %v7664 = vpop.f32.mrf.mxu0
  %v7665 = vadd.f32 0.0, %v7664
  %v7666 = vpop.f32.mrf.mxu0
  %7667 = vmatprep.mubr.f32.mxu0 0.0
  %7668 = vmatmul.mubr.f32.gmra.mxu0 %v7032
  %v7669 = vpop.f32.mrf.mxu0
  %v7670 = vadd.f32 0.0, %v7669
  %v7671 = vpop.f32.mrf.mxu0
  %7672 = vmatprep.mubr.f32.mxu0 0.0
  %7673 = vmatmul.mubr.f32.gmra.mxu0 %v7034
  %v7674 = vpop.f32.mrf.mxu0
  %v7675 = vadd.f32 0.0, %v7674
  %v7676 = vpop.f32.mrf.mxu0
  %7677 = vmatprep.mubr.f32.mxu0 0.0
  %7678 = vmatmul.mubr.f32.gmra.mxu0 %v7036
  %v7679 = vpop.f32.mrf.mxu0
  %v7680 = vadd.f32 0.0, %v7679
  %v7681 = vpop.f32.mrf.mxu0
  %7682 = vmatprep.mubr.f32.mxu0 0.0
  %7683 = vmatmul.mubr.f32.gmra.mxu0 %v7038
  %v7684 = vpop.f32.mrf.mxu0
  %v7685 = vadd.f32 0.0, %v7684
  %v7686 = vpop.f32.mrf.mxu0
  %7687 = vmatprep.mubr.f32.mxu0 0.0
  %7688 = vmatmul.mubr.f32.gmra.mxu0 %v7040
  %v7689 = vpop.f32.mrf.mxu0
  %v7690 = vadd.f32 0.0, %v7689
  %v7691 = vpop.f32.mrf.mxu0
  %7692 = vmatprep.mubr.f32.mxu0 0.0
  %7693 = vmatmul.mubr.f32.gmra.mxu0 %v7042
  %v7694 = vpop.f32.mrf.mxu0
  %v7695 = vadd.f32 0.0, %v7694
  %v7696 = vpop.f32.mrf.mxu0
  %7697 = vmatprep.mubr.f32.mxu0 0.0
  %7698 = vmatmul.mubr.f32.gmra.mxu0 %v7044
  %v7699 = vpop.f32.mrf.mxu0
  %v7700 = vadd.f32 0.0, %v7699
  %v7701 = vpop.f32.mrf.mxu0
  %7702 = vmatprep.mubr.f32.mxu0 0.0
  %7703 = vmatmul.mubr.f32.gmra.mxu0 %v7561
  %v7704 = vpop.f32.mrf.mxu0
  %v7705 = vadd.f32 0.0, %v7704
  %v7706 = vpop.f32.mrf.mxu0
  %7707 = vdwg.mxu0
  %v7708 = vadd.f32 %v7535, %v7630
  %v7709 = vadd.f32 %v7536, %v7635
  %v7710 = vadd.f32 %v7537, %v7640
  %v7711 = vadd.f32 %v7538, %v7645
  %v7712 = vadd.f32 %v7539, %v7650
  %v7713 = vadd.f32 %v7540, %v7655
  %v7714 = vadd.f32 %v7541, %v7660
  %v7715 = vadd.f32 %v7542, %v7665
  %v7716 = vadd.f32 %v7543, %v7670
  %v7717 = vadd.f32 %v7544, %v7675
  %v7718 = vadd.f32 %v7545, %v7680
  %v7719 = vadd.f32 %v7546, %v7685
  %v7720 = vadd.f32 %v7547, %v7690
  %v7721 = vadd.f32 %v7548, %v7695
  %v7722 = vadd.f32 %v7549, %v7700
  %v7723 = vadd.f32 %v7550, %v7705
  %s7724 = scalar_lea.vmem %s15, 48
  %v7725 = vld [vmem:[%s7724] sm:$0xff]
  %v7727 = vsel %vm101, %v6505, 0
  %v7730 = vsel %vm101, %v6525, 0
  %7732 = vmatprep.subr.mxu0 0.0
  %7733 = vmatpush1.msra.mxu0 0.0
  %7734 = vmatprep.subr.mxu0 0.0
  %7735 = vmatpush1.msra.mxu0 0.0
  %7736 = vmatprep.subr.mxu0 0.0
  %7737 = vmatpush1.msra.mxu0 0.0
  %7738 = vmatprep.subr.mxu0 0.0
  %7739 = vmatpush1.msra.mxu0 0.0
  %7740 = vmatprep.subr.mxu0 0.0
  %7741 = vmatpush1.msra.mxu0 0.0
  %7742 = vmatprep.subr.mxu0 0.0
  %7743 = vmatpush1.msra.mxu0 0.0
  %7744 = vmatprep.subr.mxu0 0.0
  %7745 = vmatpush1.msra.mxu0 0.0
  %7746 = vmatprep.subr.mxu0 0.0
  %7747 = vmatpush1.msra.mxu0 0.0
  %7748 = vmatprep.subr.mxu0 0.0
  %7749 = vmatpush1.msra.mxu0 0.0
  %7750 = vmatprep.subr.mxu0 0.0
  %7751 = vmatpush1.msra.mxu0 0.0
  %7752 = vmatprep.subr.mxu0 0.0
  %7753 = vmatpush1.msra.mxu0 0.0
  %7754 = vmatprep.subr.mxu0 0.0
  %7755 = vmatpush1.msra.mxu0 0.0
  %7756 = vmatprep.subr.mxu0 0.0
  %7757 = vmatpush1.msra.mxu0 0.0
  %7758 = vmatprep.subr.mxu0 0.0
  %7759 = vmatpush1.msra.mxu0 0.0
  %7760 = vmatprep.subr.mxu0 0.0
  %7761 = vmatpush1.msra.mxu0 0.0
  %7762 = vmatprep.subr.mxu0 0.0
  %7763 = vmatpush1.msra.mxu0 %v7725
  %7764 = vmatprep.subr.mxu0 0.0
  %7765 = vmatpush2.msra.mxu0 0.0
  %7766 = vmatprep.subr.mxu0 0.0
  %7767 = vmatpush2.msra.mxu0 0.0
  %7768 = vmatprep.subr.mxu0 0.0
  %7769 = vmatpush2.msra.mxu0 0.0
  %7770 = vmatprep.subr.mxu0 0.0
  %7771 = vmatpush2.msra.mxu0 0.0
  %7772 = vmatprep.subr.mxu0 0.0
  %7773 = vmatpush2.msra.mxu0 0.0
  %7774 = vmatprep.subr.mxu0 0.0
  %7775 = vmatpush2.msra.mxu0 0.0
  %7776 = vmatprep.subr.mxu0 0.0
  %7777 = vmatpush2.msra.mxu0 0.0
  %7778 = vmatprep.subr.mxu0 0.0
  %7779 = vmatpush2.msra.mxu0 0.0
  %7780 = vmatprep.subr.mxu0 0.0
  %7781 = vmatpush2.msra.mxu0 0.0
  %7782 = vmatprep.subr.mxu0 0.0
  %7783 = vmatpush2.msra.mxu0 0.0
  %7784 = vmatprep.subr.mxu0 0.0
  %7785 = vmatpush2.msra.mxu0 0.0
  %7786 = vmatprep.subr.mxu0 0.0
  %7787 = vmatpush2.msra.mxu0 0.0
  %7788 = vmatprep.subr.mxu0 0.0
  %7789 = vmatpush2.msra.mxu0 0.0
  %7790 = vmatprep.subr.mxu0 0.0
  %7791 = vmatpush2.msra.mxu0 0.0
  %7792 = vmatprep.subr.mxu0 0.0
  %7793 = vmatpush2.msra.mxu0 0.0
  %7794 = vmatprep.subr.mxu0 0.0
  %7795 = vmatpush2.msra.mxu0 0.0
  %7796 = vmatprep.mubr.f32.mxu0 0.0
  %7797 = vmatmul.mubr.f32.gmra.mxu0 %v6791
  %v7798 = vpop.f32.mrf.mxu0
  %v7799 = vadd.f32 0.0, %v7798
  %v7800 = vpop.f32.mrf.mxu0
  %7801 = vmatprep.mubr.f32.mxu0 0.0
  %7802 = vmatmul.mubr.f32.gmra.mxu0 %v6793
  %v7803 = vpop.f32.mrf.mxu0
  %v7804 = vadd.f32 0.0, %v7803
  %v7805 = vpop.f32.mrf.mxu0
  %7806 = vmatprep.mubr.f32.mxu0 0.0
  %7807 = vmatmul.mubr.f32.gmra.mxu0 %v6795
  %v7808 = vpop.f32.mrf.mxu0
  %v7809 = vadd.f32 0.0, %v7808
  %v7810 = vpop.f32.mrf.mxu0
  %7811 = vmatprep.mubr.f32.mxu0 0.0
  %7812 = vmatmul.mubr.f32.gmra.mxu0 %v6797
  %v7813 = vpop.f32.mrf.mxu0
  %v7814 = vadd.f32 0.0, %v7813
  %v7815 = vpop.f32.mrf.mxu0
  %7816 = vmatprep.mubr.f32.mxu0 0.0
  %7817 = vmatmul.mubr.f32.gmra.mxu0 %v6799
  %v7818 = vpop.f32.mrf.mxu0
  %v7819 = vadd.f32 0.0, %v7818
  %v7820 = vpop.f32.mrf.mxu0
  %7821 = vmatprep.mubr.f32.mxu0 0.0
  %7822 = vmatmul.mubr.f32.gmra.mxu0 %v6801
  %v7823 = vpop.f32.mrf.mxu0
  %v7824 = vadd.f32 0.0, %v7823
  %v7825 = vpop.f32.mrf.mxu0
  %7826 = vmatprep.mubr.f32.mxu0 0.0
  %7827 = vmatmul.mubr.f32.gmra.mxu0 %v7210
  %v7828 = vpop.f32.mrf.mxu0
  %v7829 = vadd.f32 0.0, %v7828
  %v7830 = vpop.f32.mrf.mxu0
  %7831 = vmatprep.mubr.f32.mxu0 0.0
  %7832 = vmatmul.mubr.f32.gmra.mxu0 %v7727
  %v7833 = vpop.f32.mrf.mxu0
  %v7834 = vadd.f32 0.0, %v7833
  %v7835 = vpop.f32.mrf.mxu0
  %7836 = vmatprep.mubr.f32.mxu0 0.0
  %7837 = vmatmul.mubr.f32.gmra.mxu0 %v6807
  %v7838 = vpop.f32.mrf.mxu0
  %v7839 = vadd.f32 0.0, %v7838
  %v7840 = vpop.f32.mrf.mxu0
  %7841 = vmatprep.mubr.f32.mxu0 0.0
  %7842 = vmatmul.mubr.f32.gmra.mxu0 %v6809
  %v7843 = vpop.f32.mrf.mxu0
  %v7844 = vadd.f32 0.0, %v7843
  %v7845 = vpop.f32.mrf.mxu0
  %7846 = vmatprep.mubr.f32.mxu0 0.0
  %7847 = vmatmul.mubr.f32.gmra.mxu0 %v6811
  %v7848 = vpop.f32.mrf.mxu0
  %v7849 = vadd.f32 0.0, %v7848
  %v7850 = vpop.f32.mrf.mxu0
  %7851 = vmatprep.mubr.f32.mxu0 0.0
  %7852 = vmatmul.mubr.f32.gmra.mxu0 %v6813
  %v7853 = vpop.f32.mrf.mxu0
  %v7854 = vadd.f32 0.0, %v7853
  %v7855 = vpop.f32.mrf.mxu0
  %7856 = vmatprep.mubr.f32.mxu0 0.0
  %7857 = vmatmul.mubr.f32.gmra.mxu0 %v6815
  %v7858 = vpop.f32.mrf.mxu0
  %v7859 = vadd.f32 0.0, %v7858
  %v7860 = vpop.f32.mrf.mxu0
  %7861 = vmatprep.mubr.f32.mxu0 0.0
  %7862 = vmatmul.mubr.f32.gmra.mxu0 %v6817
  %v7863 = vpop.f32.mrf.mxu0
  %v7864 = vadd.f32 0.0, %v7863
  %v7865 = vpop.f32.mrf.mxu0
  %7866 = vmatprep.mubr.f32.mxu0 0.0
  %7867 = vmatmul.mubr.f32.gmra.mxu0 %v7213
  %v7868 = vpop.f32.mrf.mxu0
  %v7869 = vadd.f32 0.0, %v7868
  %v7870 = vpop.f32.mrf.mxu0
  %7871 = vmatprep.mubr.f32.mxu0 0.0
  %7872 = vmatmul.mubr.f32.gmra.mxu0 %v7730
  %v7873 = vpop.f32.mrf.mxu0
  %v7874 = vadd.f32 0.0, %v7873
  %v7875 = vpop.f32.mrf.mxu0
  %7876 = vdwg.mxu0
  %v7877 = vadd.f32 %v7708, %v7799
  %v7878 = vadd.f32 %v7709, %v7804
  %v7879 = vadd.f32 %v7710, %v7809
  %v7880 = vadd.f32 %v7711, %v7814
  %v7881 = vadd.f32 %v7712, %v7819
  %v7882 = vadd.f32 %v7713, %v7824
  %v7883 = vadd.f32 %v7714, %v7829
  %v7884 = vadd.f32 %v7715, %v7834
  %v7885 = vadd.f32 %v7716, %v7839
  %v7886 = vadd.f32 %v7717, %v7844
  %v7887 = vadd.f32 %v7718, %v7849
  %v7888 = vadd.f32 %v7719, %v7854
  %v7889 = vadd.f32 %v7720, %v7859
  %v7890 = vadd.f32 %v7721, %v7864
  %v7891 = vadd.f32 %v7722, %v7869
  %v7892 = vadd.f32 %v7723, %v7874
  %v7895 = vrot.slane %v6505, 1
  %v7896 = vrot.slane %v6506, 1
  %v7897 = vsel %vm345, %v7895, %v7896
  %v7898 = vrot.slane %v6525, 1
  %v7899 = vrot.slane %v6526, 1
  %v7900 = vsel %vm345, %v7898, %v7899
  %s7901 = scalar_lea.vmem %s15, 56
  %v7902 = vld [vmem:[%s7901] sm:$0xff]
  %v7903 = vsel %vm101, %v7897, 0
  %v7905 = vsel %vm101, %v7900, 0
  %7907 = vmatprep.subr.mxu0 0.0
  %7908 = vmatpush1.msra.mxu0 0.0
  %7909 = vmatprep.subr.mxu0 0.0
  %7910 = vmatpush1.msra.mxu0 0.0
  %7911 = vmatprep.subr.mxu0 0.0
  %7912 = vmatpush1.msra.mxu0 0.0
  %7913 = vmatprep.subr.mxu0 0.0
  %7914 = vmatpush1.msra.mxu0 0.0
  %7915 = vmatprep.subr.mxu0 0.0
  %7916 = vmatpush1.msra.mxu0 0.0
  %7917 = vmatprep.subr.mxu0 0.0
  %7918 = vmatpush1.msra.mxu0 0.0
  %7919 = vmatprep.subr.mxu0 0.0
  %7920 = vmatpush1.msra.mxu0 0.0
  %7921 = vmatprep.subr.mxu0 0.0
  %7922 = vmatpush1.msra.mxu0 0.0
  %7923 = vmatprep.subr.mxu0 0.0
  %7924 = vmatpush1.msra.mxu0 0.0
  %7925 = vmatprep.subr.mxu0 0.0
  %7926 = vmatpush1.msra.mxu0 0.0
  %7927 = vmatprep.subr.mxu0 0.0
  %7928 = vmatpush1.msra.mxu0 0.0
  %7929 = vmatprep.subr.mxu0 0.0
  %7930 = vmatpush1.msra.mxu0 0.0
  %7931 = vmatprep.subr.mxu0 0.0
  %7932 = vmatpush1.msra.mxu0 0.0
  %7933 = vmatprep.subr.mxu0 0.0
  %7934 = vmatpush1.msra.mxu0 0.0
  %7935 = vmatprep.subr.mxu0 0.0
  %7936 = vmatpush1.msra.mxu0 0.0
  %7937 = vmatprep.subr.mxu0 0.0
  %7938 = vmatpush1.msra.mxu0 %v7902
  %7939 = vmatprep.subr.mxu0 0.0
  %7940 = vmatpush2.msra.mxu0 0.0
  %7941 = vmatprep.subr.mxu0 0.0
  %7942 = vmatpush2.msra.mxu0 0.0
  %7943 = vmatprep.subr.mxu0 0.0
  %7944 = vmatpush2.msra.mxu0 0.0
  %7945 = vmatprep.subr.mxu0 0.0
  %7946 = vmatpush2.msra.mxu0 0.0
  %7947 = vmatprep.subr.mxu0 0.0
  %7948 = vmatpush2.msra.mxu0 0.0
  %7949 = vmatprep.subr.mxu0 0.0
  %7950 = vmatpush2.msra.mxu0 0.0
  %7951 = vmatprep.subr.mxu0 0.0
  %7952 = vmatpush2.msra.mxu0 0.0
  %7953 = vmatprep.subr.mxu0 0.0
  %7954 = vmatpush2.msra.mxu0 0.0
  %7955 = vmatprep.subr.mxu0 0.0
  %7956 = vmatpush2.msra.mxu0 0.0
  %7957 = vmatprep.subr.mxu0 0.0
  %7958 = vmatpush2.msra.mxu0 0.0
  %7959 = vmatprep.subr.mxu0 0.0
  %7960 = vmatpush2.msra.mxu0 0.0
  %7961 = vmatprep.subr.mxu0 0.0
  %7962 = vmatpush2.msra.mxu0 0.0
  %7963 = vmatprep.subr.mxu0 0.0
  %7964 = vmatpush2.msra.mxu0 0.0
  %7965 = vmatprep.subr.mxu0 0.0
  %7966 = vmatpush2.msra.mxu0 0.0
  %7967 = vmatprep.subr.mxu0 0.0
  %7968 = vmatpush2.msra.mxu0 0.0
  %7969 = vmatprep.subr.mxu0 0.0
  %7970 = vmatpush2.msra.mxu0 0.0
  %7971 = vmatprep.mubr.f32.mxu0 0.0
  %7972 = vmatmul.mubr.f32.gmra.mxu0 %v6614
  %v7973 = vpop.f32.mrf.mxu0
  %v7974 = vadd.f32 0.0, %v7973
  %v7975 = vpop.f32.mrf.mxu0
  %7976 = vmatprep.mubr.f32.mxu0 0.0
  %7977 = vmatmul.mubr.f32.gmra.mxu0 %v6616
  %v7978 = vpop.f32.mrf.mxu0
  %v7979 = vadd.f32 0.0, %v7978
  %v7980 = vpop.f32.mrf.mxu0
  %7981 = vmatprep.mubr.f32.mxu0 0.0
  %7982 = vmatmul.mubr.f32.gmra.mxu0 %v6618
  %v7983 = vpop.f32.mrf.mxu0
  %v7984 = vadd.f32 0.0, %v7983
  %v7985 = vpop.f32.mrf.mxu0
  %7986 = vmatprep.mubr.f32.mxu0 0.0
  %7987 = vmatmul.mubr.f32.gmra.mxu0 %v6620
  %v7988 = vpop.f32.mrf.mxu0
  %v7989 = vadd.f32 0.0, %v7988
  %v7990 = vpop.f32.mrf.mxu0
  %7991 = vmatprep.mubr.f32.mxu0 0.0
  %7992 = vmatmul.mubr.f32.gmra.mxu0 %v6622
  %v7993 = vpop.f32.mrf.mxu0
  %v7994 = vadd.f32 0.0, %v7993
  %v7995 = vpop.f32.mrf.mxu0
  %7996 = vmatprep.mubr.f32.mxu0 0.0
  %7997 = vmatmul.mubr.f32.gmra.mxu0 %v6624
  %v7998 = vpop.f32.mrf.mxu0
  %v7999 = vadd.f32 0.0, %v7998
  %v8000 = vpop.f32.mrf.mxu0
  %8001 = vmatprep.mubr.f32.mxu0 0.0
  %8002 = vmatmul.mubr.f32.gmra.mxu0 %v7386
  %v8003 = vpop.f32.mrf.mxu0
  %v8004 = vadd.f32 0.0, %v8003
  %v8005 = vpop.f32.mrf.mxu0
  %8006 = vmatprep.mubr.f32.mxu0 0.0
  %8007 = vmatmul.mubr.f32.gmra.mxu0 %v7903
  %v8008 = vpop.f32.mrf.mxu0
  %v8009 = vadd.f32 0.0, %v8008
  %v8010 = vpop.f32.mrf.mxu0
  %8011 = vmatprep.mubr.f32.mxu0 0.0
  %8012 = vmatmul.mubr.f32.gmra.mxu0 %v6630
  %v8013 = vpop.f32.mrf.mxu0
  %v8014 = vadd.f32 0.0, %v8013
  %v8015 = vpop.f32.mrf.mxu0
  %8016 = vmatprep.mubr.f32.mxu0 0.0
  %8017 = vmatmul.mubr.f32.gmra.mxu0 %v6632
  %v8018 = vpop.f32.mrf.mxu0
  %v8019 = vadd.f32 0.0, %v8018
  %v8020 = vpop.f32.mrf.mxu0
  %8021 = vmatprep.mubr.f32.mxu0 0.0
  %8022 = vmatmul.mubr.f32.gmra.mxu0 %v6634
  %v8023 = vpop.f32.mrf.mxu0
  %v8024 = vadd.f32 0.0, %v8023
  %v8025 = vpop.f32.mrf.mxu0
  %8026 = vmatprep.mubr.f32.mxu0 0.0
  %8027 = vmatmul.mubr.f32.gmra.mxu0 %v6636
  %v8028 = vpop.f32.mrf.mxu0
  %v8029 = vadd.f32 0.0, %v8028
  %v8030 = vpop.f32.mrf.mxu0
  %8031 = vmatprep.mubr.f32.mxu0 0.0
  %8032 = vmatmul.mubr.f32.gmra.mxu0 %v6638
  %v8033 = vpop.f32.mrf.mxu0
  %v8034 = vadd.f32 0.0, %v8033
  %v8035 = vpop.f32.mrf.mxu0
  %8036 = vmatprep.mubr.f32.mxu0 0.0
  %8037 = vmatmul.mubr.f32.gmra.mxu0 %v6640
  %v8038 = vpop.f32.mrf.mxu0
  %v8039 = vadd.f32 0.0, %v8038
  %v8040 = vpop.f32.mrf.mxu0
  %8041 = vmatprep.mubr.f32.mxu0 0.0
  %8042 = vmatmul.mubr.f32.gmra.mxu0 %v7388
  %v8043 = vpop.f32.mrf.mxu0
  %v8044 = vadd.f32 0.0, %v8043
  %v8045 = vpop.f32.mrf.mxu0
  %8046 = vmatprep.mubr.f32.mxu0 0.0
  %8047 = vmatmul.mubr.f32.gmra.mxu0 %v7905
  %v8048 = vpop.f32.mrf.mxu0
  %v8049 = vadd.f32 0.0, %v8048
  %v8050 = vpop.f32.mrf.mxu0
  %8051 = vdwg.mxu0
  %v8052 = vadd.f32 %v7877, %v7974
  %v8053 = vadd.f32 %v7878, %v7979
  %v8054 = vadd.f32 %v7879, %v7984
  %v8055 = vadd.f32 %v7880, %v7989
  %v8056 = vadd.f32 %v7881, %v7994
  %v8057 = vadd.f32 %v7882, %v7999
  %v8058 = vadd.f32 %v7883, %v8004
  %v8059 = vadd.f32 %v7884, %v8009
  %v8060 = vadd.f32 %v7885, %v8014
  %v8061 = vadd.f32 %v7886, %v8019
  %v8062 = vadd.f32 %v7887, %v8024
  %v8063 = vadd.f32 %v7888, %v8029
  %v8064 = vadd.f32 %v7889, %v8034
  %v8065 = vadd.f32 %v7890, %v8039
  %v8066 = vadd.f32 %v7891, %v8044
  %v8067 = vadd.f32 %v7892, %v8049
  %v8068 = vrot.slane %v6505, 2
  %v8069 = vrot.slane %v6506, 2
  %v8070 = vsel %vm757, %v8068, %v8069
  %v8071 = vrot.slane %v6525, 2
  %v8072 = vrot.slane %v6526, 2
  %v8073 = vsel %vm757, %v8071, %v8072
  %s8074 = scalar_lea.vmem %s15, 64
  %v8075 = vld [vmem:[%s8074] sm:$0xff]
  %v8076 = vsel %vm101, %v8070, 0
  %v8078 = vsel %vm101, %v8073, 0
  %8080 = vmatprep.subr.mxu0 0.0
  %8081 = vmatpush1.msra.mxu0 0.0
  %8082 = vmatprep.subr.mxu0 0.0
  %8083 = vmatpush1.msra.mxu0 0.0
  %8084 = vmatprep.subr.mxu0 0.0
  %8085 = vmatpush1.msra.mxu0 0.0
  %8086 = vmatprep.subr.mxu0 0.0
  %8087 = vmatpush1.msra.mxu0 0.0
  %8088 = vmatprep.subr.mxu0 0.0
  %8089 = vmatpush1.msra.mxu0 0.0
  %8090 = vmatprep.subr.mxu0 0.0
  %8091 = vmatpush1.msra.mxu0 0.0
  %8092 = vmatprep.subr.mxu0 0.0
  %8093 = vmatpush1.msra.mxu0 0.0
  %8094 = vmatprep.subr.mxu0 0.0
  %8095 = vmatpush1.msra.mxu0 0.0
  %8096 = vmatprep.subr.mxu0 0.0
  %8097 = vmatpush1.msra.mxu0 0.0
  %8098 = vmatprep.subr.mxu0 0.0
  %8099 = vmatpush1.msra.mxu0 0.0
  %8100 = vmatprep.subr.mxu0 0.0
  %8101 = vmatpush1.msra.mxu0 0.0
  %8102 = vmatprep.subr.mxu0 0.0
  %8103 = vmatpush1.msra.mxu0 0.0
  %8104 = vmatprep.subr.mxu0 0.0
  %8105 = vmatpush1.msra.mxu0 0.0
  %8106 = vmatprep.subr.mxu0 0.0
  %8107 = vmatpush1.msra.mxu0 0.0
  %8108 = vmatprep.subr.mxu0 0.0
  %8109 = vmatpush1.msra.mxu0 0.0
  %8110 = vmatprep.subr.mxu0 0.0
  %8111 = vmatpush1.msra.mxu0 %v8075
  %8112 = vmatprep.subr.mxu0 0.0
  %8113 = vmatpush2.msra.mxu0 0.0
  %8114 = vmatprep.subr.mxu0 0.0
  %8115 = vmatpush2.msra.mxu0 0.0
  %8116 = vmatprep.subr.mxu0 0.0
  %8117 = vmatpush2.msra.mxu0 0.0
  %8118 = vmatprep.subr.mxu0 0.0
  %8119 = vmatpush2.msra.mxu0 0.0
  %8120 = vmatprep.subr.mxu0 0.0
  %8121 = vmatpush2.msra.mxu0 0.0
  %8122 = vmatprep.subr.mxu0 0.0
  %8123 = vmatpush2.msra.mxu0 0.0
  %8124 = vmatprep.subr.mxu0 0.0
  %8125 = vmatpush2.msra.mxu0 0.0
  %8126 = vmatprep.subr.mxu0 0.0
  %8127 = vmatpush2.msra.mxu0 0.0
  %8128 = vmatprep.subr.mxu0 0.0
  %8129 = vmatpush2.msra.mxu0 0.0
  %8130 = vmatprep.subr.mxu0 0.0
  %8131 = vmatpush2.msra.mxu0 0.0
  %8132 = vmatprep.subr.mxu0 0.0
  %8133 = vmatpush2.msra.mxu0 0.0
  %8134 = vmatprep.subr.mxu0 0.0
  %8135 = vmatpush2.msra.mxu0 0.0
  %8136 = vmatprep.subr.mxu0 0.0
  %8137 = vmatpush2.msra.mxu0 0.0
  %8138 = vmatprep.subr.mxu0 0.0
  %8139 = vmatpush2.msra.mxu0 0.0
  %8140 = vmatprep.subr.mxu0 0.0
  %8141 = vmatpush2.msra.mxu0 0.0
  %8142 = vmatprep.subr.mxu0 0.0
  %8143 = vmatpush2.msra.mxu0 0.0
  %8144 = vmatprep.mubr.f32.mxu0 0.0
  %8145 = vmatmul.mubr.f32.gmra.mxu0 %v7018
  %v8146 = vpop.f32.mrf.mxu0
  %v8147 = vadd.f32 0.0, %v8146
  %v8148 = vpop.f32.mrf.mxu0
  %8149 = vmatprep.mubr.f32.mxu0 0.0
  %8150 = vmatmul.mubr.f32.gmra.mxu0 %v7020
  %v8151 = vpop.f32.mrf.mxu0
  %v8152 = vadd.f32 0.0, %v8151
  %v8153 = vpop.f32.mrf.mxu0
  %8154 = vmatprep.mubr.f32.mxu0 0.0
  %8155 = vmatmul.mubr.f32.gmra.mxu0 %v7022
  %v8156 = vpop.f32.mrf.mxu0
  %v8157 = vadd.f32 0.0, %v8156
  %v8158 = vpop.f32.mrf.mxu0
  %8159 = vmatprep.mubr.f32.mxu0 0.0
  %8160 = vmatmul.mubr.f32.gmra.mxu0 %v7024
  %v8161 = vpop.f32.mrf.mxu0
  %v8162 = vadd.f32 0.0, %v8161
  %v8163 = vpop.f32.mrf.mxu0
  %8164 = vmatprep.mubr.f32.mxu0 0.0
  %8165 = vmatmul.mubr.f32.gmra.mxu0 %v7026
  %v8166 = vpop.f32.mrf.mxu0
  %v8167 = vadd.f32 0.0, %v8166
  %v8168 = vpop.f32.mrf.mxu0
  %8169 = vmatprep.mubr.f32.mxu0 0.0
  %8170 = vmatmul.mubr.f32.gmra.mxu0 %v7028
  %v8171 = vpop.f32.mrf.mxu0
  %v8172 = vadd.f32 0.0, %v8171
  %v8173 = vpop.f32.mrf.mxu0
  %8174 = vmatprep.mubr.f32.mxu0 0.0
  %8175 = vmatmul.mubr.f32.gmra.mxu0 %v7559
  %v8176 = vpop.f32.mrf.mxu0
  %v8177 = vadd.f32 0.0, %v8176
  %v8178 = vpop.f32.mrf.mxu0
  %8179 = vmatprep.mubr.f32.mxu0 0.0
  %8180 = vmatmul.mubr.f32.gmra.mxu0 %v8076
  %v8181 = vpop.f32.mrf.mxu0
  %v8182 = vadd.f32 0.0, %v8181
  %v8183 = vpop.f32.mrf.mxu0
  %8184 = vmatprep.mubr.f32.mxu0 0.0
  %8185 = vmatmul.mubr.f32.gmra.mxu0 %v7034
  %v8186 = vpop.f32.mrf.mxu0
  %v8187 = vadd.f32 0.0, %v8186
  %v8188 = vpop.f32.mrf.mxu0
  %8189 = vmatprep.mubr.f32.mxu0 0.0
  %8190 = vmatmul.mubr.f32.gmra.mxu0 %v7036
  %v8191 = vpop.f32.mrf.mxu0
  %v8192 = vadd.f32 0.0, %v8191
  %v8193 = vpop.f32.mrf.mxu0
  %8194 = vmatprep.mubr.f32.mxu0 0.0
  %8195 = vmatmul.mubr.f32.gmra.mxu0 %v7038
  %v8196 = vpop.f32.mrf.mxu0
  %v8197 = vadd.f32 0.0, %v8196
  %v8198 = vpop.f32.mrf.mxu0
  %8199 = vmatprep.mubr.f32.mxu0 0.0
  %8200 = vmatmul.mubr.f32.gmra.mxu0 %v7040
  %v8201 = vpop.f32.mrf.mxu0
  %v8202 = vadd.f32 0.0, %v8201
  %v8203 = vpop.f32.mrf.mxu0
  %8204 = vmatprep.mubr.f32.mxu0 0.0
  %8205 = vmatmul.mubr.f32.gmra.mxu0 %v7042
  %v8206 = vpop.f32.mrf.mxu0
  %v8207 = vadd.f32 0.0, %v8206
  %v8208 = vpop.f32.mrf.mxu0
  %8209 = vmatprep.mubr.f32.mxu0 0.0
  %8210 = vmatmul.mubr.f32.gmra.mxu0 %v7044
  %v8211 = vpop.f32.mrf.mxu0
  %v8212 = vadd.f32 0.0, %v8211
  %v8213 = vpop.f32.mrf.mxu0
  %8214 = vmatprep.mubr.f32.mxu0 0.0
  %8215 = vmatmul.mubr.f32.gmra.mxu0 %v7561
  %v8216 = vpop.f32.mrf.mxu0
  %v8217 = vadd.f32 0.0, %v8216
  %v8218 = vpop.f32.mrf.mxu0
  %8219 = vmatprep.mubr.f32.mxu0 0.0
  %8220 = vmatmul.mubr.f32.gmra.mxu0 %v8078
  %v8221 = vpop.f32.mrf.mxu0
  %v8222 = vadd.f32 0.0, %v8221
  %v8223 = vpop.f32.mrf.mxu0
  %8224 = vdwg.mxu0
  %v8225 = vadd.f32 %v8052, %v8147
  %v8226 = vadd.f32 %v8053, %v8152
  %v8227 = vadd.f32 %v8054, %v8157
  %v8228 = vadd.f32 %v8055, %v8162
  %v8229 = vadd.f32 %v8056, %v8167
  %v8230 = vadd.f32 %v8057, %v8172
  %v8231 = vadd.f32 %v8058, %v8177
  %v8232 = vadd.f32 %v8059, %v8182
  %v8233 = vadd.f32 %v8060, %v8187
  %v8234 = vadd.f32 %v8061, %v8192
  %v8235 = vadd.f32 %v8062, %v8197
  %v8236 = vadd.f32 %v8063, %v8202
  %v8237 = vadd.f32 %v8064, %v8207
  %v8238 = vadd.f32 %v8065, %v8212
  %v8239 = vadd.f32 %v8066, %v8217
  %v8240 = vadd.f32 %v8067, %v8222
  %v8241 = vsel %vm101, %v8225, 0.0
  %v8242 = vsel %vm101, %v8226, 0.0
  %v8243 = vadd.f32 %v8241, %v8242
  %v8244 = vsel %vm101, %v8227, 0.0
  %v8245 = vadd.f32 %v8243, %v8244
  %v8246 = vsel %vm101, %v8228, 0.0
  %v8247 = vadd.f32 %v8245, %v8246
  %v8248 = vsel %vm101, %v8229, 0.0
  %v8249 = vadd.f32 %v8247, %v8248
  %v8250 = vsel %vm101, %v8230, 0.0
  %v8251 = vadd.f32 %v8249, %v8250
  %v8252 = vsel %vm101, %v8231, 0.0
  %v8253 = vadd.f32 %v8251, %v8252
  %v8254 = vsel %vm101, %v8232, 0.0
  %v8255 = vadd.f32 %v8253, %v8254
  %v8256 = vsel %vm101, %v8233, 0.0
  %v8257 = vadd.f32 %v8255, %v8256
  %v8258 = vsel %vm101, %v8234, 0.0
  %v8259 = vadd.f32 %v8257, %v8258
  %v8260 = vsel %vm101, %v8235, 0.0
  %v8261 = vadd.f32 %v8259, %v8260
  %v8262 = vsel %vm101, %v8236, 0.0
  %v8263 = vadd.f32 %v8261, %v8262
  %v8264 = vsel %vm101, %v8237, 0.0
  %v8265 = vadd.f32 %v8263, %v8264
  %v8266 = vsel %vm101, %v8238, 0.0
  %v8267 = vadd.f32 %v8265, %v8266
  %v8268 = vsel %vm101, %v8239, 0.0
  %v8269 = vadd.f32 %v8267, %v8268
  %v8270 = vsel %vm101, %v8240, 0.0
  %v8271 = vadd.f32 %v8269, %v8270
  %v8272 = vrot.slane %v8271, 4
  %v8273 = vadd.f32 %v8271, %v8272
  %v8274 = vrot.slane %v8273, 2
  %v8275 = vadd.f32 %v8273, %v8274
  %v8276 = vrot.slane %v8275, 1
  %v8277 = vadd.f32 %v8275, %v8276
  %v8278 = vmul.f32 %v8277, %v2093
  %v8279 = vmul.f32 %v8225, %v8225
  %v8280 = vmul.f32 %v8226, %v8226
  %v8281 = vmul.f32 %v8227, %v8227
  %v8282 = vmul.f32 %v8228, %v8228
  %v8283 = vmul.f32 %v8229, %v8229
  %v8284 = vmul.f32 %v8230, %v8230
  %v8285 = vmul.f32 %v8231, %v8231
  %v8286 = vmul.f32 %v8232, %v8232
  %v8287 = vmul.f32 %v8233, %v8233
  %v8288 = vmul.f32 %v8234, %v8234
  %v8289 = vmul.f32 %v8235, %v8235
  %v8290 = vmul.f32 %v8236, %v8236
  %v8291 = vmul.f32 %v8237, %v8237
  %v8292 = vmul.f32 %v8238, %v8238
  %v8293 = vmul.f32 %v8239, %v8239
  %v8294 = vmul.f32 %v8240, %v8240
  %v8295 = vsel %vm101, %v8279, 0.0
  %v8296 = vsel %vm101, %v8280, 0.0
  %v8297 = vadd.f32 %v8295, %v8296
  %v8298 = vsel %vm101, %v8281, 0.0
  %v8299 = vadd.f32 %v8297, %v8298
  %v8300 = vsel %vm101, %v8282, 0.0
  %v8301 = vadd.f32 %v8299, %v8300
  %v8302 = vsel %vm101, %v8283, 0.0
  %v8303 = vadd.f32 %v8301, %v8302
  %v8304 = vsel %vm101, %v8284, 0.0
  %v8305 = vadd.f32 %v8303, %v8304
  %v8306 = vsel %vm101, %v8285, 0.0
  %v8307 = vadd.f32 %v8305, %v8306
  %v8308 = vsel %vm101, %v8286, 0.0
  %v8309 = vadd.f32 %v8307, %v8308
  %v8310 = vsel %vm101, %v8287, 0.0
  %v8311 = vadd.f32 %v8309, %v8310
  %v8312 = vsel %vm101, %v8288, 0.0
  %v8313 = vadd.f32 %v8311, %v8312
  %v8314 = vsel %vm101, %v8289, 0.0
  %v8315 = vadd.f32 %v8313, %v8314
  %v8316 = vsel %vm101, %v8290, 0.0
  %v8317 = vadd.f32 %v8315, %v8316
  %v8318 = vsel %vm101, %v8291, 0.0
  %v8319 = vadd.f32 %v8317, %v8318
  %v8320 = vsel %vm101, %v8292, 0.0
  %v8321 = vadd.f32 %v8319, %v8320
  %v8322 = vsel %vm101, %v8293, 0.0
  %v8323 = vadd.f32 %v8321, %v8322
  %v8324 = vsel %vm101, %v8294, 0.0
  %v8325 = vadd.f32 %v8323, %v8324
  %v8326 = vrot.slane %v8325, 4
  %v8327 = vadd.f32 %v8325, %v8326
  %v8328 = vrot.slane %v8327, 2
  %v8329 = vadd.f32 %v8327, %v8328
  %v8330 = vrot.slane %v8329, 1
  %v8331 = vadd.f32 %v8329, %v8330
  %v8332 = vmul.f32 %v8331, %v2093
  %v8333 = vmul.f32 %v8278, %v8278
  %v8334 = vsub.f32 %v8332, %v8333
  %v8335 = vmax.f32 %v8334, 0.0
  %v8336 = vsub.f32 %v8225, %v8278
  %v8337 = vsub.f32 %v8226, %v8278
  %v8338 = vsub.f32 %v8227, %v8278
  %v8339 = vsub.f32 %v8228, %v8278
  %v8340 = vsub.f32 %v8229, %v8278
  %v8341 = vsub.f32 %v8230, %v8278
  %v8342 = vsub.f32 %v8231, %v8278
  %v8343 = vsub.f32 %v8232, %v8278
  %v8344 = vsub.f32 %v8233, %v8278
  %v8345 = vsub.f32 %v8234, %v8278
  %v8346 = vsub.f32 %v8235, %v8278
  %v8347 = vsub.f32 %v8236, %v8278
  %v8348 = vsub.f32 %v8237, %v8278
  %v8349 = vsub.f32 %v8238, %v8278
  %v8350 = vsub.f32 %v8239, %v8278
  %v8351 = vsub.f32 %v8240, %v8278
  %v8352 = vadd.f32 %v8335, 1e-05
  %v8353 = vrsqrt.pop %v8352
  %v8354 = vmul.f32 %v8336, %v8353
  %v8355 = vmul.f32 %v8337, %v8353
  %v8356 = vmul.f32 %v8338, %v8353
  %v8357 = vmul.f32 %v8339, %v8353
  %v8358 = vmul.f32 %v8340, %v8353
  %v8359 = vmul.f32 %v8341, %v8353
  %v8360 = vmul.f32 %v8342, %v8353
  %v8361 = vmul.f32 %v8343, %v8353
  %v8362 = vmul.f32 %v8344, %v8353
  %v8363 = vmul.f32 %v8345, %v8353
  %v8364 = vmul.f32 %v8346, %v8353
  %v8365 = vmul.f32 %v8347, %v8353
  %v8366 = vmul.f32 %v8348, %v8353
  %v8367 = vmul.f32 %v8349, %v8353
  %v8368 = vmul.f32 %v8350, %v8353
  %v8369 = vmul.f32 %v8351, %v8353
  %v8370 = vld [vmem:[%s16] sm:$0x1]
  %v8372 = vlaneseq
  %v8373 = vshrl.u32 %v8372, 7
  %v8374 = vsub.s32 0, %v8373
  %v8375 = vrot.slane %v8370, %v8374
  %v8377 = vmul.f32 %v8354, %v8375
  %v8378 = vmul.f32 %v8355, %v8375
  %v8379 = vmul.f32 %v8356, %v8375
  %v8380 = vmul.f32 %v8357, %v8375
  %v8381 = vmul.f32 %v8358, %v8375
  %v8382 = vmul.f32 %v8359, %v8375
  %v8383 = vmul.f32 %v8360, %v8375
  %v8384 = vmul.f32 %v8361, %v8375
  %v8385 = vmul.f32 %v8362, %v8375
  %v8386 = vmul.f32 %v8363, %v8375
  %v8387 = vmul.f32 %v8364, %v8375
  %v8388 = vmul.f32 %v8365, %v8375
  %v8389 = vmul.f32 %v8366, %v8375
  %v8390 = vmul.f32 %v8367, %v8375
  %v8391 = vmul.f32 %v8368, %v8375
  %v8392 = vmul.f32 %v8369, %v8375
  %v8393 = vld [vmem:[%s17] sm:$0x1]
  %v8395 = vlaneseq
  %v8396 = vshrl.u32 %v8395, 7
  %v8397 = vsub.s32 0, %v8396
  %v8398 = vrot.slane %v8393, %v8397
  %v8400 = vadd.f32 %v8377, %v8398
  %v8401 = vadd.f32 %v8378, %v8398
  %v8402 = vadd.f32 %v8379, %v8398
  %v8403 = vadd.f32 %v8380, %v8398
  %v8404 = vadd.f32 %v8381, %v8398
  %v8405 = vadd.f32 %v8382, %v8398
  %v8406 = vadd.f32 %v8383, %v8398
  %v8407 = vadd.f32 %v8384, %v8398
  %v8408 = vadd.f32 %v8385, %v8398
  %v8409 = vadd.f32 %v8386, %v8398
  %v8410 = vadd.f32 %v8387, %v8398
  %v8411 = vadd.f32 %v8388, %v8398
  %v8412 = vadd.f32 %v8389, %v8398
  %v8413 = vadd.f32 %v8390, %v8398
  %v8414 = vadd.f32 %v8391, %v8398
  %v8415 = vadd.f32 %v8392, %v8398
  %v8416 = vmul.f32 %v8400, 0.01
  %v8417 = vmul.f32 %v8401, 0.01
  %v8418 = vmul.f32 %v8402, 0.01
  %v8419 = vmul.f32 %v8403, 0.01
  %v8420 = vmul.f32 %v8404, 0.01
  %v8421 = vmul.f32 %v8405, 0.01
  %v8422 = vmul.f32 %v8406, 0.01
  %v8423 = vmul.f32 %v8407, 0.01
  %v8424 = vmul.f32 %v8408, 0.01
  %v8425 = vmul.f32 %v8409, 0.01
  %v8426 = vmul.f32 %v8410, 0.01
  %v8427 = vmul.f32 %v8411, 0.01
  %v8428 = vmul.f32 %v8412, 0.01
  %v8429 = vmul.f32 %v8413, 0.01
  %v8430 = vmul.f32 %v8414, 0.01
  %v8431 = vmul.f32 %v8415, 0.01
  %v8432 = vmax.f32 %v8400, %v8416
  %v8433 = vmax.f32 %v8401, %v8417
  %v8434 = vmax.f32 %v8402, %v8418
  %v8435 = vmax.f32 %v8403, %v8419
  %v8436 = vmax.f32 %v8404, %v8420
  %v8437 = vmax.f32 %v8405, %v8421
  %v8438 = vmax.f32 %v8406, %v8422
  %v8439 = vmax.f32 %v8407, %v8423
  %v8440 = vmax.f32 %v8408, %v8424
  %v8441 = vmax.f32 %v8409, %v8425
  %v8442 = vmax.f32 %v8410, %v8426
  %v8443 = vmax.f32 %v8411, %v8427
  %v8444 = vmax.f32 %v8412, %v8428
  %v8445 = vmax.f32 %v8413, %v8429
  %v8446 = vmax.f32 %v8414, %v8430
  %v8447 = vmax.f32 %v8415, %v8431
  %v8448 = vadd.f32 %v4478, %v8432
  %v8449 = vadd.f32 %v4479, %v8433
  %v8450 = vadd.f32 %v4480, %v8434
  %v8451 = vadd.f32 %v4481, %v8435
  %v8452 = vadd.f32 %v4482, %v8436
  %v8453 = vadd.f32 %v4483, %v8437
  %v8454 = vadd.f32 %v4484, %v8438
  %v8455 = vadd.f32 %v4485, %v8439
  %v8456 = vadd.f32 %v4486, %v8440
  %v8457 = vadd.f32 %v4487, %v8441
  %v8458 = vadd.f32 %v4488, %v8442
  %v8459 = vadd.f32 %v4489, %v8443
  %v8460 = vadd.f32 %v4490, %v8444
  %v8461 = vadd.f32 %v4491, %v8445
  %v8462 = vadd.f32 %v4492, %v8446
  %v8463 = vadd.f32 %v4493, %v8447
  %v8464 = vmul.f32 %v8448, 0.01
  %v8465 = vmul.f32 %v8449, 0.01
  %v8466 = vmul.f32 %v8450, 0.01
  %v8467 = vmul.f32 %v8451, 0.01
  %v8468 = vmul.f32 %v8452, 0.01
  %v8469 = vmul.f32 %v8453, 0.01
  %v8470 = vmul.f32 %v8454, 0.01
  %v8471 = vmul.f32 %v8455, 0.01
  %v8472 = vmul.f32 %v8456, 0.01
  %v8473 = vmul.f32 %v8457, 0.01
  %v8474 = vmul.f32 %v8458, 0.01
  %v8475 = vmul.f32 %v8459, 0.01
  %v8476 = vmul.f32 %v8460, 0.01
  %v8477 = vmul.f32 %v8461, 0.01
  %v8478 = vmul.f32 %v8462, 0.01
  %v8479 = vmul.f32 %v8463, 0.01
  %v8480 = vmax.f32 %v8448, %v8464
  %v8481 = vmax.f32 %v8449, %v8465
  %v8482 = vmax.f32 %v8450, %v8466
  %v8483 = vmax.f32 %v8451, %v8467
  %v8484 = vmax.f32 %v8452, %v8468
  %v8485 = vmax.f32 %v8453, %v8469
  %v8486 = vmax.f32 %v8454, %v8470
  %v8487 = vmax.f32 %v8455, %v8471
  %v8488 = vmax.f32 %v8456, %v8472
  %v8489 = vmax.f32 %v8457, %v8473
  %v8490 = vmax.f32 %v8458, %v8474
  %v8491 = vmax.f32 %v8459, %v8475
  %v8492 = vmax.f32 %v8460, %v8476
  %v8493 = vmax.f32 %v8461, %v8477
  %v8494 = vmax.f32 %v8462, %v8478
  %v8495 = vmax.f32 %v8463, %v8479
  %8496 = vst.msk [vmem:[%s18] sm:$0xff] %vm101, %v8480
  %8497 = vst.msk [vmem:[%s18 + $0x8] sm:$0xff] %vm101, %v8481
  %8498 = vst.msk [vmem:[%s18 + $0x10] sm:$0xff] %vm101, %v8482
  %8499 = vst.msk [vmem:[%s18 + $0x18] sm:$0xff] %vm101, %v8483
  %8500 = vst.msk [vmem:[%s18 + $0x20] sm:$0xff] %vm101, %v8484
  %8501 = vst.msk [vmem:[%s18 + $0x28] sm:$0xff] %vm101, %v8485
  %8502 = vst.msk [vmem:[%s18 + $0x30] sm:$0xff] %vm101, %v8486
  %8503 = vst.msk [vmem:[%s18 + $0x38] sm:$0xff] %vm101, %v8487
  %8504 = vst.msk [vmem:[%s18 + $0x40] sm:$0xff] %vm101, %v8488
  %8505 = vst.msk [vmem:[%s18 + $0x48] sm:$0xff] %vm101, %v8489
  %8506 = vst.msk [vmem:[%s18 + $0x50] sm:$0xff] %vm101, %v8490
  %8507 = vst.msk [vmem:[%s18 + $0x58] sm:$0xff] %vm101, %v8491
  %8508 = vst.msk [vmem:[%s18 + $0x60] sm:$0xff] %vm101, %v8492
  %8509 = vst.msk [vmem:[%s18 + $0x68] sm:$0xff] %vm101, %v8493
  %8510 = vst.msk [vmem:[%s18 + $0x70] sm:$0xff] %vm101, %v8494
  %8511 = vst.msk [vmem:[%s18 + $0x78] sm:$0xff] %vm101, %v8495
  // Predicated region
  $region74: #{tpu_custom_call.1} parent=0 // pred_check
    _
  $region75: #{tpu_custom_call.1} parent=0 // pred_check_branch
    %8513 = sbr.rel (0) target = $region77
  $region76: #{tpu_custom_call.1} parent=0 // pred_region
    _
  $region77: #{tpu_custom_call.1} parent=0 // pred_fallthru
    _
  // Predicated region
  $region78: #{tpu_custom_call.1} parent=0 // pred_check
    _
  $region79: #{tpu_custom_call.1} parent=0 // pred_check_branch
    %8515 = sbr.rel (0) target = $region81
  $region80: #{tpu_custom_call.1} parent=0 // pred_region
    _
  $region81: #{tpu_custom_call.1} parent=0 // pred_fallthru
    _

</llo_original>
